<compile_context>
chip_gen: v5e
topology: v5e:2x2
jax: 0.10.0
libtpu: 0.0.40
codegen_flags: <defaults>
</compile_context>

<pallas_src>
import functools

import jax
import jax.numpy as jnp
from jax import lax
from jax.experimental import pallas as pl
from jax.experimental.pallas import tpu as pltpu

LANE = 128
BN_EPS = 1e-5
LRELU_SLOPE = 0.01

TAPS_3x3 = tuple((di, dj) for di in range(3) for dj in range(3))
TAPS_2x2 = tuple((di, dj) for di in range(2) for dj in range(2))


def _round_up(n, m):
    return ((n + m - 1) // m) * m


def _cdiv(a, b):
    return -(-a // b)


# --------------------------------------------------------------------------------------
# Row-tile sizing (per TPU generation: v7x has 64 MiB VMEM, v5e/v6e have 128 MiB)
# --------------------------------------------------------------------------------------
_ROW_TILE_CAP = None


def _default_row_tile():
    global _ROW_TILE_CAP
    if _ROW_TILE_CAP is None:
        cap = 1024
        try:
            if pltpu.get_tpu_info().vmem_capacity_bytes <= (64 << 20):
                cap = 512
        except Exception:
            cap = 512
        _ROW_TILE_CAP = cap
    return _ROW_TILE_CAP


def _tiling(L, max_off, cap):
    n_tiles = max(1, _cdiv(L, cap))
    tile_rows = _round_up(_cdiv(L, n_tiles), 8)     # balanced tiles, multiple of 8
    halo = _round_up(max_off, 8)
    return n_tiles, tile_rows, halo


# --------------------------------------------------------------------------------------
# Pallas kernels
# --------------------------------------------------------------------------------------
def _conv_tile(x_ref, w_ref, b_ref, *, tap_offsets, tile_rows):
    """Tap-stacked conv for one row tile: a single MXU matmul over K = T*C, plus bias.

    x_ref: VMEM tile of (tile_rows + halo) input rows, native (bf16) dtype.
    w_ref: [T*C, N] weights (taps stacked along the contraction dim).
    """
    xs = jnp.concatenate(
        [x_ref[off:off + tile_rows, :] for off in tap_offsets], axis=1)
    return jnp.dot(xs, w_ref[...], preferred_element_type=jnp.float32) + b_ref[...]


def _conv_bn_lrelu_kernel(x_hbm, w_ref, b_ref, g_ref, bt_ref, m_ref, o_ref,
                          xbuf, sem, stat_ref, *,
                          tap_offsets, tile_rows, halo_rows, n_groups, inv_count,
                          two_pass):
    """Fused conv + bias + BatchNorm(batch stats) + LeakyReLU over one row tile.

    two_pass=False (single tile): stats + normalize in one invocation.
    two_pass=True: grid = (2, n_tiles).  Pass 0 accumulates per-channel sum / sum-of-
    squares into a resident VMEM scratch; pass 1 recomputes the conv and normalizes.
    """
    p = pl.program_id(0)
    t = pl.program_id(1)
    N = o_ref.shape[-1]
    gs = N // n_groups

    # Fetch this tile's input rows (tile + halo) from HBM.
    # TODO(synk): double-buffer this DMA (prefetch tile t+1) to overlap with the matmul.
    row0 = pl.multiple_of(t * tile_rows, 8)
    cp = pltpu.make_async_copy(
        x_hbm.at[pl.ds(row0, tile_rows + halo_rows)], xbuf, sem.at[0])
    cp.start()
    cp.wait()

    acc = _conv_tile(xbuf, w_ref, b_ref, tap_offsets=tap_offsets,
                     tile_rows=tile_rows)                    # [tile_rows, N] f32

    def group_sum(v):                                        # [1, N] -> [1, gs]
        r = v[:, 0:gs]
        for g in range(1, n_groups):
            r = r + v[:, g * gs:(g + 1) * gs]
        return r

    def tile_stats():
        # NOTE: garbage rows are excluded via the mask; they are finite (the padded
        # input rows are zeros), so mask * acc == 0 exactly and cannot poison stats.
        ym = acc * m_ref[...]
        return (jnp.sum(ym, axis=0, keepdims=True),
                jnp.sum(ym * ym, axis=0, keepdims=True))

    def normalize_store(col_sum, col_sumsq):
        mean = group_sum(col_sum) * inv_count
        var = jnp.maximum(group_sum(col_sumsq) * inv_count - mean * mean, 0.0)
        inv_std = lax.rsqrt(var + BN_EPS)
        if n_groups > 1:      # phase groups share gamma/beta (tiled at prep time)
            mean = jnp.concatenate([mean] * n_groups, axis=1)
            inv_std = jnp.concatenate([inv_std] * n_groups, axis=1)
        scale = inv_std * g_ref[...]
        shift = bt_ref[...] - mean * scale
        y = acc * scale + shift
        o_ref[...] = jnp.maximum(y, LRELU_SLOPE * y).astype(o_ref.dtype)

    if not two_pass:
        s, ss = tile_stats()
        normalize_store(s, ss)
    else:
        @pl.when(p == 0)
        def _():
            @pl.when(t == 0)
            def _():
                stat_ref[...] = jnp.zeros_like(stat_ref)
            s, ss = tile_stats()
            stat_ref[0:1, :] += s
            stat_ref[1:2, :] += ss

        @pl.when(p == 1)
        def _():
            normalize_store(stat_ref[0:1, :], stat_ref[1:2, :])


def _conv_bias_kernel(x_hbm, w_ref, b_ref, o_ref, xbuf, sem, *,
                      tap_offsets, tile_rows, halo_rows):
    """Tap-stacked conv + bias only (final Conv2d -> Identity), one row tile per step."""
    t = pl.program_id(0)
    row0 = pl.multiple_of(t * tile_rows, 8)
    cp = pltpu.make_async_copy(
        x_hbm.at[pl.ds(row0, tile_rows + halo_rows)], xbuf, sem.at[0])
    cp.start()
    cp.wait()
    acc = _conv_tile(xbuf, w_ref, b_ref, tap_offsets=tap_offsets,
                     tile_rows=tile_rows)
    o_ref[...] = acc.astype(o_ref.dtype)


def _linear_bias_kernel(x_ref, w_ref, b_ref, o_ref):
    o_ref[...] = (jnp.dot(x_ref[...], w_ref[...], preferred_element_type=jnp.float32)
                  + b_ref[...]).astype(o_ref.dtype)


# --------------------------------------------------------------------------------------
# Pallas call wrappers
# --------------------------------------------------------------------------------------
def pallas_conv_bn_lrelu(x_flat, w, b, gamma, beta, mask, *, tap_offsets, n_groups,
                         valid_count, out_dtype, row_tile_cap=None):
    Lx, C = x_flat.shape
    K, N = w.shape
    max_off = max(tap_offsets)
    L = Lx - max_off
    cap = row_tile_cap or _default_row_tile()
    n_tiles, TL, halo = _tiling(L, max_off, cap)
    L_pad = n_tiles * TL
    rows_in = L_pad + halo              # >= Lx (L_pad >= L and halo >= max_off)
    x_pad = jnp.pad(x_flat, ((0, rows_in - Lx), (0, 0)))
    mask_pad = jnp.pad(mask, ((0, L_pad - mask.shape[0]), (0, 0)))

    two_pass = n_tiles > 1
    grid = (2, n_tiles) if two_pass else (1, 1)
    cmap = lambda p, t: (0, 0)
    kern = functools.partial(
        _conv_bn_lrelu_kernel, tap_offsets=tuple(tap_offsets), tile_rows=TL,
        halo_rows=halo, n_groups=n_groups,
        inv_count=1.0 / float(valid_count * n_groups), two_pass=two_pass)

    return pl.pallas_call(
        kern,
        out_shape=jax.ShapeDtypeStruct((L_pad, N), out_dtype),
        grid=grid,
        in_specs=[pl.BlockSpec(memory_space=pl.ANY),          # input stays in HBM
                  pl.BlockSpec((K, N), cmap),                 # weights stay resident
                  pl.BlockSpec((1, N), cmap),
                  pl.BlockSpec((1, N), cmap),
                  pl.BlockSpec((1, N), cmap),
                  pl.BlockSpec((TL, 1), lambda p, t: (t, 0))],
        # Out block index: p*t -> pass 0 parks on block 0 (no writebacks); pass 1
        # visits each block exactly once, monotonically (no non-consecutive revisit).
        out_specs=pl.BlockSpec((TL, N), lambda p, t: (p * t, 0)),
        scratch_shapes=[pltpu.VMEM((TL + halo, C), x_flat.dtype),
                        pltpu.SemaphoreType.DMA((1,)),
                        pltpu.VMEM((2, N), jnp.float32)],
        # Stats are carried across both axes -> must stay "arbitrary".
        # TODO(synk): on v7x split tiles across the 2 TensorCores with a shared-memory
        # stat reduction.
        compiler_params=pltpu.CompilerParams(
            dimension_semantics=("arbitrary", "arbitrary")),
    )(x_pad, w, b, gamma, beta, mask_pad)


def pallas_conv_bias(x_flat, w, b, *, tap_offsets, out_dtype, row_tile_cap=None):
    Lx, C = x_flat.shape
    K, N = w.shape
    max_off = max(tap_offsets)
    L = Lx - max_off
    cap = row_tile_cap or _default_row_tile()
    n_tiles, TL, halo = _tiling(L, max_off, cap)
    L_pad = n_tiles * TL
    rows_in = L_pad + halo
    x_pad = jnp.pad(x_flat, ((0, rows_in - Lx), (0, 0)))

    kern = functools.partial(_conv_bias_kernel, tap_offsets=tuple(tap_offsets),
                             tile_rows=TL, halo_rows=halo)
    return pl.pallas_call(
        kern,
        out_shape=jax.ShapeDtypeStruct((L_pad, N), out_dtype),
        grid=(n_tiles,),
        in_specs=[pl.BlockSpec(memory_space=pl.ANY),
                  pl.BlockSpec((K, N), lambda t: (0, 0)),
                  pl.BlockSpec((1, N), lambda t: (0, 0))],
        out_specs=pl.BlockSpec((TL, N), lambda t: (t, 0)),
        scratch_shapes=[pltpu.VMEM((TL + halo, C), x_flat.dtype),
                        pltpu.SemaphoreType.DMA((1,))],
        compiler_params=pltpu.CompilerParams(dimension_semantics=("parallel",)),
    )(x_pad, w, b)


def pallas_linear(x, w, b, out_dtype=jnp.float32):
    B, K = x.shape
    N = w.shape[1]
    return pl.pallas_call(
        _linear_bias_kernel,
        out_shape=jax.ShapeDtypeStruct((B, N), out_dtype),
        grid=(1,),
        in_specs=[pl.BlockSpec((B, K), lambda i: (0, 0)),
                  pl.BlockSpec((K, N), lambda i: (0, 0)),
                  pl.BlockSpec((1, N), lambda i: (0, 0))],
        out_specs=pl.BlockSpec((B, N), lambda i: (0, 0)),
        compiler_params=pltpu.CompilerParams(dimension_semantics=("arbitrary",)),
    )(x, w, b)


# --------------------------------------------------------------------------------------
# JAX-side layer glue (padding / space-to-depth / flatten; single-copy relayouts)
# --------------------------------------------------------------------------------------
def _valid_mask(Hs, Ws, OH, OW, L):
    # Small [L, 1] side input; kept host-side.
    # TODO(synk): generate in-kernel from iota once vector int div/mod is exercised.
    k = jnp.arange(L, dtype=jnp.int32)
    pos = k % (Hs * Ws)
    valid = ((pos // Ws) < OH) & ((pos % Ws) < OW)
    return valid.astype(jnp.float32)[:, None]


def _unflatten_valid(y, B, Hs, Ws, OH, OW):
    Lx = B * Hs * Ws
    if y.shape[0] >= Lx:
        y = y[:Lx]
    else:
        y = jnp.pad(y, ((0, Lx - y.shape[0]), (0, 0)))
    return y.reshape(B, Hs, Ws, -1)[:, :OH, :OW, :]


def conv3x3_s2_bn_lrelu(x, layer, oc, dtype, row_tile_cap=None):
    """Conv2d(k3,s2,p1) + BatchNorm + LeakyReLU, NHWC, stride-2 via space-to-depth."""
    B, H, W, C = x.shape
    # TODO(synk): fold the halo pad + space-to-depth into the kernel's input DMA.
    xp = jnp.pad(x, ((0, 0), (1, 1), (1, 1), (0, 0)))
    Hs, Ws = (H + 2) // 2, (W + 2) // 2
    xs = xp.reshape(B, Hs, 2, Ws, 2, C).transpose(0, 1, 3, 2, 4, 5)
    x_flat = xs.reshape(B * Hs * Ws, 4 * C).astype(dtype)
    OH, OW = H // 2, W // 2
    offs = tuple(di * Ws + dj for (di, dj) in TAPS_2x2)
    L = B * Hs * Ws - max(offs)
    mask = _valid_mask(Hs, Ws, OH, OW, L)
    y = pallas_conv_bn_lrelu(x_flat, layer["w"], layer["b"], layer["gamma"],
                             layer["beta"], mask, tap_offsets=offs, n_groups=1,
                             valid_count=B * OH * OW, out_dtype=dtype,
                             row_tile_cap=row_tile_cap)
    return _unflatten_valid(y, B, Hs, Ws, OH, OW)[..., :oc]


def convT3x3_s2_bn_lrelu(x, layer, oc, dtype, row_tile_cap=None):
    """ConvTranspose2d(k3,s2,p1,op1) + BatchNorm + LeakyReLU via the 4-phase sub-pixel
    decomposition (4-tap stride-1 conv with phase-packed outputs, then depth-to-space)."""
    B, H, W, C = x.shape
    xp = jnp.pad(x, ((0, 0), (0, 1), (0, 1), (0, 0)))      # bottom/right halo only
    Hs, Ws = H + 1, W + 1
    x_flat = xp.reshape(B * Hs * Ws, C).astype(dtype)
    offs = tuple(di * Ws + dj for (di, dj) in TAPS_2x2)
    L = B * Hs * Ws - max(offs)
    mask = _valid_mask(Hs, Ws, H, W, L)
    y = pallas_conv_bn_lrelu(x_flat, layer["w"], layer["b"], layer["gamma"],
                             layer["beta"], mask, tap_offsets=offs, n_groups=4,
                             valid_count=B * H * W, out_dtype=dtype,
                             row_tile_cap=row_tile_cap)
    y = _unflatten_valid(y, B, Hs, Ws, H, W)                # [B,H,W,4*gs]
    gs = y.shape[-1] // 4
    y = y.reshape(B, H, W, 4, gs)[..., :oc]                 # phase p = 2*r + s
    # TODO(synk): fuse this depth-to-space relayout into the next layer's input DMA.
    y = y.reshape(B, H, W, 2, 2, oc).transpose(0, 1, 3, 2, 4, 5)
    return y.reshape(B, 2 * H, 2 * W, oc)


def conv3x3_s1_bias(x, layer, oc, dtype, out_dtype, row_tile_cap=None):
    """Conv2d(k3,s1,p1) + bias (final layer, Identity activation)."""
    B, H, W, C = x.shape
    xp = jnp.pad(x, ((0, 0), (1, 1), (1, 1), (0, 0)))
    Hs, Ws = H + 2, W + 2
    x_flat = xp.reshape(B * Hs * Ws, C).astype(dtype)
    offs = tuple(di * Ws + dj for (di, dj) in TAPS_3x3)
    y = pallas_conv_bias(x_flat, layer["w"], layer["b"], tap_offsets=offs,
                         out_dtype=out_dtype, row_tile_cap=row_tile_cap)
    return _unflatten_valid(y, B, Hs, Ws, H, W)[..., :oc]


# --------------------------------------------------------------------------------------
# One-time weight pre-transformation (PyTorch layout -> tap-stacked kernel layout)
# --------------------------------------------------------------------------------------
def _pad_tail(v, width, fill=0.0):
    v = jnp.asarray(v, jnp.float32).reshape(-1)
    return jnp.full((width,), fill, jnp.float32).at[:v.shape[0]].set(v).reshape(1, width)


def _prep_conv_s2(w, b, gamma, beta, dtype):
    oc, c = int(w.shape[0]), int(w.shape[1])
    ocp = _round_up(oc, LANE)
    wt = jnp.zeros((len(TAPS_2x2), 4 * c, ocp), jnp.float32)
    for t, (di, dj) in enumerate(TAPS_2x2):
        for ph in range(2):
            for pw in range(2):
                ki, kj = 2 * di + ph, 2 * dj + pw
                if ki <= 2 and kj <= 2:
                    blk = jnp.transpose(w[:, :, ki, kj])     # [c, oc]
                    wt = wt.at[t, (2 * ph + pw) * c:(2 * ph + pw + 1) * c, :oc].set(blk)
    wt = wt.reshape(len(TAPS_2x2) * 4 * c, ocp)              # tap-stacked contraction dim
    return dict(w=wt.astype(dtype), b=_pad_tail(b, ocp),
                gamma=_pad_tail(gamma, ocp, 1.0), beta=_pad_tail(beta, ocp))


def _prep_conv_s1(w, b, dtype):
    oc, c = int(w.shape[0]), int(w.shape[1])
    ocp = _round_up(oc, LANE)
    wt = jnp.zeros((len(TAPS_3x3), c, ocp), jnp.float32)
    for t, (di, dj) in enumerate(TAPS_3x3):
        wt = wt.at[t, :, :oc].set(jnp.transpose(w[:, :, di, dj]))
    return dict(w=wt.reshape(len(TAPS_3x3) * c, ocp).astype(dtype), b=_pad_tail(b, ocp))


def _prep_convT(w, b, gamma, beta, dtype):
    cin, cout = int(w.shape[0]), int(w.shape[1])
    gs = _round_up(cout, 32)            # 4 phase groups -> N = 4*gs (lane-dense, >= 128)
    wt = jnp.zeros((len(TAPS_2x2), cin, 4 * gs), jnp.float32)
    for t, (di, dj) in enumerate(TAPS_2x2):
        for r in range(2):
            for s in range(2):
                kh, kw = r + 1 - 2 * di, s + 1 - 2 * dj
                if 0 <= kh <= 2 and 0 <= kw <= 2:
                    p = 2 * r + s
                    wt = wt.at[t, :, p * gs:p * gs + cout].set(w[:, :, kh, kw])
    wt = wt.reshape(len(TAPS_2x2) * cin, 4 * gs)
    # Invariant required by the in-kernel phase-group statistics: gamma/beta/bias are
    # tiled identically across the 4 phase groups.
    tile4 = lambda v: jnp.concatenate([v] * 4, axis=1)
    return dict(w=wt.astype(dtype), b=tile4(_pad_tail(b, gs)),
                gamma=tile4(_pad_tail(gamma, gs, 1.0)), beta=tile4(_pad_tail(beta, gs)))


def prepare_params(tp, dtype):
    kp = {
        "encoder": [_prep_conv_s2(s["w"], s["b"], s["gamma"], s["beta"], dtype)
                    for s in tp["encoder"]],
        "decoder": [_prep_convT(s["w"], s["b"], s["gamma"], s["beta"], dtype)
                    for s in tp["decoder"]],
        "final_convT": _prep_convT(tp["final_convT_w"], tp["final_convT_b"],
                                   tp["final_bn_gamma"], tp["final_bn_beta"], dtype),
        "final_conv": _prep_conv_s1(tp["final_conv_w"], tp["final_conv_b"], dtype),
    }
    feat, latent = tp["fc_mu_w"].shape
    nh = _round_up(2 * latent, LANE)
    w_heads = jnp.concatenate([tp["fc_mu_w"], tp["fc_var_w"]], axis=1)
    kp["fc_w"] = jnp.pad(w_heads, ((0, 0), (0, nh - 2 * latent))).astype(dtype)
    kp["fc_b"] = _pad_tail(jnp.concatenate([tp["fc_mu_b"], tp["fc_var_b"]]), nh)
    nf = _round_up(feat, LANE)
    kp["dec_w"] = jnp.pad(tp["dec_in_w"], ((0, 0), (0, nf - feat))).astype(dtype)
    kp["dec_b"] = _pad_tail(tp["dec_in_b"], nf)
    return kp


# --------------------------------------------------------------------------------------
# Synthetic (deterministic) parameters in PyTorch layout
# --------------------------------------------------------------------------------------
def init_torch_params(key, in_channels, in_size, latent_dim, hidden_dims):
    keys = iter(jax.random.split(key, 64))

    def nrm(shape, scale=0.1):
        return (scale * jax.random.normal(next(keys), shape)).astype(jnp.float32)

    n = len(hidden_dims)
    small_size = in_size // (2 ** n)
    feat = hidden_dims[-1] * small_size * small_size

    p = {"encoder": [], "decoder": []}
    c = in_channels
    for h in hidden_dims:
        p["encoder"].append(dict(w=nrm((h, c, 3, 3)), b=nrm((h,), 0.01),
                                 gamma=jnp.ones((h,), jnp.float32),
                                 beta=jnp.zeros((h,), jnp.float32)))
        c = h
    p["fc_mu_w"], p["fc_mu_b"] = nrm((feat, latent_dim)), nrm((latent_dim,), 0.01)
    p["fc_var_w"], p["fc_var_b"] = nrm((feat, latent_dim)), nrm((latent_dim,), 0.01)
    p["dec_in_w"], p["dec_in_b"] = nrm((latent_dim, feat)), nrm((feat,), 0.01)
    rev = list(reversed(hidden_dims))
    for i in range(len(rev) - 1):
        p["decoder"].append(dict(w=nrm((rev[i], rev[i + 1], 3, 3)),
                                 b=nrm((rev[i + 1],), 0.01),
                                 gamma=jnp.ones((rev[i + 1],), jnp.float32),
                                 beta=jnp.zeros((rev[i + 1],), jnp.float32)))
    last_hidden = min(rev[-1], 64)
    p["final_convT_w"] = nrm((rev[-1], last_hidden, 3, 3))
    p["final_convT_b"] = nrm((last_hidden,), 0.01)
    p["final_bn_gamma"] = jnp.ones((last_hidden,), jnp.float32)
    p["final_bn_beta"] = jnp.zeros((last_hidden,), jnp.float32)
    p["final_conv_w"] = nrm((in_channels, last_hidden, 3, 3))
    p["final_conv_b"] = nrm((in_channels,), 0.01)
    return p


# --------------------------------------------------------------------------------------
# Full forward (mirrors ConvolutionalVae.forward)
# --------------------------------------------------------------------------------------
def build_vae_forward(tparams, in_channels, in_size, latent_dim, hidden_dims,
                      compute_dtype=jnp.bfloat16):
    assert in_size % 32 == 0
    hidden_dims = tuple(hidden_dims)
    n = len(hidden_dims)
    assert in_size % (2 ** n) == 0
    small_size = in_size // (2 ** n)
    small_ch = hidden_dims[-1]
    feat = small_ch * small_size * small_size
    rev = tuple(reversed(hidden_dims))
    last_hidden = min(rev[-1], 64)
    kp = prepare_params(tparams, compute_dtype)

    def forward(x_nchw, eps):
        B = x_nchw.shape[0]
        h = jnp.transpose(x_nchw, (0, 2, 3, 1)).astype(compute_dtype)   # NCHW -> NHWC

        # ---- encode ----
        for i, oc in enumerate(hidden_dims):
            h = conv3x3_s2_bn_lrelu(h, kp["encoder"][i], oc, compute_dtype)

        # torch.flatten(result, start_dim=1) on NCHW -> (C, H, W) ordering
        flat = jnp.transpose(h, (0, 3, 1, 2)).reshape(B, feat).astype(compute_dtype)
        heads = pallas_linear(flat, kp["fc_w"], kp["fc_b"])      # fc_mu | fc_var fused
        mu = heads[:, :latent_dim]
        log_var = heads[:, latent_dim:2 * latent_dim]

        # ---- reparameterize (plain JAX: a (B, latent) op is pure launch overhead) ----
        z = eps * jnp.exp(0.5 * log_var) + mu

        # ---- decode ----
        d = pallas_linear(z.astype(compute_dtype), kp["dec_w"], kp["dec_b"])[:, :feat]
        h = d.reshape(B, small_ch, small_size, small_size).transpose(0, 2, 3, 1)
        for i in range(n - 1):
            h = convT3x3_s2_bn_lrelu(h, kp["decoder"][i], rev[i + 1], compute_dtype)
        h = convT3x3_s2_bn_lrelu(h, kp["final_convT"], last_hidden, compute_dtype)
        x_rec = conv3x3_s1_bias(h, kp["final_conv"], in_channels, compute_dtype,
                                out_dtype=jnp.float32)
        x_rec = jnp.transpose(x_rec, (0, 3, 1, 2))               # NHWC -> NCHW
        return {"x_rec": x_rec, "x_in": x_nchw, "mu": mu, "log_var": log_var}

    return forward


# --------------------------------------------------------------------------------------
# Pure-JAX reference (f32, PyTorch-layout weights) for numerical verification
# --------------------------------------------------------------------------------------
def _ref_bn_lrelu(y, gamma, beta):
    mean = jnp.mean(y, axis=(0, 2, 3), keepdims=True)
    var = jnp.mean((y - mean) ** 2, axis=(0, 2, 3), keepdims=True)
    yn = (y - mean) * lax.rsqrt(var + BN_EPS)
    yn = yn * gamma[None, :, None, None] + beta[None, :, None, None]
    return jnp.where(yn >= 0, yn, LRELU_SLOPE * yn)


def _ref_conv(x, w, b, stride):
    y = lax.conv_general_dilated(x, w, (stride, stride), [(1, 1), (1, 1)],
                                 dimension_numbers=("NCHW", "OIHW", "NCHW"),
                                 precision=jax.lax.Precision.HIGHEST)
    return y + b[None, :, None, None]


def _ref_convT(x, w, b):
    wf = jnp.transpose(w, (1, 0, 2, 3))[:, :, ::-1, ::-1]
    y = lax.conv_general_dilated(x, wf, (1, 1), [(1, 2), (1, 2)], lhs_dilation=(2, 2),
                                 dimension_numbers=("NCHW", "OIHW", "NCHW"),
                                 precision=jax.lax.Precision.HIGHEST)
    return y + b[None, :, None, None]


def reference_forward(tp, x, eps, in_size, hidden_dims):
    hp = jax.lax.Precision.HIGHEST
    n = len(hidden_dims)
    small_size = in_size // (2 ** n)
    small_ch = hidden_dims[-1]

    h = x
    for st in tp["encoder"]:
        h = _ref_bn_lrelu(_ref_conv(h, st["w"], st["b"], 2), st["gamma"], st["beta"])
    flat = h.reshape(h.shape[0], -1)
    mu = jnp.dot(flat, tp["fc_mu_w"], precision=hp) + tp["fc_mu_b"]
    log_var = jnp.dot(flat, tp["fc_var_w"], precision=hp) + tp["fc_var_b"]
    z = eps * jnp.exp(0.5 * log_var) + mu
    d = jnp.dot(z, tp["dec_in_w"], precision=hp) + tp["dec_in_b"]
    h = d.reshape(z.shape[0], small_ch, small_size, small_size)
    for st in tp["decoder"]:
        h = _ref_bn_lrelu(_ref_convT(h, st["w"], st["b"]), st["gamma"], st["beta"])
    h = _ref_bn_lrelu(_ref_convT(h, tp["final_convT_w"], tp["final_convT_b"]),
                      tp["final_bn_gamma"], tp["final_bn_beta"])
    x_rec = _ref_conv(h, tp["final_conv_w"], tp["final_conv_b"], 1)
    return {"x_rec": x_rec, "mu": mu, "log_var": log_var}


# --------------------------------------------------------------------------------------
if __name__ == "__main__":
    B, in_channels, in_size = 2, 3, 32
    latent_dim = 8
    hidden_dims = (8, 16, 32, 64)          # 4 stride-2 stages -> small_size = 2

    key = jax.random.PRNGKey(0)
    k_x, k_eps, k_p = jax.random.split(key, 3)
    x = jax.random.normal(k_x, (B, in_channels, in_size, in_size), jnp.float32)
    eps = jax.random.normal(k_eps, (B, latent_dim), jnp.float32)  # randn_like(std)
    tparams = init_torch_params(k_p, in_channels, in_size, latent_dim, hidden_dims)

    # Performance configuration: bf16 MXU operands, f32 accumulation & BN math.
    fwd = jax.jit(build_vae_forward(tparams, in_channels, in_size, latent_dim,
                                    hidden_dims, compute_dtype=jnp.bfloat16))
    out = fwd(x, eps)
    jax.block_until_ready(out["x_rec"])
    assert out["x_rec"].shape == x.shape, (out["x_rec"].shape, x.shape)
    assert out["mu"].shape == (B, latent_dim)
    assert out["log_var"].shape == (B, latent_dim)
    assert bool(jnp.all(jnp.isfinite(out["x_rec"])))

    # Per-layer check (f32 operands, small forced row tile so the two-pass row-tiled
    # BN path is exercised) at tight tolerance.
    st0 = tparams["encoder"][0]
    l0 = _prep_conv_s2(st0["w"], st0["b"], st0["gamma"], st0["beta"], jnp.float32)
    x_nhwc = jnp.transpose(x, (0, 2, 3, 1))
    got0 = conv3x3_s2_bn_lrelu(x_nhwc, l0, hidden_dims[0], jnp.float32,
                               row_tile_cap=128)
    ref0 = jnp.transpose(_ref_bn_lrelu(_ref_conv(x, st0["w"], st0["b"], 2),
                                       st0["gamma"], st0["beta"]), (0, 2, 3, 1))
    rel0 = float(jnp.linalg.norm(got0 - ref0) / (jnp.linalg.norm(ref0) + 1e-8))
    assert rel0 < 1e-2, rel0

    # Whole-model numerical check of the Pallas pipeline (f32 operands).
    fwd32 = jax.jit(build_vae_forward(tparams, in_channels, in_size, latent_dim,
                                      hidden_dims, compute_dtype=jnp.float32))
    got = fwd32(x, eps)
    ref = reference_forward(tparams, x, eps, in_size, hidden_dims)
    for name in ("mu", "log_var", "x_rec"):
        a = got[name].astype(jnp.float32)
        bref = ref[name].astype(jnp.float32)
        rel = float(jnp.linalg.norm(a - bref) / (jnp.linalg.norm(bref) + 1e-8))
        assert rel < 5e-2, (name, rel)

    print("KERNEL_OK")
</pallas_src>

<mosaic_0001>
module attributes {stable_mosaic.version = 11 : i64} {
  func.func @_conv_bn_lrelu_kernel(%arg0: i32, %arg1: i32, %arg2: memref<584x12xbf16, #tpu.memory_space<any>>, %arg3: memref<48x128xbf16, #tpu.memory_space<vmem>>, %arg4: memref<1x128xf32, #tpu.memory_space<vmem>>, %arg5: memref<1x128xf32, #tpu.memory_space<vmem>>, %arg6: memref<1x128xf32, #tpu.memory_space<vmem>>, %arg7: memref<280x1xf32, #tpu.memory_space<vmem>>, %arg8: memref<280x128xbf16, #tpu.memory_space<vmem>>, %arg9: memref<304x12xbf16, #tpu.memory_space<vmem>>, %arg10: memref<1x!tpu.dma_semaphore, #tpu.memory_space<semaphore_mem>>, %arg11: memref<2x128xf32, #tpu.memory_space<vmem>>) attributes {dimension_semantics = [#tpu.dimension_semantics<arbitrary>, #tpu.dimension_semantics<arbitrary>], iteration_bounds = array<i64: 2, 2>, scalar_prefetch = 0 : i64, scratch_operands = 3 : i64, tpu.core_type = #tpu.core_type<tc>, window_params = [{}, {pipeline_mode = #tpu.pipeline_mode<synchronous>, transform_indices = @transform_1, window_bounds = array<i64: 48, 128>}, {pipeline_mode = #tpu.pipeline_mode<synchronous>, transform_indices = @transform_2, window_bounds = array<i64: 1, 128>}, {pipeline_mode = #tpu.pipeline_mode<synchronous>, transform_indices = @transform_3, window_bounds = array<i64: 1, 128>}, {pipeline_mode = #tpu.pipeline_mode<synchronous>, transform_indices = @transform_4, window_bounds = array<i64: 1, 128>}, {transform_indices = @transform_5, window_bounds = array<i64: 280, 1>}, {transform_indices = @transform_6, window_bounds = array<i64: 280, 128>}]} {
    %c280_i32 = arith.constant 280 : i32
    %0 = arith.muli %arg1, %c280_i32 : i32
    %1 = tpu.assume_multiple %0, 8 : i32
    %c0_i32 = arith.constant 0 : i32
    %c0_i32_0 = arith.constant 0 : i32
    %2 = tpu.memref_slice %arg2[%1, %c0_i32_0] : memref<584x12xbf16, #tpu.memory_space<any>> -> memref<304x12xbf16, #tpu.memory_space<any>>
    %3 = tpu.memref_slice %arg10[%c0_i32] : memref<1x!tpu.dma_semaphore, #tpu.memory_space<semaphore_mem>> -> memref<1x!tpu.dma_semaphore, #tpu.memory_space<semaphore_mem>>
    %4 = tpu.memref_squeeze %3 : memref<1x!tpu.dma_semaphore, #tpu.memory_space<semaphore_mem>> -> memref<!tpu.dma_semaphore, #tpu.memory_space<semaphore_mem>>
    tpu.enqueue_dma source(%2 : memref<304x12xbf16, #tpu.memory_space<any>>) target(%arg9 : memref<304x12xbf16, #tpu.memory_space<vmem>>) target_semaphore(%4 : memref<!tpu.dma_semaphore, #tpu.memory_space<semaphore_mem>>)
    %c0_i32_1 = arith.constant 0 : i32
    %c0_i32_2 = arith.constant 0 : i32
    %5 = tpu.memref_slice %arg2[%1, %c0_i32_2] : memref<584x12xbf16, #tpu.memory_space<any>> -> memref<304x12xbf16, #tpu.memory_space<any>>
    %6 = tpu.memref_slice %arg10[%c0_i32_1] : memref<1x!tpu.dma_semaphore, #tpu.memory_space<semaphore_mem>> -> memref<1x!tpu.dma_semaphore, #tpu.memory_space<semaphore_mem>>
    %7 = tpu.memref_squeeze %6 : memref<1x!tpu.dma_semaphore, #tpu.memory_space<semaphore_mem>> -> memref<!tpu.dma_semaphore, #tpu.memory_space<semaphore_mem>>
    tpu.wait_dma2 semaphore(%7 : memref<!tpu.dma_semaphore, #tpu.memory_space<semaphore_mem>>) src(%5 : memref<304x12xbf16, #tpu.memory_space<any>>) dst(%arg9 : memref<304x12xbf16, #tpu.memory_space<vmem>>)
    %c0 = arith.constant 0 : index
    %c0_3 = arith.constant 0 : index
    %8 = vector.load %arg9[%c0, %c0_3] : memref<304x12xbf16, #tpu.memory_space<vmem>>, vector<280x12xbf16>
    %c1 = arith.constant 1 : index
    %c0_4 = arith.constant 0 : index
    %9 = vector.load %arg9[%c1, %c0_4] : memref<304x12xbf16, #tpu.memory_space<vmem>>, vector<280x12xbf16>
    %c17 = arith.constant 17 : index
    %c0_5 = arith.constant 0 : index
    %10 = vector.load %arg9[%c17, %c0_5] : memref<304x12xbf16, #tpu.memory_space<vmem>>, vector<280x12xbf16>
    %c18 = arith.constant 18 : index
    %c0_6 = arith.constant 0 : index
    %11 = vector.load %arg9[%c18, %c0_6] : memref<304x12xbf16, #tpu.memory_space<vmem>>, vector<280x12xbf16>
    %12 = tpu.concatenate %8, %9, %10, %11 in 1 : vector<280x12xbf16>, vector<280x12xbf16>, vector<280x12xbf16>, vector<280x12xbf16> -> vector<280x48xbf16>
    %c0_7 = arith.constant 0 : index
    %c0_8 = arith.constant 0 : index
    %13 = vector.load %arg3[%c0_7, %c0_8] : memref<48x128xbf16, #tpu.memory_space<vmem>>, vector<48x128xbf16>
    %cst = arith.constant dense<0.000000e+00> : vector<280x128xf32>
    %14 = tpu.matmul %12, %13, %cst {dimension_numbers = #tpu.dot_dimension_numbers<[1], [0], [0], [1], [0, 0, 1, 1], [], []>} : vector<280x48xbf16>, vector<48x128xbf16>, vector<280x128xf32> -> vector<280x128xf32>
    %c0_9 = arith.constant 0 : index
    %c0_10 = arith.constant 0 : index
    %15 = vector.load %arg4[%c0_9, %c0_10] : memref<1x128xf32, #tpu.memory_space<vmem>>, vector<1x128xf32>
    %16 = vector.broadcast %15 : vector<1x128xf32> to vector<280x128xf32>
    %17 = arith.addf %14, %16 : vector<280x128xf32>
    %c0_i32_11 = arith.constant 0 : i32
    %18 = arith.cmpi eq, %arg0, %c0_i32_11 : i32
    %19 = arith.extui %18 : i1 to i32
    %c0_i32_12 = arith.constant 0 : i32
    %20 = arith.cmpi ne, %19, %c0_i32_12 : i32
    scf.if %20 {
      %c0_i32_14 = arith.constant 0 : i32
      %24 = arith.cmpi eq, %arg1, %c0_i32_14 : i32
      %25 = arith.extui %24 : i1 to i32
      %c0_i32_15 = arith.constant 0 : i32
      %26 = arith.cmpi ne, %25, %c0_i32_15 : i32
      scf.if %26 {
        %cst_28 = arith.constant 0.000000e+00 : f32
        %41 = vector.broadcast %cst_28 : f32 to vector<2x128xf32>
        %c0_29 = arith.constant 0 : index
        %c0_30 = arith.constant 0 : index
        %42 = vector.load %arg11[%c0_29, %c0_30] : memref<2x128xf32, #tpu.memory_space<vmem>>, vector<2x128xf32>
        tpu.vector_store %arg11[%c0_29, %c0_30], %41 {strides = array<i32>} : memref<2x128xf32, #tpu.memory_space<vmem>>, vector<2x128xf32>,
      } else {
      }
      %c0_16 = arith.constant 0 : index
      %c0_17 = arith.constant 0 : index
      %27 = vector.load %arg7[%c0_16, %c0_17] : memref<280x1xf32, #tpu.memory_space<vmem>>, vector<280x1xf32>
      %28 = vector.broadcast %27 : vector<280x1xf32> to vector<280x128xf32>
      %29 = arith.mulf %17, %28 : vector<280x128xf32>
      %cst_18 = arith.constant dense<0.000000e+00> : vector<128xf32>
      %30 = vector.multi_reduction <add>, %29, %cst_18 [0] : vector<280x128xf32> to vector<128xf32>
      %31 = vector.shape_cast %30 : vector<128xf32> to vector<1x128xf32>
      %32 = arith.mulf %29, %29 : vector<280x128xf32>
      %cst_19 = arith.constant dense<0.000000e+00> : vector<128xf32>
      %33 = vector.multi_reduction <add>, %32, %cst_19 [0] : vector<280x128xf32> to vector<128xf32>
      %34 = vector.shape_cast %33 : vector<128xf32> to vector<1x128xf32>
      %c0_20 = arith.constant 0 : index
      %c0_21 = arith.constant 0 : index
      %35 = vector.load %arg11[%c0_20, %c0_21] : memref<2x128xf32, #tpu.memory_space<vmem>>, vector<1x128xf32>
      %36 = arith.addf %35, %31 : vector<1x128xf32>
      %c0_22 = arith.constant 0 : index
      %c0_23 = arith.constant 0 : index
      %37 = vector.load %arg11[%c0_22, %c0_23] : memref<2x128xf32, #tpu.memory_space<vmem>>, vector<1x128xf32>
      tpu.vector_store %arg11[%c0_22, %c0_23], %36 {strides = array<i32>} : memref<2x128xf32, #tpu.memory_space<vmem>>, vector<1x128xf32>,
      %c1_24 = arith.constant 1 : index
      %c0_25 = arith.constant 0 : index
      %38 = vector.load %arg11[%c1_24, %c0_25] : memref<2x128xf32, #tpu.memory_space<vmem>>, vector<1x128xf32>
      %39 = arith.addf %38, %34 : vector<1x128xf32>
      %c1_26 = arith.constant 1 : index
      %c0_27 = arith.constant 0 : index
      %40 = vector.load %arg11[%c1_26, %c0_27] : memref<2x128xf32, #tpu.memory_space<vmem>>, vector<1x128xf32>
      tpu.vector_store %arg11[%c1_26, %c0_27], %39 {strides = array<i32>} : memref<2x128xf32, #tpu.memory_space<vmem>>, vector<1x128xf32>,
    } else {
    }
    %c1_i32 = arith.constant 1 : i32
    %21 = arith.cmpi eq, %arg0, %c1_i32 : i32
    %22 = arith.extui %21 : i1 to i32
    %c0_i32_13 = arith.constant 0 : i32
    %23 = arith.cmpi ne, %22, %c0_i32_13 : i32
    scf.if %23 {
      %c0_14 = arith.constant 0 : index
      %c0_15 = arith.constant 0 : index
      %24 = vector.load %arg11[%c0_14, %c0_15] : memref<2x128xf32, #tpu.memory_space<vmem>>, vector<1x128xf32>
      %c1_16 = arith.constant 1 : index
      %c0_17 = arith.constant 0 : index
      %25 = vector.load %arg11[%c1_16, %c0_17] : memref<2x128xf32, #tpu.memory_space<vmem>>, vector<1x128xf32>
      %cst_18 = arith.constant 0.001953125 : f32
      %26 = vector.broadcast %cst_18 : f32 to vector<1x128xf32>
      %27 = arith.mulf %24, %26 : vector<1x128xf32>
      %cst_19 = arith.constant 0.001953125 : f32
      %28 = vector.broadcast %cst_19 : f32 to vector<1x128xf32>
      %29 = arith.mulf %25, %28 : vector<1x128xf32>
      %30 = arith.mulf %27, %27 : vector<1x128xf32>
      %31 = arith.subf %29, %30 : vector<1x128xf32>
      %cst_20 = arith.constant 0.000000e+00 : f32
      %32 = vector.broadcast %cst_20 : f32 to vector<1x128xf32>
      %33 = arith.maximumf %31, %32 : vector<1x128xf32>
      %cst_21 = arith.constant 9.99999974E-6 : f32
      %34 = vector.broadcast %cst_21 : f32 to vector<1x128xf32>
      %35 = arith.addf %33, %34 : vector<1x128xf32>
      %36 = math.rsqrt %35 : vector<1x128xf32>
      %c0_22 = arith.constant 0 : index
      %c0_23 = arith.constant 0 : index
      %37 = vector.load %arg5[%c0_22, %c0_23] : memref<1x128xf32, #tpu.memory_space<vmem>>, vector<1x128xf32>
      %38 = arith.mulf %36, %37 : vector<1x128xf32>
      %c0_24 = arith.constant 0 : index
      %c0_25 = arith.constant 0 : index
      %39 = vector.load %arg6[%c0_24, %c0_25] : memref<1x128xf32, #tpu.memory_space<vmem>>, vector<1x128xf32>
      %40 = arith.mulf %27, %38 : vector<1x128xf32>
      %41 = arith.subf %39, %40 : vector<1x128xf32>
      %42 = vector.broadcast %38 : vector<1x128xf32> to vector<280x128xf32>
      %43 = arith.mulf %17, %42 : vector<280x128xf32>
      %44 = vector.broadcast %41 : vector<1x128xf32> to vector<280x128xf32>
      %45 = arith.addf %43, %44 : vector<280x128xf32>
      %cst_26 = arith.constant 0.00999999977 : f32
      %46 = vector.broadcast %cst_26 : f32 to vector<280x128xf32>
      %47 = arith.mulf %46, %45 : vector<280x128xf32>
      %48 = arith.maximumf %45, %47 : vector<280x128xf32>
      %49 = arith.truncf %48 : vector<280x128xf32> to vector<280x128xbf16>
      %c0_27 = arith.constant 0 : index
      %c0_28 = arith.constant 0 : index
      %50 = vector.load %arg8[%c0_27, %c0_28] : memref<280x128xbf16, #tpu.memory_space<vmem>>, vector<280x128xbf16>
      tpu.vector_store %arg8[%c0_27, %c0_28], %49 {strides = array<i32>} : memref<280x128xbf16, #tpu.memory_space<vmem>>, vector<280x128xbf16>,
    } else {
    }
    return
  }
  func.func @transform_1(%arg0: i32, %arg1: i32) -> (i32, i32) {
    %c0_i32 = arith.constant 0 : i32
    %c0_i32_0 = arith.constant 0 : i32
    %c0_i32_1 = arith.constant 0 : i32
    return %c0_i32, %c0_i32_0 : i32, i32
  }
  func.func @transform_2(%arg0: i32, %arg1: i32) -> (i32, i32) {
    %c0_i32 = arith.constant 0 : i32
    %c0_i32_0 = arith.constant 0 : i32
    %c0_i32_1 = arith.constant 0 : i32
    return %c0_i32, %c0_i32_0 : i32, i32
  }
  func.func @transform_3(%arg0: i32, %arg1: i32) -> (i32, i32) {
    %c0_i32 = arith.constant 0 : i32
    %c0_i32_0 = arith.constant 0 : i32
    %c0_i32_1 = arith.constant 0 : i32
    return %c0_i32, %c0_i32_0 : i32, i32
  }
  func.func @transform_4(%arg0: i32, %arg1: i32) -> (i32, i32) {
    %c0_i32 = arith.constant 0 : i32
    %c0_i32_0 = arith.constant 0 : i32
    %c0_i32_1 = arith.constant 0 : i32
    return %c0_i32, %c0_i32_0 : i32, i32
  }
  func.func @transform_5(%arg0: i32, %arg1: i32) -> (i32, i32) {
    %c0_i32 = arith.constant 0 : i32
    %c0_i32_0 = arith.constant 0 : i32
    return %arg1, %c0_i32 : i32, i32
  }
  func.func @transform_6(%arg0: i32, %arg1: i32) -> (i32, i32) {
    %0 = arith.muli %arg0, %arg1 : i32
    %c0_i32 = arith.constant 0 : i32
    %c0_i32_0 = arith.constant 0 : i32
    return %0, %c0_i32 : i32, i32
  }
}

module attributes {stable_mosaic.version = 11 : i64} {
  func.func @_conv_bn_lrelu_kernel(%arg0: i32, %arg1: i32, %arg2: memref<168x32xbf16, #tpu.memory_space<any>>, %arg3: memref<128x128xbf16, #tpu.memory_space<vmem>>, %arg4: memref<1x128xf32, #tpu.memory_space<vmem>>, %arg5: memref<1x128xf32, #tpu.memory_space<vmem>>, %arg6: memref<1x128xf32, #tpu.memory_space<vmem>>, %arg7: memref<152x1xf32, #tpu.memory_space<vmem>>, %arg8: memref<152x128xbf16, #tpu.memory_space<vmem>>, %arg9: memref<168x32xbf16, #tpu.memory_space<vmem>>, %arg10: memref<1x!tpu.dma_semaphore, #tpu.memory_space<semaphore_mem>>, %arg11: memref<2x128xf32, #tpu.memory_space<vmem>>) attributes {dimension_semantics = [#tpu.dimension_semantics<arbitrary>, #tpu.dimension_semantics<arbitrary>], iteration_bounds = array<i64: 1, 1>, scalar_prefetch = 0 : i64, scratch_operands = 3 : i64, tpu.core_type = #tpu.core_type<tc>, window_params = [{}, {pipeline_mode = #tpu.pipeline_mode<synchronous>, transform_indices = @transform_1, window_bounds = array<i64: 128, 128>}, {pipeline_mode = #tpu.pipeline_mode<synchronous>, transform_indices = @transform_2, window_bounds = array<i64: 1, 128>}, {pipeline_mode = #tpu.pipeline_mode<synchronous>, transform_indices = @transform_3, window_bounds = array<i64: 1, 128>}, {pipeline_mode = #tpu.pipeline_mode<synchronous>, transform_indices = @transform_4, window_bounds = array<i64: 1, 128>}, {transform_indices = @transform_5, window_bounds = array<i64: 152, 1>}, {transform_indices = @transform_6, window_bounds = array<i64: 152, 128>}]} {
    %c152_i32 = arith.constant 152 : i32
    %0 = arith.muli %arg1, %c152_i32 : i32
    %1 = tpu.assume_multiple %0, 8 : i32
    %c0_i32 = arith.constant 0 : i32
    %c0_i32_0 = arith.constant 0 : i32
    %2 = tpu.memref_slice %arg2[%1, %c0_i32_0] : memref<168x32xbf16, #tpu.memory_space<any>> -> memref<168x32xbf16, #tpu.memory_space<any>>
    %3 = tpu.memref_slice %arg10[%c0_i32] : memref<1x!tpu.dma_semaphore, #tpu.memory_space<semaphore_mem>> -> memref<1x!tpu.dma_semaphore, #tpu.memory_space<semaphore_mem>>
    %4 = tpu.memref_squeeze %3 : memref<1x!tpu.dma_semaphore, #tpu.memory_space<semaphore_mem>> -> memref<!tpu.dma_semaphore, #tpu.memory_space<semaphore_mem>>
    tpu.enqueue_dma source(%2 : memref<168x32xbf16, #tpu.memory_space<any>>) target(%arg9 : memref<168x32xbf16, #tpu.memory_space<vmem>>) target_semaphore(%4 : memref<!tpu.dma_semaphore, #tpu.memory_space<semaphore_mem>>)
    %c0_i32_1 = arith.constant 0 : i32
    %c0_i32_2 = arith.constant 0 : i32
    %5 = tpu.memref_slice %arg2[%1, %c0_i32_2] : memref<168x32xbf16, #tpu.memory_space<any>> -> memref<168x32xbf16, #tpu.memory_space<any>>
    %6 = tpu.memref_slice %arg10[%c0_i32_1] : memref<1x!tpu.dma_semaphore, #tpu.memory_space<semaphore_mem>> -> memref<1x!tpu.dma_semaphore, #tpu.memory_space<semaphore_mem>>
    %7 = tpu.memref_squeeze %6 : memref<1x!tpu.dma_semaphore, #tpu.memory_space<semaphore_mem>> -> memref<!tpu.dma_semaphore, #tpu.memory_space<semaphore_mem>>
    tpu.wait_dma2 semaphore(%7 : memref<!tpu.dma_semaphore, #tpu.memory_space<semaphore_mem>>) src(%5 : memref<168x32xbf16, #tpu.memory_space<any>>) dst(%arg9 : memref<168x32xbf16, #tpu.memory_space<vmem>>)
    %c0 = arith.constant 0 : index
    %c0_3 = arith.constant 0 : index
    %8 = vector.load %arg9[%c0, %c0_3] : memref<168x32xbf16, #tpu.memory_space<vmem>>, vector<152x32xbf16>
    %c1 = arith.constant 1 : index
    %c0_4 = arith.constant 0 : index
    %9 = vector.load %arg9[%c1, %c0_4] : memref<168x32xbf16, #tpu.memory_space<vmem>>, vector<152x32xbf16>
    %c9 = arith.constant 9 : index
    %c0_5 = arith.constant 0 : index
    %10 = vector.load %arg9[%c9, %c0_5] : memref<168x32xbf16, #tpu.memory_space<vmem>>, vector<152x32xbf16>
    %c10 = arith.constant 10 : index
    %c0_6 = arith.constant 0 : index
    %11 = vector.load %arg9[%c10, %c0_6] : memref<168x32xbf16, #tpu.memory_space<vmem>>, vector<152x32xbf16>
    %12 = tpu.concatenate %8, %9, %10, %11 in 1 : vector<152x32xbf16>, vector<152x32xbf16>, vector<152x32xbf16>, vector<152x32xbf16> -> vector<152x128xbf16>
    %c0_7 = arith.constant 0 : index
    %c0_8 = arith.constant 0 : index
    %13 = vector.load %arg3[%c0_7, %c0_8] : memref<128x128xbf16, #tpu.memory_space<vmem>>, vector<128x128xbf16>
    %cst = arith.constant dense<0.000000e+00> : vector<152x128xf32>
    %14 = tpu.matmul %12, %13, %cst {dimension_numbers = #tpu.dot_dimension_numbers<[1], [0], [0], [1], [0, 0, 1, 1], [], []>} : vector<152x128xbf16>, vector<128x128xbf16>, vector<152x128xf32> -> vector<152x128xf32>
    %c0_9 = arith.constant 0 : index
    %c0_10 = arith.constant 0 : index
    %15 = vector.load %arg4[%c0_9, %c0_10] : memref<1x128xf32, #tpu.memory_space<vmem>>, vector<1x128xf32>
    %16 = vector.broadcast %15 : vector<1x128xf32> to vector<152x128xf32>
    %17 = arith.addf %14, %16 : vector<152x128xf32>
    %c0_11 = arith.constant 0 : index
    %c0_12 = arith.constant 0 : index
    %18 = vector.load %arg7[%c0_11, %c0_12] : memref<152x1xf32, #tpu.memory_space<vmem>>, vector<152x1xf32>
    %19 = vector.broadcast %18 : vector<152x1xf32> to vector<152x128xf32>
    %20 = arith.mulf %17, %19 : vector<152x128xf32>
    %cst_13 = arith.constant dense<0.000000e+00> : vector<128xf32>
    %21 = vector.multi_reduction <add>, %20, %cst_13 [0] : vector<152x128xf32> to vector<128xf32>
    %22 = vector.shape_cast %21 : vector<128xf32> to vector<1x128xf32>
    %23 = arith.mulf %20, %20 : vector<152x128xf32>
    %cst_14 = arith.constant dense<0.000000e+00> : vector<128xf32>
    %24 = vector.multi_reduction <add>, %23, %cst_14 [0] : vector<152x128xf32> to vector<128xf32>
    %25 = vector.shape_cast %24 : vector<128xf32> to vector<1x128xf32>
    %cst_15 = arith.constant 7.812500e-03 : f32
    %26 = vector.broadcast %cst_15 : f32 to vector<1x128xf32>
    %27 = arith.mulf %22, %26 : vector<1x128xf32>
    %cst_16 = arith.constant 7.812500e-03 : f32
    %28 = vector.broadcast %cst_16 : f32 to vector<1x128xf32>
    %29 = arith.mulf %25, %28 : vector<1x128xf32>
    %30 = arith.mulf %27, %27 : vector<1x128xf32>
    %31 = arith.subf %29, %30 : vector<1x128xf32>
    %cst_17 = arith.constant 0.000000e+00 : f32
    %32 = vector.broadcast %cst_17 : f32 to vector<1x128xf32>
    %33 = arith.maximumf %31, %32 : vector<1x128xf32>
    %cst_18 = arith.constant 9.99999974E-6 : f32
    %34 = vector.broadcast %cst_18 : f32 to vector<1x128xf32>
    %35 = arith.addf %33, %34 : vector<1x128xf32>
    %36 = math.rsqrt %35 : vector<1x128xf32>
    %c0_19 = arith.constant 0 : index
    %c0_20 = arith.constant 0 : index
    %37 = vector.load %arg5[%c0_19, %c0_20] : memref<1x128xf32, #tpu.memory_space<vmem>>, vector<1x128xf32>
    %38 = arith.mulf %36, %37 : vector<1x128xf32>
    %c0_21 = arith.constant 0 : index
    %c0_22 = arith.constant 0 : index
    %39 = vector.load %arg6[%c0_21, %c0_22] : memref<1x128xf32, #tpu.memory_space<vmem>>, vector<1x128xf32>
    %40 = arith.mulf %27, %38 : vector<1x128xf32>
    %41 = arith.subf %39, %40 : vector<1x128xf32>
    %42 = vector.broadcast %38 : vector<1x128xf32> to vector<152x128xf32>
    %43 = arith.mulf %17, %42 : vector<152x128xf32>
    %44 = vector.broadcast %41 : vector<1x128xf32> to vector<152x128xf32>
    %45 = arith.addf %43, %44 : vector<152x128xf32>
    %cst_23 = arith.constant 0.00999999977 : f32
    %46 = vector.broadcast %cst_23 : f32 to vector<152x128xf32>
    %47 = arith.mulf %46, %45 : vector<152x128xf32>
    %48 = arith.maximumf %45, %47 : vector<152x128xf32>
    %49 = arith.truncf %48 : vector<152x128xf32> to vector<152x128xbf16>
    %c0_24 = arith.constant 0 : index
    %c0_25 = arith.constant 0 : index
    %50 = vector.load %arg8[%c0_24, %c0_25] : memref<152x128xbf16, #tpu.memory_space<vmem>>, vector<152x128xbf16>
    tpu.vector_store %arg8[%c0_24, %c0_25], %49 {strides = array<i32>} : memref<152x128xbf16, #tpu.memory_space<vmem>>, vector<152x128xbf16>,
    return
  }
  func.func @transform_1(%arg0: i32, %arg1: i32) -> (i32, i32) {
    %c0_i32 = arith.constant 0 : i32
    %c0_i32_0 = arith.constant 0 : i32
    %c0_i32_1 = arith.constant 0 : i32
    return %c0_i32, %c0_i32_0 : i32, i32
  }
  func.func @transform_2(%arg0: i32, %arg1: i32) -> (i32, i32) {
    %c0_i32 = arith.constant 0 : i32
    %c0_i32_0 = arith.constant 0 : i32
    %c0_i32_1 = arith.constant 0 : i32
    return %c0_i32, %c0_i32_0 : i32, i32
  }
  func.func @transform_3(%arg0: i32, %arg1: i32) -> (i32, i32) {
    %c0_i32 = arith.constant 0 : i32
    %c0_i32_0 = arith.constant 0 : i32
    %c0_i32_1 = arith.constant 0 : i32
    return %c0_i32, %c0_i32_0 : i32, i32
  }
  func.func @transform_4(%arg0: i32, %arg1: i32) -> (i32, i32) {
    %c0_i32 = arith.constant 0 : i32
    %c0_i32_0 = arith.constant 0 : i32
    %c0_i32_1 = arith.constant 0 : i32
    return %c0_i32, %c0_i32_0 : i32, i32
  }
  func.func @transform_5(%arg0: i32, %arg1: i32) -> (i32, i32) {
    %c0_i32 = arith.constant 0 : i32
    %c0_i32_0 = arith.constant 0 : i32
    return %arg1, %c0_i32 : i32, i32
  }
  func.func @transform_6(%arg0: i32, %arg1: i32) -> (i32, i32) {
    %0 = arith.muli %arg0, %arg1 : i32
    %c0_i32 = arith.constant 0 : i32
    %c0_i32_0 = arith.constant 0 : i32
    return %0, %c0_i32 : i32, i32
  }
}

module attributes {stable_mosaic.version = 11 : i64} {
  func.func @_conv_bn_lrelu_kernel(%arg0: i32, %arg1: i32, %arg2: memref<56x64xbf16, #tpu.memory_space<any>>, %arg3: memref<256x128xbf16, #tpu.memory_space<vmem>>, %arg4: memref<1x128xf32, #tpu.memory_space<vmem>>, %arg5: memref<1x128xf32, #tpu.memory_space<vmem>>, %arg6: memref<1x128xf32, #tpu.memory_space<vmem>>, %arg7: memref<48x1xf32, #tpu.memory_space<vmem>>, %arg8: memref<48x128xbf16, #tpu.memory_space<vmem>>, %arg9: memref<56x64xbf16, #tpu.memory_space<vmem>>, %arg10: memref<1x!tpu.dma_semaphore, #tpu.memory_space<semaphore_mem>>, %arg11: memref<2x128xf32, #tpu.memory_space<vmem>>) attributes {dimension_semantics = [#tpu.dimension_semantics<arbitrary>, #tpu.dimension_semantics<arbitrary>], iteration_bounds = array<i64: 1, 1>, scalar_prefetch = 0 : i64, scratch_operands = 3 : i64, tpu.core_type = #tpu.core_type<tc>, window_params = [{}, {pipeline_mode = #tpu.pipeline_mode<synchronous>, transform_indices = @transform_1, window_bounds = array<i64: 256, 128>}, {pipeline_mode = #tpu.pipeline_mode<synchronous>, transform_indices = @transform_2, window_bounds = array<i64: 1, 128>}, {pipeline_mode = #tpu.pipeline_mode<synchronous>, transform_indices = @transform_3, window_bounds = array<i64: 1, 128>}, {pipeline_mode = #tpu.pipeline_mode<synchronous>, transform_indices = @transform_4, window_bounds = array<i64: 1, 128>}, {transform_indices = @transform_5, window_bounds = array<i64: 48, 1>}, {transform_indices = @transform_6, window_bounds = array<i64: 48, 128>}]} {
    %c48_i32 = arith.constant 48 : i32
    %0 = arith.muli %arg1, %c48_i32 : i32
    %1 = tpu.assume_multiple %0, 8 : i32
    %c0_i32 = arith.constant 0 : i32
    %c0_i32_0 = arith.constant 0 : i32
    %2 = tpu.memref_slice %arg2[%1, %c0_i32_0] : memref<56x64xbf16, #tpu.memory_space<any>> -> memref<56x64xbf16, #tpu.memory_space<any>>
    %3 = tpu.memref_slice %arg10[%c0_i32] : memref<1x!tpu.dma_semaphore, #tpu.memory_space<semaphore_mem>> -> memref<1x!tpu.dma_semaphore, #tpu.memory_space<semaphore_mem>>
    %4 = tpu.memref_squeeze %3 : memref<1x!tpu.dma_semaphore, #tpu.memory_space<semaphore_mem>> -> memref<!tpu.dma_semaphore, #tpu.memory_space<semaphore_mem>>
    tpu.enqueue_dma source(%2 : memref<56x64xbf16, #tpu.memory_space<any>>) target(%arg9 : memref<56x64xbf16, #tpu.memory_space<vmem>>) target_semaphore(%4 : memref<!tpu.dma_semaphore, #tpu.memory_space<semaphore_mem>>)
    %c0_i32_1 = arith.constant 0 : i32
    %c0_i32_2 = arith.constant 0 : i32
    %5 = tpu.memref_slice %arg2[%1, %c0_i32_2] : memref<56x64xbf16, #tpu.memory_space<any>> -> memref<56x64xbf16, #tpu.memory_space<any>>
    %6 = tpu.memref_slice %arg10[%c0_i32_1] : memref<1x!tpu.dma_semaphore, #tpu.memory_space<semaphore_mem>> -> memref<1x!tpu.dma_semaphore, #tpu.memory_space<semaphore_mem>>
    %7 = tpu.memref_squeeze %6 : memref<1x!tpu.dma_semaphore, #tpu.memory_space<semaphore_mem>> -> memref<!tpu.dma_semaphore, #tpu.memory_space<semaphore_mem>>
    tpu.wait_dma2 semaphore(%7 : memref<!tpu.dma_semaphore, #tpu.memory_space<semaphore_mem>>) src(%5 : memref<56x64xbf16, #tpu.memory_space<any>>) dst(%arg9 : memref<56x64xbf16, #tpu.memory_space<vmem>>)
    %c0 = arith.constant 0 : index
    %c0_3 = arith.constant 0 : index
    %8 = vector.load %arg9[%c0, %c0_3] : memref<56x64xbf16, #tpu.memory_space<vmem>>, vector<48x64xbf16>
    %c1 = arith.constant 1 : index
    %c0_4 = arith.constant 0 : index
    %9 = vector.load %arg9[%c1, %c0_4] : memref<56x64xbf16, #tpu.memory_space<vmem>>, vector<48x64xbf16>
    %c5 = arith.constant 5 : index
    %c0_5 = arith.constant 0 : index
    %10 = vector.load %arg9[%c5, %c0_5] : memref<56x64xbf16, #tpu.memory_space<vmem>>, vector<48x64xbf16>
    %c6 = arith.constant 6 : index
    %c0_6 = arith.constant 0 : index
    %11 = vector.load %arg9[%c6, %c0_6] : memref<56x64xbf16, #tpu.memory_space<vmem>>, vector<48x64xbf16>
    %12 = tpu.concatenate %8, %9, %10, %11 in 1 : vector<48x64xbf16>, vector<48x64xbf16>, vector<48x64xbf16>, vector<48x64xbf16> -> vector<48x256xbf16>
    %c0_7 = arith.constant 0 : index
    %c0_8 = arith.constant 0 : index
    %13 = vector.load %arg3[%c0_7, %c0_8] : memref<256x128xbf16, #tpu.memory_space<vmem>>, vector<256x128xbf16>
    %cst = arith.constant dense<0.000000e+00> : vector<48x128xf32>
    %14 = tpu.matmul %12, %13, %cst {dimension_numbers = #tpu.dot_dimension_numbers<[1], [0], [0], [1], [0, 0, 1, 1], [], []>} : vector<48x256xbf16>, vector<256x128xbf16>, vector<48x128xf32> -> vector<48x128xf32>
    %c0_9 = arith.constant 0 : index
    %c0_10 = arith.constant 0 : index
    %15 = vector.load %arg4[%c0_9, %c0_10] : memref<1x128xf32, #tpu.memory_space<vmem>>, vector<1x128xf32>
    %16 = vector.broadcast %15 : vector<1x128xf32> to vector<48x128xf32>
    %17 = arith.addf %14, %16 : vector<48x128xf32>
    %c0_11 = arith.constant 0 : index
    %c0_12 = arith.constant 0 : index
    %18 = vector.load %arg7[%c0_11, %c0_12] : memref<48x1xf32, #tpu.memory_space<vmem>>, vector<48x1xf32>
    %19 = vector.broadcast %18 : vector<48x1xf32> to vector<48x128xf32>
    %20 = arith.mulf %17, %19 : vector<48x128xf32>
    %cst_13 = arith.constant dense<0.000000e+00> : vector<128xf32>
    %21 = vector.multi_reduction <add>, %20, %cst_13 [0] : vector<48x128xf32> to vector<128xf32>
    %22 = vector.shape_cast %21 : vector<128xf32> to vector<1x128xf32>
    %23 = arith.mulf %20, %20 : vector<48x128xf32>
    %cst_14 = arith.constant dense<0.000000e+00> : vector<128xf32>
    %24 = vector.multi_reduction <add>, %23, %cst_14 [0] : vector<48x128xf32> to vector<128xf32>
    %25 = vector.shape_cast %24 : vector<128xf32> to vector<1x128xf32>
    %cst_15 = arith.constant 3.125000e-02 : f32
    %26 = vector.broadcast %cst_15 : f32 to vector<1x128xf32>
    %27 = arith.mulf %22, %26 : vector<1x128xf32>
    %cst_16 = arith.constant 3.125000e-02 : f32
    %28 = vector.broadcast %cst_16 : f32 to vector<1x128xf32>
    %29 = arith.mulf %25, %28 : vector<1x128xf32>
    %30 = arith.mulf %27, %27 : vector<1x128xf32>
    %31 = arith.subf %29, %30 : vector<1x128xf32>
    %cst_17 = arith.constant 0.000000e+00 : f32
    %32 = vector.broadcast %cst_17 : f32 to vector<1x128xf32>
    %33 = arith.maximumf %31, %32 : vector<1x128xf32>
    %cst_18 = arith.constant 9.99999974E-6 : f32
    %34 = vector.broadcast %cst_18 : f32 to vector<1x128xf32>
    %35 = arith.addf %33, %34 : vector<1x128xf32>
    %36 = math.rsqrt %35 : vector<1x128xf32>
    %c0_19 = arith.constant 0 : index
    %c0_20 = arith.constant 0 : index
    %37 = vector.load %arg5[%c0_19, %c0_20] : memref<1x128xf32, #tpu.memory_space<vmem>>, vector<1x128xf32>
    %38 = arith.mulf %36, %37 : vector<1x128xf32>
    %c0_21 = arith.constant 0 : index
    %c0_22 = arith.constant 0 : index
    %39 = vector.load %arg6[%c0_21, %c0_22] : memref<1x128xf32, #tpu.memory_space<vmem>>, vector<1x128xf32>
    %40 = arith.mulf %27, %38 : vector<1x128xf32>
    %41 = arith.subf %39, %40 : vector<1x128xf32>
    %42 = vector.broadcast %38 : vector<1x128xf32> to vector<48x128xf32>
    %43 = arith.mulf %17, %42 : vector<48x128xf32>
    %44 = vector.broadcast %41 : vector<1x128xf32> to vector<48x128xf32>
    %45 = arith.addf %43, %44 : vector<48x128xf32>
    %cst_23 = arith.constant 0.00999999977 : f32
    %46 = vector.broadcast %cst_23 : f32 to vector<48x128xf32>
    %47 = arith.mulf %46, %45 : vector<48x128xf32>
    %48 = arith.maximumf %45, %47 : vector<48x128xf32>
    %49 = arith.truncf %48 : vector<48x128xf32> to vector<48x128xbf16>
    %c0_24 = arith.constant 0 : index
    %c0_25 = arith.constant 0 : index
    %50 = vector.load %arg8[%c0_24, %c0_25] : memref<48x128xbf16, #tpu.memory_space<vmem>>, vector<48x128xbf16>
    tpu.vector_store %arg8[%c0_24, %c0_25], %49 {strides = array<i32>} : memref<48x128xbf16, #tpu.memory_space<vmem>>, vector<48x128xbf16>,
    return
  }
  func.func @transform_1(%arg0: i32, %arg1: i32) -> (i32, i32) {
    %c0_i32 = arith.constant 0 : i32
    %c0_i32_0 = arith.constant 0 : i32
    %c0_i32_1 = arith.constant 0 : i32
    return %c0_i32, %c0_i32_0 : i32, i32
  }
  func.func @transform_2(%arg0: i32, %arg1: i32) -> (i32, i32) {
    %c0_i32 = arith.constant 0 : i32
    %c0_i32_0 = arith.constant 0 : i32
    %c0_i32_1 = arith.constant 0 : i32
    return %c0_i32, %c0_i32_0 : i32, i32
  }
  func.func @transform_3(%arg0: i32, %arg1: i32) -> (i32, i32) {
    %c0_i32 = arith.constant 0 : i32
    %c0_i32_0 = arith.constant 0 : i32
    %c0_i32_1 = arith.constant 0 : i32
    return %c0_i32, %c0_i32_0 : i32, i32
  }
  func.func @transform_4(%arg0: i32, %arg1: i32) -> (i32, i32) {
    %c0_i32 = arith.constant 0 : i32
    %c0_i32_0 = arith.constant 0 : i32
    %c0_i32_1 = arith.constant 0 : i32
    return %c0_i32, %c0_i32_0 : i32, i32
  }
  func.func @transform_5(%arg0: i32, %arg1: i32) -> (i32, i32) {
    %c0_i32 = arith.constant 0 : i32
    %c0_i32_0 = arith.constant 0 : i32
    return %arg1, %c0_i32 : i32, i32
  }
  func.func @transform_6(%arg0: i32, %arg1: i32) -> (i32, i32) {
    %0 = arith.muli %arg0, %arg1 : i32
    %c0_i32 = arith.constant 0 : i32
    %c0_i32_0 = arith.constant 0 : i32
    return %0, %c0_i32 : i32, i32
  }
}

module attributes {stable_mosaic.version = 11 : i64} {
  func.func @_conv_bn_lrelu_kernel(%arg0: i32, %arg1: i32, %arg2: memref<24x128xbf16, #tpu.memory_space<any>>, %arg3: memref<512x128xbf16, #tpu.memory_space<vmem>>, %arg4: memref<1x128xf32, #tpu.memory_space<vmem>>, %arg5: memref<1x128xf32, #tpu.memory_space<vmem>>, %arg6: memref<1x128xf32, #tpu.memory_space<vmem>>, %arg7: memref<16x1xf32, #tpu.memory_space<vmem>>, %arg8: memref<16x128xbf16, #tpu.memory_space<vmem>>, %arg9: memref<24x128xbf16, #tpu.memory_space<vmem>>, %arg10: memref<1x!tpu.dma_semaphore, #tpu.memory_space<semaphore_mem>>, %arg11: memref<2x128xf32, #tpu.memory_space<vmem>>) attributes {dimension_semantics = [#tpu.dimension_semantics<arbitrary>, #tpu.dimension_semantics<arbitrary>], iteration_bounds = array<i64: 1, 1>, scalar_prefetch = 0 : i64, scratch_operands = 3 : i64, tpu.core_type = #tpu.core_type<tc>, window_params = [{}, {pipeline_mode = #tpu.pipeline_mode<synchronous>, transform_indices = @transform_1, window_bounds = array<i64: 512, 128>}, {pipeline_mode = #tpu.pipeline_mode<synchronous>, transform_indices = @transform_2, window_bounds = array<i64: 1, 128>}, {pipeline_mode = #tpu.pipeline_mode<synchronous>, transform_indices = @transform_3, window_bounds = array<i64: 1, 128>}, {pipeline_mode = #tpu.pipeline_mode<synchronous>, transform_indices = @transform_4, window_bounds = array<i64: 1, 128>}, {transform_indices = @transform_5, window_bounds = array<i64: 16, 1>}, {transform_indices = @transform_6, window_bounds = array<i64: 16, 128>}]} {
    %c16_i32 = arith.constant 16 : i32
    %0 = arith.muli %arg1, %c16_i32 : i32
    %1 = tpu.assume_multiple %0, 8 : i32
    %c0_i32 = arith.constant 0 : i32
    %c0_i32_0 = arith.constant 0 : i32
    %2 = tpu.memref_slice %arg2[%1, %c0_i32_0] : memref<24x128xbf16, #tpu.memory_space<any>> -> memref<24x128xbf16, #tpu.memory_space<any>>
    %3 = tpu.memref_slice %arg10[%c0_i32] : memref<1x!tpu.dma_semaphore, #tpu.memory_space<semaphore_mem>> -> memref<1x!tpu.dma_semaphore, #tpu.memory_space<semaphore_mem>>
    %4 = tpu.memref_squeeze %3 : memref<1x!tpu.dma_semaphore, #tpu.memory_space<semaphore_mem>> -> memref<!tpu.dma_semaphore, #tpu.memory_space<semaphore_mem>>
    tpu.enqueue_dma source(%2 : memref<24x128xbf16, #tpu.memory_space<any>>) target(%arg9 : memref<24x128xbf16, #tpu.memory_space<vmem>>) target_semaphore(%4 : memref<!tpu.dma_semaphore, #tpu.memory_space<semaphore_mem>>)
    %c0_i32_1 = arith.constant 0 : i32
    %c0_i32_2 = arith.constant 0 : i32
    %5 = tpu.memref_slice %arg2[%1, %c0_i32_2] : memref<24x128xbf16, #tpu.memory_space<any>> -> memref<24x128xbf16, #tpu.memory_space<any>>
    %6 = tpu.memref_slice %arg10[%c0_i32_1] : memref<1x!tpu.dma_semaphore, #tpu.memory_space<semaphore_mem>> -> memref<1x!tpu.dma_semaphore, #tpu.memory_space<semaphore_mem>>
    %7 = tpu.memref_squeeze %6 : memref<1x!tpu.dma_semaphore, #tpu.memory_space<semaphore_mem>> -> memref<!tpu.dma_semaphore, #tpu.memory_space<semaphore_mem>>
    tpu.wait_dma2 semaphore(%7 : memref<!tpu.dma_semaphore, #tpu.memory_space<semaphore_mem>>) src(%5 : memref<24x128xbf16, #tpu.memory_space<any>>) dst(%arg9 : memref<24x128xbf16, #tpu.memory_space<vmem>>)
    %c0 = arith.constant 0 : index
    %c0_3 = arith.constant 0 : index
    %8 = vector.load %arg9[%c0, %c0_3] : memref<24x128xbf16, #tpu.memory_space<vmem>>, vector<16x128xbf16>
    %c1 = arith.constant 1 : index
    %c0_4 = arith.constant 0 : index
    %9 = vector.load %arg9[%c1, %c0_4] : memref<24x128xbf16, #tpu.memory_space<vmem>>, vector<16x128xbf16>
    %c3 = arith.constant 3 : index
    %c0_5 = arith.constant 0 : index
    %10 = vector.load %arg9[%c3, %c0_5] : memref<24x128xbf16, #tpu.memory_space<vmem>>, vector<16x128xbf16>
    %c4 = arith.constant 4 : index
    %c0_6 = arith.constant 0 : index
    %11 = vector.load %arg9[%c4, %c0_6] : memref<24x128xbf16, #tpu.memory_space<vmem>>, vector<16x128xbf16>
    %12 = tpu.concatenate %8, %9, %10, %11 in 1 : vector<16x128xbf16>, vector<16x128xbf16>, vector<16x128xbf16>, vector<16x128xbf16> -> vector<16x512xbf16>
    %c0_7 = arith.constant 0 : index
    %c0_8 = arith.constant 0 : index
    %13 = vector.load %arg3[%c0_7, %c0_8] : memref<512x128xbf16, #tpu.memory_space<vmem>>, vector<512x128xbf16>
    %cst = arith.constant dense<0.000000e+00> : vector<16x128xf32>
    %14 = tpu.matmul %12, %13, %cst {dimension_numbers = #tpu.dot_dimension_numbers<[1], [0], [0], [1], [0, 0, 1, 1], [], []>} : vector<16x512xbf16>, vector<512x128xbf16>, vector<16x128xf32> -> vector<16x128xf32>
    %c0_9 = arith.constant 0 : index
    %c0_10 = arith.constant 0 : index
    %15 = vector.load %arg4[%c0_9, %c0_10] : memref<1x128xf32, #tpu.memory_space<vmem>>, vector<1x128xf32>
    %16 = vector.broadcast %15 : vector<1x128xf32> to vector<16x128xf32>
    %17 = arith.addf %14, %16 : vector<16x128xf32>
    %c0_11 = arith.constant 0 : index
    %c0_12 = arith.constant 0 : index
    %18 = vector.load %arg7[%c0_11, %c0_12] : memref<16x1xf32, #tpu.memory_space<vmem>>, vector<16x1xf32>
    %19 = vector.broadcast %18 : vector<16x1xf32> to vector<16x128xf32>
    %20 = arith.mulf %17, %19 : vector<16x128xf32>
    %cst_13 = arith.constant dense<0.000000e+00> : vector<128xf32>
    %21 = vector.multi_reduction <add>, %20, %cst_13 [0] : vector<16x128xf32> to vector<128xf32>
    %22 = vector.shape_cast %21 : vector<128xf32> to vector<1x128xf32>
    %23 = arith.mulf %20, %20 : vector<16x128xf32>
    %cst_14 = arith.constant dense<0.000000e+00> : vector<128xf32>
    %24 = vector.multi_reduction <add>, %23, %cst_14 [0] : vector<16x128xf32> to vector<128xf32>
    %25 = vector.shape_cast %24 : vector<128xf32> to vector<1x128xf32>
    %cst_15 = arith.constant 1.250000e-01 : f32
    %26 = vector.broadcast %cst_15 : f32 to vector<1x128xf32>
    %27 = arith.mulf %22, %26 : vector<1x128xf32>
    %cst_16 = arith.constant 1.250000e-01 : f32
    %28 = vector.broadcast %cst_16 : f32 to vector<1x128xf32>
    %29 = arith.mulf %25, %28 : vector<1x128xf32>
    %30 = arith.mulf %27, %27 : vector<1x128xf32>
    %31 = arith.subf %29, %30 : vector<1x128xf32>
    %cst_17 = arith.constant 0.000000e+00 : f32
    %32 = vector.broadcast %cst_17 : f32 to vector<1x128xf32>
    %33 = arith.maximumf %31, %32 : vector<1x128xf32>
    %cst_18 = arith.constant 9.99999974E-6 : f32
    %34 = vector.broadcast %cst_18 : f32 to vector<1x128xf32>
    %35 = arith.addf %33, %34 : vector<1x128xf32>
    %36 = math.rsqrt %35 : vector<1x128xf32>
    %c0_19 = arith.constant 0 : index
    %c0_20 = arith.constant 0 : index
    %37 = vector.load %arg5[%c0_19, %c0_20] : memref<1x128xf32, #tpu.memory_space<vmem>>, vector<1x128xf32>
    %38 = arith.mulf %36, %37 : vector<1x128xf32>
    %c0_21 = arith.constant 0 : index
    %c0_22 = arith.constant 0 : index
    %39 = vector.load %arg6[%c0_21, %c0_22] : memref<1x128xf32, #tpu.memory_space<vmem>>, vector<1x128xf32>
    %40 = arith.mulf %27, %38 : vector<1x128xf32>
    %41 = arith.subf %39, %40 : vector<1x128xf32>
    %42 = vector.broadcast %38 : vector<1x128xf32> to vector<16x128xf32>
    %43 = arith.mulf %17, %42 : vector<16x128xf32>
    %44 = vector.broadcast %41 : vector<1x128xf32> to vector<16x128xf32>
    %45 = arith.addf %43, %44 : vector<16x128xf32>
    %cst_23 = arith.constant 0.00999999977 : f32
    %46 = vector.broadcast %cst_23 : f32 to vector<16x128xf32>
    %47 = arith.mulf %46, %45 : vector<16x128xf32>
    %48 = arith.maximumf %45, %47 : vector<16x128xf32>
    %49 = arith.truncf %48 : vector<16x128xf32> to vector<16x128xbf16>
    %c0_24 = arith.constant 0 : index
    %c0_25 = arith.constant 0 : index
    %50 = vector.load %arg8[%c0_24, %c0_25] : memref<16x128xbf16, #tpu.memory_space<vmem>>, vector<16x128xbf16>
    tpu.vector_store %arg8[%c0_24, %c0_25], %49 {strides = array<i32>} : memref<16x128xbf16, #tpu.memory_space<vmem>>, vector<16x128xbf16>,
    return
  }
  func.func @transform_1(%arg0: i32, %arg1: i32) -> (i32, i32) {
    %c0_i32 = arith.constant 0 : i32
    %c0_i32_0 = arith.constant 0 : i32
    %c0_i32_1 = arith.constant 0 : i32
    return %c0_i32, %c0_i32_0 : i32, i32
  }
  func.func @transform_2(%arg0: i32, %arg1: i32) -> (i32, i32) {
    %c0_i32 = arith.constant 0 : i32
    %c0_i32_0 = arith.constant 0 : i32
    %c0_i32_1 = arith.constant 0 : i32
    return %c0_i32, %c0_i32_0 : i32, i32
  }
  func.func @transform_3(%arg0: i32, %arg1: i32) -> (i32, i32) {
    %c0_i32 = arith.constant 0 : i32
    %c0_i32_0 = arith.constant 0 : i32
    %c0_i32_1 = arith.constant 0 : i32
    return %c0_i32, %c0_i32_0 : i32, i32
  }
  func.func @transform_4(%arg0: i32, %arg1: i32) -> (i32, i32) {
    %c0_i32 = arith.constant 0 : i32
    %c0_i32_0 = arith.constant 0 : i32
    %c0_i32_1 = arith.constant 0 : i32
    return %c0_i32, %c0_i32_0 : i32, i32
  }
  func.func @transform_5(%arg0: i32, %arg1: i32) -> (i32, i32) {
    %c0_i32 = arith.constant 0 : i32
    %c0_i32_0 = arith.constant 0 : i32
    return %arg1, %c0_i32 : i32, i32
  }
  func.func @transform_6(%arg0: i32, %arg1: i32) -> (i32, i32) {
    %0 = arith.muli %arg0, %arg1 : i32
    %c0_i32 = arith.constant 0 : i32
    %c0_i32_0 = arith.constant 0 : i32
    return %0, %c0_i32 : i32, i32
  }
}

module attributes {stable_mosaic.version = 11 : i64} {
  func.func @_linear_bias_kernel(%arg0: i32, %arg1: memref<2x256xbf16, #tpu.memory_space<vmem>>, %arg2: memref<256x128xbf16, #tpu.memory_space<vmem>>, %arg3: memref<1x128xf32, #tpu.memory_space<vmem>>, %arg4: memref<2x128xf32, #tpu.memory_space<vmem>>) attributes {dimension_semantics = [#tpu.dimension_semantics<arbitrary>], iteration_bounds = array<i64: 1>, scalar_prefetch = 0 : i64, scratch_operands = 0 : i64, tpu.core_type = #tpu.core_type<tc>, window_params = [{pipeline_mode = #tpu.pipeline_mode<synchronous>, transform_indices = @transform_0, window_bounds = array<i64: 2, 256>}, {pipeline_mode = #tpu.pipeline_mode<synchronous>, transform_indices = @transform_1, window_bounds = array<i64: 256, 128>}, {pipeline_mode = #tpu.pipeline_mode<synchronous>, transform_indices = @transform_2, window_bounds = array<i64: 1, 128>}, {pipeline_mode = #tpu.pipeline_mode<synchronous>, transform_indices = @transform_3, window_bounds = array<i64: 2, 128>}]} {
    %c0 = arith.constant 0 : index
    %c0_0 = arith.constant 0 : index
    %0 = vector.load %arg1[%c0, %c0_0] : memref<2x256xbf16, #tpu.memory_space<vmem>>, vector<2x256xbf16>
    %c0_1 = arith.constant 0 : index
    %c0_2 = arith.constant 0 : index
    %1 = vector.load %arg2[%c0_1, %c0_2] : memref<256x128xbf16, #tpu.memory_space<vmem>>, vector<256x128xbf16>
    %cst = arith.constant dense<0.000000e+00> : vector<2x128xf32>
    %2 = tpu.matmul %0, %1, %cst {dimension_numbers = #tpu.dot_dimension_numbers<[1], [0], [0], [1], [0, 0, 1, 1], [], []>} : vector<2x256xbf16>, vector<256x128xbf16>, vector<2x128xf32> -> vector<2x128xf32>
    %c0_3 = arith.constant 0 : index
    %c0_4 = arith.constant 0 : index
    %3 = vector.load %arg3[%c0_3, %c0_4] : memref<1x128xf32, #tpu.memory_space<vmem>>, vector<1x128xf32>
    %4 = vector.broadcast %3 : vector<1x128xf32> to vector<2x128xf32>
    %5 = arith.addf %2, %4 : vector<2x128xf32>
    %c0_5 = arith.constant 0 : index
    %c0_6 = arith.constant 0 : index
    %6 = vector.load %arg4[%c0_5, %c0_6] : memref<2x128xf32, #tpu.memory_space<vmem>>, vector<2x128xf32>
    tpu.vector_store %arg4[%c0_5, %c0_6], %5 {strides = array<i32>} : memref<2x128xf32, #tpu.memory_space<vmem>>, vector<2x128xf32>,
    return
  }
  func.func @transform_0(%arg0: i32) -> (i32, i32) {
    %c0_i32 = arith.constant 0 : i32
    %c0_i32_0 = arith.constant 0 : i32
    %c0_i32_1 = arith.constant 0 : i32
    return %c0_i32, %c0_i32_0 : i32, i32
  }
  func.func @transform_1(%arg0: i32) -> (i32, i32) {
    %c0_i32 = arith.constant 0 : i32
    %c0_i32_0 = arith.constant 0 : i32
    %c0_i32_1 = arith.constant 0 : i32
    return %c0_i32, %c0_i32_0 : i32, i32
  }
  func.func @transform_2(%arg0: i32) -> (i32, i32) {
    %c0_i32 = arith.constant 0 : i32
    %c0_i32_0 = arith.constant 0 : i32
    %c0_i32_1 = arith.constant 0 : i32
    return %c0_i32, %c0_i32_0 : i32, i32
  }
  func.func @transform_3(%arg0: i32) -> (i32, i32) {
    %c0_i32 = arith.constant 0 : i32
    %c0_i32_0 = arith.constant 0 : i32
    %c0_i32_1 = arith.constant 0 : i32
    return %c0_i32, %c0_i32_0 : i32, i32
  }
}

module attributes {stable_mosaic.version = 11 : i64} {
  func.func @_linear_bias_kernel(%arg0: i32, %arg1: memref<2x8xbf16, #tpu.memory_space<vmem>>, %arg2: memref<8x256xbf16, #tpu.memory_space<vmem>>, %arg3: memref<1x256xf32, #tpu.memory_space<vmem>>, %arg4: memref<2x256xf32, #tpu.memory_space<vmem>>) attributes {dimension_semantics = [#tpu.dimension_semantics<arbitrary>], iteration_bounds = array<i64: 1>, scalar_prefetch = 0 : i64, scratch_operands = 0 : i64, tpu.core_type = #tpu.core_type<tc>, window_params = [{pipeline_mode = #tpu.pipeline_mode<synchronous>, transform_indices = @transform_0, window_bounds = array<i64: 2, 8>}, {pipeline_mode = #tpu.pipeline_mode<synchronous>, transform_indices = @transform_1, window_bounds = array<i64: 8, 256>}, {pipeline_mode = #tpu.pipeline_mode<synchronous>, transform_indices = @transform_2, window_bounds = array<i64: 1, 256>}, {pipeline_mode = #tpu.pipeline_mode<synchronous>, transform_indices = @transform_3, window_bounds = array<i64: 2, 256>}]} {
    %c0 = arith.constant 0 : index
    %c0_0 = arith.constant 0 : index
    %0 = vector.load %arg1[%c0, %c0_0] : memref<2x8xbf16, #tpu.memory_space<vmem>>, vector<2x8xbf16>
    %c0_1 = arith.constant 0 : index
    %c0_2 = arith.constant 0 : index
    %1 = vector.load %arg2[%c0_1, %c0_2] : memref<8x256xbf16, #tpu.memory_space<vmem>>, vector<8x256xbf16>
    %cst = arith.constant dense<0.000000e+00> : vector<2x256xf32>
    %2 = tpu.matmul %0, %1, %cst {dimension_numbers = #tpu.dot_dimension_numbers<[1], [0], [0], [1], [0, 0, 1, 1], [], []>} : vector<2x8xbf16>, vector<8x256xbf16>, vector<2x256xf32> -> vector<2x256xf32>
    %c0_3 = arith.constant 0 : index
    %c0_4 = arith.constant 0 : index
    %3 = vector.load %arg3[%c0_3, %c0_4] : memref<1x256xf32, #tpu.memory_space<vmem>>, vector<1x256xf32>
    %4 = vector.broadcast %3 : vector<1x256xf32> to vector<2x256xf32>
    %5 = arith.addf %2, %4 : vector<2x256xf32>
    %c0_5 = arith.constant 0 : index
    %c0_6 = arith.constant 0 : index
    %6 = vector.load %arg4[%c0_5, %c0_6] : memref<2x256xf32, #tpu.memory_space<vmem>>, vector<2x256xf32>
    tpu.vector_store %arg4[%c0_5, %c0_6], %5 {strides = array<i32>} : memref<2x256xf32, #tpu.memory_space<vmem>>, vector<2x256xf32>,
    return
  }
  func.func @transform_0(%arg0: i32) -> (i32, i32) {
    %c0_i32 = arith.constant 0 : i32
    %c0_i32_0 = arith.constant 0 : i32
    %c0_i32_1 = arith.constant 0 : i32
    return %c0_i32, %c0_i32_0 : i32, i32
  }
  func.func @transform_1(%arg0: i32) -> (i32, i32) {
    %c0_i32 = arith.constant 0 : i32
    %c0_i32_0 = arith.constant 0 : i32
    %c0_i32_1 = arith.constant 0 : i32
    return %c0_i32, %c0_i32_0 : i32, i32
  }
  func.func @transform_2(%arg0: i32) -> (i32, i32) {
    %c0_i32 = arith.constant 0 : i32
    %c0_i32_0 = arith.constant 0 : i32
    %c0_i32_1 = arith.constant 0 : i32
    return %c0_i32, %c0_i32_0 : i32, i32
  }
  func.func @transform_3(%arg0: i32) -> (i32, i32) {
    %c0_i32 = arith.constant 0 : i32
    %c0_i32_0 = arith.constant 0 : i32
    %c0_i32_1 = arith.constant 0 : i32
    return %c0_i32, %c0_i32_0 : i32, i32
  }
}

module attributes {stable_mosaic.version = 11 : i64} {
  func.func @_conv_bn_lrelu_kernel(%arg0: i32, %arg1: i32, %arg2: memref<24x64xbf16, #tpu.memory_space<any>>, %arg3: memref<256x128xbf16, #tpu.memory_space<vmem>>, %arg4: memref<1x128xf32, #tpu.memory_space<vmem>>, %arg5: memref<1x128xf32, #tpu.memory_space<vmem>>, %arg6: memref<1x128xf32, #tpu.memory_space<vmem>>, %arg7: memref<16x1xf32, #tpu.memory_space<vmem>>, %arg8: memref<16x128xbf16, #tpu.memory_space<vmem>>, %arg9: memref<24x64xbf16, #tpu.memory_space<vmem>>, %arg10: memref<1x!tpu.dma_semaphore, #tpu.memory_space<semaphore_mem>>, %arg11: memref<2x128xf32, #tpu.memory_space<vmem>>) attributes {dimension_semantics = [#tpu.dimension_semantics<arbitrary>, #tpu.dimension_semantics<arbitrary>], iteration_bounds = array<i64: 1, 1>, scalar_prefetch = 0 : i64, scratch_operands = 3 : i64, tpu.core_type = #tpu.core_type<tc>, window_params = [{}, {pipeline_mode = #tpu.pipeline_mode<synchronous>, transform_indices = @transform_1, window_bounds = array<i64: 256, 128>}, {pipeline_mode = #tpu.pipeline_mode<synchronous>, transform_indices = @transform_2, window_bounds = array<i64: 1, 128>}, {pipeline_mode = #tpu.pipeline_mode<synchronous>, transform_indices = @transform_3, window_bounds = array<i64: 1, 128>}, {pipeline_mode = #tpu.pipeline_mode<synchronous>, transform_indices = @transform_4, window_bounds = array<i64: 1, 128>}, {transform_indices = @transform_5, window_bounds = array<i64: 16, 1>}, {transform_indices = @transform_6, window_bounds = array<i64: 16, 128>}]} {
    %c16_i32 = arith.constant 16 : i32
    %0 = arith.muli %arg1, %c16_i32 : i32
    %1 = tpu.assume_multiple %0, 8 : i32
    %c0_i32 = arith.constant 0 : i32
    %c0_i32_0 = arith.constant 0 : i32
    %2 = tpu.memref_slice %arg2[%1, %c0_i32_0] : memref<24x64xbf16, #tpu.memory_space<any>> -> memref<24x64xbf16, #tpu.memory_space<any>>
    %3 = tpu.memref_slice %arg10[%c0_i32] : memref<1x!tpu.dma_semaphore, #tpu.memory_space<semaphore_mem>> -> memref<1x!tpu.dma_semaphore, #tpu.memory_space<semaphore_mem>>
    %4 = tpu.memref_squeeze %3 : memref<1x!tpu.dma_semaphore, #tpu.memory_space<semaphore_mem>> -> memref<!tpu.dma_semaphore, #tpu.memory_space<semaphore_mem>>
    tpu.enqueue_dma source(%2 : memref<24x64xbf16, #tpu.memory_space<any>>) target(%arg9 : memref<24x64xbf16, #tpu.memory_space<vmem>>) target_semaphore(%4 : memref<!tpu.dma_semaphore, #tpu.memory_space<semaphore_mem>>)
    %c0_i32_1 = arith.constant 0 : i32
    %c0_i32_2 = arith.constant 0 : i32
    %5 = tpu.memref_slice %arg2[%1, %c0_i32_2] : memref<24x64xbf16, #tpu.memory_space<any>> -> memref<24x64xbf16, #tpu.memory_space<any>>
    %6 = tpu.memref_slice %arg10[%c0_i32_1] : memref<1x!tpu.dma_semaphore, #tpu.memory_space<semaphore_mem>> -> memref<1x!tpu.dma_semaphore, #tpu.memory_space<semaphore_mem>>
    %7 = tpu.memref_squeeze %6 : memref<1x!tpu.dma_semaphore, #tpu.memory_space<semaphore_mem>> -> memref<!tpu.dma_semaphore, #tpu.memory_space<semaphore_mem>>
    tpu.wait_dma2 semaphore(%7 : memref<!tpu.dma_semaphore, #tpu.memory_space<semaphore_mem>>) src(%5 : memref<24x64xbf16, #tpu.memory_space<any>>) dst(%arg9 : memref<24x64xbf16, #tpu.memory_space<vmem>>)
    %c0 = arith.constant 0 : index
    %c0_3 = arith.constant 0 : index
    %8 = vector.load %arg9[%c0, %c0_3] : memref<24x64xbf16, #tpu.memory_space<vmem>>, vector<16x64xbf16>
    %c1 = arith.constant 1 : index
    %c0_4 = arith.constant 0 : index
    %9 = vector.load %arg9[%c1, %c0_4] : memref<24x64xbf16, #tpu.memory_space<vmem>>, vector<16x64xbf16>
    %c3 = arith.constant 3 : index
    %c0_5 = arith.constant 0 : index
    %10 = vector.load %arg9[%c3, %c0_5] : memref<24x64xbf16, #tpu.memory_space<vmem>>, vector<16x64xbf16>
    %c4 = arith.constant 4 : index
    %c0_6 = arith.constant 0 : index
    %11 = vector.load %arg9[%c4, %c0_6] : memref<24x64xbf16, #tpu.memory_space<vmem>>, vector<16x64xbf16>
    %12 = tpu.concatenate %8, %9, %10, %11 in 1 : vector<16x64xbf16>, vector<16x64xbf16>, vector<16x64xbf16>, vector<16x64xbf16> -> vector<16x256xbf16>
    %c0_7 = arith.constant 0 : index
    %c0_8 = arith.constant 0 : index
    %13 = vector.load %arg3[%c0_7, %c0_8] : memref<256x128xbf16, #tpu.memory_space<vmem>>, vector<256x128xbf16>
    %cst = arith.constant dense<0.000000e+00> : vector<16x128xf32>
    %14 = tpu.matmul %12, %13, %cst {dimension_numbers = #tpu.dot_dimension_numbers<[1], [0], [0], [1], [0, 0, 1, 1], [], []>} : vector<16x256xbf16>, vector<256x128xbf16>, vector<16x128xf32> -> vector<16x128xf32>
    %c0_9 = arith.constant 0 : index
    %c0_10 = arith.constant 0 : index
    %15 = vector.load %arg4[%c0_9, %c0_10] : memref<1x128xf32, #tpu.memory_space<vmem>>, vector<1x128xf32>
    %16 = vector.broadcast %15 : vector<1x128xf32> to vector<16x128xf32>
    %17 = arith.addf %14, %16 : vector<16x128xf32>
    %c0_11 = arith.constant 0 : index
    %c0_12 = arith.constant 0 : index
    %18 = vector.load %arg7[%c0_11, %c0_12] : memref<16x1xf32, #tpu.memory_space<vmem>>, vector<16x1xf32>
    %19 = vector.broadcast %18 : vector<16x1xf32> to vector<16x128xf32>
    %20 = arith.mulf %17, %19 : vector<16x128xf32>
    %cst_13 = arith.constant dense<0.000000e+00> : vector<128xf32>
    %21 = vector.multi_reduction <add>, %20, %cst_13 [0] : vector<16x128xf32> to vector<128xf32>
    %22 = vector.shape_cast %21 : vector<128xf32> to vector<1x128xf32>
    %23 = arith.mulf %20, %20 : vector<16x128xf32>
    %cst_14 = arith.constant dense<0.000000e+00> : vector<128xf32>
    %24 = vector.multi_reduction <add>, %23, %cst_14 [0] : vector<16x128xf32> to vector<128xf32>
    %25 = vector.shape_cast %24 : vector<128xf32> to vector<1x128xf32>
    %26 = vector.extract_strided_slice %22 {offsets = [0, 0], sizes = [1, 32], strides = [1, 1]} : vector<1x128xf32> to vector<1x32xf32>
    %27 = vector.extract_strided_slice %22 {offsets = [0, 32], sizes = [1, 32], strides = [1, 1]} : vector<1x128xf32> to vector<1x32xf32>
    %28 = arith.addf %26, %27 : vector<1x32xf32>
    %29 = vector.extract_strided_slice %22 {offsets = [0, 64], sizes = [1, 32], strides = [1, 1]} : vector<1x128xf32> to vector<1x32xf32>
    %30 = arith.addf %28, %29 : vector<1x32xf32>
    %31 = vector.extract_strided_slice %22 {offsets = [0, 96], sizes = [1, 32], strides = [1, 1]} : vector<1x128xf32> to vector<1x32xf32>
    %32 = arith.addf %30, %31 : vector<1x32xf32>
    %cst_15 = arith.constant 3.125000e-02 : f32
    %33 = vector.broadcast %cst_15 : f32 to vector<1x32xf32>
    %34 = arith.mulf %32, %33 : vector<1x32xf32>
    %35 = vector.extract_strided_slice %25 {offsets = [0, 0], sizes = [1, 32], strides = [1, 1]} : vector<1x128xf32> to vector<1x32xf32>
    %36 = vector.extract_strided_slice %25 {offsets = [0, 32], sizes = [1, 32], strides = [1, 1]} : vector<1x128xf32> to vector<1x32xf32>
    %37 = arith.addf %35, %36 : vector<1x32xf32>
    %38 = vector.extract_strided_slice %25 {offsets = [0, 64], sizes = [1, 32], strides = [1, 1]} : vector<1x128xf32> to vector<1x32xf32>
    %39 = arith.addf %37, %38 : vector<1x32xf32>
    %40 = vector.extract_strided_slice %25 {offsets = [0, 96], sizes = [1, 32], strides = [1, 1]} : vector<1x128xf32> to vector<1x32xf32>
    %41 = arith.addf %39, %40 : vector<1x32xf32>
    %cst_16 = arith.constant 3.125000e-02 : f32
    %42 = vector.broadcast %cst_16 : f32 to vector<1x32xf32>
    %43 = arith.mulf %41, %42 : vector<1x32xf32>
    %44 = arith.mulf %34, %34 : vector<1x32xf32>
    %45 = arith.subf %43, %44 : vector<1x32xf32>
    %cst_17 = arith.constant 0.000000e+00 : f32
    %46 = vector.broadcast %cst_17 : f32 to vector<1x32xf32>
    %47 = arith.maximumf %45, %46 : vector<1x32xf32>
    %cst_18 = arith.constant 9.99999974E-6 : f32
    %48 = vector.broadcast %cst_18 : f32 to vector<1x32xf32>
    %49 = arith.addf %47, %48 : vector<1x32xf32>
    %50 = math.rsqrt %49 : vector<1x32xf32>
    %51 = tpu.concatenate %34, %34, %34, %34 in 1 : vector<1x32xf32>, vector<1x32xf32>, vector<1x32xf32>, vector<1x32xf32> -> vector<1x128xf32>
    %52 = tpu.concatenate %50, %50, %50, %50 in 1 : vector<1x32xf32>, vector<1x32xf32>, vector<1x32xf32>, vector<1x32xf32> -> vector<1x128xf32>
    %c0_19 = arith.constant 0 : index
    %c0_20 = arith.constant 0 : index
    %53 = vector.load %arg5[%c0_19, %c0_20] : memref<1x128xf32, #tpu.memory_space<vmem>>, vector<1x128xf32>
    %54 = arith.mulf %52, %53 : vector<1x128xf32>
    %c0_21 = arith.constant 0 : index
    %c0_22 = arith.constant 0 : index
    %55 = vector.load %arg6[%c0_21, %c0_22] : memref<1x128xf32, #tpu.memory_space<vmem>>, vector<1x128xf32>
    %56 = arith.mulf %51, %54 : vector<1x128xf32>
    %57 = arith.subf %55, %56 : vector<1x128xf32>
    %58 = vector.broadcast %54 : vector<1x128xf32> to vector<16x128xf32>
    %59 = arith.mulf %17, %58 : vector<16x128xf32>
    %60 = vector.broadcast %57 : vector<1x128xf32> to vector<16x128xf32>
    %61 = arith.addf %59, %60 : vector<16x128xf32>
    %cst_23 = arith.constant 0.00999999977 : f32
    %62 = vector.broadcast %cst_23 : f32 to vector<16x128xf32>
    %63 = arith.mulf %62, %61 : vector<16x128xf32>
    %64 = arith.maximumf %61, %63 : vector<16x128xf32>
    %65 = arith.truncf %64 : vector<16x128xf32> to vector<16x128xbf16>
    %c0_24 = arith.constant 0 : index
    %c0_25 = arith.constant 0 : index
    %66 = vector.load %arg8[%c0_24, %c0_25] : memref<16x128xbf16, #tpu.memory_space<vmem>>, vector<16x128xbf16>
    tpu.vector_store %arg8[%c0_24, %c0_25], %65 {strides = array<i32>} : memref<16x128xbf16, #tpu.memory_space<vmem>>, vector<16x128xbf16>,
    return
  }
  func.func @transform_1(%arg0: i32, %arg1: i32) -> (i32, i32) {
    %c0_i32 = arith.constant 0 : i32
    %c0_i32_0 = arith.constant 0 : i32
    %c0_i32_1 = arith.constant 0 : i32
    return %c0_i32, %c0_i32_0 : i32, i32
  }
  func.func @transform_2(%arg0: i32, %arg1: i32) -> (i32, i32) {
    %c0_i32 = arith.constant 0 : i32
    %c0_i32_0 = arith.constant 0 : i32
    %c0_i32_1 = arith.constant 0 : i32
    return %c0_i32, %c0_i32_0 : i32, i32
  }
  func.func @transform_3(%arg0: i32, %arg1: i32) -> (i32, i32) {
    %c0_i32 = arith.constant 0 : i32
    %c0_i32_0 = arith.constant 0 : i32
    %c0_i32_1 = arith.constant 0 : i32
    return %c0_i32, %c0_i32_0 : i32, i32
  }
  func.func @transform_4(%arg0: i32, %arg1: i32) -> (i32, i32) {
    %c0_i32 = arith.constant 0 : i32
    %c0_i32_0 = arith.constant 0 : i32
    %c0_i32_1 = arith.constant 0 : i32
    return %c0_i32, %c0_i32_0 : i32, i32
  }
  func.func @transform_5(%arg0: i32, %arg1: i32) -> (i32, i32) {
    %c0_i32 = arith.constant 0 : i32
    %c0_i32_0 = arith.constant 0 : i32
    return %arg1, %c0_i32 : i32, i32
  }
  func.func @transform_6(%arg0: i32, %arg1: i32) -> (i32, i32) {
    %0 = arith.muli %arg0, %arg1 : i32
    %c0_i32 = arith.constant 0 : i32
    %c0_i32_0 = arith.constant 0 : i32
    return %0, %c0_i32 : i32, i32
  }
}

module attributes {stable_mosaic.version = 11 : i64} {
  func.func @_conv_bn_lrelu_kernel(%arg0: i32, %arg1: i32, %arg2: memref<56x32xbf16, #tpu.memory_space<any>>, %arg3: memref<128x128xbf16, #tpu.memory_space<vmem>>, %arg4: memref<1x128xf32, #tpu.memory_space<vmem>>, %arg5: memref<1x128xf32, #tpu.memory_space<vmem>>, %arg6: memref<1x128xf32, #tpu.memory_space<vmem>>, %arg7: memref<48x1xf32, #tpu.memory_space<vmem>>, %arg8: memref<48x128xbf16, #tpu.memory_space<vmem>>, %arg9: memref<56x32xbf16, #tpu.memory_space<vmem>>, %arg10: memref<1x!tpu.dma_semaphore, #tpu.memory_space<semaphore_mem>>, %arg11: memref<2x128xf32, #tpu.memory_space<vmem>>) attributes {dimension_semantics = [#tpu.dimension_semantics<arbitrary>, #tpu.dimension_semantics<arbitrary>], iteration_bounds = array<i64: 1, 1>, scalar_prefetch = 0 : i64, scratch_operands = 3 : i64, tpu.core_type = #tpu.core_type<tc>, window_params = [{}, {pipeline_mode = #tpu.pipeline_mode<synchronous>, transform_indices = @transform_1, window_bounds = array<i64: 128, 128>}, {pipeline_mode = #tpu.pipeline_mode<synchronous>, transform_indices = @transform_2, window_bounds = array<i64: 1, 128>}, {pipeline_mode = #tpu.pipeline_mode<synchronous>, transform_indices = @transform_3, window_bounds = array<i64: 1, 128>}, {pipeline_mode = #tpu.pipeline_mode<synchronous>, transform_indices = @transform_4, window_bounds = array<i64: 1, 128>}, {transform_indices = @transform_5, window_bounds = array<i64: 48, 1>}, {transform_indices = @transform_6, window_bounds = array<i64: 48, 128>}]} {
    %c48_i32 = arith.constant 48 : i32
    %0 = arith.muli %arg1, %c48_i32 : i32
    %1 = tpu.assume_multiple %0, 8 : i32
    %c0_i32 = arith.constant 0 : i32
    %c0_i32_0 = arith.constant 0 : i32
    %2 = tpu.memref_slice %arg2[%1, %c0_i32_0] : memref<56x32xbf16, #tpu.memory_space<any>> -> memref<56x32xbf16, #tpu.memory_space<any>>
    %3 = tpu.memref_slice %arg10[%c0_i32] : memref<1x!tpu.dma_semaphore, #tpu.memory_space<semaphore_mem>> -> memref<1x!tpu.dma_semaphore, #tpu.memory_space<semaphore_mem>>
    %4 = tpu.memref_squeeze %3 : memref<1x!tpu.dma_semaphore, #tpu.memory_space<semaphore_mem>> -> memref<!tpu.dma_semaphore, #tpu.memory_space<semaphore_mem>>
    tpu.enqueue_dma source(%2 : memref<56x32xbf16, #tpu.memory_space<any>>) target(%arg9 : memref<56x32xbf16, #tpu.memory_space<vmem>>) target_semaphore(%4 : memref<!tpu.dma_semaphore, #tpu.memory_space<semaphore_mem>>)
    %c0_i32_1 = arith.constant 0 : i32
    %c0_i32_2 = arith.constant 0 : i32
    %5 = tpu.memref_slice %arg2[%1, %c0_i32_2] : memref<56x32xbf16, #tpu.memory_space<any>> -> memref<56x32xbf16, #tpu.memory_space<any>>
    %6 = tpu.memref_slice %arg10[%c0_i32_1] : memref<1x!tpu.dma_semaphore, #tpu.memory_space<semaphore_mem>> -> memref<1x!tpu.dma_semaphore, #tpu.memory_space<semaphore_mem>>
    %7 = tpu.memref_squeeze %6 : memref<1x!tpu.dma_semaphore, #tpu.memory_space<semaphore_mem>> -> memref<!tpu.dma_semaphore, #tpu.memory_space<semaphore_mem>>
    tpu.wait_dma2 semaphore(%7 : memref<!tpu.dma_semaphore, #tpu.memory_space<semaphore_mem>>) src(%5 : memref<56x32xbf16, #tpu.memory_space<any>>) dst(%arg9 : memref<56x32xbf16, #tpu.memory_space<vmem>>)
    %c0 = arith.constant 0 : index
    %c0_3 = arith.constant 0 : index
    %8 = vector.load %arg9[%c0, %c0_3] : memref<56x32xbf16, #tpu.memory_space<vmem>>, vector<48x32xbf16>
    %c1 = arith.constant 1 : index
    %c0_4 = arith.constant 0 : index
    %9 = vector.load %arg9[%c1, %c0_4] : memref<56x32xbf16, #tpu.memory_space<vmem>>, vector<48x32xbf16>
    %c5 = arith.constant 5 : index
    %c0_5 = arith.constant 0 : index
    %10 = vector.load %arg9[%c5, %c0_5] : memref<56x32xbf16, #tpu.memory_space<vmem>>, vector<48x32xbf16>
    %c6 = arith.constant 6 : index
    %c0_6 = arith.constant 0 : index
    %11 = vector.load %arg9[%c6, %c0_6] : memref<56x32xbf16, #tpu.memory_space<vmem>>, vector<48x32xbf16>
    %12 = tpu.concatenate %8, %9, %10, %11 in 1 : vector<48x32xbf16>, vector<48x32xbf16>, vector<48x32xbf16>, vector<48x32xbf16> -> vector<48x128xbf16>
    %c0_7 = arith.constant 0 : index
    %c0_8 = arith.constant 0 : index
    %13 = vector.load %arg3[%c0_7, %c0_8] : memref<128x128xbf16, #tpu.memory_space<vmem>>, vector<128x128xbf16>
    %cst = arith.constant dense<0.000000e+00> : vector<48x128xf32>
    %14 = tpu.matmul %12, %13, %cst {dimension_numbers = #tpu.dot_dimension_numbers<[1], [0], [0], [1], [0, 0, 1, 1], [], []>} : vector<48x128xbf16>, vector<128x128xbf16>, vector<48x128xf32> -> vector<48x128xf32>
    %c0_9 = arith.constant 0 : index
    %c0_10 = arith.constant 0 : index
    %15 = vector.load %arg4[%c0_9, %c0_10] : memref<1x128xf32, #tpu.memory_space<vmem>>, vector<1x128xf32>
    %16 = vector.broadcast %15 : vector<1x128xf32> to vector<48x128xf32>
    %17 = arith.addf %14, %16 : vector<48x128xf32>
    %c0_11 = arith.constant 0 : index
    %c0_12 = arith.constant 0 : index
    %18 = vector.load %arg7[%c0_11, %c0_12] : memref<48x1xf32, #tpu.memory_space<vmem>>, vector<48x1xf32>
    %19 = vector.broadcast %18 : vector<48x1xf32> to vector<48x128xf32>
    %20 = arith.mulf %17, %19 : vector<48x128xf32>
    %cst_13 = arith.constant dense<0.000000e+00> : vector<128xf32>
    %21 = vector.multi_reduction <add>, %20, %cst_13 [0] : vector<48x128xf32> to vector<128xf32>
    %22 = vector.shape_cast %21 : vector<128xf32> to vector<1x128xf32>
    %23 = arith.mulf %20, %20 : vector<48x128xf32>
    %cst_14 = arith.constant dense<0.000000e+00> : vector<128xf32>
    %24 = vector.multi_reduction <add>, %23, %cst_14 [0] : vector<48x128xf32> to vector<128xf32>
    %25 = vector.shape_cast %24 : vector<128xf32> to vector<1x128xf32>
    %26 = vector.extract_strided_slice %22 {offsets = [0, 0], sizes = [1, 32], strides = [1, 1]} : vector<1x128xf32> to vector<1x32xf32>
    %27 = vector.extract_strided_slice %22 {offsets = [0, 32], sizes = [1, 32], strides = [1, 1]} : vector<1x128xf32> to vector<1x32xf32>
    %28 = arith.addf %26, %27 : vector<1x32xf32>
    %29 = vector.extract_strided_slice %22 {offsets = [0, 64], sizes = [1, 32], strides = [1, 1]} : vector<1x128xf32> to vector<1x32xf32>
    %30 = arith.addf %28, %29 : vector<1x32xf32>
    %31 = vector.extract_strided_slice %22 {offsets = [0, 96], sizes = [1, 32], strides = [1, 1]} : vector<1x128xf32> to vector<1x32xf32>
    %32 = arith.addf %30, %31 : vector<1x32xf32>
    %cst_15 = arith.constant 7.812500e-03 : f32
    %33 = vector.broadcast %cst_15 : f32 to vector<1x32xf32>
    %34 = arith.mulf %32, %33 : vector<1x32xf32>
    %35 = vector.extract_strided_slice %25 {offsets = [0, 0], sizes = [1, 32], strides = [1, 1]} : vector<1x128xf32> to vector<1x32xf32>
    %36 = vector.extract_strided_slice %25 {offsets = [0, 32], sizes = [1, 32], strides = [1, 1]} : vector<1x128xf32> to vector<1x32xf32>
    %37 = arith.addf %35, %36 : vector<1x32xf32>
    %38 = vector.extract_strided_slice %25 {offsets = [0, 64], sizes = [1, 32], strides = [1, 1]} : vector<1x128xf32> to vector<1x32xf32>
    %39 = arith.addf %37, %38 : vector<1x32xf32>
    %40 = vector.extract_strided_slice %25 {offsets = [0, 96], sizes = [1, 32], strides = [1, 1]} : vector<1x128xf32> to vector<1x32xf32>
    %41 = arith.addf %39, %40 : vector<1x32xf32>
    %cst_16 = arith.constant 7.812500e-03 : f32
    %42 = vector.broadcast %cst_16 : f32 to vector<1x32xf32>
    %43 = arith.mulf %41, %42 : vector<1x32xf32>
    %44 = arith.mulf %34, %34 : vector<1x32xf32>
    %45 = arith.subf %43, %44 : vector<1x32xf32>
    %cst_17 = arith.constant 0.000000e+00 : f32
    %46 = vector.broadcast %cst_17 : f32 to vector<1x32xf32>
    %47 = arith.maximumf %45, %46 : vector<1x32xf32>
    %cst_18 = arith.constant 9.99999974E-6 : f32
    %48 = vector.broadcast %cst_18 : f32 to vector<1x32xf32>
    %49 = arith.addf %47, %48 : vector<1x32xf32>
    %50 = math.rsqrt %49 : vector<1x32xf32>
    %51 = tpu.concatenate %34, %34, %34, %34 in 1 : vector<1x32xf32>, vector<1x32xf32>, vector<1x32xf32>, vector<1x32xf32> -> vector<1x128xf32>
    %52 = tpu.concatenate %50, %50, %50, %50 in 1 : vector<1x32xf32>, vector<1x32xf32>, vector<1x32xf32>, vector<1x32xf32> -> vector<1x128xf32>
    %c0_19 = arith.constant 0 : index
    %c0_20 = arith.constant 0 : index
    %53 = vector.load %arg5[%c0_19, %c0_20] : memref<1x128xf32, #tpu.memory_space<vmem>>, vector<1x128xf32>
    %54 = arith.mulf %52, %53 : vector<1x128xf32>
    %c0_21 = arith.constant 0 : index
    %c0_22 = arith.constant 0 : index
    %55 = vector.load %arg6[%c0_21, %c0_22] : memref<1x128xf32, #tpu.memory_space<vmem>>, vector<1x128xf32>
    %56 = arith.mulf %51, %54 : vector<1x128xf32>
    %57 = arith.subf %55, %56 : vector<1x128xf32>
    %58 = vector.broadcast %54 : vector<1x128xf32> to vector<48x128xf32>
    %59 = arith.mulf %17, %58 : vector<48x128xf32>
    %60 = vector.broadcast %57 : vector<1x128xf32> to vector<48x128xf32>
    %61 = arith.addf %59, %60 : vector<48x128xf32>
    %cst_23 = arith.constant 0.00999999977 : f32
    %62 = vector.broadcast %cst_23 : f32 to vector<48x128xf32>
    %63 = arith.mulf %62, %61 : vector<48x128xf32>
    %64 = arith.maximumf %61, %63 : vector<48x128xf32>
    %65 = arith.truncf %64 : vector<48x128xf32> to vector<48x128xbf16>
    %c0_24 = arith.constant 0 : index
    %c0_25 = arith.constant 0 : index
    %66 = vector.load %arg8[%c0_24, %c0_25] : memref<48x128xbf16, #tpu.memory_space<vmem>>, vector<48x128xbf16>
    tpu.vector_store %arg8[%c0_24, %c0_25], %65 {strides = array<i32>} : memref<48x128xbf16, #tpu.memory_space<vmem>>, vector<48x128xbf16>,
    return
  }
  func.func @transform_1(%arg0: i32, %arg1: i32) -> (i32, i32) {
    %c0_i32 = arith.constant 0 : i32
    %c0_i32_0 = arith.constant 0 : i32
    %c0_i32_1 = arith.constant 0 : i32
    return %c0_i32, %c0_i32_0 : i32, i32
  }
  func.func @transform_2(%arg0: i32, %arg1: i32) -> (i32, i32) {
    %c0_i32 = arith.constant 0 : i32
    %c0_i32_0 = arith.constant 0 : i32
    %c0_i32_1 = arith.constant 0 : i32
    return %c0_i32, %c0_i32_0 : i32, i32
  }
  func.func @transform_3(%arg0: i32, %arg1: i32) -> (i32, i32) {
    %c0_i32 = arith.constant 0 : i32
    %c0_i32_0 = arith.constant 0 : i32
    %c0_i32_1 = arith.constant 0 : i32
    return %c0_i32, %c0_i32_0 : i32, i32
  }
  func.func @transform_4(%arg0: i32, %arg1: i32) -> (i32, i32) {
    %c0_i32 = arith.constant 0 : i32
    %c0_i32_0 = arith.constant 0 : i32
    %c0_i32_1 = arith.constant 0 : i32
    return %c0_i32, %c0_i32_0 : i32, i32
  }
  func.func @transform_5(%arg0: i32, %arg1: i32) -> (i32, i32) {
    %c0_i32 = arith.constant 0 : i32
    %c0_i32_0 = arith.constant 0 : i32
    return %arg1, %c0_i32 : i32, i32
  }
  func.func @transform_6(%arg0: i32, %arg1: i32) -> (i32, i32) {
    %0 = arith.muli %arg0, %arg1 : i32
    %c0_i32 = arith.constant 0 : i32
    %c0_i32_0 = arith.constant 0 : i32
    return %0, %c0_i32 : i32, i32
  }
}

module attributes {stable_mosaic.version = 11 : i64} {
  func.func @_conv_bn_lrelu_kernel(%arg0: i32, %arg1: i32, %arg2: memref<168x16xbf16, #tpu.memory_space<any>>, %arg3: memref<64x128xbf16, #tpu.memory_space<vmem>>, %arg4: memref<1x128xf32, #tpu.memory_space<vmem>>, %arg5: memref<1x128xf32, #tpu.memory_space<vmem>>, %arg6: memref<1x128xf32, #tpu.memory_space<vmem>>, %arg7: memref<152x1xf32, #tpu.memory_space<vmem>>, %arg8: memref<152x128xbf16, #tpu.memory_space<vmem>>, %arg9: memref<168x16xbf16, #tpu.memory_space<vmem>>, %arg10: memref<1x!tpu.dma_semaphore, #tpu.memory_space<semaphore_mem>>, %arg11: memref<2x128xf32, #tpu.memory_space<vmem>>) attributes {dimension_semantics = [#tpu.dimension_semantics<arbitrary>, #tpu.dimension_semantics<arbitrary>], iteration_bounds = array<i64: 1, 1>, scalar_prefetch = 0 : i64, scratch_operands = 3 : i64, tpu.core_type = #tpu.core_type<tc>, window_params = [{}, {pipeline_mode = #tpu.pipeline_mode<synchronous>, transform_indices = @transform_1, window_bounds = array<i64: 64, 128>}, {pipeline_mode = #tpu.pipeline_mode<synchronous>, transform_indices = @transform_2, window_bounds = array<i64: 1, 128>}, {pipeline_mode = #tpu.pipeline_mode<synchronous>, transform_indices = @transform_3, window_bounds = array<i64: 1, 128>}, {pipeline_mode = #tpu.pipeline_mode<synchronous>, transform_indices = @transform_4, window_bounds = array<i64: 1, 128>}, {transform_indices = @transform_5, window_bounds = array<i64: 152, 1>}, {transform_indices = @transform_6, window_bounds = array<i64: 152, 128>}]} {
    %c152_i32 = arith.constant 152 : i32
    %0 = arith.muli %arg1, %c152_i32 : i32
    %1 = tpu.assume_multiple %0, 8 : i32
    %c0_i32 = arith.constant 0 : i32
    %c0_i32_0 = arith.constant 0 : i32
    %2 = tpu.memref_slice %arg2[%1, %c0_i32_0] : memref<168x16xbf16, #tpu.memory_space<any>> -> memref<168x16xbf16, #tpu.memory_space<any>>
    %3 = tpu.memref_slice %arg10[%c0_i32] : memref<1x!tpu.dma_semaphore, #tpu.memory_space<semaphore_mem>> -> memref<1x!tpu.dma_semaphore, #tpu.memory_space<semaphore_mem>>
    %4 = tpu.memref_squeeze %3 : memref<1x!tpu.dma_semaphore, #tpu.memory_space<semaphore_mem>> -> memref<!tpu.dma_semaphore, #tpu.memory_space<semaphore_mem>>
    tpu.enqueue_dma source(%2 : memref<168x16xbf16, #tpu.memory_space<any>>) target(%arg9 : memref<168x16xbf16, #tpu.memory_space<vmem>>) target_semaphore(%4 : memref<!tpu.dma_semaphore, #tpu.memory_space<semaphore_mem>>)
    %c0_i32_1 = arith.constant 0 : i32
    %c0_i32_2 = arith.constant 0 : i32
    %5 = tpu.memref_slice %arg2[%1, %c0_i32_2] : memref<168x16xbf16, #tpu.memory_space<any>> -> memref<168x16xbf16, #tpu.memory_space<any>>
    %6 = tpu.memref_slice %arg10[%c0_i32_1] : memref<1x!tpu.dma_semaphore, #tpu.memory_space<semaphore_mem>> -> memref<1x!tpu.dma_semaphore, #tpu.memory_space<semaphore_mem>>
    %7 = tpu.memref_squeeze %6 : memref<1x!tpu.dma_semaphore, #tpu.memory_space<semaphore_mem>> -> memref<!tpu.dma_semaphore, #tpu.memory_space<semaphore_mem>>
    tpu.wait_dma2 semaphore(%7 : memref<!tpu.dma_semaphore, #tpu.memory_space<semaphore_mem>>) src(%5 : memref<168x16xbf16, #tpu.memory_space<any>>) dst(%arg9 : memref<168x16xbf16, #tpu.memory_space<vmem>>)
    %c0 = arith.constant 0 : index
    %c0_3 = arith.constant 0 : index
    %8 = vector.load %arg9[%c0, %c0_3] : memref<168x16xbf16, #tpu.memory_space<vmem>>, vector<152x16xbf16>
    %c1 = arith.constant 1 : index
    %c0_4 = arith.constant 0 : index
    %9 = vector.load %arg9[%c1, %c0_4] : memref<168x16xbf16, #tpu.memory_space<vmem>>, vector<152x16xbf16>
    %c9 = arith.constant 9 : index
    %c0_5 = arith.constant 0 : index
    %10 = vector.load %arg9[%c9, %c0_5] : memref<168x16xbf16, #tpu.memory_space<vmem>>, vector<152x16xbf16>
    %c10 = arith.constant 10 : index
    %c0_6 = arith.constant 0 : index
    %11 = vector.load %arg9[%c10, %c0_6] : memref<168x16xbf16, #tpu.memory_space<vmem>>, vector<152x16xbf16>
    %12 = tpu.concatenate %8, %9, %10, %11 in 1 : vector<152x16xbf16>, vector<152x16xbf16>, vector<152x16xbf16>, vector<152x16xbf16> -> vector<152x64xbf16>
    %c0_7 = arith.constant 0 : index
    %c0_8 = arith.constant 0 : index
    %13 = vector.load %arg3[%c0_7, %c0_8] : memref<64x128xbf16, #tpu.memory_space<vmem>>, vector<64x128xbf16>
    %cst = arith.constant dense<0.000000e+00> : vector<152x128xf32>
    %14 = tpu.matmul %12, %13, %cst {dimension_numbers = #tpu.dot_dimension_numbers<[1], [0], [0], [1], [0, 0, 1, 1], [], []>} : vector<152x64xbf16>, vector<64x128xbf16>, vector<152x128xf32> -> vector<152x128xf32>
    %c0_9 = arith.constant 0 : index
    %c0_10 = arith.constant 0 : index
    %15 = vector.load %arg4[%c0_9, %c0_10] : memref<1x128xf32, #tpu.memory_space<vmem>>, vector<1x128xf32>
    %16 = vector.broadcast %15 : vector<1x128xf32> to vector<152x128xf32>
    %17 = arith.addf %14, %16 : vector<152x128xf32>
    %c0_11 = arith.constant 0 : index
    %c0_12 = arith.constant 0 : index
    %18 = vector.load %arg7[%c0_11, %c0_12] : memref<152x1xf32, #tpu.memory_space<vmem>>, vector<152x1xf32>
    %19 = vector.broadcast %18 : vector<152x1xf32> to vector<152x128xf32>
    %20 = arith.mulf %17, %19 : vector<152x128xf32>
    %cst_13 = arith.constant dense<0.000000e+00> : vector<128xf32>
    %21 = vector.multi_reduction <add>, %20, %cst_13 [0] : vector<152x128xf32> to vector<128xf32>
    %22 = vector.shape_cast %21 : vector<128xf32> to vector<1x128xf32>
    %23 = arith.mulf %20, %20 : vector<152x128xf32>
    %cst_14 = arith.constant dense<0.000000e+00> : vector<128xf32>
    %24 = vector.multi_reduction <add>, %23, %cst_14 [0] : vector<152x128xf32> to vector<128xf32>
    %25 = vector.shape_cast %24 : vector<128xf32> to vector<1x128xf32>
    %26 = vector.extract_strided_slice %22 {offsets = [0, 0], sizes = [1, 32], strides = [1, 1]} : vector<1x128xf32> to vector<1x32xf32>
    %27 = vector.extract_strided_slice %22 {offsets = [0, 32], sizes = [1, 32], strides = [1, 1]} : vector<1x128xf32> to vector<1x32xf32>
    %28 = arith.addf %26, %27 : vector<1x32xf32>
    %29 = vector.extract_strided_slice %22 {offsets = [0, 64], sizes = [1, 32], strides = [1, 1]} : vector<1x128xf32> to vector<1x32xf32>
    %30 = arith.addf %28, %29 : vector<1x32xf32>
    %31 = vector.extract_strided_slice %22 {offsets = [0, 96], sizes = [1, 32], strides = [1, 1]} : vector<1x128xf32> to vector<1x32xf32>
    %32 = arith.addf %30, %31 : vector<1x32xf32>
    %cst_15 = arith.constant 0.001953125 : f32
    %33 = vector.broadcast %cst_15 : f32 to vector<1x32xf32>
    %34 = arith.mulf %32, %33 : vector<1x32xf32>
    %35 = vector.extract_strided_slice %25 {offsets = [0, 0], sizes = [1, 32], strides = [1, 1]} : vector<1x128xf32> to vector<1x32xf32>
    %36 = vector.extract_strided_slice %25 {offsets = [0, 32], sizes = [1, 32], strides = [1, 1]} : vector<1x128xf32> to vector<1x32xf32>
    %37 = arith.addf %35, %36 : vector<1x32xf32>
    %38 = vector.extract_strided_slice %25 {offsets = [0, 64], sizes = [1, 32], strides = [1, 1]} : vector<1x128xf32> to vector<1x32xf32>
    %39 = arith.addf %37, %38 : vector<1x32xf32>
    %40 = vector.extract_strided_slice %25 {offsets = [0, 96], sizes = [1, 32], strides = [1, 1]} : vector<1x128xf32> to vector<1x32xf32>
    %41 = arith.addf %39, %40 : vector<1x32xf32>
    %cst_16 = arith.constant 0.001953125 : f32
    %42 = vector.broadcast %cst_16 : f32 to vector<1x32xf32>
    %43 = arith.mulf %41, %42 : vector<1x32xf32>
    %44 = arith.mulf %34, %34 : vector<1x32xf32>
    %45 = arith.subf %43, %44 : vector<1x32xf32>
    %cst_17 = arith.constant 0.000000e+00 : f32
    %46 = vector.broadcast %cst_17 : f32 to vector<1x32xf32>
    %47 = arith.maximumf %45, %46 : vector<1x32xf32>
    %cst_18 = arith.constant 9.99999974E-6 : f32
    %48 = vector.broadcast %cst_18 : f32 to vector<1x32xf32>
    %49 = arith.addf %47, %48 : vector<1x32xf32>
    %50 = math.rsqrt %49 : vector<1x32xf32>
    %51 = tpu.concatenate %34, %34, %34, %34 in 1 : vector<1x32xf32>, vector<1x32xf32>, vector<1x32xf32>, vector<1x32xf32> -> vector<1x128xf32>
    %52 = tpu.concatenate %50, %50, %50, %50 in 1 : vector<1x32xf32>, vector<1x32xf32>, vector<1x32xf32>, vector<1x32xf32> -> vector<1x128xf32>
    %c0_19 = arith.constant 0 : index
    %c0_20 = arith.constant 0 : index
    %53 = vector.load %arg5[%c0_19, %c0_20] : memref<1x128xf32, #tpu.memory_space<vmem>>, vector<1x128xf32>
    %54 = arith.mulf %52, %53 : vector<1x128xf32>
    %c0_21 = arith.constant 0 : index
    %c0_22 = arith.constant 0 : index
    %55 = vector.load %arg6[%c0_21, %c0_22] : memref<1x128xf32, #tpu.memory_space<vmem>>, vector<1x128xf32>
    %56 = arith.mulf %51, %54 : vector<1x128xf32>
    %57 = arith.subf %55, %56 : vector<1x128xf32>
    %58 = vector.broadcast %54 : vector<1x128xf32> to vector<152x128xf32>
    %59 = arith.mulf %17, %58 : vector<152x128xf32>
    %60 = vector.broadcast %57 : vector<1x128xf32> to vector<152x128xf32>
    %61 = arith.addf %59, %60 : vector<152x128xf32>
    %cst_23 = arith.constant 0.00999999977 : f32
    %62 = vector.broadcast %cst_23 : f32 to vector<152x128xf32>
    %63 = arith.mulf %62, %61 : vector<152x128xf32>
    %64 = arith.maximumf %61, %63 : vector<152x128xf32>
    %65 = arith.truncf %64 : vector<152x128xf32> to vector<152x128xbf16>
    %c0_24 = arith.constant 0 : index
    %c0_25 = arith.constant 0 : index
    %66 = vector.load %arg8[%c0_24, %c0_25] : memref<152x128xbf16, #tpu.memory_space<vmem>>, vector<152x128xbf16>
    tpu.vector_store %arg8[%c0_24, %c0_25], %65 {strides = array<i32>} : memref<152x128xbf16, #tpu.memory_space<vmem>>, vector<152x128xbf16>,
    return
  }
  func.func @transform_1(%arg0: i32, %arg1: i32) -> (i32, i32) {
    %c0_i32 = arith.constant 0 : i32
    %c0_i32_0 = arith.constant 0 : i32
    %c0_i32_1 = arith.constant 0 : i32
    return %c0_i32, %c0_i32_0 : i32, i32
  }
  func.func @transform_2(%arg0: i32, %arg1: i32) -> (i32, i32) {
    %c0_i32 = arith.constant 0 : i32
    %c0_i32_0 = arith.constant 0 : i32
    %c0_i32_1 = arith.constant 0 : i32
    return %c0_i32, %c0_i32_0 : i32, i32
  }
  func.func @transform_3(%arg0: i32, %arg1: i32) -> (i32, i32) {
    %c0_i32 = arith.constant 0 : i32
    %c0_i32_0 = arith.constant 0 : i32
    %c0_i32_1 = arith.constant 0 : i32
    return %c0_i32, %c0_i32_0 : i32, i32
  }
  func.func @transform_4(%arg0: i32, %arg1: i32) -> (i32, i32) {
    %c0_i32 = arith.constant 0 : i32
    %c0_i32_0 = arith.constant 0 : i32
    %c0_i32_1 = arith.constant 0 : i32
    return %c0_i32, %c0_i32_0 : i32, i32
  }
  func.func @transform_5(%arg0: i32, %arg1: i32) -> (i32, i32) {
    %c0_i32 = arith.constant 0 : i32
    %c0_i32_0 = arith.constant 0 : i32
    return %arg1, %c0_i32 : i32, i32
  }
  func.func @transform_6(%arg0: i32, %arg1: i32) -> (i32, i32) {
    %0 = arith.muli %arg0, %arg1 : i32
    %c0_i32 = arith.constant 0 : i32
    %c0_i32_0 = arith.constant 0 : i32
    return %0, %c0_i32 : i32, i32
  }
}

module attributes {stable_mosaic.version = 11 : i64} {
  func.func @_conv_bn_lrelu_kernel(%arg0: i32, %arg1: i32, %arg2: memref<584x8xbf16, #tpu.memory_space<any>>, %arg3: memref<32x128xbf16, #tpu.memory_space<vmem>>, %arg4: memref<1x128xf32, #tpu.memory_space<vmem>>, %arg5: memref<1x128xf32, #tpu.memory_space<vmem>>, %arg6: memref<1x128xf32, #tpu.memory_space<vmem>>, %arg7: memref<280x1xf32, #tpu.memory_space<vmem>>, %arg8: memref<280x128xbf16, #tpu.memory_space<vmem>>, %arg9: memref<304x8xbf16, #tpu.memory_space<vmem>>, %arg10: memref<1x!tpu.dma_semaphore, #tpu.memory_space<semaphore_mem>>, %arg11: memref<2x128xf32, #tpu.memory_space<vmem>>) attributes {dimension_semantics = [#tpu.dimension_semantics<arbitrary>, #tpu.dimension_semantics<arbitrary>], iteration_bounds = array<i64: 2, 2>, scalar_prefetch = 0 : i64, scratch_operands = 3 : i64, tpu.core_type = #tpu.core_type<tc>, window_params = [{}, {pipeline_mode = #tpu.pipeline_mode<synchronous>, transform_indices = @transform_1, window_bounds = array<i64: 32, 128>}, {pipeline_mode = #tpu.pipeline_mode<synchronous>, transform_indices = @transform_2, window_bounds = array<i64: 1, 128>}, {pipeline_mode = #tpu.pipeline_mode<synchronous>, transform_indices = @transform_3, window_bounds = array<i64: 1, 128>}, {pipeline_mode = #tpu.pipeline_mode<synchronous>, transform_indices = @transform_4, window_bounds = array<i64: 1, 128>}, {transform_indices = @transform_5, window_bounds = array<i64: 280, 1>}, {transform_indices = @transform_6, window_bounds = array<i64: 280, 128>}]} {
    %c280_i32 = arith.constant 280 : i32
    %0 = arith.muli %arg1, %c280_i32 : i32
    %1 = tpu.assume_multiple %0, 8 : i32
    %c0_i32 = arith.constant 0 : i32
    %c0_i32_0 = arith.constant 0 : i32
    %2 = tpu.memref_slice %arg2[%1, %c0_i32_0] : memref<584x8xbf16, #tpu.memory_space<any>> -> memref<304x8xbf16, #tpu.memory_space<any>>
    %3 = tpu.memref_slice %arg10[%c0_i32] : memref<1x!tpu.dma_semaphore, #tpu.memory_space<semaphore_mem>> -> memref<1x!tpu.dma_semaphore, #tpu.memory_space<semaphore_mem>>
    %4 = tpu.memref_squeeze %3 : memref<1x!tpu.dma_semaphore, #tpu.memory_space<semaphore_mem>> -> memref<!tpu.dma_semaphore, #tpu.memory_space<semaphore_mem>>
    tpu.enqueue_dma source(%2 : memref<304x8xbf16, #tpu.memory_space<any>>) target(%arg9 : memref<304x8xbf16, #tpu.memory_space<vmem>>) target_semaphore(%4 : memref<!tpu.dma_semaphore, #tpu.memory_space<semaphore_mem>>)
    %c0_i32_1 = arith.constant 0 : i32
    %c0_i32_2 = arith.constant 0 : i32
    %5 = tpu.memref_slice %arg2[%1, %c0_i32_2] : memref<584x8xbf16, #tpu.memory_space<any>> -> memref<304x8xbf16, #tpu.memory_space<any>>
    %6 = tpu.memref_slice %arg10[%c0_i32_1] : memref<1x!tpu.dma_semaphore, #tpu.memory_space<semaphore_mem>> -> memref<1x!tpu.dma_semaphore, #tpu.memory_space<semaphore_mem>>
    %7 = tpu.memref_squeeze %6 : memref<1x!tpu.dma_semaphore, #tpu.memory_space<semaphore_mem>> -> memref<!tpu.dma_semaphore, #tpu.memory_space<semaphore_mem>>
    tpu.wait_dma2 semaphore(%7 : memref<!tpu.dma_semaphore, #tpu.memory_space<semaphore_mem>>) src(%5 : memref<304x8xbf16, #tpu.memory_space<any>>) dst(%arg9 : memref<304x8xbf16, #tpu.memory_space<vmem>>)
    %c0 = arith.constant 0 : index
    %c0_3 = arith.constant 0 : index
    %8 = vector.load %arg9[%c0, %c0_3] : memref<304x8xbf16, #tpu.memory_space<vmem>>, vector<280x8xbf16>
    %c1 = arith.constant 1 : index
    %c0_4 = arith.constant 0 : index
    %9 = vector.load %arg9[%c1, %c0_4] : memref<304x8xbf16, #tpu.memory_space<vmem>>, vector<280x8xbf16>
    %c17 = arith.constant 17 : index
    %c0_5 = arith.constant 0 : index
    %10 = vector.load %arg9[%c17, %c0_5] : memref<304x8xbf16, #tpu.memory_space<vmem>>, vector<280x8xbf16>
    %c18 = arith.constant 18 : index
    %c0_6 = arith.constant 0 : index
    %11 = vector.load %arg9[%c18, %c0_6] : memref<304x8xbf16, #tpu.memory_space<vmem>>, vector<280x8xbf16>
    %12 = tpu.concatenate %8, %9, %10, %11 in 1 : vector<280x8xbf16>, vector<280x8xbf16>, vector<280x8xbf16>, vector<280x8xbf16> -> vector<280x32xbf16>
    %c0_7 = arith.constant 0 : index
    %c0_8 = arith.constant 0 : index
    %13 = vector.load %arg3[%c0_7, %c0_8] : memref<32x128xbf16, #tpu.memory_space<vmem>>, vector<32x128xbf16>
    %cst = arith.constant dense<0.000000e+00> : vector<280x128xf32>
    %14 = tpu.matmul %12, %13, %cst {dimension_numbers = #tpu.dot_dimension_numbers<[1], [0], [0], [1], [0, 0, 1, 1], [], []>} : vector<280x32xbf16>, vector<32x128xbf16>, vector<280x128xf32> -> vector<280x128xf32>
    %c0_9 = arith.constant 0 : index
    %c0_10 = arith.constant 0 : index
    %15 = vector.load %arg4[%c0_9, %c0_10] : memref<1x128xf32, #tpu.memory_space<vmem>>, vector<1x128xf32>
    %16 = vector.broadcast %15 : vector<1x128xf32> to vector<280x128xf32>
    %17 = arith.addf %14, %16 : vector<280x128xf32>
    %c0_i32_11 = arith.constant 0 : i32
    %18 = arith.cmpi eq, %arg0, %c0_i32_11 : i32
    %19 = arith.extui %18 : i1 to i32
    %c0_i32_12 = arith.constant 0 : i32
    %20 = arith.cmpi ne, %19, %c0_i32_12 : i32
    scf.if %20 {
      %c0_i32_14 = arith.constant 0 : i32
      %24 = arith.cmpi eq, %arg1, %c0_i32_14 : i32
      %25 = arith.extui %24 : i1 to i32
      %c0_i32_15 = arith.constant 0 : i32
      %26 = arith.cmpi ne, %25, %c0_i32_15 : i32
      scf.if %26 {
        %cst_28 = arith.constant 0.000000e+00 : f32
        %41 = vector.broadcast %cst_28 : f32 to vector<2x128xf32>
        %c0_29 = arith.constant 0 : index
        %c0_30 = arith.constant 0 : index
        %42 = vector.load %arg11[%c0_29, %c0_30] : memref<2x128xf32, #tpu.memory_space<vmem>>, vector<2x128xf32>
        tpu.vector_store %arg11[%c0_29, %c0_30], %41 {strides = array<i32>} : memref<2x128xf32, #tpu.memory_space<vmem>>, vector<2x128xf32>,
      } else {
      }
      %c0_16 = arith.constant 0 : index
      %c0_17 = arith.constant 0 : index
      %27 = vector.load %arg7[%c0_16, %c0_17] : memref<280x1xf32, #tpu.memory_space<vmem>>, vector<280x1xf32>
      %28 = vector.broadcast %27 : vector<280x1xf32> to vector<280x128xf32>
      %29 = arith.mulf %17, %28 : vector<280x128xf32>
      %cst_18 = arith.constant dense<0.000000e+00> : vector<128xf32>
      %30 = vector.multi_reduction <add>, %29, %cst_18 [0] : vector<280x128xf32> to vector<128xf32>
      %31 = vector.shape_cast %30 : vector<128xf32> to vector<1x128xf32>
      %32 = arith.mulf %29, %29 : vector<280x128xf32>
      %cst_19 = arith.constant dense<0.000000e+00> : vector<128xf32>
      %33 = vector.multi_reduction <add>, %32, %cst_19 [0] : vector<280x128xf32> to vector<128xf32>
      %34 = vector.shape_cast %33 : vector<128xf32> to vector<1x128xf32>
      %c0_20 = arith.constant 0 : index
      %c0_21 = arith.constant 0 : index
      %35 = vector.load %arg11[%c0_20, %c0_21] : memref<2x128xf32, #tpu.memory_space<vmem>>, vector<1x128xf32>
      %36 = arith.addf %35, %31 : vector<1x128xf32>
      %c0_22 = arith.constant 0 : index
      %c0_23 = arith.constant 0 : index
      %37 = vector.load %arg11[%c0_22, %c0_23] : memref<2x128xf32, #tpu.memory_space<vmem>>, vector<1x128xf32>
      tpu.vector_store %arg11[%c0_22, %c0_23], %36 {strides = array<i32>} : memref<2x128xf32, #tpu.memory_space<vmem>>, vector<1x128xf32>,
      %c1_24 = arith.constant 1 : index
      %c0_25 = arith.constant 0 : index
      %38 = vector.load %arg11[%c1_24, %c0_25] : memref<2x128xf32, #tpu.memory_space<vmem>>, vector<1x128xf32>
      %39 = arith.addf %38, %34 : vector<1x128xf32>
      %c1_26 = arith.constant 1 : index
      %c0_27 = arith.constant 0 : index
      %40 = vector.load %arg11[%c1_26, %c0_27] : memref<2x128xf32, #tpu.memory_space<vmem>>, vector<1x128xf32>
      tpu.vector_store %arg11[%c1_26, %c0_27], %39 {strides = array<i32>} : memref<2x128xf32, #tpu.memory_space<vmem>>, vector<1x128xf32>,
    } else {
    }
    %c1_i32 = arith.constant 1 : i32
    %21 = arith.cmpi eq, %arg0, %c1_i32 : i32
    %22 = arith.extui %21 : i1 to i32
    %c0_i32_13 = arith.constant 0 : i32
    %23 = arith.cmpi ne, %22, %c0_i32_13 : i32
    scf.if %23 {
      %c0_14 = arith.constant 0 : index
      %c0_15 = arith.constant 0 : index
      %24 = vector.load %arg11[%c0_14, %c0_15] : memref<2x128xf32, #tpu.memory_space<vmem>>, vector<1x128xf32>
      %c1_16 = arith.constant 1 : index
      %c0_17 = arith.constant 0 : index
      %25 = vector.load %arg11[%c1_16, %c0_17] : memref<2x128xf32, #tpu.memory_space<vmem>>, vector<1x128xf32>
      %26 = vector.extract_strided_slice %24 {offsets = [0, 0], sizes = [1, 32], strides = [1, 1]} : vector<1x128xf32> to vector<1x32xf32>
      %27 = vector.extract_strided_slice %24 {offsets = [0, 32], sizes = [1, 32], strides = [1, 1]} : vector<1x128xf32> to vector<1x32xf32>
      %28 = arith.addf %26, %27 : vector<1x32xf32>
      %29 = vector.extract_strided_slice %24 {offsets = [0, 64], sizes = [1, 32], strides = [1, 1]} : vector<1x128xf32> to vector<1x32xf32>
      %30 = arith.addf %28, %29 : vector<1x32xf32>
      %31 = vector.extract_strided_slice %24 {offsets = [0, 96], sizes = [1, 32], strides = [1, 1]} : vector<1x128xf32> to vector<1x32xf32>
      %32 = arith.addf %30, %31 : vector<1x32xf32>
      %cst_18 = arith.constant 4.8828125E-4 : f32
      %33 = vector.broadcast %cst_18 : f32 to vector<1x32xf32>
      %34 = arith.mulf %32, %33 : vector<1x32xf32>
      %35 = vector.extract_strided_slice %25 {offsets = [0, 0], sizes = [1, 32], strides = [1, 1]} : vector<1x128xf32> to vector<1x32xf32>
      %36 = vector.extract_strided_slice %25 {offsets = [0, 32], sizes = [1, 32], strides = [1, 1]} : vector<1x128xf32> to vector<1x32xf32>
      %37 = arith.addf %35, %36 : vector<1x32xf32>
      %38 = vector.extract_strided_slice %25 {offsets = [0, 64], sizes = [1, 32], strides = [1, 1]} : vector<1x128xf32> to vector<1x32xf32>
      %39 = arith.addf %37, %38 : vector<1x32xf32>
      %40 = vector.extract_strided_slice %25 {offsets = [0, 96], sizes = [1, 32], strides = [1, 1]} : vector<1x128xf32> to vector<1x32xf32>
      %41 = arith.addf %39, %40 : vector<1x32xf32>
      %cst_19 = arith.constant 4.8828125E-4 : f32
      %42 = vector.broadcast %cst_19 : f32 to vector<1x32xf32>
      %43 = arith.mulf %41, %42 : vector<1x32xf32>
      %44 = arith.mulf %34, %34 : vector<1x32xf32>
      %45 = arith.subf %43, %44 : vector<1x32xf32>
      %cst_20 = arith.constant 0.000000e+00 : f32
      %46 = vector.broadcast %cst_20 : f32 to vector<1x32xf32>
      %47 = arith.maximumf %45, %46 : vector<1x32xf32>
      %cst_21 = arith.constant 9.99999974E-6 : f32
      %48 = vector.broadcast %cst_21 : f32 to vector<1x32xf32>
      %49 = arith.addf %47, %48 : vector<1x32xf32>
      %50 = math.rsqrt %49 : vector<1x32xf32>
      %51 = tpu.concatenate %34, %34, %34, %34 in 1 : vector<1x32xf32>, vector<1x32xf32>, vector<1x32xf32>, vector<1x32xf32> -> vector<1x128xf32>
      %52 = tpu.concatenate %50, %50, %50, %50 in 1 : vector<1x32xf32>, vector<1x32xf32>, vector<1x32xf32>, vector<1x32xf32> -> vector<1x128xf32>
      %c0_22 = arith.constant 0 : index
      %c0_23 = arith.constant 0 : index
      %53 = vector.load %arg5[%c0_22, %c0_23] : memref<1x128xf32, #tpu.memory_space<vmem>>, vector<1x128xf32>
      %54 = arith.mulf %52, %53 : vector<1x128xf32>
      %c0_24 = arith.constant 0 : index
      %c0_25 = arith.constant 0 : index
      %55 = vector.load %arg6[%c0_24, %c0_25] : memref<1x128xf32, #tpu.memory_space<vmem>>, vector<1x128xf32>
      %56 = arith.mulf %51, %54 : vector<1x128xf32>
      %57 = arith.subf %55, %56 : vector<1x128xf32>
      %58 = vector.broadcast %54 : vector<1x128xf32> to vector<280x128xf32>
      %59 = arith.mulf %17, %58 : vector<280x128xf32>
      %60 = vector.broadcast %57 : vector<1x128xf32> to vector<280x128xf32>
      %61 = arith.addf %59, %60 : vector<280x128xf32>
      %cst_26 = arith.constant 0.00999999977 : f32
      %62 = vector.broadcast %cst_26 : f32 to vector<280x128xf32>
      %63 = arith.mulf %62, %61 : vector<280x128xf32>
      %64 = arith.maximumf %61, %63 : vector<280x128xf32>
      %65 = arith.truncf %64 : vector<280x128xf32> to vector<280x128xbf16>
      %c0_27 = arith.constant 0 : index
      %c0_28 = arith.constant 0 : index
      %66 = vector.load %arg8[%c0_27, %c0_28] : memref<280x128xbf16, #tpu.memory_space<vmem>>, vector<280x128xbf16>
      tpu.vector_store %arg8[%c0_27, %c0_28], %65 {strides = array<i32>} : memref<280x128xbf16, #tpu.memory_space<vmem>>, vector<280x128xbf16>,
    } else {
    }
    return
  }
  func.func @transform_1(%arg0: i32, %arg1: i32) -> (i32, i32) {
    %c0_i32 = arith.constant 0 : i32
    %c0_i32_0 = arith.constant 0 : i32
    %c0_i32_1 = arith.constant 0 : i32
    return %c0_i32, %c0_i32_0 : i32, i32
  }
  func.func @transform_2(%arg0: i32, %arg1: i32) -> (i32, i32) {
    %c0_i32 = arith.constant 0 : i32
    %c0_i32_0 = arith.constant 0 : i32
    %c0_i32_1 = arith.constant 0 : i32
    return %c0_i32, %c0_i32_0 : i32, i32
  }
  func.func @transform_3(%arg0: i32, %arg1: i32) -> (i32, i32) {
    %c0_i32 = arith.constant 0 : i32
    %c0_i32_0 = arith.constant 0 : i32
    %c0_i32_1 = arith.constant 0 : i32
    return %c0_i32, %c0_i32_0 : i32, i32
  }
  func.func @transform_4(%arg0: i32, %arg1: i32) -> (i32, i32) {
    %c0_i32 = arith.constant 0 : i32
    %c0_i32_0 = arith.constant 0 : i32
    %c0_i32_1 = arith.constant 0 : i32
    return %c0_i32, %c0_i32_0 : i32, i32
  }
  func.func @transform_5(%arg0: i32, %arg1: i32) -> (i32, i32) {
    %c0_i32 = arith.constant 0 : i32
    %c0_i32_0 = arith.constant 0 : i32
    return %arg1, %c0_i32 : i32, i32
  }
  func.func @transform_6(%arg0: i32, %arg1: i32) -> (i32, i32) {
    %0 = arith.muli %arg0, %arg1 : i32
    %c0_i32 = arith.constant 0 : i32
    %c0_i32_0 = arith.constant 0 : i32
    return %0, %c0_i32 : i32, i32
  }
}

module attributes {stable_mosaic.version = 11 : i64} {
  func.func @_conv_bias_kernel(%arg0: i32, %arg1: memref<2352x8xbf16, #tpu.memory_space<any>>, %arg2: memref<72x128xbf16, #tpu.memory_space<vmem>>, %arg3: memref<1x128xf32, #tpu.memory_space<vmem>>, %arg4: memref<456x128xf32, #tpu.memory_space<vmem>>, %arg5: memref<528x8xbf16, #tpu.memory_space<vmem>>, %arg6: memref<1x!tpu.dma_semaphore, #tpu.memory_space<semaphore_mem>>) attributes {dimension_semantics = [#tpu.dimension_semantics<parallel>], iteration_bounds = array<i64: 5>, scalar_prefetch = 0 : i64, scratch_operands = 2 : i64, tpu.core_type = #tpu.core_type<tc>, window_params = [{}, {pipeline_mode = #tpu.pipeline_mode<synchronous>, transform_indices = @transform_1, window_bounds = array<i64: 72, 128>}, {pipeline_mode = #tpu.pipeline_mode<synchronous>, transform_indices = @transform_2, window_bounds = array<i64: 1, 128>}, {transform_indices = @transform_3, window_bounds = array<i64: 456, 128>}]} {
    %c456_i32 = arith.constant 456 : i32
    %0 = arith.muli %arg0, %c456_i32 : i32
    %1 = tpu.assume_multiple %0, 8 : i32
    %c0_i32 = arith.constant 0 : i32
    %c0_i32_0 = arith.constant 0 : i32
    %2 = tpu.memref_slice %arg1[%1, %c0_i32_0] : memref<2352x8xbf16, #tpu.memory_space<any>> -> memref<528x8xbf16, #tpu.memory_space<any>>
    %3 = tpu.memref_slice %arg6[%c0_i32] : memref<1x!tpu.dma_semaphore, #tpu.memory_space<semaphore_mem>> -> memref<1x!tpu.dma_semaphore, #tpu.memory_space<semaphore_mem>>
    %4 = tpu.memref_squeeze %3 : memref<1x!tpu.dma_semaphore, #tpu.memory_space<semaphore_mem>> -> memref<!tpu.dma_semaphore, #tpu.memory_space<semaphore_mem>>
    tpu.enqueue_dma source(%2 : memref<528x8xbf16, #tpu.memory_space<any>>) target(%arg5 : memref<528x8xbf16, #tpu.memory_space<vmem>>) target_semaphore(%4 : memref<!tpu.dma_semaphore, #tpu.memory_space<semaphore_mem>>)
    %c0_i32_1 = arith.constant 0 : i32
    %c0_i32_2 = arith.constant 0 : i32
    %5 = tpu.memref_slice %arg1[%1, %c0_i32_2] : memref<2352x8xbf16, #tpu.memory_space<any>> -> memref<528x8xbf16, #tpu.memory_space<any>>
    %6 = tpu.memref_slice %arg6[%c0_i32_1] : memref<1x!tpu.dma_semaphore, #tpu.memory_space<semaphore_mem>> -> memref<1x!tpu.dma_semaphore, #tpu.memory_space<semaphore_mem>>
    %7 = tpu.memref_squeeze %6 : memref<1x!tpu.dma_semaphore, #tpu.memory_space<semaphore_mem>> -> memref<!tpu.dma_semaphore, #tpu.memory_space<semaphore_mem>>
    tpu.wait_dma2 semaphore(%7 : memref<!tpu.dma_semaphore, #tpu.memory_space<semaphore_mem>>) src(%5 : memref<528x8xbf16, #tpu.memory_space<any>>) dst(%arg5 : memref<528x8xbf16, #tpu.memory_space<vmem>>)
    %c0 = arith.constant 0 : index
    %c0_3 = arith.constant 0 : index
    %8 = vector.load %arg5[%c0, %c0_3] : memref<528x8xbf16, #tpu.memory_space<vmem>>, vector<456x8xbf16>
    %c1 = arith.constant 1 : index
    %c0_4 = arith.constant 0 : index
    %9 = vector.load %arg5[%c1, %c0_4] : memref<528x8xbf16, #tpu.memory_space<vmem>>, vector<456x8xbf16>
    %c2 = arith.constant 2 : index
    %c0_5 = arith.constant 0 : index
    %10 = vector.load %arg5[%c2, %c0_5] : memref<528x8xbf16, #tpu.memory_space<vmem>>, vector<456x8xbf16>
    %c34 = arith.constant 34 : index
    %c0_6 = arith.constant 0 : index
    %11 = vector.load %arg5[%c34, %c0_6] : memref<528x8xbf16, #tpu.memory_space<vmem>>, vector<456x8xbf16>
    %c35 = arith.constant 35 : index
    %c0_7 = arith.constant 0 : index
    %12 = vector.load %arg5[%c35, %c0_7] : memref<528x8xbf16, #tpu.memory_space<vmem>>, vector<456x8xbf16>
    %c36 = arith.constant 36 : index
    %c0_8 = arith.constant 0 : index
    %13 = vector.load %arg5[%c36, %c0_8] : memref<528x8xbf16, #tpu.memory_space<vmem>>, vector<456x8xbf16>
    %c68 = arith.constant 68 : index
    %c0_9 = arith.constant 0 : index
    %14 = vector.load %arg5[%c68, %c0_9] : memref<528x8xbf16, #tpu.memory_space<vmem>>, vector<456x8xbf16>
    %c69 = arith.constant 69 : index
    %c0_10 = arith.constant 0 : index
    %15 = vector.load %arg5[%c69, %c0_10] : memref<528x8xbf16, #tpu.memory_space<vmem>>, vector<456x8xbf16>
    %c70 = arith.constant 70 : index
    %c0_11 = arith.constant 0 : index
    %16 = vector.load %arg5[%c70, %c0_11] : memref<528x8xbf16, #tpu.memory_space<vmem>>, vector<456x8xbf16>
    %17 = tpu.concatenate %8, %9, %10, %11, %12, %13, %14, %15, %16 in 1 : vector<456x8xbf16>, vector<456x8xbf16>, vector<456x8xbf16>, vector<456x8xbf16>, vector<456x8xbf16>, vector<456x8xbf16>, vector<456x8xbf16>, vector<456x8xbf16>, vector<456x8xbf16> -> vector<456x72xbf16>
    %c0_12 = arith.constant 0 : index
    %c0_13 = arith.constant 0 : index
    %18 = vector.load %arg2[%c0_12, %c0_13] : memref<72x128xbf16, #tpu.memory_space<vmem>>, vector<72x128xbf16>
    %cst = arith.constant dense<0.000000e+00> : vector<456x128xf32>
    %19 = tpu.matmul %17, %18, %cst {dimension_numbers = #tpu.dot_dimension_numbers<[1], [0], [0], [1], [0, 0, 1, 1], [], []>} : vector<456x72xbf16>, vector<72x128xbf16>, vector<456x128xf32> -> vector<456x128xf32>
    %c0_14 = arith.constant 0 : index
    %c0_15 = arith.constant 0 : index
    %20 = vector.load %arg3[%c0_14, %c0_15] : memref<1x128xf32, #tpu.memory_space<vmem>>, vector<1x128xf32>
    %21 = vector.broadcast %20 : vector<1x128xf32> to vector<456x128xf32>
    %22 = arith.addf %19, %21 : vector<456x128xf32>
    %c0_16 = arith.constant 0 : index
    %c0_17 = arith.constant 0 : index
    %23 = vector.load %arg4[%c0_16, %c0_17] : memref<456x128xf32, #tpu.memory_space<vmem>>, vector<456x128xf32>
    tpu.vector_store %arg4[%c0_16, %c0_17], %22 {strides = array<i32>} : memref<456x128xf32, #tpu.memory_space<vmem>>, vector<456x128xf32>,
    return
  }
  func.func @transform_1(%arg0: i32) -> (i32, i32) {
    %c0_i32 = arith.constant 0 : i32
    %c0_i32_0 = arith.constant 0 : i32
    %c0_i32_1 = arith.constant 0 : i32
    return %c0_i32, %c0_i32_0 : i32, i32
  }
  func.func @transform_2(%arg0: i32) -> (i32, i32) {
    %c0_i32 = arith.constant 0 : i32
    %c0_i32_0 = arith.constant 0 : i32
    %c0_i32_1 = arith.constant 0 : i32
    return %c0_i32, %c0_i32_0 : i32, i32
  }
  func.func @transform_3(%arg0: i32) -> (i32, i32) {
    %c0_i32 = arith.constant 0 : i32
    %c0_i32_0 = arith.constant 0 : i32
    return %arg0, %c0_i32 : i32, i32
  }
}

</mosaic_0001>

<llo_original>
// kernel: forward.11
$region0: #{forward.11}
  #allocation0 [shape = 'u32[]', space=smem, size = 0x4, offset = 0x4, fixed_abs, tag = 'smem constant byte address 0x4 - core index']
  #allocation1 [shape = 'u32[72,128]{1,0:T(1,128)}', space=vmem, size = 0x9000, scoped, tag = 'internal scratch']
  #allocation2 [shape = 'bf16[304,12]{1,0:T(8,128)(2,1)}', space=vmem, size = 0x13000, scoped, tag = 'scratch operand']
  #allocation3 [shape = 's32[1]{0}', space=sflag, size = 0x4, scoped, tag = 'scratch operand']
  #allocation4 [shape = 'f32[2,128]{1,0:T(2,128)}', space=vmem, size = 0x400, scoped, tag = 'scratch operand']
  #allocation5 [shape = 's32[]', space=sflag, size = 0x4, offset = 0, fixed_abs, tag = 'sflag constant byte address 0x0 - dummy sync flag']
  %s0 = inlined_call_operand.vmem [shape: bf16[584,12], index: 0, kind: input, shape index: {}]
  %s1 = inlined_call_operand.vmem [shape: bf16[48,128], index: 1, kind: input, shape index: {}]
  %s2 = inlined_call_operand.vmem [shape: f32[1,128], index: 2, kind: input, shape index: {}]
  %s3 = inlined_call_operand.vmem [shape: f32[1,128], index: 3, kind: input, shape index: {}]
  %s4 = inlined_call_operand.vmem [shape: f32[1,128], index: 4, kind: input, shape index: {}]
  %s5 = inlined_call_operand.vmem [shape: f32[560,1], index: 5, kind: input, shape index: {}]
  %s6 = inlined_call_operand.vmem [shape: bf16[560,128], index: 6, kind: output, shape index: {}]
  %s7 = sld [smem:[#allocation0]]
  $region84: #{forward.11} parent=0
    _
  %s9 = ssub.s32 1, %s7
  %s10 = scalar_select 0, %s9, %s7
  loop: start=0, step=1, limit=6
  $region2: #{forward.11} parent=0 // loop_pre_header
    _
  $region3: #{forward.11} parent=0 // loop_header
    %s12 = sphi 0, %s16
    %p13 = scmp.ge.s32.totalorder %s12, 6
    %s19 = sphi 0, %s31
    %s20 = sphi 0, %s27
    %s21 = sphi 0, %s19
    %s22 = sphi 0, %s20
    %s23 = sphi 0, %s21
    %s24 = sphi 0, %s22
    %s32 = sphi 0, %s32
    %s34 = sphi 0, %s32
    %s35 = sphi 0, %s34
    %s49 = sphi 0, %s35
    %s53 = sphi 0, %s53
    %s55 = sphi 0, %s53
    %s56 = sphi 0, %s55
    %s70 = sphi 0, %s56
    %s74 = sphi 0, %s74
    %s76 = sphi 0, %s74
    %s77 = sphi 0, %s76
    %s91 = sphi 0, %s77
    %s95 = sphi 0, %s95
    %s97 = sphi 0, %s95
    %s98 = sphi 0, %s97
    %s112 = sphi 0, %s98
    %s118 = sphi 0, %s120
    %s121 = sphi 0, %s118
    %s122 = sphi 0, %s121
    %s138 = sphi 0, %s122
    %s146 = sphi 0, %s148
    %s149 = sphi 0, %s146
    %s150 = sphi 0, %s149
    %s166 = sphi 0, %s150
  $region4: #{forward.11} parent=0 // loop_header_branch
    %15 = sbr.rel (%p13) target = $region8
  $region5: #{forward.11} parent=0 // loop_body
    %s17 = ssub.s32 %s12, 1
    %s18 = ssub.s32 %s12, 2
    %s25 = sadd.s32 1, %s20
    %p26 = scmp.ge.s32.totalorder %s25, 2
    %s27 = scalar_select %p26, 0, %s25
    %s28 = sadd.s32 1, %s19
    %s29 = scalar_select %p26, %s28, %s19
    %p30 = scmp.ge.s32.totalorder %s29, 2
    %s31 = scalar_select %p30, 0, %s29
    %s33 = sadd.s32 %s32, 1
    %p36 = scmp.eq.s32.totalorder %s12, 3
    %p37 = scmp.ne.s32.totalorder %s32, %s34
    %p38 = scmp.eq.s32.totalorder %s12, 0
    %p39 = por %p37, %p38
    %p40 = scmp.ne.s32.totalorder %s32, %s34
    %p41 = scmp.eq.s32.totalorder %s17, 3
    %p42 = por %p40, %p41
    %p43 = scmp.ne.s32.totalorder %s34, %s35
    %p44 = scmp.eq.s32.totalorder %s17, 0
    %p45 = por %p43, %p44
    %p46 = scmp.ne.s32.totalorder %s34, %s35
    %p47 = scmp.eq.s32.totalorder %s18, 3
    %p48 = por %p46, %p47
    %p50 = scmp.ne.s32.totalorder %s35, %s49
    %p51 = scmp.eq.s32.totalorder %s18, 0
    %p52 = por %p50, %p51
    %s54 = sadd.s32 %s53, 1
    %p57 = scmp.eq.s32.totalorder %s12, 3
    %p58 = scmp.ne.s32.totalorder %s53, %s55
    %p59 = scmp.eq.s32.totalorder %s12, 0
    %p60 = por %p58, %p59
    %p61 = scmp.ne.s32.totalorder %s53, %s55
    %p62 = scmp.eq.s32.totalorder %s17, 3
    %p63 = por %p61, %p62
    %p64 = scmp.ne.s32.totalorder %s55, %s56
    %p65 = scmp.eq.s32.totalorder %s17, 0
    %p66 = por %p64, %p65
    %p67 = scmp.ne.s32.totalorder %s55, %s56
    %p68 = scmp.eq.s32.totalorder %s18, 3
    %p69 = por %p67, %p68
    %p71 = scmp.ne.s32.totalorder %s56, %s70
    %p72 = scmp.eq.s32.totalorder %s18, 0
    %p73 = por %p71, %p72
    %s75 = sadd.s32 %s74, 1
    %p78 = scmp.eq.s32.totalorder %s12, 3
    %p79 = scmp.ne.s32.totalorder %s74, %s76
    %p80 = scmp.eq.s32.totalorder %s12, 0
    %p81 = por %p79, %p80
    %p82 = scmp.ne.s32.totalorder %s74, %s76
    %p83 = scmp.eq.s32.totalorder %s17, 3
    %p84 = por %p82, %p83
    %p85 = scmp.ne.s32.totalorder %s76, %s77
    %p86 = scmp.eq.s32.totalorder %s17, 0
    %p87 = por %p85, %p86
    %p88 = scmp.ne.s32.totalorder %s76, %s77
    %p89 = scmp.eq.s32.totalorder %s18, 3
    %p90 = por %p88, %p89
    %p92 = scmp.ne.s32.totalorder %s77, %s91
    %p93 = scmp.eq.s32.totalorder %s18, 0
    %p94 = por %p92, %p93
    %s96 = sadd.s32 %s95, 1
    %p99 = scmp.eq.s32.totalorder %s12, 3
    %p100 = scmp.ne.s32.totalorder %s95, %s97
    %p101 = scmp.eq.s32.totalorder %s12, 0
    %p102 = por %p100, %p101
    %p103 = scmp.ne.s32.totalorder %s95, %s97
    %p104 = scmp.eq.s32.totalorder %s17, 3
    %p105 = por %p103, %p104
    %p106 = scmp.ne.s32.totalorder %s97, %s98
    %p107 = scmp.eq.s32.totalorder %s17, 0
    %p108 = por %p106, %p107
    %p109 = scmp.ne.s32.totalorder %s97, %s98
    %p110 = scmp.eq.s32.totalorder %s18, 3
    %p111 = por %p109, %p110
    %p113 = scmp.ne.s32.totalorder %s98, %s112
    %p114 = scmp.eq.s32.totalorder %s18, 0
    %p115 = por %p113, %p114
    %s116 = ssub.s32 %s20, %s27
    %p117 = scmp.eq.s32.totalorder %s116, 0
    %s119 = sadd.s32 %s118, 1
    %s120 = scalar_select %p117, %s118, %s119
    %p123 = pneg %p117
    %p124 = scmp.eq.s32.totalorder %s12, 3
    %p125 = por %p123, %p124
    %p126 = scmp.ne.s32.totalorder %s118, %s121
    %p127 = scmp.eq.s32.totalorder %s12, 0
    %p128 = por %p126, %p127
    %p129 = scmp.ne.s32.totalorder %s118, %s121
    %p130 = scmp.eq.s32.totalorder %s17, 3
    %p131 = por %p129, %p130
    %p132 = scmp.ne.s32.totalorder %s121, %s122
    %p133 = scmp.eq.s32.totalorder %s17, 0
    %p134 = por %p132, %p133
    %p135 = scmp.ne.s32.totalorder %s121, %s122
    %p136 = scmp.eq.s32.totalorder %s18, 3
    %p137 = por %p135, %p136
    %p139 = scmp.ne.s32.totalorder %s122, %s138
    %p140 = scmp.eq.s32.totalorder %s18, 0
    %p141 = por %p139, %p140
    %s142 = smul.u32 %s19, %s20
    %s143 = smul.u32 %s31, %s27
    %s144 = ssub.s32 %s142, %s143
    %p145 = scmp.eq.s32.totalorder %s144, 0
    %s147 = sadd.s32 %s146, 1
    %s148 = scalar_select %p145, %s146, %s147
    %p151 = pneg %p145
    %p152 = scmp.eq.s32.totalorder %s12, 3
    %p153 = por %p151, %p152
    %p154 = scmp.ne.s32.totalorder %s146, %s149
    %p155 = scmp.eq.s32.totalorder %s12, 0
    %p156 = por %p154, %p155
    %p157 = scmp.ne.s32.totalorder %s146, %s149
    %p158 = scmp.eq.s32.totalorder %s17, 3
    %p159 = por %p157, %p158
    %p160 = scmp.ne.s32.totalorder %s149, %s150
    %p161 = scmp.eq.s32.totalorder %s17, 0
    %p162 = por %p160, %p161
    %p163 = scmp.ne.s32.totalorder %s149, %s150
    %p164 = scmp.eq.s32.totalorder %s18, 3
    %p165 = por %p163, %p164
    %p167 = scmp.ne.s32.totalorder %s150, %s166
    %p168 = scmp.eq.s32.totalorder %s18, 0
    %p169 = por %p167, %p168
    %p170 = scmp.le.s32.totalorder 1, %s12
    %p171 = scmp.lt.s32.totalorder %s12, 5
    %p172 = pnand %p170, %p171
    %p173 = pneg %p172
    // Predicated region
    $region9: #{forward.11} parent=5 // pred_check
      _
    $region10: #{forward.11} parent=5 // pred_check_branch
      %175 = sbr.rel (%p172) target = $region12
    $region11: #{forward.11} parent=5 // pred_region
      %s176 = ssub.s32 %s12, 1
      // Predicated region
      $region13: #{forward.11} parent=11 // pred_check
        %p177 = pneg %p45
      $region14: #{forward.11} parent=11 // pred_check_branch
        %179 = sbr.rel (%p177) target = $region16
      $region15: #{forward.11} parent=11 // pred_region
        _
      $region16: #{forward.11} parent=11 // pred_fallthru
        _
      // Predicated region
      $region17: #{forward.11} parent=11 // pred_check
        %p180 = pneg %p66
      $region18: #{forward.11} parent=11 // pred_check_branch
        %182 = sbr.rel (%p180) target = $region20
      $region19: #{forward.11} parent=11 // pred_region
        _
      $region20: #{forward.11} parent=11 // pred_fallthru
        _
      // Predicated region
      $region21: #{forward.11} parent=11 // pred_check
        %p183 = pneg %p87
      $region22: #{forward.11} parent=11 // pred_check_branch
        %185 = sbr.rel (%p183) target = $region24
      $region23: #{forward.11} parent=11 // pred_region
        _
      $region24: #{forward.11} parent=11 // pred_fallthru
        _
      // Predicated region
      $region25: #{forward.11} parent=11 // pred_check
        %p186 = pneg %p108
      $region26: #{forward.11} parent=11 // pred_check_branch
        %188 = sbr.rel (%p186) target = $region28
      $region27: #{forward.11} parent=11 // pred_region
        _
      $region28: #{forward.11} parent=11 // pred_fallthru
        _
    $region12: #{forward.11} parent=5 // pred_fallthru
      _
    %p189 = scmp.lt.s32.totalorder %s12, 4
    // Predicated region
    $region29: #{forward.11} parent=5 // pred_check
      %p190 = pneg %p189
    $region30: #{forward.11} parent=5 // pred_check_branch
      %192 = sbr.rel (%p190) target = $region32
    $region31: #{forward.11} parent=5 // pred_region
      // Predicated region
      $region33: #{forward.11} parent=31 // pred_check
        %p193 = pneg %p128
      $region34: #{forward.11} parent=31 // pred_check_branch
        %195 = sbr.rel (%p193) target = $region36
      $region35: #{forward.11} parent=31 // pred_region
        %s196 = smul.u32 35, %s20
        %p197 = scmp.lt.s32.totalorder %s196, 69
        %s198 = scalar_select %p197, %s196, 69
        %s199 = smul.addr %s198, 8
        %s200 = scalar_lea.vmem %s5, %s199
        %s201 = smul.u32 35, %s20
      $region36: #{forward.11} parent=31 // pred_fallthru
        _
    $region32: #{forward.11} parent=5 // pred_fallthru
      _
    %p202 = scmp.le.s32.totalorder 1, %s12
    %p203 = scmp.lt.s32.totalorder %s12, 5
    %p204 = pnand %p202, %p203
    %p205 = pneg %p204
    // Predicated region
    $region37: #{forward.11} parent=5 // pred_check
      _
    $region38: #{forward.11} parent=5 // pred_check_branch
      %207 = sbr.rel (%p204) target = $region40
    $region39: #{forward.11} parent=5 // pred_region
      %s208 = ssub.s32 %s12, 1
      %p209 = pneg %p45
      %p210 = pneg %p42
      %p211 = pneg %p66
      %p212 = pneg %p63
      %p213 = pneg %p87
      %p214 = pneg %p84
      %p215 = pneg %p108
      %p216 = pneg %p105
      %s217 = smul.u32 35, %s22
      %p218 = scmp.lt.s32.totalorder %s217, 69
      %s219 = scalar_select %p218, %s217, 69
      %s220 = smul.addr %s219, 8
      %s221 = scalar_lea.vmem %s5, %s220
      %p222 = pneg %p134
      %p223 = pneg %p131
      %p224 = pneg %p162
      %p225 = pneg %p159
      %s226 = smul.u32 %s21, %s22
      %s227 = smul.u32 35, %s226
      %p228 = scmp.lt.s32.totalorder %s227, 69
      %s229 = scalar_select %p228, %s227, 69
      %s230 = smul.addr %s229, 4
      %s231 = scalar_lea.vmem %s6, %s230
      %s232 = smul.u32 35, %s22
      %p233 = scmp.lt.s32.totalorder %s232, 69
      %s234 = scalar_select %p233, %s232, 69
      %s235 = smul.addr %s234, 8
      %s236 = scalar_lea.vmem %s5, %s235
      %s237 = smul.u32 35, %s22
      %s238 = smul.u32 %s21, %s22
      %s239 = smul.u32 35, %s238
      %p240 = scmp.lt.s32.totalorder %s239, 69
      %s241 = scalar_select %p240, %s239, 69
      %s242 = smul.addr %s241, 4
      %s243 = scalar_lea.vmem %s6, %s242
      %s244 = smul.u32 %s21, %s22
      %s245 = smul.u32 35, %s244
      %s247 = smul.u32 %s22, 280
      %s248 = sshra.s32 %s247, 3
      %s249 = sand.u32 %s247, 7
      %s250 = smul.addr %s248, 4
      %s251 = scalar_lea.vmem %s0, %s250
      // Predicated region
      $region41: #{forward.11} parent=39 // pred_check
        _
      $region42: #{forward.11} parent=39 // pred_check_branch
        %253 = sbr.rel (0) target = $region44
      $region43: #{forward.11} parent=39 // pred_region
        loop: start=0, step=1, limit=1
        $region45: #{forward.11} parent=43 // loop_pre_header
          _
        $region46: #{forward.11} parent=43 // loop_header
          %s255 = sphi 0, %s259
          %p256 = scmp.ge.s32.totalorder %s255, 1
          %s260 = sphi %s251, %s251
          %s261 = sphi [#allocation2], [#allocation2]
        $region47: #{forward.11} parent=43 // loop_header_branch
          %258 = sbr.rel (%p256) target = $region51
        $region48: #{forward.11} parent=43 // loop_body
          %v262 = vld [vmem:[%s260] sm:$0xff]
          %263 = vst [vmem:[%s261] sm:$0xff] %v262
          %v264 = vld [vmem:[%s260 + $0x8] sm:$0xff]
          %265 = vst [vmem:[%s261 + $0x8] sm:$0xff] %v264
          %v266 = vld [vmem:[%s260 + $0x10] sm:$0xff]
          %267 = vst [vmem:[%s261 + $0x10] sm:$0xff] %v266
          %v268 = vld [vmem:[%s260 + $0x18] sm:$0xff]
          %269 = vst [vmem:[%s261 + $0x18] sm:$0xff] %v268
          %v270 = vld [vmem:[%s260 + $0x20] sm:$0xff]
          %271 = vst [vmem:[%s261 + $0x20] sm:$0xff] %v270
          %v272 = vld [vmem:[%s260 + $0x28] sm:$0xff]
          %273 = vst [vmem:[%s261 + $0x28] sm:$0xff] %v272
          %v274 = vld [vmem:[%s260 + $0x30] sm:$0xff]
          %275 = vst [vmem:[%s261 + $0x30] sm:$0xff] %v274
          %v276 = vld [vmem:[%s260 + $0x38] sm:$0xff]
          %277 = vst [vmem:[%s261 + $0x38] sm:$0xff] %v276
          %v278 = vld [vmem:[%s260 + $0x40] sm:$0xff]
          %279 = vst [vmem:[%s261 + $0x40] sm:$0xff] %v278
          %v280 = vld [vmem:[%s260 + $0x48] sm:$0xff]
          %281 = vst [vmem:[%s261 + $0x48] sm:$0xff] %v280
          %v282 = vld [vmem:[%s260 + $0x50] sm:$0xff]
          %283 = vst [vmem:[%s261 + $0x50] sm:$0xff] %v282
          %v284 = vld [vmem:[%s260 + $0x58] sm:$0xff]
          %285 = vst [vmem:[%s261 + $0x58] sm:$0xff] %v284
          %v286 = vld [vmem:[%s260 + $0x60] sm:$0xff]
          %287 = vst [vmem:[%s261 + $0x60] sm:$0xff] %v286
          %v288 = vld [vmem:[%s260 + $0x68] sm:$0xff]
          %289 = vst [vmem:[%s261 + $0x68] sm:$0xff] %v288
          %v290 = vld [vmem:[%s260 + $0x70] sm:$0xff]
          %291 = vst [vmem:[%s261 + $0x70] sm:$0xff] %v290
          %v292 = vld [vmem:[%s260 + $0x78] sm:$0xff]
          %293 = vst [vmem:[%s261 + $0x78] sm:$0xff] %v292
          %v294 = vld [vmem:[%s260 + $0x80] sm:$0xff]
          %295 = vst [vmem:[%s261 + $0x80] sm:$0xff] %v294
          %v296 = vld [vmem:[%s260 + $0x88] sm:$0xff]
          %297 = vst [vmem:[%s261 + $0x88] sm:$0xff] %v296
          %v298 = vld [vmem:[%s260 + $0x90] sm:$0xff]
          %299 = vst [vmem:[%s261 + $0x90] sm:$0xff] %v298
        $region49: #{forward.11} parent=43 // loop_footer
          %s259 = sadd.s32 1, %s255
        $region50: #{forward.11} parent=43 // loop_footer_branch
          %254 = sbr.rel target = $region46
        $region51: #{forward.11} parent=43 // loop_exit
          _
      $region44: #{forward.11} parent=39 // pred_fallthru
        _
      // Predicated region
      $region52: #{forward.11} parent=39 // pred_check
        _
      $region53: #{forward.11} parent=39 // pred_check_branch
        %301 = sbr.rel target = $region55
      $region54: #{forward.11} parent=39 // pred_region
        _
      $region55: #{forward.11} parent=39 // pred_fallthru
        _
      // Predicated region
      $region56: #{forward.11} parent=39 // pred_check
        _
      $region57: #{forward.11} parent=39 // pred_check_branch
        %304 = sbr.rel (0) target = $region59
      $region58: #{forward.11} parent=39 // pred_region
        %305 = vsyncadd [#allocation3], 2432
      $region59: #{forward.11} parent=39 // pred_fallthru
        _
      %s306 = smul.u32 4, 38
      %s307 = smul.u32 %s306, 1
      %s308 = sshll.u32 %s307, 4
      %309 = dma.done [#allocation3], %s308
      %v310 = vld [vmem:[#allocation2] sm:$0xf]
      %v311 = vld [vmem:[#allocation2 + $0x4] sm:$0xf]
      %v312 = vld [vmem:[#allocation2 + $0x8] sm:$0xf]
      %v313 = vld [vmem:[#allocation2 + $0xc] sm:$0xf]
      %v314 = vld [vmem:[#allocation2 + $0x10] sm:$0xf]
      %v315 = vld [vmem:[#allocation2 + $0x14] sm:$0xf]
      %v316 = vld [vmem:[#allocation2 + $0x18] sm:$0xf]
      %v317 = vld [vmem:[#allocation2 + $0x1c] sm:$0xf]
      %v318 = vld [vmem:[#allocation2 + $0x20] sm:$0xf]
      %v319 = vld [vmem:[#allocation2 + $0x24] sm:$0xf]
      %v320 = vld [vmem:[#allocation2 + $0x28] sm:$0xf]
      %v321 = vld [vmem:[#allocation2 + $0x2c] sm:$0xf]
      %v322 = vld [vmem:[#allocation2 + $0x30] sm:$0xf]
      %v323 = vld [vmem:[#allocation2 + $0x34] sm:$0xf]
      %v324 = vld [vmem:[#allocation2 + $0x38] sm:$0xf]
      %v325 = vld [vmem:[#allocation2 + $0x3c] sm:$0xf]
      %v326 = vld [vmem:[#allocation2 + $0x40] sm:$0xf]
      %v327 = vld [vmem:[#allocation2 + $0x44] sm:$0xf]
      %v328 = vld [vmem:[#allocation2 + $0x48] sm:$0xf]
      %v329 = vld [vmem:[#allocation2 + $0x4c] sm:$0xf]
      %v330 = vld [vmem:[#allocation2 + $0x50] sm:$0xf]
      %v331 = vld [vmem:[#allocation2 + $0x54] sm:$0xf]
      %v332 = vld [vmem:[#allocation2 + $0x58] sm:$0xf]
      %v333 = vld [vmem:[#allocation2 + $0x5c] sm:$0xf]
      %v334 = vld [vmem:[#allocation2 + $0x60] sm:$0xf]
      %v335 = vld [vmem:[#allocation2 + $0x64] sm:$0xf]
      %v336 = vld [vmem:[#allocation2 + $0x68] sm:$0xf]
      %v337 = vld [vmem:[#allocation2 + $0x6c] sm:$0xf]
      %v338 = vld [vmem:[#allocation2 + $0x70] sm:$0xf]
      %v339 = vld [vmem:[#allocation2 + $0x74] sm:$0xf]
      %v340 = vld [vmem:[#allocation2 + $0x78] sm:$0xf]
      %v341 = vld [vmem:[#allocation2 + $0x7c] sm:$0xf]
      %v342 = vld [vmem:[#allocation2 + $0x80] sm:$0xf]
      %v343 = vld [vmem:[#allocation2 + $0x84] sm:$0xf]
      %v344 = vld [vmem:[#allocation2 + $0x88] sm:$0xf]
      %v345 = vld [vmem:[#allocation2 + $0x8c] sm:$0x1]
      %v346 = vld [vmem:[#allocation2 + $0x8c] sm:$0xf]
      %v347 = vld [vmem:[#allocation2 + $0x90] sm:$0xf]
      %v348 = vld [vmem:[#allocation2 + $0x94] sm:$0x1]
      %v349 = vld [vmem:[#allocation2 + $0x8] sm:$0xe]
      %v385 = vunpack.c.l.b16 %v310
      %v386 = vunpack.c.l.b16 %v311
      %v387 = vunpack.c.l.b16 %v312
      %v388 = vunpack.c.l.b16 %v313
      %v389 = vunpack.c.l.b16 %v314
      %v390 = vunpack.c.l.b16 %v315
      %v391 = vunpack.c.l.b16 %v316
      %v392 = vunpack.c.l.b16 %v317
      %v393 = vunpack.c.l.b16 %v318
      %v394 = vunpack.c.l.b16 %v319
      %v395 = vunpack.c.l.b16 %v320
      %v396 = vunpack.c.l.b16 %v321
      %v397 = vunpack.c.l.b16 %v322
      %v398 = vunpack.c.l.b16 %v323
      %v399 = vunpack.c.l.b16 %v324
      %v400 = vunpack.c.l.b16 %v325
      %v401 = vunpack.c.l.b16 %v326
      %v402 = vunpack.c.l.b16 %v327
      %v403 = vunpack.c.l.b16 %v328
      %v404 = vunpack.c.l.b16 %v329
      %v405 = vunpack.c.l.b16 %v330
      %v406 = vunpack.c.l.b16 %v331
      %v407 = vunpack.c.l.b16 %v332
      %v408 = vunpack.c.l.b16 %v333
      %v409 = vunpack.c.l.b16 %v334
      %v410 = vunpack.c.l.b16 %v335
      %v411 = vunpack.c.l.b16 %v336
      %v412 = vunpack.c.l.b16 %v337
      %v413 = vunpack.c.l.b16 %v338
      %v414 = vunpack.c.l.b16 %v339
      %v415 = vunpack.c.l.b16 %v340
      %v416 = vunpack.c.l.b16 %v341
      %v417 = vunpack.c.l.b16 %v342
      %v418 = vunpack.c.l.b16 %v343
      %v419 = vunpack.c.l.b16 %v344
      %v420 = vpack.c.b16 %v386, %v385
      %v421 = vpack.c.b16 %v388, %v387
      %v422 = vpack.c.b16 %v390, %v389
      %v423 = vpack.c.b16 %v392, %v391
      %v424 = vpack.c.b16 %v394, %v393
      %v425 = vpack.c.b16 %v396, %v395
      %v426 = vpack.c.b16 %v398, %v397
      %v427 = vpack.c.b16 %v400, %v399
      %v428 = vpack.c.b16 %v402, %v401
      %v429 = vpack.c.b16 %v404, %v403
      %v430 = vpack.c.b16 %v406, %v405
      %v431 = vpack.c.b16 %v408, %v407
      %v432 = vpack.c.b16 %v410, %v409
      %v433 = vpack.c.b16 %v412, %v411
      %v434 = vpack.c.b16 %v414, %v413
      %v435 = vpack.c.b16 %v416, %v415
      %v436 = vpack.c.b16 %v418, %v417
      %v437 = vpack.c.b16 %v419, %v419
      %v439 = vunpack.c.l.b16 %v345
      %v440 = vpack.c.b16 %v439, %v419
      %vm441 = vsmask.f32 7424
      %v443 = vshrl.u32 %v420, 16
      %v445 = vshll.u32 %v420, 16
      %v447 = vrot.slane %v445, 1
      %v448 = vor.u32 %v443, %v447
      %v450 = vshll.u32 %v421, 16
      %v452 = vrot.slane %v450, 1
      %v453 = vsel %vm441, %v448, %v452
      %v454 = vshrl.u32 %v421, 16
      %v456 = vor.u32 %v454, %v452
      %v458 = vshll.u32 %v422, 16
      %v460 = vrot.slane %v458, 1
      %v461 = vsel %vm441, %v456, %v460
      %v462 = vshrl.u32 %v422, 16
      %v464 = vor.u32 %v462, %v460
      %v466 = vshll.u32 %v423, 16
      %v468 = vrot.slane %v466, 1
      %v469 = vsel %vm441, %v464, %v468
      %v470 = vshrl.u32 %v423, 16
      %v472 = vor.u32 %v470, %v468
      %v474 = vshll.u32 %v424, 16
      %v476 = vrot.slane %v474, 1
      %v477 = vsel %vm441, %v472, %v476
      %v478 = vshrl.u32 %v424, 16
      %v480 = vor.u32 %v478, %v476
      %v482 = vshll.u32 %v425, 16
      %v484 = vrot.slane %v482, 1
      %v485 = vsel %vm441, %v480, %v484
      %v486 = vshrl.u32 %v425, 16
      %v488 = vor.u32 %v486, %v484
      %v490 = vshll.u32 %v426, 16
      %v492 = vrot.slane %v490, 1
      %v493 = vsel %vm441, %v488, %v492
      %v494 = vshrl.u32 %v426, 16
      %v496 = vor.u32 %v494, %v492
      %v498 = vshll.u32 %v427, 16
      %v500 = vrot.slane %v498, 1
      %v501 = vsel %vm441, %v496, %v500
      %v502 = vshrl.u32 %v427, 16
      %v504 = vor.u32 %v502, %v500
      %v506 = vshll.u32 %v428, 16
      %v508 = vrot.slane %v506, 1
      %v509 = vsel %vm441, %v504, %v508
      %v510 = vshrl.u32 %v428, 16
      %v512 = vor.u32 %v510, %v508
      %v514 = vshll.u32 %v429, 16
      %v516 = vrot.slane %v514, 1
      %v517 = vsel %vm441, %v512, %v516
      %v518 = vshrl.u32 %v429, 16
      %v520 = vor.u32 %v518, %v516
      %v522 = vshll.u32 %v430, 16
      %v524 = vrot.slane %v522, 1
      %v525 = vsel %vm441, %v520, %v524
      %v526 = vshrl.u32 %v430, 16
      %v528 = vor.u32 %v526, %v524
      %v530 = vshll.u32 %v431, 16
      %v532 = vrot.slane %v530, 1
      %v533 = vsel %vm441, %v528, %v532
      %v534 = vshrl.u32 %v431, 16
      %v536 = vor.u32 %v534, %v532
      %v538 = vshll.u32 %v432, 16
      %v540 = vrot.slane %v538, 1
      %v541 = vsel %vm441, %v536, %v540
      %v542 = vshrl.u32 %v432, 16
      %v544 = vor.u32 %v542, %v540
      %v546 = vshll.u32 %v433, 16
      %v548 = vrot.slane %v546, 1
      %v549 = vsel %vm441, %v544, %v548
      %v550 = vshrl.u32 %v433, 16
      %v552 = vor.u32 %v550, %v548
      %v554 = vshll.u32 %v434, 16
      %v556 = vrot.slane %v554, 1
      %v557 = vsel %vm441, %v552, %v556
      %v558 = vshrl.u32 %v434, 16
      %v560 = vor.u32 %v558, %v556
      %v562 = vshll.u32 %v435, 16
      %v564 = vrot.slane %v562, 1
      %v565 = vsel %vm441, %v560, %v564
      %v566 = vshrl.u32 %v435, 16
      %v568 = vor.u32 %v566, %v564
      %v570 = vshll.u32 %v436, 16
      %v572 = vrot.slane %v570, 1
      %v573 = vsel %vm441, %v568, %v572
      %v574 = vshrl.u32 %v436, 16
      %v576 = vor.u32 %v574, %v572
      %v578 = vshll.u32 %v440, 16
      %v580 = vrot.slane %v578, 1
      %v581 = vsel %vm441, %v576, %v580
      %v582 = vshrl.u32 %v440, 16
      %v584 = vor.u32 %v582, %v580
      %585 = vrot.lane.b32.xlu0 %v453, 12
      %v586 = vpop.permute.xlu0 %585
      %587 = vrot.lane.b32.xlu0 %v461, 12
      %v588 = vpop.permute.xlu0 %587
      %589 = vrot.lane.b32.xlu0 %v469, 12
      %v590 = vpop.permute.xlu0 %589
      %591 = vrot.lane.b32.xlu0 %v477, 12
      %v592 = vpop.permute.xlu0 %591
      %593 = vrot.lane.b32.xlu0 %v485, 12
      %v594 = vpop.permute.xlu0 %593
      %595 = vrot.lane.b32.xlu0 %v493, 12
      %v596 = vpop.permute.xlu0 %595
      %597 = vrot.lane.b32.xlu0 %v501, 12
      %v598 = vpop.permute.xlu0 %597
      %599 = vrot.lane.b32.xlu0 %v509, 12
      %v600 = vpop.permute.xlu0 %599
      %601 = vrot.lane.b32.xlu0 %v517, 12
      %v602 = vpop.permute.xlu0 %601
      %603 = vrot.lane.b32.xlu0 %v525, 12
      %v604 = vpop.permute.xlu0 %603
      %605 = vrot.lane.b32.xlu0 %v533, 12
      %v606 = vpop.permute.xlu0 %605
      %607 = vrot.lane.b32.xlu0 %v541, 12
      %v608 = vpop.permute.xlu0 %607
      %609 = vrot.lane.b32.xlu0 %v549, 12
      %v610 = vpop.permute.xlu0 %609
      %611 = vrot.lane.b32.xlu0 %v557, 12
      %v612 = vpop.permute.xlu0 %611
      %613 = vrot.lane.b32.xlu0 %v565, 12
      %v614 = vpop.permute.xlu0 %613
      %615 = vrot.lane.b32.xlu0 %v573, 12
      %v616 = vpop.permute.xlu0 %615
      %617 = vrot.lane.b32.xlu0 %v581, 12
      %v618 = vpop.permute.xlu0 %617
      %619 = vrot.lane.b32.xlu0 %v584, 12
      %v620 = vpop.permute.xlu0 %619
      %v624 = vunpack.c.l.b16 %v346
      %v625 = vunpack.c.l.b16 %v347
      %v626 = vunpack.c.l.b16 %v348
      %v627 = vpack.c.b16 %v624, %v419
      %v628 = vpack.c.b16 %v626, %v625
      %v630 = vshll.u32 %v627, 16
      %v632 = vrot.slane %v630, 1
      %v633 = vsel %vm441, %v576, %v632
      %v634 = vshrl.u32 %v627, 16
      %v636 = vor.u32 %v634, %v632
      %v638 = vshll.u32 %v628, 16
      %v640 = vrot.slane %v638, 1
      %v641 = vsel %vm441, %v636, %v640
      %v642 = vshrl.u32 %v628, 16
      %v644 = vor.u32 %v642, %v640
      %645 = vrot.lane.b32.xlu0 %v461, 24
      %v646 = vpop.permute.xlu0 %645
      %647 = vrot.lane.b32.xlu0 %v469, 24
      %v648 = vpop.permute.xlu0 %647
      %649 = vrot.lane.b32.xlu0 %v477, 24
      %v650 = vpop.permute.xlu0 %649
      %651 = vrot.lane.b32.xlu0 %v485, 24
      %v652 = vpop.permute.xlu0 %651
      %653 = vrot.lane.b32.xlu0 %v493, 24
      %v654 = vpop.permute.xlu0 %653
      %655 = vrot.lane.b32.xlu0 %v501, 24
      %v656 = vpop.permute.xlu0 %655
      %657 = vrot.lane.b32.xlu0 %v509, 24
      %v658 = vpop.permute.xlu0 %657
      %659 = vrot.lane.b32.xlu0 %v517, 24
      %v660 = vpop.permute.xlu0 %659
      %661 = vrot.lane.b32.xlu0 %v525, 24
      %v662 = vpop.permute.xlu0 %661
      %663 = vrot.lane.b32.xlu0 %v533, 24
      %v664 = vpop.permute.xlu0 %663
      %665 = vrot.lane.b32.xlu0 %v541, 24
      %v666 = vpop.permute.xlu0 %665
      %667 = vrot.lane.b32.xlu0 %v549, 24
      %v668 = vpop.permute.xlu0 %667
      %669 = vrot.lane.b32.xlu0 %v557, 24
      %v670 = vpop.permute.xlu0 %669
      %671 = vrot.lane.b32.xlu0 %v565, 24
      %v672 = vpop.permute.xlu0 %671
      %673 = vrot.lane.b32.xlu0 %v573, 24
      %v674 = vpop.permute.xlu0 %673
      %675 = vrot.lane.b32.xlu0 %v633, 24
      %v676 = vpop.permute.xlu0 %675
      %677 = vrot.lane.b32.xlu0 %v641, 24
      %v678 = vpop.permute.xlu0 %677
      %679 = vrot.lane.b32.xlu0 %v644, 24
      %v680 = vpop.permute.xlu0 %679
      %v682 = vunpack.c.l.b16 %v349
      %v683 = vpack.c.b16 %v388, %v682
      %vm684 = vcmask 1046528
      %v685 = vrot.slane %v683, 1
      %v686 = vrot.slane %v422, 1
      %v687 = vsel %vm684, %v685, %v686
      %v688 = vrot.slane %v423, 1
      %v689 = vsel %vm684, %v686, %v688
      %v690 = vrot.slane %v424, 1
      %v691 = vsel %vm684, %v688, %v690
      %v692 = vrot.slane %v425, 1
      %v693 = vsel %vm684, %v690, %v692
      %v694 = vrot.slane %v426, 1
      %v695 = vsel %vm684, %v692, %v694
      %v696 = vrot.slane %v427, 1
      %v697 = vsel %vm684, %v694, %v696
      %v698 = vrot.slane %v428, 1
      %v699 = vsel %vm684, %v696, %v698
      %v700 = vrot.slane %v429, 1
      %v701 = vsel %vm684, %v698, %v700
      %v702 = vrot.slane %v430, 1
      %v703 = vsel %vm684, %v700, %v702
      %v704 = vrot.slane %v431, 1
      %v705 = vsel %vm684, %v702, %v704
      %v706 = vrot.slane %v432, 1
      %v707 = vsel %vm684, %v704, %v706
      %v708 = vrot.slane %v433, 1
      %v709 = vsel %vm684, %v706, %v708
      %v710 = vrot.slane %v434, 1
      %v711 = vsel %vm684, %v708, %v710
      %v712 = vrot.slane %v435, 1
      %v713 = vsel %vm684, %v710, %v712
      %v714 = vrot.slane %v436, 1
      %v715 = vsel %vm684, %v712, %v714
      %v716 = vrot.slane %v627, 1
      %v717 = vsel %vm684, %v714, %v716
      %v718 = vrot.slane %v628, 1
      %v719 = vsel %vm684, %v716, %v718
      %720 = vrot.lane.b32.xlu0 %v687, 36
      %v721 = vpop.permute.xlu0 %720
      %722 = vrot.lane.b32.xlu0 %v689, 36
      %v723 = vpop.permute.xlu0 %722
      %724 = vrot.lane.b32.xlu0 %v691, 36
      %v725 = vpop.permute.xlu0 %724
      %726 = vrot.lane.b32.xlu0 %v693, 36
      %v727 = vpop.permute.xlu0 %726
      %728 = vrot.lane.b32.xlu0 %v695, 36
      %v729 = vpop.permute.xlu0 %728
      %730 = vrot.lane.b32.xlu0 %v697, 36
      %v731 = vpop.permute.xlu0 %730
      %732 = vrot.lane.b32.xlu0 %v699, 36
      %v733 = vpop.permute.xlu0 %732
      %734 = vrot.lane.b32.xlu0 %v701, 36
      %v735 = vpop.permute.xlu0 %734
      %736 = vrot.lane.b32.xlu0 %v703, 36
      %v737 = vpop.permute.xlu0 %736
      %738 = vrot.lane.b32.xlu0 %v705, 36
      %v739 = vpop.permute.xlu0 %738
      %740 = vrot.lane.b32.xlu0 %v707, 36
      %v741 = vpop.permute.xlu0 %740
      %742 = vrot.lane.b32.xlu0 %v709, 36
      %v743 = vpop.permute.xlu0 %742
      %744 = vrot.lane.b32.xlu0 %v711, 36
      %v745 = vpop.permute.xlu0 %744
      %746 = vrot.lane.b32.xlu0 %v713, 36
      %v747 = vpop.permute.xlu0 %746
      %748 = vrot.lane.b32.xlu0 %v715, 36
      %v749 = vpop.permute.xlu0 %748
      %750 = vrot.lane.b32.xlu0 %v717, 36
      %v751 = vpop.permute.xlu0 %750
      %752 = vrot.lane.b32.xlu0 %v719, 36
      %v753 = vpop.permute.xlu0 %752
      %754 = vrot.lane.b32.xlu0 %v718, 36
      %v755 = vpop.permute.xlu0 %754
      %vm756 = vcmask 97280
      %v758 = vsel %vm756, %v420, %v586
      %v760 = vsel %vm756, %v421, %v588
      %v762 = vsel %vm756, %v422, %v590
      %v764 = vsel %vm756, %v423, %v592
      %v766 = vsel %vm756, %v424, %v594
      %v768 = vsel %vm756, %v425, %v596
      %v770 = vsel %vm756, %v426, %v598
      %v772 = vsel %vm756, %v427, %v600
      %v774 = vsel %vm756, %v428, %v602
      %v776 = vsel %vm756, %v429, %v604
      %v778 = vsel %vm756, %v430, %v606
      %v780 = vsel %vm756, %v431, %v608
      %v782 = vsel %vm756, %v432, %v610
      %v784 = vsel %vm756, %v433, %v612
      %v786 = vsel %vm756, %v434, %v614
      %v788 = vsel %vm756, %v435, %v616
      %v790 = vsel %vm756, %v436, %v618
      %v793 = vsel %vm756, %v437, %v620
      %vm794 = vcmask 195584
      %v796 = vsel %vm794, %v758, %v646
      %v798 = vsel %vm794, %v760, %v648
      %v800 = vsel %vm794, %v762, %v650
      %v802 = vsel %vm794, %v764, %v652
      %v804 = vsel %vm794, %v766, %v654
      %v806 = vsel %vm794, %v768, %v656
      %v808 = vsel %vm794, %v770, %v658
      %v810 = vsel %vm794, %v772, %v660
      %v812 = vsel %vm794, %v774, %v662
      %v814 = vsel %vm794, %v776, %v664
      %v816 = vsel %vm794, %v778, %v666
      %v818 = vsel %vm794, %v780, %v668
      %v820 = vsel %vm794, %v782, %v670
      %v822 = vsel %vm794, %v784, %v672
      %v824 = vsel %vm794, %v786, %v674
      %v826 = vsel %vm794, %v788, %v676
      %v828 = vsel %vm794, %v790, %v678
      %v830 = vsel %vm794, %v793, %v680
      %vm831 = vcmask 293888
      %v833 = vsel %vm831, %v796, %v721
      %v835 = vsel %vm831, %v798, %v723
      %v837 = vsel %vm831, %v800, %v725
      %v839 = vsel %vm831, %v802, %v727
      %v841 = vsel %vm831, %v804, %v729
      %v843 = vsel %vm831, %v806, %v731
      %v845 = vsel %vm831, %v808, %v733
      %v847 = vsel %vm831, %v810, %v735
      %v849 = vsel %vm831, %v812, %v737
      %v851 = vsel %vm831, %v814, %v739
      %v853 = vsel %vm831, %v816, %v741
      %v855 = vsel %vm831, %v818, %v743
      %v857 = vsel %vm831, %v820, %v745
      %v859 = vsel %vm831, %v822, %v747
      %v861 = vsel %vm831, %v824, %v749
      %v863 = vsel %vm831, %v826, %v751
      %v865 = vsel %vm831, %v828, %v753
      %v867 = vsel %vm831, %v830, %v755
      %v868 = vld [vmem:[%s1] sm:$0xf]
      %v869 = vld [vmem:[%s1 + $0x4] sm:$0xf]
      %v870 = vld [vmem:[%s1 + $0x8] sm:$0xf]
      %v871 = vld [vmem:[%s1 + $0xc] sm:$0xf]
      %v872 = vld [vmem:[%s1 + $0x10] sm:$0xf]
      %v873 = vld [vmem:[%s1 + $0x14] sm:$0xf]
      %v874 = vld [vmem:[%s2] sm:$0x1]
      %v876 = vperm.slane %v874, 0
      %v884 = vunpack.c.l.b16 %v868
      %v885 = vunpack.c.l.b16 %v869
      %v886 = vunpack.c.l.b16 %v870
      %v887 = vunpack.c.l.b16 %v871
      %v888 = vunpack.c.l.b16 %v872
      %v889 = vunpack.c.l.b16 %v873
      %v890 = vpack.c.b16 %v885, %v884
      %v891 = vpack.c.b16 %v887, %v886
      %v892 = vpack.c.b16 %v889, %v888
      %vm896 = vcmask 392192
      %v897 = vsel %vm896, %v833, 0
      %v899 = vsel %vm896, %v835, 0
      %v901 = vsel %vm896, %v837, 0
      %v903 = vsel %vm896, %v839, 0
      %v905 = vsel %vm896, %v841, 0
      %v907 = vsel %vm896, %v843, 0
      %v909 = vsel %vm896, %v845, 0
      %v911 = vsel %vm896, %v847, 0
      %v913 = vsel %vm896, %v849, 0
      %v915 = vsel %vm896, %v851, 0
      %v917 = vsel %vm896, %v853, 0
      %v919 = vsel %vm896, %v855, 0
      %v921 = vsel %vm896, %v857, 0
      %v923 = vsel %vm896, %v859, 0
      %v925 = vsel %vm896, %v861, 0
      %v927 = vsel %vm896, %v863, 0
      %v929 = vsel %vm896, %v865, 0
      %v931 = vsel %vm896, %v867, 0
      %933 = vmatpush.bf16.msra.mxu0 0
      %934 = vmatpush.bf16.msra.mxu0 0
      %935 = vmatpush.bf16.msra.mxu0 0
      %936 = vmatpush.bf16.msra.mxu0 0
      %937 = vmatpush.bf16.msra.mxu0 0
      %938 = vmatpush.bf16.msra.mxu0 %v892
      %939 = vmatpush.bf16.msra.mxu0 %v891
      %940 = vmatpush.bf16.msra.mxu0 %v890
      %941 = vmatmul.bf16.gmra.mxu0 %v897
      %v942 = vpop.f32.mrf.mxu0
      %v943 = vadd.f32 %v876, %v942
      %v944 = vpop.f32.mrf.mxu0
      %v945 = vadd.f32 %v876, %v944
      %946 = vmatmul.bf16.gmra.mxu0 %v899
      %v947 = vpop.f32.mrf.mxu0
      %v948 = vadd.f32 %v876, %v947
      %v949 = vpop.f32.mrf.mxu0
      %v950 = vadd.f32 %v876, %v949
      %951 = vmatmul.bf16.gmra.mxu0 %v901
      %v952 = vpop.f32.mrf.mxu0
      %v953 = vadd.f32 %v876, %v952
      %v954 = vpop.f32.mrf.mxu0
      %v955 = vadd.f32 %v876, %v954
      %956 = vmatmul.bf16.gmra.mxu0 %v903
      %v957 = vpop.f32.mrf.mxu0
      %v958 = vadd.f32 %v876, %v957
      %v959 = vpop.f32.mrf.mxu0
      %v960 = vadd.f32 %v876, %v959
      %961 = vmatmul.bf16.gmra.mxu0 %v905
      %v962 = vpop.f32.mrf.mxu0
      %v963 = vadd.f32 %v876, %v962
      %v964 = vpop.f32.mrf.mxu0
      %v965 = vadd.f32 %v876, %v964
      %966 = vmatmul.bf16.gmra.mxu0 %v907
      %v967 = vpop.f32.mrf.mxu0
      %v968 = vadd.f32 %v876, %v967
      %v969 = vpop.f32.mrf.mxu0
      %v970 = vadd.f32 %v876, %v969
      %971 = vmatmul.bf16.gmra.mxu0 %v909
      %v972 = vpop.f32.mrf.mxu0
      %v973 = vadd.f32 %v876, %v972
      %v974 = vpop.f32.mrf.mxu0
      %v975 = vadd.f32 %v876, %v974
      %976 = vmatmul.bf16.gmra.mxu0 %v911
      %v977 = vpop.f32.mrf.mxu0
      %v978 = vadd.f32 %v876, %v977
      %v979 = vpop.f32.mrf.mxu0
      %v980 = vadd.f32 %v876, %v979
      %981 = vmatmul.bf16.gmra.mxu0 %v913
      %v982 = vpop.f32.mrf.mxu0
      %v983 = vadd.f32 %v876, %v982
      %v984 = vpop.f32.mrf.mxu0
      %v985 = vadd.f32 %v876, %v984
      %986 = vmatmul.bf16.gmra.mxu0 %v915
      %v987 = vpop.f32.mrf.mxu0
      %v988 = vadd.f32 %v876, %v987
      %v989 = vpop.f32.mrf.mxu0
      %v990 = vadd.f32 %v876, %v989
      %991 = vmatmul.bf16.gmra.mxu0 %v917
      %v992 = vpop.f32.mrf.mxu0
      %v993 = vadd.f32 %v876, %v992
      %v994 = vpop.f32.mrf.mxu0
      %v995 = vadd.f32 %v876, %v994
      %996 = vmatmul.bf16.gmra.mxu0 %v919
      %v997 = vpop.f32.mrf.mxu0
      %v998 = vadd.f32 %v876, %v997
      %v999 = vpop.f32.mrf.mxu0
      %v1000 = vadd.f32 %v876, %v999
      %1001 = vmatmul.bf16.gmra.mxu0 %v921
      %v1002 = vpop.f32.mrf.mxu0
      %v1003 = vadd.f32 %v876, %v1002
      %v1004 = vpop.f32.mrf.mxu0
      %v1005 = vadd.f32 %v876, %v1004
      %1006 = vmatmul.bf16.gmra.mxu0 %v923
      %v1007 = vpop.f32.mrf.mxu0
      %v1008 = vadd.f32 %v876, %v1007
      %v1009 = vpop.f32.mrf.mxu0
      %v1010 = vadd.f32 %v876, %v1009
      %1011 = vmatmul.bf16.gmra.mxu0 %v925
      %v1012 = vpop.f32.mrf.mxu0
      %v1013 = vadd.f32 %v876, %v1012
      %v1014 = vpop.f32.mrf.mxu0
      %v1015 = vadd.f32 %v876, %v1014
      %1016 = vmatmul.bf16.gmra.mxu0 %v927
      %v1017 = vpop.f32.mrf.mxu0
      %v1018 = vadd.f32 %v876, %v1017
      %v1019 = vpop.f32.mrf.mxu0
      %v1020 = vadd.f32 %v876, %v1019
      %1021 = vmatmul.bf16.gmra.mxu0 %v929
      %v1022 = vpop.f32.mrf.mxu0
      %v1023 = vadd.f32 %v876, %v1022
      %v1024 = vpop.f32.mrf.mxu0
      %v1025 = vadd.f32 %v876, %v1024
      %1026 = vmatmul.bf16.gmra.mxu0 %v931
      %v1027 = vpop.f32.mrf.mxu0
      %v1028 = vadd.f32 %v876, %v1027
      %v1029 = vpop.f32.mrf.mxu0
      %1030 = vdwg.mxu0
      %p1031 = scmp.eq.s32.totalorder %s21, 0
      // Predicated region
      $region60: #{forward.11} parent=39 // pred_check
        %p1032 = pneg %p1031
      $region61: #{forward.11} parent=39 // pred_check_branch
        %1034 = sbr.rel (%p1032) target = $region63
      $region62: #{forward.11} parent=39 // pred_region
        %p1035 = scmp.eq.s32.totalorder %s22, 0
        // Predicated region
        $region64: #{forward.11} parent=62 // pred_check
          %p1036 = pneg %p1035
        $region65: #{forward.11} parent=62 // pred_check_branch
          %1038 = sbr.rel (%p1036) target = $region67
        $region66: #{forward.11} parent=62 // pred_region
          %1039 = vst [vmem:[#allocation4] sm:$0x3] 0.0
        $region67: #{forward.11} parent=62 // pred_fallthru
          _
        %v1040 = vld [vmem:[%s236] sm:$0xff]
        %v1041 = vld [vmem:[%s236 + $0x8] sm:$0xff]
        %v1042 = vld [vmem:[%s236 + $0x10] sm:$0xff]
        %v1043 = vld [vmem:[%s236 + $0x18] sm:$0xff]
        %v1044 = vld [vmem:[%s236 + $0x20] sm:$0xff]
        %v1045 = vld [vmem:[%s236 + $0x28] sm:$0xff]
        %v1046 = vld [vmem:[%s236 + $0x30] sm:$0xff]
        %v1047 = vld [vmem:[%s236 + $0x38] sm:$0xff]
        %v1048 = vld [vmem:[%s236 + $0x40] sm:$0xff]
        %v1049 = vld [vmem:[%s236 + $0x48] sm:$0xff]
        %v1050 = vld [vmem:[%s236 + $0x50] sm:$0xff]
        %v1051 = vld [vmem:[%s236 + $0x58] sm:$0xff]
        %v1052 = vld [vmem:[%s236 + $0x60] sm:$0xff]
        %v1053 = vld [vmem:[%s236 + $0x68] sm:$0xff]
        %v1054 = vld [vmem:[%s236 + $0x70] sm:$0xff]
        %v1055 = vld [vmem:[%s236 + $0x78] sm:$0xff]
        %v1056 = vld [vmem:[%s236 + $0x80] sm:$0xff]
        %v1057 = vld [vmem:[%s236 + $0x88] sm:$0xff]
        %v1058 = vld [vmem:[%s236 + $0x90] sm:$0xff]
        %v1059 = vld [vmem:[%s236 + $0x98] sm:$0xff]
        %v1060 = vld [vmem:[%s236 + $0xa0] sm:$0xff]
        %v1061 = vld [vmem:[%s236 + $0xa8] sm:$0xff]
        %v1062 = vld [vmem:[%s236 + $0xb0] sm:$0xff]
        %v1063 = vld [vmem:[%s236 + $0xb8] sm:$0xff]
        %v1064 = vld [vmem:[%s236 + $0xc0] sm:$0xff]
        %v1065 = vld [vmem:[%s236 + $0xc8] sm:$0xff]
        %v1066 = vld [vmem:[%s236 + $0xd0] sm:$0xff]
        %v1067 = vld [vmem:[%s236 + $0xd8] sm:$0xff]
        %v1068 = vld [vmem:[%s236 + $0xe0] sm:$0xff]
        %v1069 = vld [vmem:[%s236 + $0xe8] sm:$0xff]
        %v1070 = vld [vmem:[%s236 + $0xf0] sm:$0xff]
        %v1071 = vld [vmem:[%s236 + $0xf8] sm:$0xff]
        %v1072 = vld [vmem:[%s236 + $0x100] sm:$0xff]
        %v1073 = vld [vmem:[%s236 + $0x108] sm:$0xff]
        %v1074 = vld [vmem:[%s236 + $0x110] sm:$0xff]
        %1076 = vset.pattern.permute.xlu0 0
        %1077 = vperm.xlu0 %1076, %v1040
        %v1078 = vpop.permute.xlu0 %1077
        %1081 = vset.pattern.permute.xlu0 0
        %1082 = vperm.xlu0 %1081, %v1041
        %v1083 = vpop.permute.xlu0 %1082
        %1086 = vset.pattern.permute.xlu0 0
        %1087 = vperm.xlu0 %1086, %v1042
        %v1088 = vpop.permute.xlu0 %1087
        %1091 = vset.pattern.permute.xlu0 0
        %1092 = vperm.xlu0 %1091, %v1043
        %v1093 = vpop.permute.xlu0 %1092
        %1096 = vset.pattern.permute.xlu0 0
        %1097 = vperm.xlu0 %1096, %v1044
        %v1098 = vpop.permute.xlu0 %1097
        %1101 = vset.pattern.permute.xlu0 0
        %1102 = vperm.xlu0 %1101, %v1045
        %v1103 = vpop.permute.xlu0 %1102
        %1106 = vset.pattern.permute.xlu0 0
        %1107 = vperm.xlu0 %1106, %v1046
        %v1108 = vpop.permute.xlu0 %1107
        %1111 = vset.pattern.permute.xlu0 0
        %1112 = vperm.xlu0 %1111, %v1047
        %v1113 = vpop.permute.xlu0 %1112
        %1116 = vset.pattern.permute.xlu0 0
        %1117 = vperm.xlu0 %1116, %v1048
        %v1118 = vpop.permute.xlu0 %1117
        %1121 = vset.pattern.permute.xlu0 0
        %1122 = vperm.xlu0 %1121, %v1049
        %v1123 = vpop.permute.xlu0 %1122
        %1126 = vset.pattern.permute.xlu0 0
        %1127 = vperm.xlu0 %1126, %v1050
        %v1128 = vpop.permute.xlu0 %1127
        %1131 = vset.pattern.permute.xlu0 0
        %1132 = vperm.xlu0 %1131, %v1051
        %v1133 = vpop.permute.xlu0 %1132
        %1136 = vset.pattern.permute.xlu0 0
        %1137 = vperm.xlu0 %1136, %v1052
        %v1138 = vpop.permute.xlu0 %1137
        %1141 = vset.pattern.permute.xlu0 0
        %1142 = vperm.xlu0 %1141, %v1053
        %v1143 = vpop.permute.xlu0 %1142
        %1146 = vset.pattern.permute.xlu0 0
        %1147 = vperm.xlu0 %1146, %v1054
        %v1148 = vpop.permute.xlu0 %1147
        %1151 = vset.pattern.permute.xlu0 0
        %1152 = vperm.xlu0 %1151, %v1055
        %v1153 = vpop.permute.xlu0 %1152
        %1156 = vset.pattern.permute.xlu0 0
        %1157 = vperm.xlu0 %1156, %v1056
        %v1158 = vpop.permute.xlu0 %1157
        %1161 = vset.pattern.permute.xlu0 0
        %1162 = vperm.xlu0 %1161, %v1057
        %v1163 = vpop.permute.xlu0 %1162
        %1166 = vset.pattern.permute.xlu0 0
        %1167 = vperm.xlu0 %1166, %v1058
        %v1168 = vpop.permute.xlu0 %1167
        %1171 = vset.pattern.permute.xlu0 0
        %1172 = vperm.xlu0 %1171, %v1059
        %v1173 = vpop.permute.xlu0 %1172
        %1176 = vset.pattern.permute.xlu0 0
        %1177 = vperm.xlu0 %1176, %v1060
        %v1178 = vpop.permute.xlu0 %1177
        %1181 = vset.pattern.permute.xlu0 0
        %1182 = vperm.xlu0 %1181, %v1061
        %v1183 = vpop.permute.xlu0 %1182
        %1186 = vset.pattern.permute.xlu0 0
        %1187 = vperm.xlu0 %1186, %v1062
        %v1188 = vpop.permute.xlu0 %1187
        %1191 = vset.pattern.permute.xlu0 0
        %1192 = vperm.xlu0 %1191, %v1063
        %v1193 = vpop.permute.xlu0 %1192
        %1196 = vset.pattern.permute.xlu0 0
        %1197 = vperm.xlu0 %1196, %v1064
        %v1198 = vpop.permute.xlu0 %1197
        %1201 = vset.pattern.permute.xlu0 0
        %1202 = vperm.xlu0 %1201, %v1065
        %v1203 = vpop.permute.xlu0 %1202
        %1206 = vset.pattern.permute.xlu0 0
        %1207 = vperm.xlu0 %1206, %v1066
        %v1208 = vpop.permute.xlu0 %1207
        %1211 = vset.pattern.permute.xlu0 0
        %1212 = vperm.xlu0 %1211, %v1067
        %v1213 = vpop.permute.xlu0 %1212
        %1216 = vset.pattern.permute.xlu0 0
        %1217 = vperm.xlu0 %1216, %v1068
        %v1218 = vpop.permute.xlu0 %1217
        %1221 = vset.pattern.permute.xlu0 0
        %1222 = vperm.xlu0 %1221, %v1069
        %v1223 = vpop.permute.xlu0 %1222
        %1226 = vset.pattern.permute.xlu0 0
        %1227 = vperm.xlu0 %1226, %v1070
        %v1228 = vpop.permute.xlu0 %1227
        %1231 = vset.pattern.permute.xlu0 0
        %1232 = vperm.xlu0 %1231, %v1071
        %v1233 = vpop.permute.xlu0 %1232
        %1236 = vset.pattern.permute.xlu0 0
        %1237 = vperm.xlu0 %1236, %v1072
        %v1238 = vpop.permute.xlu0 %1237
        %1241 = vset.pattern.permute.xlu0 0
        %1242 = vperm.xlu0 %1241, %v1073
        %v1243 = vpop.permute.xlu0 %1242
        %1246 = vset.pattern.permute.xlu0 0
        %1247 = vperm.xlu0 %1246, %v1074
        %v1248 = vpop.permute.xlu0 %1247
        %v1250 = vmul.f32 %v943, %v1078
        %v1251 = vmul.f32 %v945, %v1083
        %v1252 = vmul.f32 %v948, %v1088
        %v1253 = vmul.f32 %v950, %v1093
        %v1254 = vmul.f32 %v953, %v1098
        %v1255 = vmul.f32 %v955, %v1103
        %v1256 = vmul.f32 %v958, %v1108
        %v1257 = vmul.f32 %v960, %v1113
        %v1258 = vmul.f32 %v963, %v1118
        %v1259 = vmul.f32 %v965, %v1123
        %v1260 = vmul.f32 %v968, %v1128
        %v1261 = vmul.f32 %v970, %v1133
        %v1262 = vmul.f32 %v973, %v1138
        %v1263 = vmul.f32 %v975, %v1143
        %v1264 = vmul.f32 %v978, %v1148
        %v1265 = vmul.f32 %v980, %v1153
        %v1266 = vmul.f32 %v983, %v1158
        %v1267 = vmul.f32 %v985, %v1163
        %v1268 = vmul.f32 %v988, %v1168
        %v1269 = vmul.f32 %v990, %v1173
        %v1270 = vmul.f32 %v993, %v1178
        %v1271 = vmul.f32 %v995, %v1183
        %v1272 = vmul.f32 %v998, %v1188
        %v1273 = vmul.f32 %v1000, %v1193
        %v1274 = vmul.f32 %v1003, %v1198
        %v1275 = vmul.f32 %v1005, %v1203
        %v1276 = vmul.f32 %v1008, %v1208
        %v1277 = vmul.f32 %v1010, %v1213
        %v1278 = vmul.f32 %v1013, %v1218
        %v1279 = vmul.f32 %v1015, %v1223
        %v1280 = vmul.f32 %v1018, %v1228
        %v1281 = vmul.f32 %v1020, %v1233
        %v1282 = vmul.f32 %v1023, %v1238
        %v1283 = vmul.f32 %v1025, %v1243
        %v1284 = vmul.f32 %v1028, %v1248
        %v1285 = vadd.f32 %v1250, %v1251
        %v1286 = vadd.f32 %v1285, %v1252
        %v1287 = vadd.f32 %v1286, %v1253
        %v1288 = vadd.f32 %v1287, %v1254
        %v1289 = vadd.f32 %v1288, %v1255
        %v1290 = vadd.f32 %v1289, %v1256
        %v1291 = vadd.f32 %v1290, %v1257
        %v1292 = vadd.f32 %v1291, %v1258
        %v1293 = vadd.f32 %v1292, %v1259
        %v1294 = vadd.f32 %v1293, %v1260
        %v1295 = vadd.f32 %v1294, %v1261
        %v1296 = vadd.f32 %v1295, %v1262
        %v1297 = vadd.f32 %v1296, %v1263
        %v1298 = vadd.f32 %v1297, %v1264
        %v1299 = vadd.f32 %v1298, %v1265
        %v1300 = vadd.f32 %v1299, %v1266
        %v1301 = vadd.f32 %v1300, %v1267
        %v1302 = vadd.f32 %v1301, %v1268
        %v1303 = vadd.f32 %v1302, %v1269
        %v1304 = vadd.f32 %v1303, %v1270
        %v1305 = vadd.f32 %v1304, %v1271
        %v1306 = vadd.f32 %v1305, %v1272
        %v1307 = vadd.f32 %v1306, %v1273
        %v1308 = vadd.f32 %v1307, %v1274
        %v1309 = vadd.f32 %v1308, %v1275
        %v1310 = vadd.f32 %v1309, %v1276
        %v1311 = vadd.f32 %v1310, %v1277
        %v1312 = vadd.f32 %v1311, %v1278
        %v1313 = vadd.f32 %v1312, %v1279
        %v1314 = vadd.f32 %v1313, %v1280
        %v1315 = vadd.f32 %v1314, %v1281
        %v1316 = vadd.f32 %v1315, %v1282
        %v1317 = vadd.f32 %v1316, %v1283
        %v1318 = vadd.f32 %v1317, %v1284
        %v1319 = vrot.slane %v1318, 4
        %v1320 = vadd.f32 %v1318, %v1319
        %v1321 = vrot.slane %v1320, 2
        %v1322 = vadd.f32 %v1320, %v1321
        %v1323 = vrot.slane %v1322, 1
        %v1324 = vadd.f32 %v1322, %v1323
        %v1325 = vmul.f32 %v1250, %v1250
        %v1326 = vmul.f32 %v1251, %v1251
        %v1327 = vmul.f32 %v1252, %v1252
        %v1328 = vmul.f32 %v1253, %v1253
        %v1329 = vmul.f32 %v1254, %v1254
        %v1330 = vmul.f32 %v1255, %v1255
        %v1331 = vmul.f32 %v1256, %v1256
        %v1332 = vmul.f32 %v1257, %v1257
        %v1333 = vmul.f32 %v1258, %v1258
        %v1334 = vmul.f32 %v1259, %v1259
        %v1335 = vmul.f32 %v1260, %v1260
        %v1336 = vmul.f32 %v1261, %v1261
        %v1337 = vmul.f32 %v1262, %v1262
        %v1338 = vmul.f32 %v1263, %v1263
        %v1339 = vmul.f32 %v1264, %v1264
        %v1340 = vmul.f32 %v1265, %v1265
        %v1341 = vmul.f32 %v1266, %v1266
        %v1342 = vmul.f32 %v1267, %v1267
        %v1343 = vmul.f32 %v1268, %v1268
        %v1344 = vmul.f32 %v1269, %v1269
        %v1345 = vmul.f32 %v1270, %v1270
        %v1346 = vmul.f32 %v1271, %v1271
        %v1347 = vmul.f32 %v1272, %v1272
        %v1348 = vmul.f32 %v1273, %v1273
        %v1349 = vmul.f32 %v1274, %v1274
        %v1350 = vmul.f32 %v1275, %v1275
        %v1351 = vmul.f32 %v1276, %v1276
        %v1352 = vmul.f32 %v1277, %v1277
        %v1353 = vmul.f32 %v1278, %v1278
        %v1354 = vmul.f32 %v1279, %v1279
        %v1355 = vmul.f32 %v1280, %v1280
        %v1356 = vmul.f32 %v1281, %v1281
        %v1357 = vmul.f32 %v1282, %v1282
        %v1358 = vmul.f32 %v1283, %v1283
        %v1359 = vmul.f32 %v1284, %v1284
        %v1360 = vadd.f32 %v1325, %v1326
        %v1361 = vadd.f32 %v1360, %v1327
        %v1362 = vadd.f32 %v1361, %v1328
        %v1363 = vadd.f32 %v1362, %v1329
        %v1364 = vadd.f32 %v1363, %v1330
        %v1365 = vadd.f32 %v1364, %v1331
        %v1366 = vadd.f32 %v1365, %v1332
        %v1367 = vadd.f32 %v1366, %v1333
        %v1368 = vadd.f32 %v1367, %v1334
        %v1369 = vadd.f32 %v1368, %v1335
        %v1370 = vadd.f32 %v1369, %v1336
        %v1371 = vadd.f32 %v1370, %v1337
        %v1372 = vadd.f32 %v1371, %v1338
        %v1373 = vadd.f32 %v1372, %v1339
        %v1374 = vadd.f32 %v1373, %v1340
        %v1375 = vadd.f32 %v1374, %v1341
        %v1376 = vadd.f32 %v1375, %v1342
        %v1377 = vadd.f32 %v1376, %v1343
        %v1378 = vadd.f32 %v1377, %v1344
        %v1379 = vadd.f32 %v1378, %v1345
        %v1380 = vadd.f32 %v1379, %v1346
        %v1381 = vadd.f32 %v1380, %v1347
        %v1382 = vadd.f32 %v1381, %v1348
        %v1383 = vadd.f32 %v1382, %v1349
        %v1384 = vadd.f32 %v1383, %v1350
        %v1385 = vadd.f32 %v1384, %v1351
        %v1386 = vadd.f32 %v1385, %v1352
        %v1387 = vadd.f32 %v1386, %v1353
        %v1388 = vadd.f32 %v1387, %v1354
        %v1389 = vadd.f32 %v1388, %v1355
        %v1390 = vadd.f32 %v1389, %v1356
        %v1391 = vadd.f32 %v1390, %v1357
        %v1392 = vadd.f32 %v1391, %v1358
        %v1393 = vadd.f32 %v1392, %v1359
        %v1394 = vrot.slane %v1393, 4
        %v1395 = vadd.f32 %v1393, %v1394
        %v1396 = vrot.slane %v1395, 2
        %v1397 = vadd.f32 %v1395, %v1396
        %v1398 = vrot.slane %v1397, 1
        %v1399 = vadd.f32 %v1397, %v1398
        %v1400 = vld [vmem:[#allocation4] sm:$0x1]
        %v1401 = vadd.f32 %v1400, %v1324
        %1402 = vst [vmem:[#allocation4] sm:$0x1] %v1401
        %v1403 = vld [vmem:[#allocation4 + $0x1] sm:$0x1]
        %v1404 = vadd.f32 %v1403, %v1399
        %1405 = vst [vmem:[#allocation4 + $0x1] sm:$0x1] %v1404
      $region63: #{forward.11} parent=39 // pred_fallthru
        _
      %p1406 = scmp.eq.s32.totalorder %s21, 1
      // Predicated region
      $region68: #{forward.11} parent=39 // pred_check
        %p1407 = pneg %p1406
      $region69: #{forward.11} parent=39 // pred_check_branch
        %1409 = sbr.rel (%p1407) target = $region71
      $region70: #{forward.11} parent=39 // pred_region
        %v1410 = vld [vmem:[#allocation4] sm:$0x1]
        %v1411 = vld [vmem:[#allocation4 + $0x1] sm:$0x1]
        %v1412 = vmul.f32 %v1410, 0.001953125
        %v1413 = vmul.f32 %v1411, 0.001953125
        %v1414 = vmul.f32 %v1412, %v1412
        %v1415 = vsub.f32 %v1413, %v1414
        %v1416 = vmax.f32 %v1415, 0.0
        %v1417 = vadd.f32 %v1416, 1e-05
        %v1418 = vrsqrt.pop %v1417
        %v1419 = vmul.f32 %v1418, %v1417
        %v1420 = vmul.f32 %v1419, %v1418
        %v1421 = vmul.f32 0.5, %v1420
        %v1422 = vsub.f32 1.5, %v1421
        %v1423 = vmul.f32 %v1418, %v1422
        %vm1424 = vweird.f32 %v1417
        %vm1425 = vweird.f32 %v1418
        %vm1426 = vmor %vm1424, %vm1425
        %v1427 = vsel %vm1426, %v1418, %v1423
        %v1428 = vld [vmem:[%s3] sm:$0x1]
        %v1429 = vmul.f32 %v1427, %v1428
        %v1430 = vld [vmem:[%s4] sm:$0x1]
        %v1431 = vmul.f32 %v1412, %v1429
        %v1432 = vsub.f32 %v1430, %v1431
        %v1433 = vperm.slane %v1429, 0
        %v1434 = vmul.f32 %v943, %v1433
        %v1435 = vmul.f32 %v945, %v1433
        %v1436 = vmul.f32 %v948, %v1433
        %v1437 = vmul.f32 %v950, %v1433
        %v1438 = vmul.f32 %v953, %v1433
        %v1439 = vmul.f32 %v955, %v1433
        %v1440 = vmul.f32 %v958, %v1433
        %v1441 = vmul.f32 %v960, %v1433
        %v1442 = vmul.f32 %v963, %v1433
        %v1443 = vmul.f32 %v965, %v1433
        %v1444 = vmul.f32 %v968, %v1433
        %v1445 = vmul.f32 %v970, %v1433
        %v1446 = vmul.f32 %v973, %v1433
        %v1447 = vmul.f32 %v975, %v1433
        %v1448 = vmul.f32 %v978, %v1433
        %v1449 = vmul.f32 %v980, %v1433
        %v1450 = vmul.f32 %v983, %v1433
        %v1451 = vmul.f32 %v985, %v1433
        %v1452 = vmul.f32 %v988, %v1433
        %v1453 = vmul.f32 %v990, %v1433
        %v1454 = vmul.f32 %v993, %v1433
        %v1455 = vmul.f32 %v995, %v1433
        %v1456 = vmul.f32 %v998, %v1433
        %v1457 = vmul.f32 %v1000, %v1433
        %v1458 = vmul.f32 %v1003, %v1433
        %v1459 = vmul.f32 %v1005, %v1433
        %v1460 = vmul.f32 %v1008, %v1433
        %v1461 = vmul.f32 %v1010, %v1433
        %v1462 = vmul.f32 %v1013, %v1433
        %v1463 = vmul.f32 %v1015, %v1433
        %v1464 = vmul.f32 %v1018, %v1433
        %v1465 = vmul.f32 %v1020, %v1433
        %v1466 = vmul.f32 %v1023, %v1433
        %v1467 = vmul.f32 %v1025, %v1433
        %v1468 = vmul.f32 %v1028, %v1433
        %v1470 = vperm.slane %v1432, 0
        %v1472 = vadd.f32 %v1434, %v1470
        %v1473 = vadd.f32 %v1435, %v1470
        %v1474 = vadd.f32 %v1436, %v1470
        %v1475 = vadd.f32 %v1437, %v1470
        %v1476 = vadd.f32 %v1438, %v1470
        %v1477 = vadd.f32 %v1439, %v1470
        %v1478 = vadd.f32 %v1440, %v1470
        %v1479 = vadd.f32 %v1441, %v1470
        %v1480 = vadd.f32 %v1442, %v1470
        %v1481 = vadd.f32 %v1443, %v1470
        %v1482 = vadd.f32 %v1444, %v1470
        %v1483 = vadd.f32 %v1445, %v1470
        %v1484 = vadd.f32 %v1446, %v1470
        %v1485 = vadd.f32 %v1447, %v1470
        %v1486 = vadd.f32 %v1448, %v1470
        %v1487 = vadd.f32 %v1449, %v1470
        %v1488 = vadd.f32 %v1450, %v1470
        %v1489 = vadd.f32 %v1451, %v1470
        %v1490 = vadd.f32 %v1452, %v1470
        %v1491 = vadd.f32 %v1453, %v1470
        %v1492 = vadd.f32 %v1454, %v1470
        %v1493 = vadd.f32 %v1455, %v1470
        %v1494 = vadd.f32 %v1456, %v1470
        %v1495 = vadd.f32 %v1457, %v1470
        %v1496 = vadd.f32 %v1458, %v1470
        %v1497 = vadd.f32 %v1459, %v1470
        %v1498 = vadd.f32 %v1460, %v1470
        %v1499 = vadd.f32 %v1461, %v1470
        %v1500 = vadd.f32 %v1462, %v1470
        %v1501 = vadd.f32 %v1463, %v1470
        %v1502 = vadd.f32 %v1464, %v1470
        %v1503 = vadd.f32 %v1465, %v1470
        %v1504 = vadd.f32 %v1466, %v1470
        %v1505 = vadd.f32 %v1467, %v1470
        %v1506 = vadd.f32 %v1468, %v1470
        %v1507 = vmul.f32 %v1472, 0.01
        %v1508 = vmul.f32 %v1473, 0.01
        %v1509 = vmul.f32 %v1474, 0.01
        %v1510 = vmul.f32 %v1475, 0.01
        %v1511 = vmul.f32 %v1476, 0.01
        %v1512 = vmul.f32 %v1477, 0.01
        %v1513 = vmul.f32 %v1478, 0.01
        %v1514 = vmul.f32 %v1479, 0.01
        %v1515 = vmul.f32 %v1480, 0.01
        %v1516 = vmul.f32 %v1481, 0.01
        %v1517 = vmul.f32 %v1482, 0.01
        %v1518 = vmul.f32 %v1483, 0.01
        %v1519 = vmul.f32 %v1484, 0.01
        %v1520 = vmul.f32 %v1485, 0.01
        %v1521 = vmul.f32 %v1486, 0.01
        %v1522 = vmul.f32 %v1487, 0.01
        %v1523 = vmul.f32 %v1488, 0.01
        %v1524 = vmul.f32 %v1489, 0.01
        %v1525 = vmul.f32 %v1490, 0.01
        %v1526 = vmul.f32 %v1491, 0.01
        %v1527 = vmul.f32 %v1492, 0.01
        %v1528 = vmul.f32 %v1493, 0.01
        %v1529 = vmul.f32 %v1494, 0.01
        %v1530 = vmul.f32 %v1495, 0.01
        %v1531 = vmul.f32 %v1496, 0.01
        %v1532 = vmul.f32 %v1497, 0.01
        %v1533 = vmul.f32 %v1498, 0.01
        %v1534 = vmul.f32 %v1499, 0.01
        %v1535 = vmul.f32 %v1500, 0.01
        %v1536 = vmul.f32 %v1501, 0.01
        %v1537 = vmul.f32 %v1502, 0.01
        %v1538 = vmul.f32 %v1503, 0.01
        %v1539 = vmul.f32 %v1504, 0.01
        %v1540 = vmul.f32 %v1505, 0.01
        %v1541 = vmul.f32 %v1506, 0.01
        %v1542 = vmax.f32 %v1472, %v1507
        %v1543 = vmax.f32 %v1473, %v1508
        %v1544 = vmax.f32 %v1474, %v1509
        %v1545 = vmax.f32 %v1475, %v1510
        %v1546 = vmax.f32 %v1476, %v1511
        %v1547 = vmax.f32 %v1477, %v1512
        %v1548 = vmax.f32 %v1478, %v1513
        %v1549 = vmax.f32 %v1479, %v1514
        %v1550 = vmax.f32 %v1480, %v1515
        %v1551 = vmax.f32 %v1481, %v1516
        %v1552 = vmax.f32 %v1482, %v1517
        %v1553 = vmax.f32 %v1483, %v1518
        %v1554 = vmax.f32 %v1484, %v1519
        %v1555 = vmax.f32 %v1485, %v1520
        %v1556 = vmax.f32 %v1486, %v1521
        %v1557 = vmax.f32 %v1487, %v1522
        %v1558 = vmax.f32 %v1488, %v1523
        %v1559 = vmax.f32 %v1489, %v1524
        %v1560 = vmax.f32 %v1490, %v1525
        %v1561 = vmax.f32 %v1491, %v1526
        %v1562 = vmax.f32 %v1492, %v1527
        %v1563 = vmax.f32 %v1493, %v1528
        %v1564 = vmax.f32 %v1494, %v1529
        %v1565 = vmax.f32 %v1495, %v1530
        %v1566 = vmax.f32 %v1496, %v1531
        %v1567 = vmax.f32 %v1497, %v1532
        %v1568 = vmax.f32 %v1498, %v1533
        %v1569 = vmax.f32 %v1499, %v1534
        %v1570 = vmax.f32 %v1500, %v1535
        %v1571 = vmax.f32 %v1501, %v1536
        %v1572 = vmax.f32 %v1502, %v1537
        %v1573 = vmax.f32 %v1503, %v1538
        %v1574 = vmax.f32 %v1504, %v1539
        %v1575 = vmax.f32 %v1505, %v1540
        %v1576 = vmax.f32 %v1506, %v1541
        %v1577 = vpack.c.bf16 %v1542, %v1542
        %v1578 = vpack.c.bf16 %v1543, %v1543
        %v1579 = vpack.c.bf16 %v1544, %v1544
        %v1580 = vpack.c.bf16 %v1545, %v1545
        %v1581 = vpack.c.bf16 %v1546, %v1546
        %v1582 = vpack.c.bf16 %v1547, %v1547
        %v1583 = vpack.c.bf16 %v1548, %v1548
        %v1584 = vpack.c.bf16 %v1549, %v1549
        %v1585 = vpack.c.bf16 %v1550, %v1550
        %v1586 = vpack.c.bf16 %v1551, %v1551
        %v1587 = vpack.c.bf16 %v1552, %v1552
        %v1588 = vpack.c.bf16 %v1553, %v1553
        %v1589 = vpack.c.bf16 %v1554, %v1554
        %v1590 = vpack.c.bf16 %v1555, %v1555
        %v1591 = vpack.c.bf16 %v1556, %v1556
        %v1592 = vpack.c.bf16 %v1557, %v1557
        %v1593 = vpack.c.bf16 %v1558, %v1558
        %v1594 = vpack.c.bf16 %v1559, %v1559
        %v1595 = vpack.c.bf16 %v1560, %v1560
        %v1596 = vpack.c.bf16 %v1561, %v1561
        %v1597 = vpack.c.bf16 %v1562, %v1562
        %v1598 = vpack.c.bf16 %v1563, %v1563
        %v1599 = vpack.c.bf16 %v1564, %v1564
        %v1600 = vpack.c.bf16 %v1565, %v1565
        %v1601 = vpack.c.bf16 %v1566, %v1566
        %v1602 = vpack.c.bf16 %v1567, %v1567
        %v1603 = vpack.c.bf16 %v1568, %v1568
        %v1604 = vpack.c.bf16 %v1569, %v1569
        %v1605 = vpack.c.bf16 %v1570, %v1570
        %v1606 = vpack.c.bf16 %v1571, %v1571
        %v1607 = vpack.c.bf16 %v1572, %v1572
        %v1608 = vpack.c.bf16 %v1573, %v1573
        %v1609 = vpack.c.bf16 %v1574, %v1574
        %v1610 = vpack.c.bf16 %v1575, %v1575
        %v1611 = vpack.c.bf16 %v1576, %v1576
        %1612 = vst [vmem:[%s243] sm:$0xf] %v1577
        %1613 = vst [vmem:[%s243 + $0x4] sm:$0xf] %v1578
        %1614 = vst [vmem:[%s243 + $0x8] sm:$0xf] %v1579
        %1615 = vst [vmem:[%s243 + $0xc] sm:$0xf] %v1580
        %1616 = vst [vmem:[%s243 + $0x10] sm:$0xf] %v1581
        %1617 = vst [vmem:[%s243 + $0x14] sm:$0xf] %v1582
        %1618 = vst [vmem:[%s243 + $0x18] sm:$0xf] %v1583
        %1619 = vst [vmem:[%s243 + $0x1c] sm:$0xf] %v1584
        %1620 = vst [vmem:[%s243 + $0x20] sm:$0xf] %v1585
        %1621 = vst [vmem:[%s243 + $0x24] sm:$0xf] %v1586
        %1622 = vst [vmem:[%s243 + $0x28] sm:$0xf] %v1587
        %1623 = vst [vmem:[%s243 + $0x2c] sm:$0xf] %v1588
        %1624 = vst [vmem:[%s243 + $0x30] sm:$0xf] %v1589
        %1625 = vst [vmem:[%s243 + $0x34] sm:$0xf] %v1590
        %1626 = vst [vmem:[%s243 + $0x38] sm:$0xf] %v1591
        %1627 = vst [vmem:[%s243 + $0x3c] sm:$0xf] %v1592
        %1628 = vst [vmem:[%s243 + $0x40] sm:$0xf] %v1593
        %1629 = vst [vmem:[%s243 + $0x44] sm:$0xf] %v1594
        %1630 = vst [vmem:[%s243 + $0x48] sm:$0xf] %v1595
        %1631 = vst [vmem:[%s243 + $0x4c] sm:$0xf] %v1596
        %1632 = vst [vmem:[%s243 + $0x50] sm:$0xf] %v1597
        %1633 = vst [vmem:[%s243 + $0x54] sm:$0xf] %v1598
        %1634 = vst [vmem:[%s243 + $0x58] sm:$0xf] %v1599
        %1635 = vst [vmem:[%s243 + $0x5c] sm:$0xf] %v1600
        %1636 = vst [vmem:[%s243 + $0x60] sm:$0xf] %v1601
        %1637 = vst [vmem:[%s243 + $0x64] sm:$0xf] %v1602
        %1638 = vst [vmem:[%s243 + $0x68] sm:$0xf] %v1603
        %1639 = vst [vmem:[%s243 + $0x6c] sm:$0xf] %v1604
        %1640 = vst [vmem:[%s243 + $0x70] sm:$0xf] %v1605
        %1641 = vst [vmem:[%s243 + $0x74] sm:$0xf] %v1606
        %1642 = vst [vmem:[%s243 + $0x78] sm:$0xf] %v1607
        %1643 = vst [vmem:[%s243 + $0x7c] sm:$0xf] %v1608
        %1644 = vst [vmem:[%s243 + $0x80] sm:$0xf] %v1609
        %1645 = vst [vmem:[%s243 + $0x84] sm:$0xf] %v1610
        %1646 = vst [vmem:[%s243 + $0x88] sm:$0xf] %v1611
      $region71: #{forward.11} parent=39 // pred_fallthru
        _
      %s1647 = smul.u32 %s21, %s22
      %s1648 = smul.u32 35, %s1647
      %p1649 = scmp.lt.s32.totalorder %s1648, 69
      %s1650 = scalar_select %p1649, %s1648, 69
      %s1651 = smul.addr %s1650, 4
      %s1652 = scalar_lea.vmem %s6, %s1651
      // Predicated region
      $region72: #{forward.11} parent=39 // pred_check
        %p1653 = pneg %p159
      $region73: #{forward.11} parent=39 // pred_check_branch
        %1655 = sbr.rel (%p1653) target = $region75
      $region74: #{forward.11} parent=39 // pred_region
        %s1656 = smul.u32 %s21, %s22
        %s1657 = smul.u32 35, %s1656
      $region75: #{forward.11} parent=39 // pred_fallthru
        _
    $region40: #{forward.11} parent=5 // pred_fallthru
      _
    %p1658 = scmp.le.s32.totalorder 2, %s12
    // Predicated region
    $region76: #{forward.11} parent=5 // pred_check
      %p1659 = pneg %p1658
    $region77: #{forward.11} parent=5 // pred_check_branch
      %1661 = sbr.rel (%p1659) target = $region79
    $region78: #{forward.11} parent=5 // pred_region
      %s1662 = ssub.s32 %s12, 2
      // Predicated region
      $region80: #{forward.11} parent=78 // pred_check
        %p1663 = pneg %p165
      $region81: #{forward.11} parent=78 // pred_check_branch
        %1665 = sbr.rel (%p1663) target = $region83
      $region82: #{forward.11} parent=78 // pred_region
        %s1666 = smul.u32 %s23, %s24
        %s1667 = smul.u32 35, %s1666
        %p1668 = scmp.lt.s32.totalorder %s1667, 69
        %s1669 = scalar_select %p1668, %s1667, 69
        %s1670 = smul.addr %s1669, 4
        %s1671 = scalar_lea.vmem %s6, %s1670
      $region83: #{forward.11} parent=78 // pred_fallthru
        _
    $region79: #{forward.11} parent=5 // pred_fallthru
      _
  $region6: #{forward.11} parent=0 // loop_footer
    %s16 = sadd.s32 1, %s12
  $region7: #{forward.11} parent=0 // loop_footer_branch
    %11 = sbr.rel target = $region3
  $region8: #{forward.11} parent=0 // loop_exit
    _
  %1672 = vsyncmov [#allocation3]
  %s1673 = vpop.sfrf %1672
  %p1674 = scmp.eq.s32.totalorder %s1673, 0
  %p1675 = pneg %p1674
  %1677 = shalt.err (%p1675)

// kernel: forward.12
$region0: #{forward.12}
  #allocation0 [shape = 'u32[]', space=smem, size = 0x4, offset = 0x4, fixed_abs, tag = 'smem constant byte address 0x4 - core index']
  #allocation1 [shape = 'u32[72,128]{1,0:T(1,128)}', space=vmem, size = 0x9000, scoped, tag = 'internal scratch']
  #allocation2 [shape = 'bf16[168,32]{1,0:T(8,128)(2,1)}', space=vmem, size = 0xa800, scoped, tag = 'scratch operand']
  #allocation3 [shape = 's32[1]{0}', space=sflag, size = 0x4, scoped, tag = 'scratch operand']
  #allocation4 [shape = 'f32[2,128]{1,0:T(2,128)}', space=vmem, size = 0x400, scoped, tag = 'scratch operand']
  #allocation5 [shape = 's32[]', space=sflag, size = 0x4, offset = 0, fixed_abs, tag = 'sflag constant byte address 0x0 - dummy sync flag']
  %s0 = inlined_call_operand.vmem [shape: bf16[168,32], index: 0, kind: input, shape index: {}]
  %s1 = inlined_call_operand.vmem [shape: bf16[128,128], index: 1, kind: input, shape index: {}]
  %s2 = inlined_call_operand.vmem [shape: f32[1,128], index: 2, kind: input, shape index: {}]
  %s3 = inlined_call_operand.vmem [shape: f32[1,128], index: 3, kind: input, shape index: {}]
  %s4 = inlined_call_operand.vmem [shape: f32[1,128], index: 4, kind: input, shape index: {}]
  %s5 = inlined_call_operand.vmem [shape: f32[152,1], index: 5, kind: input, shape index: {}]
  %s6 = inlined_call_operand.vmem [shape: bf16[152,128], index: 6, kind: output, shape index: {}]
  %s7 = sld [smem:[#allocation0]]
  $region52: #{forward.12} parent=0
    _
  %s9 = ssub.s32 1, %s7
  %s10 = scalar_select 0, %s9, %s7
  // Predicated region
  $region2: #{forward.12} parent=0 // pred_check
    _
  $region3: #{forward.12} parent=0 // pred_check_branch
    %12 = sbr.rel (0) target = $region5
  $region4: #{forward.12} parent=0 // pred_region
    _
  $region5: #{forward.12} parent=0 // pred_fallthru
    _
  // Predicated region
  $region6: #{forward.12} parent=0 // pred_check
    _
  $region7: #{forward.12} parent=0 // pred_check_branch
    %14 = sbr.rel (0) target = $region9
  $region8: #{forward.12} parent=0 // pred_region
    _
  $region9: #{forward.12} parent=0 // pred_fallthru
    _
  // Predicated region
  $region10: #{forward.12} parent=0 // pred_check
    _
  $region11: #{forward.12} parent=0 // pred_check_branch
    %16 = sbr.rel (0) target = $region13
  $region12: #{forward.12} parent=0 // pred_region
    _
  $region13: #{forward.12} parent=0 // pred_fallthru
    _
  // Predicated region
  $region14: #{forward.12} parent=0 // pred_check
    _
  $region15: #{forward.12} parent=0 // pred_check_branch
    %18 = sbr.rel (0) target = $region17
  $region16: #{forward.12} parent=0 // pred_region
    _
  $region17: #{forward.12} parent=0 // pred_fallthru
    _
  // Predicated region
  $region18: #{forward.12} parent=0 // pred_check
    _
  $region19: #{forward.12} parent=0 // pred_check_branch
    %20 = sbr.rel (0) target = $region21
  $region20: #{forward.12} parent=0 // pred_region
    _
  $region21: #{forward.12} parent=0 // pred_fallthru
    _
  %s21 = smul.u32 0, 0
  %s22 = smul.u32 19, %s21
  %p23 = scmp.lt.s32.totalorder %s22, 18
  %s24 = scalar_select %p23, %s22, 18
  %s25 = smul.addr %s24, 4
  %s26 = scalar_lea.vmem %s6, %s25
  %s27 = smul.u32 0, 0
  %s28 = smul.u32 19, %s27
  %p29 = scmp.lt.s32.totalorder %s28, 18
  %s30 = scalar_select %p29, %s28, 18
  %s31 = smul.addr %s30, 4
  %s32 = scalar_lea.vmem %s6, %s31
  %s33 = smul.u32 0, 0
  %s34 = smul.u32 19, %s33
  %s35 = smul.u32 0, 152
  %s36 = sshra.s32 %s35, 3
  %s37 = sand.u32 %s35, 7
  %s38 = smul.addr %s36, 4
  %s39 = scalar_lea.vmem %s0, %s38
  // Predicated region
  $region22: #{forward.12} parent=0 // pred_check
    _
  $region23: #{forward.12} parent=0 // pred_check_branch
    %41 = sbr.rel (0) target = $region25
  $region24: #{forward.12} parent=0 // pred_region
    %s42 = scalar_lea.vmem %s39, 80
    %s43 = scalar_lea.vmem [#allocation2], 80
    loop: start=0, step=1, limit=1
    $region26: #{forward.12} parent=24 // loop_pre_header
      _
    $region27: #{forward.12} parent=24 // loop_header
      %s45 = sphi 0, %s49
      %p46 = scmp.ge.s32.totalorder %s45, 1
      %s50 = sphi %s39, %s39
      %s51 = sphi [#allocation2], [#allocation2]
    $region28: #{forward.12} parent=24 // loop_header_branch
      %48 = sbr.rel (%p46) target = $region32
    $region29: #{forward.12} parent=24 // loop_body
      %v52 = vld [vmem:[%s50] sm:$0xff]
      %53 = vst [vmem:[%s51] sm:$0xff] %v52
      %v54 = vld [vmem:[%s50 + $0x8] sm:$0xff]
      %55 = vst [vmem:[%s51 + $0x8] sm:$0xff] %v54
      %v56 = vld [vmem:[%s50 + $0x10] sm:$0xff]
      %57 = vst [vmem:[%s51 + $0x10] sm:$0xff] %v56
      %v58 = vld [vmem:[%s50 + $0x18] sm:$0xff]
      %59 = vst [vmem:[%s51 + $0x18] sm:$0xff] %v58
      %v60 = vld [vmem:[%s50 + $0x20] sm:$0xff]
      %61 = vst [vmem:[%s51 + $0x20] sm:$0xff] %v60
      %v62 = vld [vmem:[%s50 + $0x28] sm:$0xff]
      %63 = vst [vmem:[%s51 + $0x28] sm:$0xff] %v62
      %v64 = vld [vmem:[%s50 + $0x30] sm:$0xff]
      %65 = vst [vmem:[%s51 + $0x30] sm:$0xff] %v64
      %v66 = vld [vmem:[%s50 + $0x38] sm:$0xff]
      %67 = vst [vmem:[%s51 + $0x38] sm:$0xff] %v66
      %v68 = vld [vmem:[%s50 + $0x40] sm:$0xff]
      %69 = vst [vmem:[%s51 + $0x40] sm:$0xff] %v68
      %v70 = vld [vmem:[%s50 + $0x48] sm:$0xff]
      %71 = vst [vmem:[%s51 + $0x48] sm:$0xff] %v70
    $region30: #{forward.12} parent=24 // loop_footer
      %s49 = sadd.s32 1, %s45
    $region31: #{forward.12} parent=24 // loop_footer_branch
      %44 = sbr.rel target = $region27
    $region32: #{forward.12} parent=24 // loop_exit
      _
    %s73 = ssub.s32 16, 1
    loop: start=0, step=1, limit=1
    $region33: #{forward.12} parent=24 // loop_pre_header
      _
    $region34: #{forward.12} parent=24 // loop_header
      %s75 = sphi 0, %s79
      %p76 = scmp.ge.s32.totalorder %s75, 1
      %s80 = sphi %s42, %s42
      %s81 = sphi %s43, %s43
    $region35: #{forward.12} parent=24 // loop_header_branch
      %78 = sbr.rel (%p76) target = $region39
    $region36: #{forward.12} parent=24 // loop_body
      %v82 = vld [vmem:[%s80] sm:%s73]
      %83 = vst [vmem:[%s81] sm:%s73] %v82
    $region37: #{forward.12} parent=24 // loop_footer
      %s79 = sadd.s32 1, %s75
    $region38: #{forward.12} parent=24 // loop_footer_branch
      %74 = sbr.rel target = $region34
    $region39: #{forward.12} parent=24 // loop_exit
      _
  $region25: #{forward.12} parent=0 // pred_fallthru
    _
  // Predicated region
  $region40: #{forward.12} parent=0 // pred_check
    _
  $region41: #{forward.12} parent=0 // pred_check_branch
    %86 = sbr.rel (0) target = $region43
  $region42: #{forward.12} parent=0 // pred_region
    %87 = vsyncadd [#allocation3], 1344
  $region43: #{forward.12} parent=0 // pred_fallthru
    _
  %s88 = smul.u32 4, 21
  %s89 = smul.u32 %s88, 1
  %s90 = sshll.u32 %s89, 4
  %91 = dma.done [#allocation3], %s90
  %v92 = vld [vmem:[#allocation2] sm:$0xf]
  %v93 = vld [vmem:[#allocation2 + $0x4] sm:$0xf]
  %v94 = vld [vmem:[#allocation2 + $0x8] sm:$0xf]
  %v95 = vld [vmem:[#allocation2 + $0xc] sm:$0xf]
  %v96 = vld [vmem:[#allocation2 + $0x10] sm:$0xf]
  %v97 = vld [vmem:[#allocation2 + $0x14] sm:$0xf]
  %v98 = vld [vmem:[#allocation2 + $0x18] sm:$0xf]
  %v99 = vld [vmem:[#allocation2 + $0x1c] sm:$0xf]
  %v100 = vld [vmem:[#allocation2 + $0x20] sm:$0xf]
  %v101 = vld [vmem:[#allocation2 + $0x24] sm:$0xf]
  %v102 = vld [vmem:[#allocation2 + $0x28] sm:$0xf]
  %v103 = vld [vmem:[#allocation2 + $0x2c] sm:$0xf]
  %v104 = vld [vmem:[#allocation2 + $0x30] sm:$0xf]
  %v105 = vld [vmem:[#allocation2 + $0x34] sm:$0xf]
  %v106 = vld [vmem:[#allocation2 + $0x38] sm:$0xf]
  %v107 = vld [vmem:[#allocation2 + $0x3c] sm:$0xf]
  %v108 = vld [vmem:[#allocation2 + $0x40] sm:$0xf]
  %v109 = vld [vmem:[#allocation2 + $0x44] sm:$0xf]
  %v110 = vld [vmem:[#allocation2 + $0x48] sm:$0xf]
  %v111 = vld [vmem:[#allocation2 + $0x4c] sm:$0x1]
  %v112 = vld [vmem:[#allocation2 + $0x4c] sm:$0xf]
  %v113 = vld [vmem:[#allocation2 + $0x50] sm:$0x1]
  %v114 = vld [vmem:[#allocation2 + $0x4] sm:$0xe]
  %v134 = vunpack.c.l.b16 %v92
  %v135 = vunpack.c.l.b16 %v93
  %v136 = vunpack.c.l.b16 %v94
  %v137 = vunpack.c.l.b16 %v95
  %v138 = vunpack.c.l.b16 %v96
  %v139 = vunpack.c.l.b16 %v97
  %v140 = vunpack.c.l.b16 %v98
  %v141 = vunpack.c.l.b16 %v99
  %v142 = vunpack.c.l.b16 %v100
  %v143 = vunpack.c.l.b16 %v101
  %v144 = vunpack.c.l.b16 %v102
  %v145 = vunpack.c.l.b16 %v103
  %v146 = vunpack.c.l.b16 %v104
  %v147 = vunpack.c.l.b16 %v105
  %v148 = vunpack.c.l.b16 %v106
  %v149 = vunpack.c.l.b16 %v107
  %v150 = vunpack.c.l.b16 %v108
  %v151 = vunpack.c.l.b16 %v109
  %v152 = vunpack.c.l.b16 %v110
  %v153 = vpack.c.b16 %v135, %v134
  %v154 = vpack.c.b16 %v137, %v136
  %v155 = vpack.c.b16 %v139, %v138
  %v156 = vpack.c.b16 %v141, %v140
  %v157 = vpack.c.b16 %v143, %v142
  %v158 = vpack.c.b16 %v145, %v144
  %v159 = vpack.c.b16 %v147, %v146
  %v160 = vpack.c.b16 %v149, %v148
  %v161 = vpack.c.b16 %v151, %v150
  %v162 = vpack.c.b16 %v152, %v152
  %v164 = vunpack.c.l.b16 %v111
  %v165 = vpack.c.b16 %v164, %v152
  %vm166 = vsmask.f32 7424
  %v168 = vshrl.u32 %v153, 16
  %v170 = vshll.u32 %v153, 16
  %v172 = vrot.slane %v170, 1
  %v173 = vor.u32 %v168, %v172
  %v175 = vshll.u32 %v154, 16
  %v177 = vrot.slane %v175, 1
  %v178 = vsel %vm166, %v173, %v177
  %v179 = vshrl.u32 %v154, 16
  %v181 = vor.u32 %v179, %v177
  %v183 = vshll.u32 %v155, 16
  %v185 = vrot.slane %v183, 1
  %v186 = vsel %vm166, %v181, %v185
  %v187 = vshrl.u32 %v155, 16
  %v189 = vor.u32 %v187, %v185
  %v191 = vshll.u32 %v156, 16
  %v193 = vrot.slane %v191, 1
  %v194 = vsel %vm166, %v189, %v193
  %v195 = vshrl.u32 %v156, 16
  %v197 = vor.u32 %v195, %v193
  %v199 = vshll.u32 %v157, 16
  %v201 = vrot.slane %v199, 1
  %v202 = vsel %vm166, %v197, %v201
  %v203 = vshrl.u32 %v157, 16
  %v205 = vor.u32 %v203, %v201
  %v207 = vshll.u32 %v158, 16
  %v209 = vrot.slane %v207, 1
  %v210 = vsel %vm166, %v205, %v209
  %v211 = vshrl.u32 %v158, 16
  %v213 = vor.u32 %v211, %v209
  %v215 = vshll.u32 %v159, 16
  %v217 = vrot.slane %v215, 1
  %v218 = vsel %vm166, %v213, %v217
  %v219 = vshrl.u32 %v159, 16
  %v221 = vor.u32 %v219, %v217
  %v223 = vshll.u32 %v160, 16
  %v225 = vrot.slane %v223, 1
  %v226 = vsel %vm166, %v221, %v225
  %v227 = vshrl.u32 %v160, 16
  %v229 = vor.u32 %v227, %v225
  %v231 = vshll.u32 %v161, 16
  %v233 = vrot.slane %v231, 1
  %v234 = vsel %vm166, %v229, %v233
  %v235 = vshrl.u32 %v161, 16
  %v237 = vor.u32 %v235, %v233
  %v239 = vshll.u32 %v165, 16
  %v241 = vrot.slane %v239, 1
  %v242 = vsel %vm166, %v237, %v241
  %v243 = vshrl.u32 %v165, 16
  %v245 = vor.u32 %v243, %v241
  %246 = vrot.lane.b32.xlu0 %v178, 32
  %v247 = vpop.permute.xlu0 %246
  %248 = vrot.lane.b32.xlu0 %v186, 32
  %v249 = vpop.permute.xlu0 %248
  %250 = vrot.lane.b32.xlu0 %v194, 32
  %v251 = vpop.permute.xlu0 %250
  %252 = vrot.lane.b32.xlu0 %v202, 32
  %v253 = vpop.permute.xlu0 %252
  %254 = vrot.lane.b32.xlu0 %v210, 32
  %v255 = vpop.permute.xlu0 %254
  %256 = vrot.lane.b32.xlu0 %v218, 32
  %v257 = vpop.permute.xlu0 %256
  %258 = vrot.lane.b32.xlu0 %v226, 32
  %v259 = vpop.permute.xlu0 %258
  %260 = vrot.lane.b32.xlu0 %v234, 32
  %v261 = vpop.permute.xlu0 %260
  %262 = vrot.lane.b32.xlu0 %v242, 32
  %v263 = vpop.permute.xlu0 %262
  %264 = vrot.lane.b32.xlu0 %v245, 32
  %v265 = vpop.permute.xlu0 %264
  %v268 = vunpack.c.l.b16 %v112
  %v269 = vunpack.c.l.b16 %v113
  %v270 = vpack.c.b16 %v136, %v135
  %v271 = vpack.c.b16 %v138, %v137
  %v272 = vpack.c.b16 %v140, %v139
  %v273 = vpack.c.b16 %v142, %v141
  %v274 = vpack.c.b16 %v144, %v143
  %v275 = vpack.c.b16 %v146, %v145
  %v276 = vpack.c.b16 %v148, %v147
  %v277 = vpack.c.b16 %v150, %v149
  %v278 = vpack.c.b16 %v152, %v151
  %v279 = vpack.c.b16 %v269, %v268
  %v281 = vshrl.u32 %v270, 16
  %v283 = vshll.u32 %v270, 16
  %v285 = vrot.slane %v283, 1
  %v286 = vor.u32 %v281, %v285
  %v288 = vshll.u32 %v271, 16
  %v290 = vrot.slane %v288, 1
  %v291 = vsel %vm166, %v286, %v290
  %v292 = vshrl.u32 %v271, 16
  %v294 = vor.u32 %v292, %v290
  %v296 = vshll.u32 %v272, 16
  %v298 = vrot.slane %v296, 1
  %v299 = vsel %vm166, %v294, %v298
  %v300 = vshrl.u32 %v272, 16
  %v302 = vor.u32 %v300, %v298
  %v304 = vshll.u32 %v273, 16
  %v306 = vrot.slane %v304, 1
  %v307 = vsel %vm166, %v302, %v306
  %v308 = vshrl.u32 %v273, 16
  %v310 = vor.u32 %v308, %v306
  %v312 = vshll.u32 %v274, 16
  %v314 = vrot.slane %v312, 1
  %v315 = vsel %vm166, %v310, %v314
  %v316 = vshrl.u32 %v274, 16
  %v318 = vor.u32 %v316, %v314
  %v320 = vshll.u32 %v275, 16
  %v322 = vrot.slane %v320, 1
  %v323 = vsel %vm166, %v318, %v322
  %v324 = vshrl.u32 %v275, 16
  %v326 = vor.u32 %v324, %v322
  %v328 = vshll.u32 %v276, 16
  %v330 = vrot.slane %v328, 1
  %v331 = vsel %vm166, %v326, %v330
  %v332 = vshrl.u32 %v276, 16
  %v334 = vor.u32 %v332, %v330
  %v336 = vshll.u32 %v277, 16
  %v338 = vrot.slane %v336, 1
  %v339 = vsel %vm166, %v334, %v338
  %v340 = vshrl.u32 %v277, 16
  %v342 = vor.u32 %v340, %v338
  %v344 = vshll.u32 %v278, 16
  %v346 = vrot.slane %v344, 1
  %v347 = vsel %vm166, %v342, %v346
  %v348 = vshrl.u32 %v278, 16
  %v350 = vor.u32 %v348, %v346
  %v352 = vshll.u32 %v279, 16
  %v354 = vrot.slane %v352, 1
  %v355 = vsel %vm166, %v350, %v354
  %v356 = vshrl.u32 %v279, 16
  %v358 = vor.u32 %v356, %v354
  %359 = vrot.lane.b32.xlu0 %v291, 64
  %v360 = vpop.permute.xlu0 %359
  %361 = vrot.lane.b32.xlu0 %v299, 64
  %v362 = vpop.permute.xlu0 %361
  %363 = vrot.lane.b32.xlu0 %v307, 64
  %v364 = vpop.permute.xlu0 %363
  %365 = vrot.lane.b32.xlu0 %v315, 64
  %v366 = vpop.permute.xlu0 %365
  %367 = vrot.lane.b32.xlu0 %v323, 64
  %v368 = vpop.permute.xlu0 %367
  %369 = vrot.lane.b32.xlu0 %v331, 64
  %v370 = vpop.permute.xlu0 %369
  %371 = vrot.lane.b32.xlu0 %v339, 64
  %v372 = vpop.permute.xlu0 %371
  %373 = vrot.lane.b32.xlu0 %v347, 64
  %v374 = vpop.permute.xlu0 %373
  %375 = vrot.lane.b32.xlu0 %v355, 64
  %v376 = vpop.permute.xlu0 %375
  %377 = vrot.lane.b32.xlu0 %v358, 64
  %v378 = vpop.permute.xlu0 %377
  %v380 = vunpack.c.l.b16 %v114
  %v381 = vpack.c.b16 %v136, %v380
  %vm382 = vcmask 1046528
  %v383 = vrot.slane %v381, 1
  %v384 = vrot.slane %v271, 1
  %v385 = vsel %vm382, %v383, %v384
  %v386 = vrot.slane %v272, 1
  %v387 = vsel %vm382, %v384, %v386
  %v388 = vrot.slane %v273, 1
  %v389 = vsel %vm382, %v386, %v388
  %v390 = vrot.slane %v274, 1
  %v391 = vsel %vm382, %v388, %v390
  %v392 = vrot.slane %v275, 1
  %v393 = vsel %vm382, %v390, %v392
  %v394 = vrot.slane %v276, 1
  %v395 = vsel %vm382, %v392, %v394
  %v396 = vrot.slane %v277, 1
  %v397 = vsel %vm382, %v394, %v396
  %v398 = vrot.slane %v278, 1
  %v399 = vsel %vm382, %v396, %v398
  %v400 = vrot.slane %v279, 1
  %v401 = vsel %vm382, %v398, %v400
  %402 = vrot.lane.b32.xlu0 %v385, 96
  %v403 = vpop.permute.xlu0 %402
  %404 = vrot.lane.b32.xlu0 %v387, 96
  %v405 = vpop.permute.xlu0 %404
  %406 = vrot.lane.b32.xlu0 %v389, 96
  %v407 = vpop.permute.xlu0 %406
  %408 = vrot.lane.b32.xlu0 %v391, 96
  %v409 = vpop.permute.xlu0 %408
  %410 = vrot.lane.b32.xlu0 %v393, 96
  %v411 = vpop.permute.xlu0 %410
  %412 = vrot.lane.b32.xlu0 %v395, 96
  %v413 = vpop.permute.xlu0 %412
  %414 = vrot.lane.b32.xlu0 %v397, 96
  %v415 = vpop.permute.xlu0 %414
  %416 = vrot.lane.b32.xlu0 %v399, 96
  %v417 = vpop.permute.xlu0 %416
  %418 = vrot.lane.b32.xlu0 %v401, 96
  %v419 = vpop.permute.xlu0 %418
  %420 = vrot.lane.b32.xlu0 %v400, 96
  %v421 = vpop.permute.xlu0 %420
  %vm422 = vcmask 261120
  %v424 = vsel %vm422, %v153, %v247
  %v426 = vsel %vm422, %v154, %v249
  %v428 = vsel %vm422, %v155, %v251
  %v430 = vsel %vm422, %v156, %v253
  %v432 = vsel %vm422, %v157, %v255
  %v434 = vsel %vm422, %v158, %v257
  %v436 = vsel %vm422, %v159, %v259
  %v438 = vsel %vm422, %v160, %v261
  %v440 = vsel %vm422, %v161, %v263
  %v443 = vsel %vm422, %v162, %v265
  %vm444 = vcmask 523264
  %v446 = vsel %vm444, %v424, %v360
  %v448 = vsel %vm444, %v426, %v362
  %v450 = vsel %vm444, %v428, %v364
  %v452 = vsel %vm444, %v430, %v366
  %v454 = vsel %vm444, %v432, %v368
  %v456 = vsel %vm444, %v434, %v370
  %v458 = vsel %vm444, %v436, %v372
  %v460 = vsel %vm444, %v438, %v374
  %v462 = vsel %vm444, %v440, %v376
  %v464 = vsel %vm444, %v443, %v378
  %vm465 = vcmask 785408
  %v467 = vsel %vm465, %v446, %v403
  %v470 = vsel %vm465, %v448, %v405
  %v473 = vsel %vm465, %v450, %v407
  %v476 = vsel %vm465, %v452, %v409
  %v479 = vsel %vm465, %v454, %v411
  %v482 = vsel %vm465, %v456, %v413
  %v485 = vsel %vm465, %v458, %v415
  %v488 = vsel %vm465, %v460, %v417
  %v491 = vsel %vm465, %v462, %v419
  %v494 = vsel %vm465, %v464, %v421
  %v496 = vld [vmem:[%s1] sm:$0xf]
  %v497 = vld [vmem:[%s1 + $0x4] sm:$0xf]
  %v498 = vld [vmem:[%s1 + $0x8] sm:$0xf]
  %v499 = vld [vmem:[%s1 + $0xc] sm:$0xf]
  %v500 = vld [vmem:[%s1 + $0x10] sm:$0xf]
  %v501 = vld [vmem:[%s1 + $0x14] sm:$0xf]
  %v502 = vld [vmem:[%s1 + $0x18] sm:$0xf]
  %v503 = vld [vmem:[%s1 + $0x1c] sm:$0xf]
  %v504 = vld [vmem:[%s1 + $0x20] sm:$0xf]
  %v505 = vld [vmem:[%s1 + $0x24] sm:$0xf]
  %v506 = vld [vmem:[%s1 + $0x28] sm:$0xf]
  %v507 = vld [vmem:[%s1 + $0x2c] sm:$0xf]
  %v508 = vld [vmem:[%s1 + $0x30] sm:$0xf]
  %v509 = vld [vmem:[%s1 + $0x34] sm:$0xf]
  %v510 = vld [vmem:[%s1 + $0x38] sm:$0xf]
  %v511 = vld [vmem:[%s1 + $0x3c] sm:$0xf]
  %v512 = vld [vmem:[%s2] sm:$0x1]
  %v514 = vperm.slane %v512, 0
  %v532 = vunpack.c.l.b16 %v496
  %v533 = vunpack.c.l.b16 %v497
  %v534 = vunpack.c.l.b16 %v498
  %v535 = vunpack.c.l.b16 %v499
  %v536 = vunpack.c.l.b16 %v500
  %v537 = vunpack.c.l.b16 %v501
  %v538 = vunpack.c.l.b16 %v502
  %v539 = vunpack.c.l.b16 %v503
  %v540 = vunpack.c.l.b16 %v504
  %v541 = vunpack.c.l.b16 %v505
  %v542 = vunpack.c.l.b16 %v506
  %v543 = vunpack.c.l.b16 %v507
  %v544 = vunpack.c.l.b16 %v508
  %v545 = vunpack.c.l.b16 %v509
  %v546 = vunpack.c.l.b16 %v510
  %v547 = vunpack.c.l.b16 %v511
  %v548 = vpack.c.b16 %v533, %v532
  %v549 = vpack.c.b16 %v535, %v534
  %v550 = vpack.c.b16 %v537, %v536
  %v551 = vpack.c.b16 %v539, %v538
  %v552 = vpack.c.b16 %v541, %v540
  %v553 = vpack.c.b16 %v543, %v542
  %v554 = vpack.c.b16 %v545, %v544
  %v555 = vpack.c.b16 %v547, %v546
  %564 = vmatpush.bf16.msra.mxu0 %v555
  %565 = vmatpush.bf16.msra.mxu0 %v554
  %566 = vmatpush.bf16.msra.mxu0 %v553
  %567 = vmatpush.bf16.msra.mxu0 %v552
  %568 = vmatpush.bf16.msra.mxu0 %v551
  %569 = vmatpush.bf16.msra.mxu0 %v550
  %570 = vmatpush.bf16.msra.mxu0 %v549
  %571 = vmatpush.bf16.msra.mxu0 %v548
  %572 = vmatmul.bf16.gmra.mxu0 %v467
  %v573 = vpop.f32.mrf.mxu0
  %v574 = vadd.f32 %v514, %v573
  %v575 = vpop.f32.mrf.mxu0
  %v576 = vadd.f32 %v514, %v575
  %577 = vmatmul.bf16.gmra.mxu0 %v470
  %v578 = vpop.f32.mrf.mxu0
  %v579 = vadd.f32 %v514, %v578
  %v580 = vpop.f32.mrf.mxu0
  %v581 = vadd.f32 %v514, %v580
  %582 = vmatmul.bf16.gmra.mxu0 %v473
  %v583 = vpop.f32.mrf.mxu0
  %v584 = vadd.f32 %v514, %v583
  %v585 = vpop.f32.mrf.mxu0
  %v586 = vadd.f32 %v514, %v585
  %587 = vmatmul.bf16.gmra.mxu0 %v476
  %v588 = vpop.f32.mrf.mxu0
  %v589 = vadd.f32 %v514, %v588
  %v590 = vpop.f32.mrf.mxu0
  %v591 = vadd.f32 %v514, %v590
  %592 = vmatmul.bf16.gmra.mxu0 %v479
  %v593 = vpop.f32.mrf.mxu0
  %v594 = vadd.f32 %v514, %v593
  %v595 = vpop.f32.mrf.mxu0
  %v596 = vadd.f32 %v514, %v595
  %597 = vmatmul.bf16.gmra.mxu0 %v482
  %v598 = vpop.f32.mrf.mxu0
  %v599 = vadd.f32 %v514, %v598
  %v600 = vpop.f32.mrf.mxu0
  %v601 = vadd.f32 %v514, %v600
  %602 = vmatmul.bf16.gmra.mxu0 %v485
  %v603 = vpop.f32.mrf.mxu0
  %v604 = vadd.f32 %v514, %v603
  %v605 = vpop.f32.mrf.mxu0
  %v606 = vadd.f32 %v514, %v605
  %607 = vmatmul.bf16.gmra.mxu0 %v488
  %v608 = vpop.f32.mrf.mxu0
  %v609 = vadd.f32 %v514, %v608
  %v610 = vpop.f32.mrf.mxu0
  %v611 = vadd.f32 %v514, %v610
  %612 = vmatmul.bf16.gmra.mxu0 %v491
  %v613 = vpop.f32.mrf.mxu0
  %v614 = vadd.f32 %v514, %v613
  %v615 = vpop.f32.mrf.mxu0
  %v616 = vadd.f32 %v514, %v615
  %617 = vmatmul.bf16.gmra.mxu0 %v494
  %v618 = vpop.f32.mrf.mxu0
  %v619 = vadd.f32 %v514, %v618
  %v620 = vpop.f32.mrf.mxu0
  %621 = vdwg.mxu0
  %v622 = vld [vmem:[%s5] sm:$0xff]
  %v623 = vld [vmem:[%s5 + $0x8] sm:$0xff]
  %v624 = vld [vmem:[%s5 + $0x10] sm:$0xff]
  %v625 = vld [vmem:[%s5 + $0x18] sm:$0xff]
  %v626 = vld [vmem:[%s5 + $0x20] sm:$0xff]
  %v627 = vld [vmem:[%s5 + $0x28] sm:$0xff]
  %v628 = vld [vmem:[%s5 + $0x30] sm:$0xff]
  %v629 = vld [vmem:[%s5 + $0x38] sm:$0xff]
  %v630 = vld [vmem:[%s5 + $0x40] sm:$0xff]
  %v631 = vld [vmem:[%s5 + $0x48] sm:$0xff]
  %v632 = vld [vmem:[%s5 + $0x50] sm:$0xff]
  %v633 = vld [vmem:[%s5 + $0x58] sm:$0xff]
  %v634 = vld [vmem:[%s5 + $0x60] sm:$0xff]
  %v635 = vld [vmem:[%s5 + $0x68] sm:$0xff]
  %v636 = vld [vmem:[%s5 + $0x70] sm:$0xff]
  %v637 = vld [vmem:[%s5 + $0x78] sm:$0xff]
  %v638 = vld [vmem:[%s5 + $0x80] sm:$0xff]
  %v639 = vld [vmem:[%s5 + $0x88] sm:$0xff]
  %v640 = vld [vmem:[%s5 + $0x90] sm:$0xff]
  %642 = vset.pattern.permute.xlu0 0
  %643 = vperm.xlu0 %642, %v622
  %v644 = vpop.permute.xlu0 %643
  %647 = vset.pattern.permute.xlu0 0
  %648 = vperm.xlu0 %647, %v623
  %v649 = vpop.permute.xlu0 %648
  %652 = vset.pattern.permute.xlu0 0
  %653 = vperm.xlu0 %652, %v624
  %v654 = vpop.permute.xlu0 %653
  %657 = vset.pattern.permute.xlu0 0
  %658 = vperm.xlu0 %657, %v625
  %v659 = vpop.permute.xlu0 %658
  %662 = vset.pattern.permute.xlu0 0
  %663 = vperm.xlu0 %662, %v626
  %v664 = vpop.permute.xlu0 %663
  %667 = vset.pattern.permute.xlu0 0
  %668 = vperm.xlu0 %667, %v627
  %v669 = vpop.permute.xlu0 %668
  %672 = vset.pattern.permute.xlu0 0
  %673 = vperm.xlu0 %672, %v628
  %v674 = vpop.permute.xlu0 %673
  %677 = vset.pattern.permute.xlu0 0
  %678 = vperm.xlu0 %677, %v629
  %v679 = vpop.permute.xlu0 %678
  %682 = vset.pattern.permute.xlu0 0
  %683 = vperm.xlu0 %682, %v630
  %v684 = vpop.permute.xlu0 %683
  %687 = vset.pattern.permute.xlu0 0
  %688 = vperm.xlu0 %687, %v631
  %v689 = vpop.permute.xlu0 %688
  %692 = vset.pattern.permute.xlu0 0
  %693 = vperm.xlu0 %692, %v632
  %v694 = vpop.permute.xlu0 %693
  %697 = vset.pattern.permute.xlu0 0
  %698 = vperm.xlu0 %697, %v633
  %v699 = vpop.permute.xlu0 %698
  %702 = vset.pattern.permute.xlu0 0
  %703 = vperm.xlu0 %702, %v634
  %v704 = vpop.permute.xlu0 %703
  %707 = vset.pattern.permute.xlu0 0
  %708 = vperm.xlu0 %707, %v635
  %v709 = vpop.permute.xlu0 %708
  %712 = vset.pattern.permute.xlu0 0
  %713 = vperm.xlu0 %712, %v636
  %v714 = vpop.permute.xlu0 %713
  %717 = vset.pattern.permute.xlu0 0
  %718 = vperm.xlu0 %717, %v637
  %v719 = vpop.permute.xlu0 %718
  %722 = vset.pattern.permute.xlu0 0
  %723 = vperm.xlu0 %722, %v638
  %v724 = vpop.permute.xlu0 %723
  %727 = vset.pattern.permute.xlu0 0
  %728 = vperm.xlu0 %727, %v639
  %v729 = vpop.permute.xlu0 %728
  %732 = vset.pattern.permute.xlu0 0
  %733 = vperm.xlu0 %732, %v640
  %v734 = vpop.permute.xlu0 %733
  %v736 = vmul.f32 %v574, %v644
  %v737 = vmul.f32 %v576, %v649
  %v738 = vmul.f32 %v579, %v654
  %v739 = vmul.f32 %v581, %v659
  %v740 = vmul.f32 %v584, %v664
  %v741 = vmul.f32 %v586, %v669
  %v742 = vmul.f32 %v589, %v674
  %v743 = vmul.f32 %v591, %v679
  %v744 = vmul.f32 %v594, %v684
  %v745 = vmul.f32 %v596, %v689
  %v746 = vmul.f32 %v599, %v694
  %v747 = vmul.f32 %v601, %v699
  %v748 = vmul.f32 %v604, %v704
  %v749 = vmul.f32 %v606, %v709
  %v750 = vmul.f32 %v609, %v714
  %v751 = vmul.f32 %v611, %v719
  %v752 = vmul.f32 %v614, %v724
  %v753 = vmul.f32 %v616, %v729
  %v754 = vmul.f32 %v619, %v734
  %v755 = vadd.f32 %v736, %v737
  %v756 = vadd.f32 %v755, %v738
  %v757 = vadd.f32 %v756, %v739
  %v758 = vadd.f32 %v757, %v740
  %v759 = vadd.f32 %v758, %v741
  %v760 = vadd.f32 %v759, %v742
  %v761 = vadd.f32 %v760, %v743
  %v762 = vadd.f32 %v761, %v744
  %v763 = vadd.f32 %v762, %v745
  %v764 = vadd.f32 %v763, %v746
  %v765 = vadd.f32 %v764, %v747
  %v766 = vadd.f32 %v765, %v748
  %v767 = vadd.f32 %v766, %v749
  %v768 = vadd.f32 %v767, %v750
  %v769 = vadd.f32 %v768, %v751
  %v770 = vadd.f32 %v769, %v752
  %v771 = vadd.f32 %v770, %v753
  %v772 = vadd.f32 %v771, %v754
  %v773 = vrot.slane %v772, 4
  %v774 = vadd.f32 %v772, %v773
  %v775 = vrot.slane %v774, 2
  %v776 = vadd.f32 %v774, %v775
  %v777 = vrot.slane %v776, 1
  %v778 = vadd.f32 %v776, %v777
  %v779 = vmul.f32 %v736, %v736
  %v780 = vmul.f32 %v737, %v737
  %v781 = vmul.f32 %v738, %v738
  %v782 = vmul.f32 %v739, %v739
  %v783 = vmul.f32 %v740, %v740
  %v784 = vmul.f32 %v741, %v741
  %v785 = vmul.f32 %v742, %v742
  %v786 = vmul.f32 %v743, %v743
  %v787 = vmul.f32 %v744, %v744
  %v788 = vmul.f32 %v745, %v745
  %v789 = vmul.f32 %v746, %v746
  %v790 = vmul.f32 %v747, %v747
  %v791 = vmul.f32 %v748, %v748
  %v792 = vmul.f32 %v749, %v749
  %v793 = vmul.f32 %v750, %v750
  %v794 = vmul.f32 %v751, %v751
  %v795 = vmul.f32 %v752, %v752
  %v796 = vmul.f32 %v753, %v753
  %v797 = vmul.f32 %v754, %v754
  %v798 = vadd.f32 %v779, %v780
  %v799 = vadd.f32 %v798, %v781
  %v800 = vadd.f32 %v799, %v782
  %v801 = vadd.f32 %v800, %v783
  %v802 = vadd.f32 %v801, %v784
  %v803 = vadd.f32 %v802, %v785
  %v804 = vadd.f32 %v803, %v786
  %v805 = vadd.f32 %v804, %v787
  %v806 = vadd.f32 %v805, %v788
  %v807 = vadd.f32 %v806, %v789
  %v808 = vadd.f32 %v807, %v790
  %v809 = vadd.f32 %v808, %v791
  %v810 = vadd.f32 %v809, %v792
  %v811 = vadd.f32 %v810, %v793
  %v812 = vadd.f32 %v811, %v794
  %v813 = vadd.f32 %v812, %v795
  %v814 = vadd.f32 %v813, %v796
  %v815 = vadd.f32 %v814, %v797
  %v816 = vrot.slane %v815, 4
  %v817 = vadd.f32 %v815, %v816
  %v818 = vrot.slane %v817, 2
  %v819 = vadd.f32 %v817, %v818
  %v820 = vrot.slane %v819, 1
  %v821 = vadd.f32 %v819, %v820
  %v822 = vmul.f32 %v778, 0.0078125
  %v823 = vmul.f32 %v821, 0.0078125
  %v824 = vmul.f32 %v822, %v822
  %v825 = vsub.f32 %v823, %v824
  %v826 = vmax.f32 %v825, 0.0
  %v827 = vadd.f32 %v826, 1e-05
  %v828 = vrsqrt.pop %v827
  %v829 = vmul.f32 %v828, %v827
  %v830 = vmul.f32 %v829, %v828
  %v831 = vmul.f32 0.5, %v830
  %v832 = vsub.f32 1.5, %v831
  %v833 = vmul.f32 %v828, %v832
  %vm834 = vweird.f32 %v827
  %vm835 = vweird.f32 %v828
  %vm836 = vmor %vm834, %vm835
  %v837 = vsel %vm836, %v828, %v833
  %v838 = vld [vmem:[%s3] sm:$0x1]
  %v839 = vmul.f32 %v837, %v838
  %v840 = vld [vmem:[%s4] sm:$0x1]
  %v841 = vmul.f32 %v822, %v839
  %v842 = vsub.f32 %v840, %v841
  %v843 = vperm.slane %v839, 0
  %v844 = vmul.f32 %v574, %v843
  %v845 = vmul.f32 %v576, %v843
  %v846 = vmul.f32 %v579, %v843
  %v847 = vmul.f32 %v581, %v843
  %v848 = vmul.f32 %v584, %v843
  %v849 = vmul.f32 %v586, %v843
  %v850 = vmul.f32 %v589, %v843
  %v851 = vmul.f32 %v591, %v843
  %v852 = vmul.f32 %v594, %v843
  %v853 = vmul.f32 %v596, %v843
  %v854 = vmul.f32 %v599, %v843
  %v855 = vmul.f32 %v601, %v843
  %v856 = vmul.f32 %v604, %v843
  %v857 = vmul.f32 %v606, %v843
  %v858 = vmul.f32 %v609, %v843
  %v859 = vmul.f32 %v611, %v843
  %v860 = vmul.f32 %v614, %v843
  %v861 = vmul.f32 %v616, %v843
  %v862 = vmul.f32 %v619, %v843
  %v864 = vperm.slane %v842, 0
  %v866 = vadd.f32 %v844, %v864
  %v867 = vadd.f32 %v845, %v864
  %v868 = vadd.f32 %v846, %v864
  %v869 = vadd.f32 %v847, %v864
  %v870 = vadd.f32 %v848, %v864
  %v871 = vadd.f32 %v849, %v864
  %v872 = vadd.f32 %v850, %v864
  %v873 = vadd.f32 %v851, %v864
  %v874 = vadd.f32 %v852, %v864
  %v875 = vadd.f32 %v853, %v864
  %v876 = vadd.f32 %v854, %v864
  %v877 = vadd.f32 %v855, %v864
  %v878 = vadd.f32 %v856, %v864
  %v879 = vadd.f32 %v857, %v864
  %v880 = vadd.f32 %v858, %v864
  %v881 = vadd.f32 %v859, %v864
  %v882 = vadd.f32 %v860, %v864
  %v883 = vadd.f32 %v861, %v864
  %v884 = vadd.f32 %v862, %v864
  %v885 = vmul.f32 %v866, 0.01
  %v886 = vmul.f32 %v867, 0.01
  %v887 = vmul.f32 %v868, 0.01
  %v888 = vmul.f32 %v869, 0.01
  %v889 = vmul.f32 %v870, 0.01
  %v890 = vmul.f32 %v871, 0.01
  %v891 = vmul.f32 %v872, 0.01
  %v892 = vmul.f32 %v873, 0.01
  %v893 = vmul.f32 %v874, 0.01
  %v894 = vmul.f32 %v875, 0.01
  %v895 = vmul.f32 %v876, 0.01
  %v896 = vmul.f32 %v877, 0.01
  %v897 = vmul.f32 %v878, 0.01
  %v898 = vmul.f32 %v879, 0.01
  %v899 = vmul.f32 %v880, 0.01
  %v900 = vmul.f32 %v881, 0.01
  %v901 = vmul.f32 %v882, 0.01
  %v902 = vmul.f32 %v883, 0.01
  %v903 = vmul.f32 %v884, 0.01
  %v904 = vmax.f32 %v866, %v885
  %v905 = vmax.f32 %v867, %v886
  %v906 = vmax.f32 %v868, %v887
  %v907 = vmax.f32 %v869, %v888
  %v908 = vmax.f32 %v870, %v889
  %v909 = vmax.f32 %v871, %v890
  %v910 = vmax.f32 %v872, %v891
  %v911 = vmax.f32 %v873, %v892
  %v912 = vmax.f32 %v874, %v893
  %v913 = vmax.f32 %v875, %v894
  %v914 = vmax.f32 %v876, %v895
  %v915 = vmax.f32 %v877, %v896
  %v916 = vmax.f32 %v878, %v897
  %v917 = vmax.f32 %v879, %v898
  %v918 = vmax.f32 %v880, %v899
  %v919 = vmax.f32 %v881, %v900
  %v920 = vmax.f32 %v882, %v901
  %v921 = vmax.f32 %v883, %v902
  %v922 = vmax.f32 %v884, %v903
  %v923 = vpack.c.bf16 %v904, %v904
  %v924 = vpack.c.bf16 %v905, %v905
  %v925 = vpack.c.bf16 %v906, %v906
  %v926 = vpack.c.bf16 %v907, %v907
  %v927 = vpack.c.bf16 %v908, %v908
  %v928 = vpack.c.bf16 %v909, %v909
  %v929 = vpack.c.bf16 %v910, %v910
  %v930 = vpack.c.bf16 %v911, %v911
  %v931 = vpack.c.bf16 %v912, %v912
  %v932 = vpack.c.bf16 %v913, %v913
  %v933 = vpack.c.bf16 %v914, %v914
  %v934 = vpack.c.bf16 %v915, %v915
  %v935 = vpack.c.bf16 %v916, %v916
  %v936 = vpack.c.bf16 %v917, %v917
  %v937 = vpack.c.bf16 %v918, %v918
  %v938 = vpack.c.bf16 %v919, %v919
  %v939 = vpack.c.bf16 %v920, %v920
  %v940 = vpack.c.bf16 %v921, %v921
  %v941 = vpack.c.bf16 %v922, %v922
  %942 = vst [vmem:[%s32] sm:$0xf] %v923
  %943 = vst [vmem:[%s32 + $0x4] sm:$0xf] %v924
  %944 = vst [vmem:[%s32 + $0x8] sm:$0xf] %v925
  %945 = vst [vmem:[%s32 + $0xc] sm:$0xf] %v926
  %946 = vst [vmem:[%s32 + $0x10] sm:$0xf] %v927
  %947 = vst [vmem:[%s32 + $0x14] sm:$0xf] %v928
  %948 = vst [vmem:[%s32 + $0x18] sm:$0xf] %v929
  %949 = vst [vmem:[%s32 + $0x1c] sm:$0xf] %v930
  %950 = vst [vmem:[%s32 + $0x20] sm:$0xf] %v931
  %951 = vst [vmem:[%s32 + $0x24] sm:$0xf] %v932
  %952 = vst [vmem:[%s32 + $0x28] sm:$0xf] %v933
  %953 = vst [vmem:[%s32 + $0x2c] sm:$0xf] %v934
  %954 = vst [vmem:[%s32 + $0x30] sm:$0xf] %v935
  %955 = vst [vmem:[%s32 + $0x34] sm:$0xf] %v936
  %956 = vst [vmem:[%s32 + $0x38] sm:$0xf] %v937
  %957 = vst [vmem:[%s32 + $0x3c] sm:$0xf] %v938
  %958 = vst [vmem:[%s32 + $0x40] sm:$0xf] %v939
  %959 = vst [vmem:[%s32 + $0x44] sm:$0xf] %v940
  %960 = vst [vmem:[%s32 + $0x48] sm:$0xf] %v941
  %s961 = smul.u32 0, 0
  %s962 = smul.u32 19, %s961
  %p963 = scmp.lt.s32.totalorder %s962, 18
  %s964 = scalar_select %p963, %s962, 18
  %s965 = smul.addr %s964, 4
  %s966 = scalar_lea.vmem %s6, %s965
  // Predicated region
  $region44: #{forward.12} parent=0 // pred_check
    _
  $region45: #{forward.12} parent=0 // pred_check_branch
    %968 = sbr.rel (0) target = $region47
  $region46: #{forward.12} parent=0 // pred_region
    %s969 = smul.u32 0, 0
    %s970 = smul.u32 19, %s969
  $region47: #{forward.12} parent=0 // pred_fallthru
    _
  // Predicated region
  $region48: #{forward.12} parent=0 // pred_check
    _
  $region49: #{forward.12} parent=0 // pred_check_branch
    %972 = sbr.rel (0) target = $region51
  $region50: #{forward.12} parent=0 // pred_region
    %s973 = smul.u32 0, 0
    %s974 = smul.u32 19, %s973
    %p975 = scmp.lt.s32.totalorder %s974, 18
    %s976 = scalar_select %p975, %s974, 18
    %s977 = smul.addr %s976, 4
    %s978 = scalar_lea.vmem %s6, %s977
  $region51: #{forward.12} parent=0 // pred_fallthru
    _
  %979 = vsyncmov [#allocation3]
  %s980 = vpop.sfrf %979
  %p981 = scmp.eq.s32.totalorder %s980, 0
  %p982 = pneg %p981
  %984 = shalt.err (%p982)

// kernel: forward.13
$region0: #{forward.13}
  #allocation0 [shape = 'u32[]', space=smem, size = 0x4, offset = 0x4, fixed_abs, tag = 'smem constant byte address 0x4 - core index']
  #allocation1 [shape = 'u32[72,128]{1,0:T(1,128)}', space=vmem, size = 0x9000, scoped, tag = 'internal scratch']
  #allocation2 [shape = 'bf16[56,64]{1,0:T(8,128)(2,1)}', space=vmem, size = 0x3800, scoped, tag = 'scratch operand']
  #allocation3 [shape = 's32[1]{0}', space=sflag, size = 0x4, scoped, tag = 'scratch operand']
  #allocation4 [shape = 'f32[2,128]{1,0:T(2,128)}', space=vmem, size = 0x400, scoped, tag = 'scratch operand']
  #allocation5 [shape = 's32[]', space=sflag, size = 0x4, offset = 0, fixed_abs, tag = 'sflag constant byte address 0x0 - dummy sync flag']
  %s0 = inlined_call_operand.vmem [shape: bf16[56,64], index: 0, kind: input, shape index: {}]
  %s1 = inlined_call_operand.vmem [shape: bf16[256,128], index: 1, kind: input, shape index: {}]
  %s2 = inlined_call_operand.vmem [shape: f32[1,128], index: 2, kind: input, shape index: {}]
  %s3 = inlined_call_operand.vmem [shape: f32[1,128], index: 3, kind: input, shape index: {}]
  %s4 = inlined_call_operand.vmem [shape: f32[1,128], index: 4, kind: input, shape index: {}]
  %s5 = inlined_call_operand.vmem [shape: f32[48,1], index: 5, kind: input, shape index: {}]
  %s6 = inlined_call_operand.vmem [shape: bf16[48,128], index: 6, kind: output, shape index: {}]
  %s7 = sld [smem:[#allocation0]]
  $region52: #{forward.13} parent=0
    _
  %s9 = ssub.s32 1, %s7
  %s10 = scalar_select 0, %s9, %s7
  // Predicated region
  $region2: #{forward.13} parent=0 // pred_check
    _
  $region3: #{forward.13} parent=0 // pred_check_branch
    %12 = sbr.rel (0) target = $region5
  $region4: #{forward.13} parent=0 // pred_region
    _
  $region5: #{forward.13} parent=0 // pred_fallthru
    _
  // Predicated region
  $region6: #{forward.13} parent=0 // pred_check
    _
  $region7: #{forward.13} parent=0 // pred_check_branch
    %14 = sbr.rel (0) target = $region9
  $region8: #{forward.13} parent=0 // pred_region
    _
  $region9: #{forward.13} parent=0 // pred_fallthru
    _
  // Predicated region
  $region10: #{forward.13} parent=0 // pred_check
    _
  $region11: #{forward.13} parent=0 // pred_check_branch
    %16 = sbr.rel (0) target = $region13
  $region12: #{forward.13} parent=0 // pred_region
    _
  $region13: #{forward.13} parent=0 // pred_fallthru
    _
  // Predicated region
  $region14: #{forward.13} parent=0 // pred_check
    _
  $region15: #{forward.13} parent=0 // pred_check_branch
    %18 = sbr.rel (0) target = $region17
  $region16: #{forward.13} parent=0 // pred_region
    _
  $region17: #{forward.13} parent=0 // pred_fallthru
    _
  // Predicated region
  $region18: #{forward.13} parent=0 // pred_check
    _
  $region19: #{forward.13} parent=0 // pred_check_branch
    %20 = sbr.rel (0) target = $region21
  $region20: #{forward.13} parent=0 // pred_region
    _
  $region21: #{forward.13} parent=0 // pred_fallthru
    _
  %s21 = smul.u32 0, 0
  %s22 = smul.u32 6, %s21
  %p23 = scmp.lt.s32.totalorder %s22, 5
  %s24 = scalar_select %p23, %s22, 5
  %s25 = smul.addr %s24, 4
  %s26 = scalar_lea.vmem %s6, %s25
  %s27 = smul.u32 0, 0
  %s28 = smul.u32 6, %s27
  %p29 = scmp.lt.s32.totalorder %s28, 5
  %s30 = scalar_select %p29, %s28, 5
  %s31 = smul.addr %s30, 4
  %s32 = scalar_lea.vmem %s6, %s31
  %s33 = smul.u32 0, 0
  %s34 = smul.u32 6, %s33
  %s35 = smul.u32 0, 48
  %s36 = sshra.s32 %s35, 3
  %s37 = sand.u32 %s35, 7
  %s38 = smul.addr %s36, 4
  %s39 = scalar_lea.vmem %s0, %s38
  // Predicated region
  $region22: #{forward.13} parent=0 // pred_check
    _
  $region23: #{forward.13} parent=0 // pred_check_branch
    %41 = sbr.rel (0) target = $region25
  $region24: #{forward.13} parent=0 // pred_region
    %s42 = scalar_lea.vmem %s39, 24
    %s43 = scalar_lea.vmem [#allocation2], 24
    loop: start=0, step=1, limit=1
    $region26: #{forward.13} parent=24 // loop_pre_header
      _
    $region27: #{forward.13} parent=24 // loop_header
      %s45 = sphi 0, %s49
      %p46 = scmp.ge.s32.totalorder %s45, 1
      %s50 = sphi %s39, %s39
      %s51 = sphi [#allocation2], [#allocation2]
    $region28: #{forward.13} parent=24 // loop_header_branch
      %48 = sbr.rel (%p46) target = $region32
    $region29: #{forward.13} parent=24 // loop_body
      %v52 = vld [vmem:[%s50] sm:$0xff]
      %53 = vst [vmem:[%s51] sm:$0xff] %v52
      %v54 = vld [vmem:[%s50 + $0x8] sm:$0xff]
      %55 = vst [vmem:[%s51 + $0x8] sm:$0xff] %v54
      %v56 = vld [vmem:[%s50 + $0x10] sm:$0xff]
      %57 = vst [vmem:[%s51 + $0x10] sm:$0xff] %v56
    $region30: #{forward.13} parent=24 // loop_footer
      %s49 = sadd.s32 1, %s45
    $region31: #{forward.13} parent=24 // loop_footer_branch
      %44 = sbr.rel target = $region27
    $region32: #{forward.13} parent=24 // loop_exit
      _
    %s59 = ssub.s32 16, 1
    loop: start=0, step=1, limit=1
    $region33: #{forward.13} parent=24 // loop_pre_header
      _
    $region34: #{forward.13} parent=24 // loop_header
      %s61 = sphi 0, %s65
      %p62 = scmp.ge.s32.totalorder %s61, 1
      %s66 = sphi %s42, %s42
      %s67 = sphi %s43, %s43
    $region35: #{forward.13} parent=24 // loop_header_branch
      %64 = sbr.rel (%p62) target = $region39
    $region36: #{forward.13} parent=24 // loop_body
      %v68 = vld [vmem:[%s66] sm:%s59]
      %69 = vst [vmem:[%s67] sm:%s59] %v68
    $region37: #{forward.13} parent=24 // loop_footer
      %s65 = sadd.s32 1, %s61
    $region38: #{forward.13} parent=24 // loop_footer_branch
      %60 = sbr.rel target = $region34
    $region39: #{forward.13} parent=24 // loop_exit
      _
  $region25: #{forward.13} parent=0 // pred_fallthru
    _
  // Predicated region
  $region40: #{forward.13} parent=0 // pred_check
    _
  $region41: #{forward.13} parent=0 // pred_check_branch
    %72 = sbr.rel (0) target = $region43
  $region42: #{forward.13} parent=0 // pred_region
    %73 = vsyncadd [#allocation3], 448
  $region43: #{forward.13} parent=0 // pred_fallthru
    _
  %s74 = smul.u32 4, 7
  %s75 = smul.u32 %s74, 1
  %s76 = sshll.u32 %s75, 4
  %77 = dma.done [#allocation3], %s76
  %v78 = vld [vmem:[#allocation2] sm:$0xf]
  %v79 = vld [vmem:[#allocation2 + $0x4] sm:$0xf]
  %v80 = vld [vmem:[#allocation2 + $0x8] sm:$0xf]
  %v81 = vld [vmem:[#allocation2 + $0xc] sm:$0xf]
  %v82 = vld [vmem:[#allocation2 + $0x10] sm:$0xf]
  %v83 = vld [vmem:[#allocation2 + $0x14] sm:$0xf]
  %v84 = vld [vmem:[#allocation2 + $0x18] sm:$0x1]
  %v85 = vld [vmem:[#allocation2] sm:$0xc]
  %v86 = vld [vmem:[#allocation2 + $0x18] sm:$0x7]
  %v87 = vld [vmem:[#allocation2] sm:$0x8]
  %v94 = vunpack.c.l.b16 %v78
  %v95 = vunpack.c.l.b16 %v79
  %v96 = vunpack.c.l.b16 %v80
  %v97 = vunpack.c.l.b16 %v81
  %v98 = vunpack.c.l.b16 %v82
  %v99 = vunpack.c.l.b16 %v83
  %v100 = vpack.c.b16 %v95, %v94
  %v101 = vpack.c.b16 %v97, %v96
  %v102 = vpack.c.b16 %v99, %v98
  %v104 = vunpack.c.l.b16 %v84
  %v105 = vpack.c.b16 %v104, %v104
  %vm106 = vsmask.f32 7424
  %v108 = vshrl.u32 %v100, 16
  %v110 = vshll.u32 %v100, 16
  %v112 = vrot.slane %v110, 1
  %v113 = vor.u32 %v108, %v112
  %v115 = vshll.u32 %v101, 16
  %v117 = vrot.slane %v115, 1
  %v118 = vsel %vm106, %v113, %v117
  %v119 = vshrl.u32 %v101, 16
  %v121 = vor.u32 %v119, %v117
  %v123 = vshll.u32 %v102, 16
  %v125 = vrot.slane %v123, 1
  %v126 = vsel %vm106, %v121, %v125
  %v127 = vshrl.u32 %v102, 16
  %v129 = vor.u32 %v127, %v125
  %v131 = vshll.u32 %v105, 16
  %v133 = vrot.slane %v131, 1
  %v134 = vsel %vm106, %v129, %v133
  %135 = vrot.lane.b32.xlu0 %v118, 64
  %v136 = vpop.permute.xlu0 %135
  %137 = vrot.lane.b32.xlu0 %v126, 64
  %v138 = vpop.permute.xlu0 %137
  %139 = vrot.lane.b32.xlu0 %v134, 64
  %v140 = vpop.permute.xlu0 %139
  %v143 = vunpack.c.l.b16 %v85
  %v144 = vunpack.c.l.b16 %v86
  %v145 = vpack.c.b16 %v95, %v143
  %v146 = vpack.c.b16 %v144, %v144
  %vm147 = vsmask.f32 5376
  %v149 = vshrl.u32 %v145, 16
  %v151 = vrot.slane %v149, 2
  %v152 = vshll.u32 %v145, 16
  %v154 = vrot.slane %v152, 3
  %v155 = vor.u32 %v151, %v154
  %v156 = vrot.slane %v119, 2
  %v157 = vrot.slane %v115, 3
  %v158 = vor.u32 %v156, %v157
  %v159 = vsel %vm147, %v155, %v158
  %v160 = vrot.slane %v127, 2
  %v161 = vrot.slane %v123, 3
  %v162 = vor.u32 %v160, %v161
  %v163 = vsel %vm147, %v158, %v162
  %v165 = vshrl.u32 %v146, 16
  %v167 = vrot.slane %v165, 2
  %v168 = vshll.u32 %v146, 16
  %v170 = vrot.slane %v168, 3
  %v171 = vor.u32 %v167, %v170
  %v172 = vsel %vm147, %v162, %v171
  %v174 = vunpack.c.l.b16 %v87
  %v175 = vpack.c.b16 %v95, %v174
  %vm176 = vcmask 1044480
  %v177 = vrot.slane %v175, 3
  %v178 = vrot.slane %v101, 3
  %v179 = vsel %vm176, %v177, %v178
  %v180 = vrot.slane %v102, 3
  %v181 = vsel %vm176, %v178, %v180
  %v182 = vrot.slane %v146, 3
  %v183 = vsel %vm176, %v180, %v182
  %184 = vrot.lane.b32.xlu0 %v179, 64
  %v185 = vpop.permute.xlu0 %184
  %186 = vrot.lane.b32.xlu0 %v181, 64
  %v187 = vpop.permute.xlu0 %186
  %188 = vrot.lane.b32.xlu0 %v183, 64
  %v189 = vpop.permute.xlu0 %188
  %vm190 = vcmask 523264
  %v192 = vsel %vm190, %v100, %v136
  %v195 = vsel %vm190, %v101, %v138
  %v198 = vsel %vm190, %v102, %v140
  %v202 = vsel %vm190, %v159, %v185
  %v206 = vsel %vm190, %v163, %v187
  %v210 = vsel %vm190, %v172, %v189
  %v212 = vld [vmem:[%s1] sm:$0xf]
  %v213 = vld [vmem:[%s1 + $0x4] sm:$0xf]
  %v214 = vld [vmem:[%s1 + $0x8] sm:$0xf]
  %v215 = vld [vmem:[%s1 + $0xc] sm:$0xf]
  %v216 = vld [vmem:[%s1 + $0x10] sm:$0xf]
  %v217 = vld [vmem:[%s1 + $0x14] sm:$0xf]
  %v218 = vld [vmem:[%s1 + $0x18] sm:$0xf]
  %v219 = vld [vmem:[%s1 + $0x1c] sm:$0xf]
  %v220 = vld [vmem:[%s1 + $0x20] sm:$0xf]
  %v221 = vld [vmem:[%s1 + $0x24] sm:$0xf]
  %v222 = vld [vmem:[%s1 + $0x28] sm:$0xf]
  %v223 = vld [vmem:[%s1 + $0x2c] sm:$0xf]
  %v224 = vld [vmem:[%s1 + $0x30] sm:$0xf]
  %v225 = vld [vmem:[%s1 + $0x34] sm:$0xf]
  %v226 = vld [vmem:[%s1 + $0x38] sm:$0xf]
  %v227 = vld [vmem:[%s1 + $0x3c] sm:$0xf]
  %v228 = vld [vmem:[%s1 + $0x40] sm:$0xf]
  %v229 = vld [vmem:[%s1 + $0x44] sm:$0xf]
  %v230 = vld [vmem:[%s1 + $0x48] sm:$0xf]
  %v231 = vld [vmem:[%s1 + $0x4c] sm:$0xf]
  %v232 = vld [vmem:[%s1 + $0x50] sm:$0xf]
  %v233 = vld [vmem:[%s1 + $0x54] sm:$0xf]
  %v234 = vld [vmem:[%s1 + $0x58] sm:$0xf]
  %v235 = vld [vmem:[%s1 + $0x5c] sm:$0xf]
  %v236 = vld [vmem:[%s1 + $0x60] sm:$0xf]
  %v237 = vld [vmem:[%s1 + $0x64] sm:$0xf]
  %v238 = vld [vmem:[%s1 + $0x68] sm:$0xf]
  %v239 = vld [vmem:[%s1 + $0x6c] sm:$0xf]
  %v240 = vld [vmem:[%s1 + $0x70] sm:$0xf]
  %v241 = vld [vmem:[%s1 + $0x74] sm:$0xf]
  %v242 = vld [vmem:[%s1 + $0x78] sm:$0xf]
  %v243 = vld [vmem:[%s1 + $0x7c] sm:$0xf]
  %v244 = vld [vmem:[%s2] sm:$0x1]
  %v246 = vperm.slane %v244, 0
  %v280 = vunpack.c.l.b16 %v212
  %v281 = vunpack.c.l.b16 %v213
  %v282 = vunpack.c.l.b16 %v214
  %v283 = vunpack.c.l.b16 %v215
  %v284 = vunpack.c.l.b16 %v216
  %v285 = vunpack.c.l.b16 %v217
  %v286 = vunpack.c.l.b16 %v218
  %v287 = vunpack.c.l.b16 %v219
  %v288 = vunpack.c.l.b16 %v220
  %v289 = vunpack.c.l.b16 %v221
  %v290 = vunpack.c.l.b16 %v222
  %v291 = vunpack.c.l.b16 %v223
  %v292 = vunpack.c.l.b16 %v224
  %v293 = vunpack.c.l.b16 %v225
  %v294 = vunpack.c.l.b16 %v226
  %v295 = vunpack.c.l.b16 %v227
  %v296 = vunpack.c.l.b16 %v228
  %v297 = vunpack.c.l.b16 %v229
  %v298 = vunpack.c.l.b16 %v230
  %v299 = vunpack.c.l.b16 %v231
  %v300 = vunpack.c.l.b16 %v232
  %v301 = vunpack.c.l.b16 %v233
  %v302 = vunpack.c.l.b16 %v234
  %v303 = vunpack.c.l.b16 %v235
  %v304 = vunpack.c.l.b16 %v236
  %v305 = vunpack.c.l.b16 %v237
  %v306 = vunpack.c.l.b16 %v238
  %v307 = vunpack.c.l.b16 %v239
  %v308 = vunpack.c.l.b16 %v240
  %v309 = vunpack.c.l.b16 %v241
  %v310 = vunpack.c.l.b16 %v242
  %v311 = vunpack.c.l.b16 %v243
  %v312 = vpack.c.b16 %v281, %v280
  %v313 = vpack.c.b16 %v283, %v282
  %v314 = vpack.c.b16 %v285, %v284
  %v315 = vpack.c.b16 %v287, %v286
  %v316 = vpack.c.b16 %v289, %v288
  %v317 = vpack.c.b16 %v291, %v290
  %v318 = vpack.c.b16 %v293, %v292
  %v319 = vpack.c.b16 %v295, %v294
  %v320 = vpack.c.b16 %v297, %v296
  %v321 = vpack.c.b16 %v299, %v298
  %v322 = vpack.c.b16 %v301, %v300
  %v323 = vpack.c.b16 %v303, %v302
  %v324 = vpack.c.b16 %v305, %v304
  %v325 = vpack.c.b16 %v307, %v306
  %v326 = vpack.c.b16 %v309, %v308
  %v327 = vpack.c.b16 %v311, %v310
  %344 = vmatpush.bf16.msra.mxu0 %v319
  %345 = vmatpush.bf16.msra.mxu0 %v318
  %346 = vmatpush.bf16.msra.mxu0 %v317
  %347 = vmatpush.bf16.msra.mxu0 %v316
  %348 = vmatpush.bf16.msra.mxu0 %v315
  %349 = vmatpush.bf16.msra.mxu0 %v314
  %350 = vmatpush.bf16.msra.mxu0 %v313
  %351 = vmatpush.bf16.msra.mxu0 %v312
  %352 = vmatmul.bf16.gmra.mxu0 %v192
  %v353 = vpop.f32.mrf.mxu0
  %v354 = vadd.f32 %v246, %v353
  %v355 = vpop.f32.mrf.mxu0
  %v356 = vadd.f32 %v246, %v355
  %357 = vmatmul.bf16.gmra.mxu0 %v195
  %v358 = vpop.f32.mrf.mxu0
  %v359 = vadd.f32 %v246, %v358
  %v360 = vpop.f32.mrf.mxu0
  %v361 = vadd.f32 %v246, %v360
  %362 = vmatmul.bf16.gmra.mxu0 %v198
  %v363 = vpop.f32.mrf.mxu0
  %v364 = vadd.f32 %v246, %v363
  %v365 = vpop.f32.mrf.mxu0
  %v366 = vadd.f32 %v246, %v365
  %367 = vdwg.mxu0
  %368 = vmatpush.bf16.msra.mxu0 %v327
  %369 = vmatpush.bf16.msra.mxu0 %v326
  %370 = vmatpush.bf16.msra.mxu0 %v325
  %371 = vmatpush.bf16.msra.mxu0 %v324
  %372 = vmatpush.bf16.msra.mxu0 %v323
  %373 = vmatpush.bf16.msra.mxu0 %v322
  %374 = vmatpush.bf16.msra.mxu0 %v321
  %375 = vmatpush.bf16.msra.mxu0 %v320
  %376 = vmatmul.bf16.gmra.mxu0 %v202
  %v377 = vpop.f32.mrf.mxu0
  %v378 = vadd.f32 %v354, %v377
  %v379 = vpop.f32.mrf.mxu0
  %v380 = vadd.f32 %v356, %v379
  %381 = vmatmul.bf16.gmra.mxu0 %v206
  %v382 = vpop.f32.mrf.mxu0
  %v383 = vadd.f32 %v359, %v382
  %v384 = vpop.f32.mrf.mxu0
  %v385 = vadd.f32 %v361, %v384
  %386 = vmatmul.bf16.gmra.mxu0 %v210
  %v387 = vpop.f32.mrf.mxu0
  %v388 = vadd.f32 %v364, %v387
  %v389 = vpop.f32.mrf.mxu0
  %v390 = vadd.f32 %v366, %v389
  %391 = vdwg.mxu0
  %v392 = vld [vmem:[%s5] sm:$0xff]
  %v393 = vld [vmem:[%s5 + $0x8] sm:$0xff]
  %v394 = vld [vmem:[%s5 + $0x10] sm:$0xff]
  %v395 = vld [vmem:[%s5 + $0x18] sm:$0xff]
  %v396 = vld [vmem:[%s5 + $0x20] sm:$0xff]
  %v397 = vld [vmem:[%s5 + $0x28] sm:$0xff]
  %399 = vset.pattern.permute.xlu0 0
  %400 = vperm.xlu0 %399, %v392
  %v401 = vpop.permute.xlu0 %400
  %404 = vset.pattern.permute.xlu0 0
  %405 = vperm.xlu0 %404, %v393
  %v406 = vpop.permute.xlu0 %405
  %409 = vset.pattern.permute.xlu0 0
  %410 = vperm.xlu0 %409, %v394
  %v411 = vpop.permute.xlu0 %410
  %414 = vset.pattern.permute.xlu0 0
  %415 = vperm.xlu0 %414, %v395
  %v416 = vpop.permute.xlu0 %415
  %419 = vset.pattern.permute.xlu0 0
  %420 = vperm.xlu0 %419, %v396
  %v421 = vpop.permute.xlu0 %420
  %424 = vset.pattern.permute.xlu0 0
  %425 = vperm.xlu0 %424, %v397
  %v426 = vpop.permute.xlu0 %425
  %v428 = vmul.f32 %v378, %v401
  %v429 = vmul.f32 %v380, %v406
  %v430 = vmul.f32 %v383, %v411
  %v431 = vmul.f32 %v385, %v416
  %v432 = vmul.f32 %v388, %v421
  %v433 = vmul.f32 %v390, %v426
  %v434 = vadd.f32 %v428, %v429
  %v435 = vadd.f32 %v434, %v430
  %v436 = vadd.f32 %v435, %v431
  %v437 = vadd.f32 %v436, %v432
  %v438 = vadd.f32 %v437, %v433
  %v439 = vrot.slane %v438, 4
  %v440 = vadd.f32 %v438, %v439
  %v441 = vrot.slane %v440, 2
  %v442 = vadd.f32 %v440, %v441
  %v443 = vrot.slane %v442, 1
  %v444 = vadd.f32 %v442, %v443
  %v445 = vmul.f32 %v428, %v428
  %v446 = vmul.f32 %v429, %v429
  %v447 = vmul.f32 %v430, %v430
  %v448 = vmul.f32 %v431, %v431
  %v449 = vmul.f32 %v432, %v432
  %v450 = vmul.f32 %v433, %v433
  %v451 = vadd.f32 %v445, %v446
  %v452 = vadd.f32 %v451, %v447
  %v453 = vadd.f32 %v452, %v448
  %v454 = vadd.f32 %v453, %v449
  %v455 = vadd.f32 %v454, %v450
  %v456 = vrot.slane %v455, 4
  %v457 = vadd.f32 %v455, %v456
  %v458 = vrot.slane %v457, 2
  %v459 = vadd.f32 %v457, %v458
  %v460 = vrot.slane %v459, 1
  %v461 = vadd.f32 %v459, %v460
  %v462 = vmul.f32 %v444, 0.03125
  %v463 = vmul.f32 %v461, 0.03125
  %v464 = vmul.f32 %v462, %v462
  %v465 = vsub.f32 %v463, %v464
  %v466 = vmax.f32 %v465, 0.0
  %v467 = vadd.f32 %v466, 1e-05
  %v468 = vrsqrt.pop %v467
  %v469 = vmul.f32 %v468, %v467
  %v470 = vmul.f32 %v469, %v468
  %v471 = vmul.f32 0.5, %v470
  %v472 = vsub.f32 1.5, %v471
  %v473 = vmul.f32 %v468, %v472
  %vm474 = vweird.f32 %v467
  %vm475 = vweird.f32 %v468
  %vm476 = vmor %vm474, %vm475
  %v477 = vsel %vm476, %v468, %v473
  %v478 = vld [vmem:[%s3] sm:$0x1]
  %v479 = vmul.f32 %v477, %v478
  %v480 = vld [vmem:[%s4] sm:$0x1]
  %v481 = vmul.f32 %v462, %v479
  %v482 = vsub.f32 %v480, %v481
  %v483 = vperm.slane %v479, 0
  %v484 = vmul.f32 %v378, %v483
  %v485 = vmul.f32 %v380, %v483
  %v486 = vmul.f32 %v383, %v483
  %v487 = vmul.f32 %v385, %v483
  %v488 = vmul.f32 %v388, %v483
  %v489 = vmul.f32 %v390, %v483
  %v491 = vperm.slane %v482, 0
  %v493 = vadd.f32 %v484, %v491
  %v494 = vadd.f32 %v485, %v491
  %v495 = vadd.f32 %v486, %v491
  %v496 = vadd.f32 %v487, %v491
  %v497 = vadd.f32 %v488, %v491
  %v498 = vadd.f32 %v489, %v491
  %v499 = vmul.f32 %v493, 0.01
  %v500 = vmul.f32 %v494, 0.01
  %v501 = vmul.f32 %v495, 0.01
  %v502 = vmul.f32 %v496, 0.01
  %v503 = vmul.f32 %v497, 0.01
  %v504 = vmul.f32 %v498, 0.01
  %v505 = vmax.f32 %v493, %v499
  %v506 = vmax.f32 %v494, %v500
  %v507 = vmax.f32 %v495, %v501
  %v508 = vmax.f32 %v496, %v502
  %v509 = vmax.f32 %v497, %v503
  %v510 = vmax.f32 %v498, %v504
  %v511 = vpack.c.bf16 %v505, %v505
  %v512 = vpack.c.bf16 %v506, %v506
  %v513 = vpack.c.bf16 %v507, %v507
  %v514 = vpack.c.bf16 %v508, %v508
  %v515 = vpack.c.bf16 %v509, %v509
  %v516 = vpack.c.bf16 %v510, %v510
  %517 = vst [vmem:[%s32] sm:$0xf] %v511
  %518 = vst [vmem:[%s32 + $0x4] sm:$0xf] %v512
  %519 = vst [vmem:[%s32 + $0x8] sm:$0xf] %v513
  %520 = vst [vmem:[%s32 + $0xc] sm:$0xf] %v514
  %521 = vst [vmem:[%s32 + $0x10] sm:$0xf] %v515
  %522 = vst [vmem:[%s32 + $0x14] sm:$0xf] %v516
  %s523 = smul.u32 0, 0
  %s524 = smul.u32 6, %s523
  %p525 = scmp.lt.s32.totalorder %s524, 5
  %s526 = scalar_select %p525, %s524, 5
  %s527 = smul.addr %s526, 4
  %s528 = scalar_lea.vmem %s6, %s527
  // Predicated region
  $region44: #{forward.13} parent=0 // pred_check
    _
  $region45: #{forward.13} parent=0 // pred_check_branch
    %530 = sbr.rel (0) target = $region47
  $region46: #{forward.13} parent=0 // pred_region
    %s531 = smul.u32 0, 0
    %s532 = smul.u32 6, %s531
  $region47: #{forward.13} parent=0 // pred_fallthru
    _
  // Predicated region
  $region48: #{forward.13} parent=0 // pred_check
    _
  $region49: #{forward.13} parent=0 // pred_check_branch
    %534 = sbr.rel (0) target = $region51
  $region50: #{forward.13} parent=0 // pred_region
    %s535 = smul.u32 0, 0
    %s536 = smul.u32 6, %s535
    %p537 = scmp.lt.s32.totalorder %s536, 5
    %s538 = scalar_select %p537, %s536, 5
    %s539 = smul.addr %s538, 4
    %s540 = scalar_lea.vmem %s6, %s539
  $region51: #{forward.13} parent=0 // pred_fallthru
    _
  %541 = vsyncmov [#allocation3]
  %s542 = vpop.sfrf %541
  %p543 = scmp.eq.s32.totalorder %s542, 0
  %p544 = pneg %p543
  %546 = shalt.err (%p544)

// kernel: forward.14
$region0: #{forward.14}
  #allocation0 [shape = 'u32[]', space=smem, size = 0x4, offset = 0x4, fixed_abs, tag = 'smem constant byte address 0x4 - core index']
  #allocation1 [shape = 'u32[72,128]{1,0:T(1,128)}', space=vmem, size = 0x9000, scoped, tag = 'internal scratch']
  #allocation2 [shape = 'bf16[24,128]{1,0:T(8,128)(2,1)}', space=vmem, size = 0x1800, scoped, tag = 'scratch operand']
  #allocation3 [shape = 's32[1]{0}', space=sflag, size = 0x4, scoped, tag = 'scratch operand']
  #allocation4 [shape = 'f32[2,128]{1,0:T(2,128)}', space=vmem, size = 0x400, scoped, tag = 'scratch operand']
  #allocation5 [shape = 's32[]', space=sflag, size = 0x4, offset = 0, fixed_abs, tag = 'sflag constant byte address 0x0 - dummy sync flag']
  %s0 = inlined_call_operand.vmem [shape: bf16[24,128], index: 0, kind: input, shape index: {}]
  %s1 = inlined_call_operand.vmem [shape: bf16[512,128], index: 1, kind: input, shape index: {}]
  %s2 = inlined_call_operand.vmem [shape: f32[1,128], index: 2, kind: input, shape index: {}]
  %s3 = inlined_call_operand.vmem [shape: f32[1,128], index: 3, kind: input, shape index: {}]
  %s4 = inlined_call_operand.vmem [shape: f32[1,128], index: 4, kind: input, shape index: {}]
  %s5 = inlined_call_operand.vmem [shape: f32[16,1], index: 5, kind: input, shape index: {}]
  %s6 = inlined_call_operand.vmem [shape: bf16[16,128], index: 6, kind: output, shape index: {}]
  %s7 = sld [smem:[#allocation0]]
  $region52: #{forward.14} parent=0
    _
  %s9 = ssub.s32 1, %s7
  %s10 = scalar_select 0, %s9, %s7
  // Predicated region
  $region2: #{forward.14} parent=0 // pred_check
    _
  $region3: #{forward.14} parent=0 // pred_check_branch
    %12 = sbr.rel (0) target = $region5
  $region4: #{forward.14} parent=0 // pred_region
    _
  $region5: #{forward.14} parent=0 // pred_fallthru
    _
  // Predicated region
  $region6: #{forward.14} parent=0 // pred_check
    _
  $region7: #{forward.14} parent=0 // pred_check_branch
    %14 = sbr.rel (0) target = $region9
  $region8: #{forward.14} parent=0 // pred_region
    _
  $region9: #{forward.14} parent=0 // pred_fallthru
    _
  // Predicated region
  $region10: #{forward.14} parent=0 // pred_check
    _
  $region11: #{forward.14} parent=0 // pred_check_branch
    %16 = sbr.rel (0) target = $region13
  $region12: #{forward.14} parent=0 // pred_region
    _
  $region13: #{forward.14} parent=0 // pred_fallthru
    _
  // Predicated region
  $region14: #{forward.14} parent=0 // pred_check
    _
  $region15: #{forward.14} parent=0 // pred_check_branch
    %18 = sbr.rel (0) target = $region17
  $region16: #{forward.14} parent=0 // pred_region
    _
  $region17: #{forward.14} parent=0 // pred_fallthru
    _
  // Predicated region
  $region18: #{forward.14} parent=0 // pred_check
    _
  $region19: #{forward.14} parent=0 // pred_check_branch
    %20 = sbr.rel (0) target = $region21
  $region20: #{forward.14} parent=0 // pred_region
    _
  $region21: #{forward.14} parent=0 // pred_fallthru
    _
  %s21 = smul.u32 0, 0
  %s22 = smul.u32 2, %s21
  %p23 = scmp.lt.s32.totalorder %s22, 1
  %s24 = scalar_select %p23, %s22, 1
  %s25 = smul.addr %s24, 4
  %s26 = scalar_lea.vmem %s6, %s25
  %s27 = smul.u32 0, 0
  %s28 = smul.u32 2, %s27
  %p29 = scmp.lt.s32.totalorder %s28, 1
  %s30 = scalar_select %p29, %s28, 1
  %s31 = smul.addr %s30, 4
  %s32 = scalar_lea.vmem %s6, %s31
  %s33 = smul.u32 0, 0
  %s34 = smul.u32 2, %s33
  %s35 = smul.u32 0, 16
  %s36 = sshra.s32 %s35, 3
  %s37 = sand.u32 %s35, 7
  %s38 = smul.addr %s36, 4
  %s39 = scalar_lea.vmem %s0, %s38
  // Predicated region
  $region22: #{forward.14} parent=0 // pred_check
    _
  $region23: #{forward.14} parent=0 // pred_check_branch
    %41 = sbr.rel (0) target = $region25
  $region24: #{forward.14} parent=0 // pred_region
    %s42 = scalar_lea.vmem %s39, 8
    %s43 = scalar_lea.vmem [#allocation2], 8
    loop: start=0, step=1, limit=1
    $region26: #{forward.14} parent=24 // loop_pre_header
      _
    $region27: #{forward.14} parent=24 // loop_header
      %s45 = sphi 0, %s49
      %p46 = scmp.ge.s32.totalorder %s45, 1
      %s50 = sphi %s39, %s39
      %s51 = sphi [#allocation2], [#allocation2]
    $region28: #{forward.14} parent=24 // loop_header_branch
      %48 = sbr.rel (%p46) target = $region32
    $region29: #{forward.14} parent=24 // loop_body
      %v52 = vld [vmem:[%s50] sm:$0xff]
      %53 = vst [vmem:[%s51] sm:$0xff] %v52
    $region30: #{forward.14} parent=24 // loop_footer
      %s49 = sadd.s32 1, %s45
    $region31: #{forward.14} parent=24 // loop_footer_branch
      %44 = sbr.rel target = $region27
    $region32: #{forward.14} parent=24 // loop_exit
      _
    %s55 = ssub.s32 16, 1
    loop: start=0, step=1, limit=1
    $region33: #{forward.14} parent=24 // loop_pre_header
      _
    $region34: #{forward.14} parent=24 // loop_header
      %s57 = sphi 0, %s61
      %p58 = scmp.ge.s32.totalorder %s57, 1
      %s62 = sphi %s42, %s42
      %s63 = sphi %s43, %s43
    $region35: #{forward.14} parent=24 // loop_header_branch
      %60 = sbr.rel (%p58) target = $region39
    $region36: #{forward.14} parent=24 // loop_body
      %v64 = vld [vmem:[%s62] sm:%s55]
      %65 = vst [vmem:[%s63] sm:%s55] %v64
    $region37: #{forward.14} parent=24 // loop_footer
      %s61 = sadd.s32 1, %s57
    $region38: #{forward.14} parent=24 // loop_footer_branch
      %56 = sbr.rel target = $region34
    $region39: #{forward.14} parent=24 // loop_exit
      _
  $region25: #{forward.14} parent=0 // pred_fallthru
    _
  // Predicated region
  $region40: #{forward.14} parent=0 // pred_check
    _
  $region41: #{forward.14} parent=0 // pred_check_branch
    %68 = sbr.rel (0) target = $region43
  $region42: #{forward.14} parent=0 // pred_region
    %69 = vsyncadd [#allocation3], 192
  $region43: #{forward.14} parent=0 // pred_fallthru
    _
  %s70 = smul.u32 4, 3
  %s71 = smul.u32 %s70, 1
  %s72 = sshll.u32 %s71, 4
  %73 = dma.done [#allocation3], %s72
  %v74 = vld [vmem:[#allocation2] sm:$0xf]
  %v75 = vld [vmem:[#allocation2 + $0x4] sm:$0xf]
  %v76 = vld [vmem:[#allocation2] sm:$0xf]
  %v77 = vld [vmem:[#allocation2 + $0x4] sm:$0xf]
  %v78 = vld [vmem:[#allocation2 + $0x8] sm:$0x1]
  %v79 = vld [vmem:[#allocation2] sm:$0xe]
  %v80 = vld [vmem:[#allocation2 + $0x8] sm:$0x3]
  %v81 = vld [vmem:[#allocation2] sm:$0xc]
  %v84 = vunpack.c.l.b16 %v74
  %v85 = vunpack.c.l.b16 %v75
  %v86 = vpack.c.b16 %v85, %v84
  %v91 = vunpack.c.l.b16 %v76
  %v92 = vunpack.c.l.b16 %v77
  %v93 = vunpack.c.l.b16 %v78
  %v94 = vpack.c.b16 %v92, %v91
  %v95 = vpack.c.b16 %v93, %v93
  %vm96 = vsmask.f32 7424
  %v98 = vshrl.u32 %v94, 16
  %v100 = vshll.u32 %v94, 16
  %v102 = vrot.slane %v100, 1
  %v103 = vor.u32 %v98, %v102
  %v105 = vshll.u32 %v95, 16
  %v107 = vrot.slane %v105, 1
  %v108 = vsel %vm96, %v103, %v107
  %v112 = vunpack.c.l.b16 %v79
  %v113 = vunpack.c.l.b16 %v80
  %v114 = vpack.c.b16 %v92, %v112
  %v115 = vpack.c.b16 %v113, %v113
  %vm116 = vsmask.f32 6400
  %v118 = vshrl.u32 %v114, 16
  %v120 = vrot.slane %v118, 1
  %v121 = vshll.u32 %v114, 16
  %v123 = vrot.slane %v121, 2
  %v124 = vor.u32 %v120, %v123
  %v126 = vshrl.u32 %v115, 16
  %v128 = vrot.slane %v126, 1
  %v129 = vshll.u32 %v115, 16
  %v131 = vrot.slane %v129, 2
  %v132 = vor.u32 %v128, %v131
  %v133 = vsel %vm116, %v124, %v132
  %v136 = vunpack.c.l.b16 %v81
  %v137 = vpack.c.b16 %v92, %v136
  %vm138 = vcmask 1045504
  %v139 = vrot.slane %v137, 2
  %v140 = vrot.slane %v115, 2
  %v141 = vsel %vm138, %v139, %v140
  %v143 = vld [vmem:[%s1] sm:$0xf]
  %v144 = vld [vmem:[%s1 + $0x4] sm:$0xf]
  %v145 = vld [vmem:[%s1 + $0x8] sm:$0xf]
  %v146 = vld [vmem:[%s1 + $0xc] sm:$0xf]
  %v147 = vld [vmem:[%s1 + $0x10] sm:$0xf]
  %v148 = vld [vmem:[%s1 + $0x14] sm:$0xf]
  %v149 = vld [vmem:[%s1 + $0x18] sm:$0xf]
  %v150 = vld [vmem:[%s1 + $0x1c] sm:$0xf]
  %v151 = vld [vmem:[%s1 + $0x20] sm:$0xf]
  %v152 = vld [vmem:[%s1 + $0x24] sm:$0xf]
  %v153 = vld [vmem:[%s1 + $0x28] sm:$0xf]
  %v154 = vld [vmem:[%s1 + $0x2c] sm:$0xf]
  %v155 = vld [vmem:[%s1 + $0x30] sm:$0xf]
  %v156 = vld [vmem:[%s1 + $0x34] sm:$0xf]
  %v157 = vld [vmem:[%s1 + $0x38] sm:$0xf]
  %v158 = vld [vmem:[%s1 + $0x3c] sm:$0xf]
  %v159 = vld [vmem:[%s1 + $0x40] sm:$0xf]
  %v160 = vld [vmem:[%s1 + $0x44] sm:$0xf]
  %v161 = vld [vmem:[%s1 + $0x48] sm:$0xf]
  %v162 = vld [vmem:[%s1 + $0x4c] sm:$0xf]
  %v163 = vld [vmem:[%s1 + $0x50] sm:$0xf]
  %v164 = vld [vmem:[%s1 + $0x54] sm:$0xf]
  %v165 = vld [vmem:[%s1 + $0x58] sm:$0xf]
  %v166 = vld [vmem:[%s1 + $0x5c] sm:$0xf]
  %v167 = vld [vmem:[%s1 + $0x60] sm:$0xf]
  %v168 = vld [vmem:[%s1 + $0x64] sm:$0xf]
  %v169 = vld [vmem:[%s1 + $0x68] sm:$0xf]
  %v170 = vld [vmem:[%s1 + $0x6c] sm:$0xf]
  %v171 = vld [vmem:[%s1 + $0x70] sm:$0xf]
  %v172 = vld [vmem:[%s1 + $0x74] sm:$0xf]
  %v173 = vld [vmem:[%s1 + $0x78] sm:$0xf]
  %v174 = vld [vmem:[%s1 + $0x7c] sm:$0xf]
  %v175 = vld [vmem:[%s1 + $0x80] sm:$0xf]
  %v176 = vld [vmem:[%s1 + $0x84] sm:$0xf]
  %v177 = vld [vmem:[%s1 + $0x88] sm:$0xf]
  %v178 = vld [vmem:[%s1 + $0x8c] sm:$0xf]
  %v179 = vld [vmem:[%s1 + $0x90] sm:$0xf]
  %v180 = vld [vmem:[%s1 + $0x94] sm:$0xf]
  %v181 = vld [vmem:[%s1 + $0x98] sm:$0xf]
  %v182 = vld [vmem:[%s1 + $0x9c] sm:$0xf]
  %v183 = vld [vmem:[%s1 + $0xa0] sm:$0xf]
  %v184 = vld [vmem:[%s1 + $0xa4] sm:$0xf]
  %v185 = vld [vmem:[%s1 + $0xa8] sm:$0xf]
  %v186 = vld [vmem:[%s1 + $0xac] sm:$0xf]
  %v187 = vld [vmem:[%s1 + $0xb0] sm:$0xf]
  %v188 = vld [vmem:[%s1 + $0xb4] sm:$0xf]
  %v189 = vld [vmem:[%s1 + $0xb8] sm:$0xf]
  %v190 = vld [vmem:[%s1 + $0xbc] sm:$0xf]
  %v191 = vld [vmem:[%s1 + $0xc0] sm:$0xf]
  %v192 = vld [vmem:[%s1 + $0xc4] sm:$0xf]
  %v193 = vld [vmem:[%s1 + $0xc8] sm:$0xf]
  %v194 = vld [vmem:[%s1 + $0xcc] sm:$0xf]
  %v195 = vld [vmem:[%s1 + $0xd0] sm:$0xf]
  %v196 = vld [vmem:[%s1 + $0xd4] sm:$0xf]
  %v197 = vld [vmem:[%s1 + $0xd8] sm:$0xf]
  %v198 = vld [vmem:[%s1 + $0xdc] sm:$0xf]
  %v199 = vld [vmem:[%s1 + $0xe0] sm:$0xf]
  %v200 = vld [vmem:[%s1 + $0xe4] sm:$0xf]
  %v201 = vld [vmem:[%s1 + $0xe8] sm:$0xf]
  %v202 = vld [vmem:[%s1 + $0xec] sm:$0xf]
  %v203 = vld [vmem:[%s1 + $0xf0] sm:$0xf]
  %v204 = vld [vmem:[%s1 + $0xf4] sm:$0xf]
  %v205 = vld [vmem:[%s1 + $0xf8] sm:$0xf]
  %v206 = vld [vmem:[%s1 + $0xfc] sm:$0xf]
  %v207 = vld [vmem:[%s2] sm:$0x1]
  %v209 = vperm.slane %v207, 0
  %v275 = vunpack.c.l.b16 %v143
  %v276 = vunpack.c.l.b16 %v144
  %v277 = vunpack.c.l.b16 %v145
  %v278 = vunpack.c.l.b16 %v146
  %v279 = vunpack.c.l.b16 %v147
  %v280 = vunpack.c.l.b16 %v148
  %v281 = vunpack.c.l.b16 %v149
  %v282 = vunpack.c.l.b16 %v150
  %v283 = vunpack.c.l.b16 %v151
  %v284 = vunpack.c.l.b16 %v152
  %v285 = vunpack.c.l.b16 %v153
  %v286 = vunpack.c.l.b16 %v154
  %v287 = vunpack.c.l.b16 %v155
  %v288 = vunpack.c.l.b16 %v156
  %v289 = vunpack.c.l.b16 %v157
  %v290 = vunpack.c.l.b16 %v158
  %v291 = vunpack.c.l.b16 %v159
  %v292 = vunpack.c.l.b16 %v160
  %v293 = vunpack.c.l.b16 %v161
  %v294 = vunpack.c.l.b16 %v162
  %v295 = vunpack.c.l.b16 %v163
  %v296 = vunpack.c.l.b16 %v164
  %v297 = vunpack.c.l.b16 %v165
  %v298 = vunpack.c.l.b16 %v166
  %v299 = vunpack.c.l.b16 %v167
  %v300 = vunpack.c.l.b16 %v168
  %v301 = vunpack.c.l.b16 %v169
  %v302 = vunpack.c.l.b16 %v170
  %v303 = vunpack.c.l.b16 %v171
  %v304 = vunpack.c.l.b16 %v172
  %v305 = vunpack.c.l.b16 %v173
  %v306 = vunpack.c.l.b16 %v174
  %v307 = vunpack.c.l.b16 %v175
  %v308 = vunpack.c.l.b16 %v176
  %v309 = vunpack.c.l.b16 %v177
  %v310 = vunpack.c.l.b16 %v178
  %v311 = vunpack.c.l.b16 %v179
  %v312 = vunpack.c.l.b16 %v180
  %v313 = vunpack.c.l.b16 %v181
  %v314 = vunpack.c.l.b16 %v182
  %v315 = vunpack.c.l.b16 %v183
  %v316 = vunpack.c.l.b16 %v184
  %v317 = vunpack.c.l.b16 %v185
  %v318 = vunpack.c.l.b16 %v186
  %v319 = vunpack.c.l.b16 %v187
  %v320 = vunpack.c.l.b16 %v188
  %v321 = vunpack.c.l.b16 %v189
  %v322 = vunpack.c.l.b16 %v190
  %v323 = vunpack.c.l.b16 %v191
  %v324 = vunpack.c.l.b16 %v192
  %v325 = vunpack.c.l.b16 %v193
  %v326 = vunpack.c.l.b16 %v194
  %v327 = vunpack.c.l.b16 %v195
  %v328 = vunpack.c.l.b16 %v196
  %v329 = vunpack.c.l.b16 %v197
  %v330 = vunpack.c.l.b16 %v198
  %v331 = vunpack.c.l.b16 %v199
  %v332 = vunpack.c.l.b16 %v200
  %v333 = vunpack.c.l.b16 %v201
  %v334 = vunpack.c.l.b16 %v202
  %v335 = vunpack.c.l.b16 %v203
  %v336 = vunpack.c.l.b16 %v204
  %v337 = vunpack.c.l.b16 %v205
  %v338 = vunpack.c.l.b16 %v206
  %v339 = vpack.c.b16 %v276, %v275
  %v340 = vpack.c.b16 %v278, %v277
  %v341 = vpack.c.b16 %v280, %v279
  %v342 = vpack.c.b16 %v282, %v281
  %v343 = vpack.c.b16 %v284, %v283
  %v344 = vpack.c.b16 %v286, %v285
  %v345 = vpack.c.b16 %v288, %v287
  %v346 = vpack.c.b16 %v290, %v289
  %v347 = vpack.c.b16 %v292, %v291
  %v348 = vpack.c.b16 %v294, %v293
  %v349 = vpack.c.b16 %v296, %v295
  %v350 = vpack.c.b16 %v298, %v297
  %v351 = vpack.c.b16 %v300, %v299
  %v352 = vpack.c.b16 %v302, %v301
  %v353 = vpack.c.b16 %v304, %v303
  %v354 = vpack.c.b16 %v306, %v305
  %v355 = vpack.c.b16 %v308, %v307
  %v356 = vpack.c.b16 %v310, %v309
  %v357 = vpack.c.b16 %v312, %v311
  %v358 = vpack.c.b16 %v314, %v313
  %v359 = vpack.c.b16 %v316, %v315
  %v360 = vpack.c.b16 %v318, %v317
  %v361 = vpack.c.b16 %v320, %v319
  %v362 = vpack.c.b16 %v322, %v321
  %v363 = vpack.c.b16 %v324, %v323
  %v364 = vpack.c.b16 %v326, %v325
  %v365 = vpack.c.b16 %v328, %v327
  %v366 = vpack.c.b16 %v330, %v329
  %v367 = vpack.c.b16 %v332, %v331
  %v368 = vpack.c.b16 %v334, %v333
  %v369 = vpack.c.b16 %v336, %v335
  %v370 = vpack.c.b16 %v338, %v337
  %403 = vmatpush.bf16.msra.mxu0 %v346
  %404 = vmatpush.bf16.msra.mxu0 %v345
  %405 = vmatpush.bf16.msra.mxu0 %v344
  %406 = vmatpush.bf16.msra.mxu0 %v343
  %407 = vmatpush.bf16.msra.mxu0 %v342
  %408 = vmatpush.bf16.msra.mxu0 %v341
  %409 = vmatpush.bf16.msra.mxu0 %v340
  %410 = vmatpush.bf16.msra.mxu0 %v339
  %411 = vmatmul.bf16.gmra.mxu0 %v86
  %v412 = vpop.f32.mrf.mxu0
  %v413 = vadd.f32 %v209, %v412
  %v414 = vpop.f32.mrf.mxu0
  %v415 = vadd.f32 %v209, %v414
  %416 = vdwg.mxu0
  %417 = vmatpush.bf16.msra.mxu0 %v354
  %418 = vmatpush.bf16.msra.mxu0 %v353
  %419 = vmatpush.bf16.msra.mxu0 %v352
  %420 = vmatpush.bf16.msra.mxu0 %v351
  %421 = vmatpush.bf16.msra.mxu0 %v350
  %422 = vmatpush.bf16.msra.mxu0 %v349
  %423 = vmatpush.bf16.msra.mxu0 %v348
  %424 = vmatpush.bf16.msra.mxu0 %v347
  %425 = vmatmul.bf16.gmra.mxu0 %v108
  %v426 = vpop.f32.mrf.mxu0
  %v427 = vadd.f32 %v413, %v426
  %v428 = vpop.f32.mrf.mxu0
  %v429 = vadd.f32 %v415, %v428
  %430 = vdwg.mxu0
  %431 = vmatpush.bf16.msra.mxu0 %v362
  %432 = vmatpush.bf16.msra.mxu0 %v361
  %433 = vmatpush.bf16.msra.mxu0 %v360
  %434 = vmatpush.bf16.msra.mxu0 %v359
  %435 = vmatpush.bf16.msra.mxu0 %v358
  %436 = vmatpush.bf16.msra.mxu0 %v357
  %437 = vmatpush.bf16.msra.mxu0 %v356
  %438 = vmatpush.bf16.msra.mxu0 %v355
  %439 = vmatmul.bf16.gmra.mxu0 %v133
  %v440 = vpop.f32.mrf.mxu0
  %v441 = vadd.f32 %v427, %v440
  %v442 = vpop.f32.mrf.mxu0
  %v443 = vadd.f32 %v429, %v442
  %444 = vdwg.mxu0
  %445 = vmatpush.bf16.msra.mxu0 %v370
  %446 = vmatpush.bf16.msra.mxu0 %v369
  %447 = vmatpush.bf16.msra.mxu0 %v368
  %448 = vmatpush.bf16.msra.mxu0 %v367
  %449 = vmatpush.bf16.msra.mxu0 %v366
  %450 = vmatpush.bf16.msra.mxu0 %v365
  %451 = vmatpush.bf16.msra.mxu0 %v364
  %452 = vmatpush.bf16.msra.mxu0 %v363
  %453 = vmatmul.bf16.gmra.mxu0 %v141
  %v454 = vpop.f32.mrf.mxu0
  %v455 = vadd.f32 %v441, %v454
  %v456 = vpop.f32.mrf.mxu0
  %v457 = vadd.f32 %v443, %v456
  %458 = vdwg.mxu0
  %v459 = vld [vmem:[%s5] sm:$0xff]
  %v460 = vld [vmem:[%s5 + $0x8] sm:$0xff]
  %462 = vset.pattern.permute.xlu0 0
  %463 = vperm.xlu0 %462, %v459
  %v464 = vpop.permute.xlu0 %463
  %467 = vset.pattern.permute.xlu0 0
  %468 = vperm.xlu0 %467, %v460
  %v469 = vpop.permute.xlu0 %468
  %v471 = vmul.f32 %v455, %v464
  %v472 = vmul.f32 %v457, %v469
  %v473 = vadd.f32 %v471, %v472
  %v474 = vrot.slane %v473, 4
  %v475 = vadd.f32 %v473, %v474
  %v476 = vrot.slane %v475, 2
  %v477 = vadd.f32 %v475, %v476
  %v478 = vrot.slane %v477, 1
  %v479 = vadd.f32 %v477, %v478
  %v480 = vmul.f32 %v471, %v471
  %v481 = vmul.f32 %v472, %v472
  %v482 = vadd.f32 %v480, %v481
  %v483 = vrot.slane %v482, 4
  %v484 = vadd.f32 %v482, %v483
  %v485 = vrot.slane %v484, 2
  %v486 = vadd.f32 %v484, %v485
  %v487 = vrot.slane %v486, 1
  %v488 = vadd.f32 %v486, %v487
  %v489 = vmul.f32 %v479, 0.125
  %v490 = vmul.f32 %v488, 0.125
  %v491 = vmul.f32 %v489, %v489
  %v492 = vsub.f32 %v490, %v491
  %v493 = vmax.f32 %v492, 0.0
  %v494 = vadd.f32 %v493, 1e-05
  %v495 = vrsqrt.pop %v494
  %v496 = vmul.f32 %v495, %v494
  %v497 = vmul.f32 %v496, %v495
  %v498 = vmul.f32 0.5, %v497
  %v499 = vsub.f32 1.5, %v498
  %v500 = vmul.f32 %v495, %v499
  %vm501 = vweird.f32 %v494
  %vm502 = vweird.f32 %v495
  %vm503 = vmor %vm501, %vm502
  %v504 = vsel %vm503, %v495, %v500
  %v505 = vld [vmem:[%s3] sm:$0x1]
  %v506 = vmul.f32 %v504, %v505
  %v507 = vld [vmem:[%s4] sm:$0x1]
  %v508 = vmul.f32 %v489, %v506
  %v509 = vsub.f32 %v507, %v508
  %v510 = vperm.slane %v506, 0
  %v511 = vmul.f32 %v455, %v510
  %v512 = vmul.f32 %v457, %v510
  %v514 = vperm.slane %v509, 0
  %v516 = vadd.f32 %v511, %v514
  %v517 = vadd.f32 %v512, %v514
  %v518 = vmul.f32 %v516, 0.01
  %v519 = vmul.f32 %v517, 0.01
  %v520 = vmax.f32 %v516, %v518
  %v521 = vmax.f32 %v517, %v519
  %v522 = vpack.c.bf16 %v520, %v520
  %v523 = vpack.c.bf16 %v521, %v521
  %524 = vst [vmem:[%s32] sm:$0xf] %v522
  %525 = vst [vmem:[%s32 + $0x4] sm:$0xf] %v523
  %s526 = smul.u32 0, 0
  %s527 = smul.u32 2, %s526
  %p528 = scmp.lt.s32.totalorder %s527, 1
  %s529 = scalar_select %p528, %s527, 1
  %s530 = smul.addr %s529, 4
  %s531 = scalar_lea.vmem %s6, %s530
  // Predicated region
  $region44: #{forward.14} parent=0 // pred_check
    _
  $region45: #{forward.14} parent=0 // pred_check_branch
    %533 = sbr.rel (0) target = $region47
  $region46: #{forward.14} parent=0 // pred_region
    %s534 = smul.u32 0, 0
    %s535 = smul.u32 2, %s534
  $region47: #{forward.14} parent=0 // pred_fallthru
    _
  // Predicated region
  $region48: #{forward.14} parent=0 // pred_check
    _
  $region49: #{forward.14} parent=0 // pred_check_branch
    %537 = sbr.rel (0) target = $region51
  $region50: #{forward.14} parent=0 // pred_region
    %s538 = smul.u32 0, 0
    %s539 = smul.u32 2, %s538
    %p540 = scmp.lt.s32.totalorder %s539, 1
    %s541 = scalar_select %p540, %s539, 1
    %s542 = smul.addr %s541, 4
    %s543 = scalar_lea.vmem %s6, %s542
  $region51: #{forward.14} parent=0 // pred_fallthru
    _
  %544 = vsyncmov [#allocation3]
  %s545 = vpop.sfrf %544
  %p546 = scmp.eq.s32.totalorder %s545, 0
  %p547 = pneg %p546
  %549 = shalt.err (%p547)

// kernel: forward.15
$region0: #{forward.15}
  #allocation0 [shape = 'u32[]', space=smem, size = 0x4, offset = 0x4, fixed_abs, tag = 'smem constant byte address 0x4 - core index']
  #allocation1 [shape = 'u32[72,128]{1,0:T(1,128)}', space=vmem, size = 0x9000, scoped, tag = 'internal scratch']
  %s0 = inlined_call_operand.vmem [shape: bf16[2,256], index: 0, kind: input, shape index: {}]
  %s1 = inlined_call_operand.vmem [shape: bf16[256,128], index: 1, kind: input, shape index: {}]
  %s2 = inlined_call_operand.vmem [shape: f32[1,128], index: 2, kind: input, shape index: {}]
  %s3 = inlined_call_operand.vmem [shape: f32[2,128], index: 3, kind: output, shape index: {}]
  %s4 = sld [smem:[#allocation0]]
  $region22: #{forward.15} parent=0
    _
  %s6 = ssub.s32 1, %s4
  %s7 = scalar_select 0, %s6, %s4
  // Predicated region
  $region2: #{forward.15} parent=0 // pred_check
    _
  $region3: #{forward.15} parent=0 // pred_check_branch
    %9 = sbr.rel (0) target = $region5
  $region4: #{forward.15} parent=0 // pred_region
    _
  $region5: #{forward.15} parent=0 // pred_fallthru
    _
  // Predicated region
  $region6: #{forward.15} parent=0 // pred_check
    _
  $region7: #{forward.15} parent=0 // pred_check_branch
    %11 = sbr.rel (0) target = $region9
  $region8: #{forward.15} parent=0 // pred_region
    _
  $region9: #{forward.15} parent=0 // pred_fallthru
    _
  // Predicated region
  $region10: #{forward.15} parent=0 // pred_check
    _
  $region11: #{forward.15} parent=0 // pred_check_branch
    %13 = sbr.rel (0) target = $region13
  $region12: #{forward.15} parent=0 // pred_region
    _
  $region13: #{forward.15} parent=0 // pred_fallthru
    _
  %v14 = vld [vmem:[%s0] sm:$0x3]
  %v15 = vld [vmem:[%s1] sm:$0xf]
  %v16 = vld [vmem:[%s1 + $0x4] sm:$0xf]
  %v17 = vld [vmem:[%s1 + $0x8] sm:$0xf]
  %v18 = vld [vmem:[%s1 + $0xc] sm:$0xf]
  %v19 = vld [vmem:[%s1 + $0x10] sm:$0xf]
  %v20 = vld [vmem:[%s1 + $0x14] sm:$0xf]
  %v21 = vld [vmem:[%s1 + $0x18] sm:$0xf]
  %v22 = vld [vmem:[%s1 + $0x1c] sm:$0xf]
  %v23 = vld [vmem:[%s1 + $0x20] sm:$0xf]
  %v24 = vld [vmem:[%s1 + $0x24] sm:$0xf]
  %v25 = vld [vmem:[%s1 + $0x28] sm:$0xf]
  %v26 = vld [vmem:[%s1 + $0x2c] sm:$0xf]
  %v27 = vld [vmem:[%s1 + $0x30] sm:$0xf]
  %v28 = vld [vmem:[%s1 + $0x34] sm:$0xf]
  %v29 = vld [vmem:[%s1 + $0x38] sm:$0xf]
  %v30 = vld [vmem:[%s1 + $0x3c] sm:$0xf]
  %v31 = vld [vmem:[%s1 + $0x40] sm:$0xf]
  %v32 = vld [vmem:[%s1 + $0x44] sm:$0xf]
  %v33 = vld [vmem:[%s1 + $0x48] sm:$0xf]
  %v34 = vld [vmem:[%s1 + $0x4c] sm:$0xf]
  %v35 = vld [vmem:[%s1 + $0x50] sm:$0xf]
  %v36 = vld [vmem:[%s1 + $0x54] sm:$0xf]
  %v37 = vld [vmem:[%s1 + $0x58] sm:$0xf]
  %v38 = vld [vmem:[%s1 + $0x5c] sm:$0xf]
  %v39 = vld [vmem:[%s1 + $0x60] sm:$0xf]
  %v40 = vld [vmem:[%s1 + $0x64] sm:$0xf]
  %v41 = vld [vmem:[%s1 + $0x68] sm:$0xf]
  %v42 = vld [vmem:[%s1 + $0x6c] sm:$0xf]
  %v43 = vld [vmem:[%s1 + $0x70] sm:$0xf]
  %v44 = vld [vmem:[%s1 + $0x74] sm:$0xf]
  %v45 = vld [vmem:[%s1 + $0x78] sm:$0xf]
  %v46 = vld [vmem:[%s1 + $0x7c] sm:$0xf]
  %v47 = vld [vmem:[%s2] sm:$0x1]
  %v49 = vperm.slane %v47, 0
  %52 = vst [vmem:[#allocation1] ss:$9 sm:$0xff] %v14
  %v53 = vld [vmem:[#allocation1] sm:$0xff]
  %v54 = vld [vmem:[#allocation1 + $0x9] sm:$0xff]
  %v89 = vunpack.c.l.b16 %v15
  %v90 = vunpack.c.l.b16 %v16
  %v91 = vunpack.c.l.b16 %v17
  %v92 = vunpack.c.l.b16 %v18
  %v93 = vunpack.c.l.b16 %v19
  %v94 = vunpack.c.l.b16 %v20
  %v95 = vunpack.c.l.b16 %v21
  %v96 = vunpack.c.l.b16 %v22
  %v97 = vunpack.c.l.b16 %v23
  %v98 = vunpack.c.l.b16 %v24
  %v99 = vunpack.c.l.b16 %v25
  %v100 = vunpack.c.l.b16 %v26
  %v101 = vunpack.c.l.b16 %v27
  %v102 = vunpack.c.l.b16 %v28
  %v103 = vunpack.c.l.b16 %v29
  %v104 = vunpack.c.l.b16 %v30
  %v105 = vunpack.c.l.b16 %v31
  %v106 = vunpack.c.l.b16 %v32
  %v107 = vunpack.c.l.b16 %v33
  %v108 = vunpack.c.l.b16 %v34
  %v109 = vunpack.c.l.b16 %v35
  %v110 = vunpack.c.l.b16 %v36
  %v111 = vunpack.c.l.b16 %v37
  %v112 = vunpack.c.l.b16 %v38
  %v113 = vunpack.c.l.b16 %v39
  %v114 = vunpack.c.l.b16 %v40
  %v115 = vunpack.c.l.b16 %v41
  %v116 = vunpack.c.l.b16 %v42
  %v117 = vunpack.c.l.b16 %v43
  %v118 = vunpack.c.l.b16 %v44
  %v119 = vunpack.c.l.b16 %v45
  %v120 = vunpack.c.l.b16 %v46
  %v121 = vpack.c.b16 %v90, %v89
  %v122 = vpack.c.b16 %v92, %v91
  %v123 = vpack.c.b16 %v94, %v93
  %v124 = vpack.c.b16 %v96, %v95
  %v125 = vpack.c.b16 %v98, %v97
  %v126 = vpack.c.b16 %v100, %v99
  %v127 = vpack.c.b16 %v102, %v101
  %v128 = vpack.c.b16 %v104, %v103
  %v129 = vpack.c.b16 %v106, %v105
  %v130 = vpack.c.b16 %v108, %v107
  %v131 = vpack.c.b16 %v110, %v109
  %v132 = vpack.c.b16 %v112, %v111
  %v133 = vpack.c.b16 %v114, %v113
  %v134 = vpack.c.b16 %v116, %v115
  %v135 = vpack.c.b16 %v118, %v117
  %v136 = vpack.c.b16 %v120, %v119
  %153 = vmatpush.bf16.msra.mxu0 %v128
  %154 = vmatpush.bf16.msra.mxu0 %v127
  %155 = vmatpush.bf16.msra.mxu0 %v126
  %156 = vmatpush.bf16.msra.mxu0 %v125
  %157 = vmatpush.bf16.msra.mxu0 %v124
  %158 = vmatpush.bf16.msra.mxu0 %v123
  %159 = vmatpush.bf16.msra.mxu0 %v122
  %160 = vmatpush.bf16.msra.mxu0 %v121
  %161 = vmatmul.bf16.gmra.mxu0 %v53
  %v162 = vpop.f32.mrf.mxu0
  %v163 = vadd.f32 %v49, %v162
  %v164 = vpop.f32.mrf.mxu0
  %165 = vdwg.mxu0
  %166 = vmatpush.bf16.msra.mxu0 %v136
  %167 = vmatpush.bf16.msra.mxu0 %v135
  %168 = vmatpush.bf16.msra.mxu0 %v134
  %169 = vmatpush.bf16.msra.mxu0 %v133
  %170 = vmatpush.bf16.msra.mxu0 %v132
  %171 = vmatpush.bf16.msra.mxu0 %v131
  %172 = vmatpush.bf16.msra.mxu0 %v130
  %173 = vmatpush.bf16.msra.mxu0 %v129
  %174 = vmatmul.bf16.gmra.mxu0 %v54
  %v175 = vpop.f32.mrf.mxu0
  %v176 = vadd.f32 %v163, %v175
  %v177 = vpop.f32.mrf.mxu0
  %178 = vdwg.mxu0
  %179 = vst [vmem:[%s3] sm:$0x3] %v176
  // Predicated region
  $region14: #{forward.15} parent=0 // pred_check
    _
  $region15: #{forward.15} parent=0 // pred_check_branch
    %181 = sbr.rel (0) target = $region17
  $region16: #{forward.15} parent=0 // pred_region
    _
  $region17: #{forward.15} parent=0 // pred_fallthru
    _
  // Predicated region
  $region18: #{forward.15} parent=0 // pred_check
    _
  $region19: #{forward.15} parent=0 // pred_check_branch
    %183 = sbr.rel (0) target = $region21
  $region20: #{forward.15} parent=0 // pred_region
    _
  $region21: #{forward.15} parent=0 // pred_fallthru
    _

// kernel: forward.16
$region0: #{forward.16}
  #allocation0 [shape = 'u32[]', space=smem, size = 0x4, offset = 0x4, fixed_abs, tag = 'smem constant byte address 0x4 - core index']
  #allocation1 [shape = 'u32[72,128]{1,0:T(1,128)}', space=vmem, size = 0x9000, scoped, tag = 'internal scratch']
  %s0 = inlined_call_operand.vmem [shape: bf16[2,8], index: 0, kind: input, shape index: {}]
  %s1 = inlined_call_operand.vmem [shape: bf16[8,256], index: 1, kind: input, shape index: {}]
  %s2 = inlined_call_operand.vmem [shape: f32[1,256], index: 2, kind: input, shape index: {}]
  %s3 = inlined_call_operand.vmem [shape: f32[2,256], index: 3, kind: output, shape index: {}]
  %s4 = sld [smem:[#allocation0]]
  $region22: #{forward.16} parent=0
    _
  %s6 = ssub.s32 1, %s4
  %s7 = scalar_select 0, %s6, %s4
  // Predicated region
  $region2: #{forward.16} parent=0 // pred_check
    _
  $region3: #{forward.16} parent=0 // pred_check_branch
    %9 = sbr.rel (0) target = $region5
  $region4: #{forward.16} parent=0 // pred_region
    _
  $region5: #{forward.16} parent=0 // pred_fallthru
    _
  // Predicated region
  $region6: #{forward.16} parent=0 // pred_check
    _
  $region7: #{forward.16} parent=0 // pred_check_branch
    %11 = sbr.rel (0) target = $region9
  $region8: #{forward.16} parent=0 // pred_region
    _
  $region9: #{forward.16} parent=0 // pred_fallthru
    _
  // Predicated region
  $region10: #{forward.16} parent=0 // pred_check
    _
  $region11: #{forward.16} parent=0 // pred_check_branch
    %13 = sbr.rel (0) target = $region13
  $region12: #{forward.16} parent=0 // pred_region
    _
  $region13: #{forward.16} parent=0 // pred_fallthru
    _
  %v15 = vld [vmem:[%s0] sm:$0x1]
  %v16 = vld [vmem:[%s1] sm:$0xff]
  %v17 = vld [vmem:[%s2] sm:$0x3]
  %v19 = vperm.slane %v17, 0
  %v20 = vperm.slane %v17, 1
  %v24 = vunpack.c.l.b16 %v16
  %v25 = vunpack.c.h.b16 %v16
  %v26 = vpack.c.b16 %v24, %v24
  %v27 = vpack.c.b16 %v25, %v25
  %vm28 = vcmask 64512
  %v30 = vsel %vm28, %v15, 0
  %vm32 = vcmask 1043456
  %v34 = vsel %vm32, %v26, 0
  %v37 = vsel %vm32, %v27, 0
  %39 = vmatpush.bf16.msra.mxu0 0
  %40 = vmatpush.bf16.msra.mxu0 0
  %41 = vmatpush.bf16.msra.mxu0 0
  %42 = vmatpush.bf16.msra.mxu0 0
  %43 = vmatpush.bf16.msra.mxu0 0
  %44 = vmatpush.bf16.msra.mxu0 0
  %45 = vmatpush.bf16.msra.mxu0 0
  %46 = vmatpush.bf16.msra.mxu0 %v34
  %47 = vmatmul.bf16.gmra.mxu0 %v30
  %v48 = vpop.f32.mrf.mxu0
  %v49 = vadd.f32 %v19, %v48
  %v50 = vpop.f32.mrf.mxu0
  %51 = vdwg.mxu0
  %52 = vmatpush.bf16.msra.mxu0 0
  %53 = vmatpush.bf16.msra.mxu0 0
  %54 = vmatpush.bf16.msra.mxu0 0
  %55 = vmatpush.bf16.msra.mxu0 0
  %56 = vmatpush.bf16.msra.mxu0 0
  %57 = vmatpush.bf16.msra.mxu0 0
  %58 = vmatpush.bf16.msra.mxu0 0
  %59 = vmatpush.bf16.msra.mxu0 %v37
  %60 = vmatmul.bf16.gmra.mxu0 %v30
  %v61 = vpop.f32.mrf.mxu0
  %v62 = vadd.f32 %v20, %v61
  %v63 = vpop.f32.mrf.mxu0
  %64 = vdwg.mxu0
  %v67 = vrot.slane %v62, 6
  %vm68 = vcmask 1041408
  %v69 = vsel %vm68, %v49, %v67
  %71 = vst [vmem:[%s3] sm:$0xf] %v69
  // Predicated region
  $region14: #{forward.16} parent=0 // pred_check
    _
  $region15: #{forward.16} parent=0 // pred_check_branch
    %73 = sbr.rel (0) target = $region17
  $region16: #{forward.16} parent=0 // pred_region
    _
  $region17: #{forward.16} parent=0 // pred_fallthru
    _
  // Predicated region
  $region18: #{forward.16} parent=0 // pred_check
    _
  $region19: #{forward.16} parent=0 // pred_check_branch
    %75 = sbr.rel (0) target = $region21
  $region20: #{forward.16} parent=0 // pred_region
    _
  $region21: #{forward.16} parent=0 // pred_fallthru
    _

// kernel: forward.17
$region0: #{forward.17}
  #allocation0 [shape = 'u32[]', space=smem, size = 0x4, offset = 0x4, fixed_abs, tag = 'smem constant byte address 0x4 - core index']
  #allocation1 [shape = 'u32[72,128]{1,0:T(1,128)}', space=vmem, size = 0x9000, scoped, tag = 'internal scratch']
  #allocation2 [shape = 'bf16[24,64]{1,0:T(8,128)(2,1)}', space=vmem, size = 0x1800, scoped, tag = 'scratch operand']
  #allocation3 [shape = 's32[1]{0}', space=sflag, size = 0x4, scoped, tag = 'scratch operand']
  #allocation4 [shape = 'f32[2,128]{1,0:T(2,128)}', space=vmem, size = 0x400, scoped, tag = 'scratch operand']
  #allocation5 [shape = 's32[]', space=sflag, size = 0x4, offset = 0, fixed_abs, tag = 'sflag constant byte address 0x0 - dummy sync flag']
  %s0 = inlined_call_operand.vmem [shape: bf16[24,64], index: 0, kind: input, shape index: {}]
  %s1 = inlined_call_operand.vmem [shape: bf16[256,128], index: 1, kind: input, shape index: {}]
  %s2 = inlined_call_operand.vmem [shape: f32[1,128], index: 2, kind: input, shape index: {}]
  %s3 = inlined_call_operand.vmem [shape: f32[1,128], index: 3, kind: input, shape index: {}]
  %s4 = inlined_call_operand.vmem [shape: f32[1,128], index: 4, kind: input, shape index: {}]
  %s5 = inlined_call_operand.vmem [shape: f32[16,1], index: 5, kind: input, shape index: {}]
  %s6 = inlined_call_operand.vmem [shape: bf16[16,128], index: 6, kind: output, shape index: {}]
  %s7 = sld [smem:[#allocation0]]
  $region52: #{forward.17} parent=0
    _
  %s9 = ssub.s32 1, %s7
  %s10 = scalar_select 0, %s9, %s7
  // Predicated region
  $region2: #{forward.17} parent=0 // pred_check
    _
  $region3: #{forward.17} parent=0 // pred_check_branch
    %12 = sbr.rel (0) target = $region5
  $region4: #{forward.17} parent=0 // pred_region
    _
  $region5: #{forward.17} parent=0 // pred_fallthru
    _
  // Predicated region
  $region6: #{forward.17} parent=0 // pred_check
    _
  $region7: #{forward.17} parent=0 // pred_check_branch
    %14 = sbr.rel (0) target = $region9
  $region8: #{forward.17} parent=0 // pred_region
    _
  $region9: #{forward.17} parent=0 // pred_fallthru
    _
  // Predicated region
  $region10: #{forward.17} parent=0 // pred_check
    _
  $region11: #{forward.17} parent=0 // pred_check_branch
    %16 = sbr.rel (0) target = $region13
  $region12: #{forward.17} parent=0 // pred_region
    _
  $region13: #{forward.17} parent=0 // pred_fallthru
    _
  // Predicated region
  $region14: #{forward.17} parent=0 // pred_check
    _
  $region15: #{forward.17} parent=0 // pred_check_branch
    %18 = sbr.rel (0) target = $region17
  $region16: #{forward.17} parent=0 // pred_region
    _
  $region17: #{forward.17} parent=0 // pred_fallthru
    _
  // Predicated region
  $region18: #{forward.17} parent=0 // pred_check
    _
  $region19: #{forward.17} parent=0 // pred_check_branch
    %20 = sbr.rel (0) target = $region21
  $region20: #{forward.17} parent=0 // pred_region
    _
  $region21: #{forward.17} parent=0 // pred_fallthru
    _
  %s21 = smul.u32 0, 0
  %s22 = smul.u32 2, %s21
  %p23 = scmp.lt.s32.totalorder %s22, 1
  %s24 = scalar_select %p23, %s22, 1
  %s25 = smul.addr %s24, 4
  %s26 = scalar_lea.vmem %s6, %s25
  %s27 = smul.u32 0, 0
  %s28 = smul.u32 2, %s27
  %p29 = scmp.lt.s32.totalorder %s28, 1
  %s30 = scalar_select %p29, %s28, 1
  %s31 = smul.addr %s30, 4
  %s32 = scalar_lea.vmem %s6, %s31
  %s33 = smul.u32 0, 0
  %s34 = smul.u32 2, %s33
  %s35 = smul.u32 0, 16
  %s36 = sshra.s32 %s35, 3
  %s37 = sand.u32 %s35, 7
  %s38 = smul.addr %s36, 4
  %s39 = scalar_lea.vmem %s0, %s38
  // Predicated region
  $region22: #{forward.17} parent=0 // pred_check
    _
  $region23: #{forward.17} parent=0 // pred_check_branch
    %41 = sbr.rel (0) target = $region25
  $region24: #{forward.17} parent=0 // pred_region
    %s42 = scalar_lea.vmem %s39, 8
    %s43 = scalar_lea.vmem [#allocation2], 8
    loop: start=0, step=1, limit=1
    $region26: #{forward.17} parent=24 // loop_pre_header
      _
    $region27: #{forward.17} parent=24 // loop_header
      %s45 = sphi 0, %s49
      %p46 = scmp.ge.s32.totalorder %s45, 1
      %s50 = sphi %s39, %s39
      %s51 = sphi [#allocation2], [#allocation2]
    $region28: #{forward.17} parent=24 // loop_header_branch
      %48 = sbr.rel (%p46) target = $region32
    $region29: #{forward.17} parent=24 // loop_body
      %v52 = vld [vmem:[%s50] sm:$0xff]
      %53 = vst [vmem:[%s51] sm:$0xff] %v52
    $region30: #{forward.17} parent=24 // loop_footer
      %s49 = sadd.s32 1, %s45
    $region31: #{forward.17} parent=24 // loop_footer_branch
      %44 = sbr.rel target = $region27
    $region32: #{forward.17} parent=24 // loop_exit
      _
    %s55 = ssub.s32 16, 1
    loop: start=0, step=1, limit=1
    $region33: #{forward.17} parent=24 // loop_pre_header
      _
    $region34: #{forward.17} parent=24 // loop_header
      %s57 = sphi 0, %s61
      %p58 = scmp.ge.s32.totalorder %s57, 1
      %s62 = sphi %s42, %s42
      %s63 = sphi %s43, %s43
    $region35: #{forward.17} parent=24 // loop_header_branch
      %60 = sbr.rel (%p58) target = $region39
    $region36: #{forward.17} parent=24 // loop_body
      %v64 = vld [vmem:[%s62] sm:%s55]
      %65 = vst [vmem:[%s63] sm:%s55] %v64
    $region37: #{forward.17} parent=24 // loop_footer
      %s61 = sadd.s32 1, %s57
    $region38: #{forward.17} parent=24 // loop_footer_branch
      %56 = sbr.rel target = $region34
    $region39: #{forward.17} parent=24 // loop_exit
      _
  $region25: #{forward.17} parent=0 // pred_fallthru
    _
  // Predicated region
  $region40: #{forward.17} parent=0 // pred_check
    _
  $region41: #{forward.17} parent=0 // pred_check_branch
    %68 = sbr.rel (0) target = $region43
  $region42: #{forward.17} parent=0 // pred_region
    %69 = vsyncadd [#allocation3], 192
  $region43: #{forward.17} parent=0 // pred_fallthru
    _
  %s70 = smul.u32 4, 3
  %s71 = smul.u32 %s70, 1
  %s72 = sshll.u32 %s71, 4
  %73 = dma.done [#allocation3], %s72
  %v74 = vld [vmem:[#allocation2] sm:$0xf]
  %v75 = vld [vmem:[#allocation2 + $0x4] sm:$0xf]
  %v76 = vld [vmem:[#allocation2 + $0x8] sm:$0x1]
  %v77 = vld [vmem:[#allocation2] sm:$0xe]
  %v78 = vld [vmem:[#allocation2 + $0x8] sm:$0x3]
  %v79 = vld [vmem:[#allocation2] sm:$0xc]
  %v82 = vunpack.c.l.b16 %v74
  %v83 = vunpack.c.l.b16 %v75
  %v84 = vpack.c.b16 %v83, %v82
  %v86 = vunpack.c.l.b16 %v76
  %v87 = vpack.c.b16 %v86, %v86
  %vm88 = vsmask.f32 7424
  %v90 = vshrl.u32 %v84, 16
  %v92 = vshll.u32 %v84, 16
  %v94 = vrot.slane %v92, 1
  %v95 = vor.u32 %v90, %v94
  %v97 = vshll.u32 %v87, 16
  %v99 = vrot.slane %v97, 1
  %v100 = vsel %vm88, %v95, %v99
  %101 = vrot.lane.b32.xlu0 %v100, 64
  %v102 = vpop.permute.xlu0 %101
  %v105 = vunpack.c.l.b16 %v77
  %v106 = vunpack.c.l.b16 %v78
  %v107 = vpack.c.b16 %v83, %v105
  %v108 = vpack.c.b16 %v106, %v106
  %vm109 = vsmask.f32 6400
  %v111 = vshrl.u32 %v107, 16
  %v113 = vrot.slane %v111, 1
  %v114 = vshll.u32 %v107, 16
  %v116 = vrot.slane %v114, 2
  %v117 = vor.u32 %v113, %v116
  %v119 = vshrl.u32 %v108, 16
  %v121 = vrot.slane %v119, 1
  %v122 = vshll.u32 %v108, 16
  %v124 = vrot.slane %v122, 2
  %v125 = vor.u32 %v121, %v124
  %v126 = vsel %vm109, %v117, %v125
  %v128 = vunpack.c.l.b16 %v79
  %v129 = vpack.c.b16 %v83, %v128
  %vm130 = vcmask 1045504
  %v131 = vrot.slane %v129, 2
  %v132 = vrot.slane %v108, 2
  %v133 = vsel %vm130, %v131, %v132
  %134 = vrot.lane.b32.xlu0 %v133, 64
  %v135 = vpop.permute.xlu0 %134
  %vm136 = vcmask 523264
  %v138 = vsel %vm136, %v84, %v102
  %v142 = vsel %vm136, %v126, %v135
  %v144 = vld [vmem:[%s1] sm:$0xf]
  %v145 = vld [vmem:[%s1 + $0x4] sm:$0xf]
  %v146 = vld [vmem:[%s1 + $0x8] sm:$0xf]
  %v147 = vld [vmem:[%s1 + $0xc] sm:$0xf]
  %v148 = vld [vmem:[%s1 + $0x10] sm:$0xf]
  %v149 = vld [vmem:[%s1 + $0x14] sm:$0xf]
  %v150 = vld [vmem:[%s1 + $0x18] sm:$0xf]
  %v151 = vld [vmem:[%s1 + $0x1c] sm:$0xf]
  %v152 = vld [vmem:[%s1 + $0x20] sm:$0xf]
  %v153 = vld [vmem:[%s1 + $0x24] sm:$0xf]
  %v154 = vld [vmem:[%s1 + $0x28] sm:$0xf]
  %v155 = vld [vmem:[%s1 + $0x2c] sm:$0xf]
  %v156 = vld [vmem:[%s1 + $0x30] sm:$0xf]
  %v157 = vld [vmem:[%s1 + $0x34] sm:$0xf]
  %v158 = vld [vmem:[%s1 + $0x38] sm:$0xf]
  %v159 = vld [vmem:[%s1 + $0x3c] sm:$0xf]
  %v160 = vld [vmem:[%s1 + $0x40] sm:$0xf]
  %v161 = vld [vmem:[%s1 + $0x44] sm:$0xf]
  %v162 = vld [vmem:[%s1 + $0x48] sm:$0xf]
  %v163 = vld [vmem:[%s1 + $0x4c] sm:$0xf]
  %v164 = vld [vmem:[%s1 + $0x50] sm:$0xf]
  %v165 = vld [vmem:[%s1 + $0x54] sm:$0xf]
  %v166 = vld [vmem:[%s1 + $0x58] sm:$0xf]
  %v167 = vld [vmem:[%s1 + $0x5c] sm:$0xf]
  %v168 = vld [vmem:[%s1 + $0x60] sm:$0xf]
  %v169 = vld [vmem:[%s1 + $0x64] sm:$0xf]
  %v170 = vld [vmem:[%s1 + $0x68] sm:$0xf]
  %v171 = vld [vmem:[%s1 + $0x6c] sm:$0xf]
  %v172 = vld [vmem:[%s1 + $0x70] sm:$0xf]
  %v173 = vld [vmem:[%s1 + $0x74] sm:$0xf]
  %v174 = vld [vmem:[%s1 + $0x78] sm:$0xf]
  %v175 = vld [vmem:[%s1 + $0x7c] sm:$0xf]
  %v176 = vld [vmem:[%s2] sm:$0x1]
  %v178 = vperm.slane %v176, 0
  %v212 = vunpack.c.l.b16 %v144
  %v213 = vunpack.c.l.b16 %v145
  %v214 = vunpack.c.l.b16 %v146
  %v215 = vunpack.c.l.b16 %v147
  %v216 = vunpack.c.l.b16 %v148
  %v217 = vunpack.c.l.b16 %v149
  %v218 = vunpack.c.l.b16 %v150
  %v219 = vunpack.c.l.b16 %v151
  %v220 = vunpack.c.l.b16 %v152
  %v221 = vunpack.c.l.b16 %v153
  %v222 = vunpack.c.l.b16 %v154
  %v223 = vunpack.c.l.b16 %v155
  %v224 = vunpack.c.l.b16 %v156
  %v225 = vunpack.c.l.b16 %v157
  %v226 = vunpack.c.l.b16 %v158
  %v227 = vunpack.c.l.b16 %v159
  %v228 = vunpack.c.l.b16 %v160
  %v229 = vunpack.c.l.b16 %v161
  %v230 = vunpack.c.l.b16 %v162
  %v231 = vunpack.c.l.b16 %v163
  %v232 = vunpack.c.l.b16 %v164
  %v233 = vunpack.c.l.b16 %v165
  %v234 = vunpack.c.l.b16 %v166
  %v235 = vunpack.c.l.b16 %v167
  %v236 = vunpack.c.l.b16 %v168
  %v237 = vunpack.c.l.b16 %v169
  %v238 = vunpack.c.l.b16 %v170
  %v239 = vunpack.c.l.b16 %v171
  %v240 = vunpack.c.l.b16 %v172
  %v241 = vunpack.c.l.b16 %v173
  %v242 = vunpack.c.l.b16 %v174
  %v243 = vunpack.c.l.b16 %v175
  %v244 = vpack.c.b16 %v213, %v212
  %v245 = vpack.c.b16 %v215, %v214
  %v246 = vpack.c.b16 %v217, %v216
  %v247 = vpack.c.b16 %v219, %v218
  %v248 = vpack.c.b16 %v221, %v220
  %v249 = vpack.c.b16 %v223, %v222
  %v250 = vpack.c.b16 %v225, %v224
  %v251 = vpack.c.b16 %v227, %v226
  %v252 = vpack.c.b16 %v229, %v228
  %v253 = vpack.c.b16 %v231, %v230
  %v254 = vpack.c.b16 %v233, %v232
  %v255 = vpack.c.b16 %v235, %v234
  %v256 = vpack.c.b16 %v237, %v236
  %v257 = vpack.c.b16 %v239, %v238
  %v258 = vpack.c.b16 %v241, %v240
  %v259 = vpack.c.b16 %v243, %v242
  %276 = vmatpush.bf16.msra.mxu0 %v251
  %277 = vmatpush.bf16.msra.mxu0 %v250
  %278 = vmatpush.bf16.msra.mxu0 %v249
  %279 = vmatpush.bf16.msra.mxu0 %v248
  %280 = vmatpush.bf16.msra.mxu0 %v247
  %281 = vmatpush.bf16.msra.mxu0 %v246
  %282 = vmatpush.bf16.msra.mxu0 %v245
  %283 = vmatpush.bf16.msra.mxu0 %v244
  %284 = vmatmul.bf16.gmra.mxu0 %v138
  %v285 = vpop.f32.mrf.mxu0
  %v286 = vadd.f32 %v178, %v285
  %v287 = vpop.f32.mrf.mxu0
  %v288 = vadd.f32 %v178, %v287
  %289 = vdwg.mxu0
  %290 = vmatpush.bf16.msra.mxu0 %v259
  %291 = vmatpush.bf16.msra.mxu0 %v258
  %292 = vmatpush.bf16.msra.mxu0 %v257
  %293 = vmatpush.bf16.msra.mxu0 %v256
  %294 = vmatpush.bf16.msra.mxu0 %v255
  %295 = vmatpush.bf16.msra.mxu0 %v254
  %296 = vmatpush.bf16.msra.mxu0 %v253
  %297 = vmatpush.bf16.msra.mxu0 %v252
  %298 = vmatmul.bf16.gmra.mxu0 %v142
  %v299 = vpop.f32.mrf.mxu0
  %v300 = vadd.f32 %v286, %v299
  %v301 = vpop.f32.mrf.mxu0
  %v302 = vadd.f32 %v288, %v301
  %303 = vdwg.mxu0
  %v304 = vld [vmem:[%s5] sm:$0xff]
  %v305 = vld [vmem:[%s5 + $0x8] sm:$0xff]
  %307 = vset.pattern.permute.xlu0 0
  %308 = vperm.xlu0 %307, %v304
  %v309 = vpop.permute.xlu0 %308
  %312 = vset.pattern.permute.xlu0 0
  %313 = vperm.xlu0 %312, %v305
  %v314 = vpop.permute.xlu0 %313
  %v316 = vmul.f32 %v300, %v309
  %v317 = vmul.f32 %v302, %v314
  %v318 = vadd.f32 %v316, %v317
  %v319 = vrot.slane %v318, 4
  %v320 = vadd.f32 %v318, %v319
  %v321 = vrot.slane %v320, 2
  %v322 = vadd.f32 %v320, %v321
  %v323 = vrot.slane %v322, 1
  %v324 = vadd.f32 %v322, %v323
  %v325 = vmul.f32 %v316, %v316
  %v326 = vmul.f32 %v317, %v317
  %v327 = vadd.f32 %v325, %v326
  %v328 = vrot.slane %v327, 4
  %v329 = vadd.f32 %v327, %v328
  %v330 = vrot.slane %v329, 2
  %v331 = vadd.f32 %v329, %v330
  %v332 = vrot.slane %v331, 1
  %v333 = vadd.f32 %v331, %v332
  %335 = vrot.lane.b32.xlu0 %v324, 96
  %v336 = vpop.permute.xlu0 %335
  %v338 = vadd.f32 %v324, %v336
  %339 = vrot.lane.b32.xlu0 %v324, 64
  %v340 = vpop.permute.xlu0 %339
  %v342 = vadd.f32 %v338, %v340
  %343 = vrot.lane.b32.xlu0 %v324, 32
  %v344 = vpop.permute.xlu0 %343
  %v346 = vadd.f32 %v342, %v344
  %v347 = vmul.f32 %v346, 0.03125
  %349 = vrot.lane.b32.xlu0 %v333, 96
  %v350 = vpop.permute.xlu0 %349
  %v352 = vadd.f32 %v333, %v350
  %353 = vrot.lane.b32.xlu0 %v333, 64
  %v354 = vpop.permute.xlu0 %353
  %v356 = vadd.f32 %v352, %v354
  %357 = vrot.lane.b32.xlu0 %v333, 32
  %v358 = vpop.permute.xlu0 %357
  %v360 = vadd.f32 %v356, %v358
  %v361 = vmul.f32 %v360, 0.03125
  %v362 = vmul.f32 %v347, %v347
  %v363 = vsub.f32 %v361, %v362
  %v364 = vmax.f32 %v363, 0.0
  %v365 = vadd.f32 %v364, 1e-05
  %v366 = vrsqrt.pop %v365
  %v367 = vmul.f32 %v366, %v365
  %v368 = vmul.f32 %v367, %v366
  %v369 = vmul.f32 0.5, %v368
  %v370 = vsub.f32 1.5, %v369
  %v371 = vmul.f32 %v366, %v370
  %vm372 = vweird.f32 %v365
  %vm373 = vweird.f32 %v366
  %vm374 = vmor %vm372, %vm373
  %v375 = vsel %vm374, %v366, %v371
  %377 = vrot.lane.b32.xlu0 %v347, 32
  %v378 = vpop.permute.xlu0 %377
  %380 = vrot.lane.b32.xlu0 %v347, 64
  %v381 = vpop.permute.xlu0 %380
  %383 = vrot.lane.b32.xlu0 %v347, 96
  %v384 = vpop.permute.xlu0 %383
  %vm386 = vcmask 261120
  %v387 = vsel %vm386, %v347, %v378
  %v388 = vsel %vm136, %v387, %v381
  %vm389 = vcmask 785408
  %v390 = vsel %vm389, %v388, %v384
  %392 = vrot.lane.b32.xlu0 %v375, 32
  %v393 = vpop.permute.xlu0 %392
  %395 = vrot.lane.b32.xlu0 %v375, 64
  %v396 = vpop.permute.xlu0 %395
  %398 = vrot.lane.b32.xlu0 %v375, 96
  %v399 = vpop.permute.xlu0 %398
  %v401 = vsel %vm386, %v375, %v393
  %v402 = vsel %vm136, %v401, %v396
  %v403 = vsel %vm389, %v402, %v399
  %v404 = vld [vmem:[%s3] sm:$0x1]
  %v405 = vmul.f32 %v403, %v404
  %v406 = vld [vmem:[%s4] sm:$0x1]
  %v407 = vmul.f32 %v390, %v405
  %v408 = vsub.f32 %v406, %v407
  %v409 = vperm.slane %v405, 0
  %v410 = vmul.f32 %v300, %v409
  %v411 = vmul.f32 %v302, %v409
  %v413 = vperm.slane %v408, 0
  %v415 = vadd.f32 %v410, %v413
  %v416 = vadd.f32 %v411, %v413
  %v417 = vmul.f32 %v415, 0.01
  %v418 = vmul.f32 %v416, 0.01
  %v419 = vmax.f32 %v415, %v417
  %v420 = vmax.f32 %v416, %v418
  %v421 = vpack.c.bf16 %v419, %v419
  %v422 = vpack.c.bf16 %v420, %v420
  %423 = vst [vmem:[%s32] sm:$0xf] %v421
  %424 = vst [vmem:[%s32 + $0x4] sm:$0xf] %v422
  %s425 = smul.u32 0, 0
  %s426 = smul.u32 2, %s425
  %p427 = scmp.lt.s32.totalorder %s426, 1
  %s428 = scalar_select %p427, %s426, 1
  %s429 = smul.addr %s428, 4
  %s430 = scalar_lea.vmem %s6, %s429
  // Predicated region
  $region44: #{forward.17} parent=0 // pred_check
    _
  $region45: #{forward.17} parent=0 // pred_check_branch
    %432 = sbr.rel (0) target = $region47
  $region46: #{forward.17} parent=0 // pred_region
    %s433 = smul.u32 0, 0
    %s434 = smul.u32 2, %s433
  $region47: #{forward.17} parent=0 // pred_fallthru
    _
  // Predicated region
  $region48: #{forward.17} parent=0 // pred_check
    _
  $region49: #{forward.17} parent=0 // pred_check_branch
    %436 = sbr.rel (0) target = $region51
  $region50: #{forward.17} parent=0 // pred_region
    %s437 = smul.u32 0, 0
    %s438 = smul.u32 2, %s437
    %p439 = scmp.lt.s32.totalorder %s438, 1
    %s440 = scalar_select %p439, %s438, 1
    %s441 = smul.addr %s440, 4
    %s442 = scalar_lea.vmem %s6, %s441
  $region51: #{forward.17} parent=0 // pred_fallthru
    _
  %443 = vsyncmov [#allocation3]
  %s444 = vpop.sfrf %443
  %p445 = scmp.eq.s32.totalorder %s444, 0
  %p446 = pneg %p445
  %448 = shalt.err (%p446)

// kernel: forward.18
$region0: #{forward.18}
  #allocation0 [shape = 'u32[]', space=smem, size = 0x4, offset = 0x4, fixed_abs, tag = 'smem constant byte address 0x4 - core index']
  #allocation1 [shape = 'u32[72,128]{1,0:T(1,128)}', space=vmem, size = 0x9000, scoped, tag = 'internal scratch']
  #allocation2 [shape = 'bf16[56,32]{1,0:T(8,128)(2,1)}', space=vmem, size = 0x3800, scoped, tag = 'scratch operand']
  #allocation3 [shape = 's32[1]{0}', space=sflag, size = 0x4, scoped, tag = 'scratch operand']
  #allocation4 [shape = 'f32[2,128]{1,0:T(2,128)}', space=vmem, size = 0x400, scoped, tag = 'scratch operand']
  #allocation5 [shape = 's32[]', space=sflag, size = 0x4, offset = 0, fixed_abs, tag = 'sflag constant byte address 0x0 - dummy sync flag']
  %s0 = inlined_call_operand.vmem [shape: bf16[56,32], index: 0, kind: input, shape index: {}]
  %s1 = inlined_call_operand.vmem [shape: bf16[128,128], index: 1, kind: input, shape index: {}]
  %s2 = inlined_call_operand.vmem [shape: f32[1,128], index: 2, kind: input, shape index: {}]
  %s3 = inlined_call_operand.vmem [shape: f32[1,128], index: 3, kind: input, shape index: {}]
  %s4 = inlined_call_operand.vmem [shape: f32[1,128], index: 4, kind: input, shape index: {}]
  %s5 = inlined_call_operand.vmem [shape: f32[48,1], index: 5, kind: input, shape index: {}]
  %s6 = inlined_call_operand.vmem [shape: bf16[48,128], index: 6, kind: output, shape index: {}]
  %s7 = sld [smem:[#allocation0]]
  $region52: #{forward.18} parent=0
    _
  %s9 = ssub.s32 1, %s7
  %s10 = scalar_select 0, %s9, %s7
  // Predicated region
  $region2: #{forward.18} parent=0 // pred_check
    _
  $region3: #{forward.18} parent=0 // pred_check_branch
    %12 = sbr.rel (0) target = $region5
  $region4: #{forward.18} parent=0 // pred_region
    _
  $region5: #{forward.18} parent=0 // pred_fallthru
    _
  // Predicated region
  $region6: #{forward.18} parent=0 // pred_check
    _
  $region7: #{forward.18} parent=0 // pred_check_branch
    %14 = sbr.rel (0) target = $region9
  $region8: #{forward.18} parent=0 // pred_region
    _
  $region9: #{forward.18} parent=0 // pred_fallthru
    _
  // Predicated region
  $region10: #{forward.18} parent=0 // pred_check
    _
  $region11: #{forward.18} parent=0 // pred_check_branch
    %16 = sbr.rel (0) target = $region13
  $region12: #{forward.18} parent=0 // pred_region
    _
  $region13: #{forward.18} parent=0 // pred_fallthru
    _
  // Predicated region
  $region14: #{forward.18} parent=0 // pred_check
    _
  $region15: #{forward.18} parent=0 // pred_check_branch
    %18 = sbr.rel (0) target = $region17
  $region16: #{forward.18} parent=0 // pred_region
    _
  $region17: #{forward.18} parent=0 // pred_fallthru
    _
  // Predicated region
  $region18: #{forward.18} parent=0 // pred_check
    _
  $region19: #{forward.18} parent=0 // pred_check_branch
    %20 = sbr.rel (0) target = $region21
  $region20: #{forward.18} parent=0 // pred_region
    _
  $region21: #{forward.18} parent=0 // pred_fallthru
    _
  %s21 = smul.u32 0, 0
  %s22 = smul.u32 6, %s21
  %p23 = scmp.lt.s32.totalorder %s22, 5
  %s24 = scalar_select %p23, %s22, 5
  %s25 = smul.addr %s24, 4
  %s26 = scalar_lea.vmem %s6, %s25
  %s27 = smul.u32 0, 0
  %s28 = smul.u32 6, %s27
  %p29 = scmp.lt.s32.totalorder %s28, 5
  %s30 = scalar_select %p29, %s28, 5
  %s31 = smul.addr %s30, 4
  %s32 = scalar_lea.vmem %s6, %s31
  %s33 = smul.u32 0, 0
  %s34 = smul.u32 6, %s33
  %s35 = smul.u32 0, 48
  %s36 = sshra.s32 %s35, 3
  %s37 = sand.u32 %s35, 7
  %s38 = smul.addr %s36, 4
  %s39 = scalar_lea.vmem %s0, %s38
  // Predicated region
  $region22: #{forward.18} parent=0 // pred_check
    _
  $region23: #{forward.18} parent=0 // pred_check_branch
    %41 = sbr.rel (0) target = $region25
  $region24: #{forward.18} parent=0 // pred_region
    %s42 = scalar_lea.vmem %s39, 24
    %s43 = scalar_lea.vmem [#allocation2], 24
    loop: start=0, step=1, limit=1
    $region26: #{forward.18} parent=24 // loop_pre_header
      _
    $region27: #{forward.18} parent=24 // loop_header
      %s45 = sphi 0, %s49
      %p46 = scmp.ge.s32.totalorder %s45, 1
      %s50 = sphi %s39, %s39
      %s51 = sphi [#allocation2], [#allocation2]
    $region28: #{forward.18} parent=24 // loop_header_branch
      %48 = sbr.rel (%p46) target = $region32
    $region29: #{forward.18} parent=24 // loop_body
      %v52 = vld [vmem:[%s50] sm:$0xff]
      %53 = vst [vmem:[%s51] sm:$0xff] %v52
      %v54 = vld [vmem:[%s50 + $0x8] sm:$0xff]
      %55 = vst [vmem:[%s51 + $0x8] sm:$0xff] %v54
      %v56 = vld [vmem:[%s50 + $0x10] sm:$0xff]
      %57 = vst [vmem:[%s51 + $0x10] sm:$0xff] %v56
    $region30: #{forward.18} parent=24 // loop_footer
      %s49 = sadd.s32 1, %s45
    $region31: #{forward.18} parent=24 // loop_footer_branch
      %44 = sbr.rel target = $region27
    $region32: #{forward.18} parent=24 // loop_exit
      _
    %s59 = ssub.s32 16, 1
    loop: start=0, step=1, limit=1
    $region33: #{forward.18} parent=24 // loop_pre_header
      _
    $region34: #{forward.18} parent=24 // loop_header
      %s61 = sphi 0, %s65
      %p62 = scmp.ge.s32.totalorder %s61, 1
      %s66 = sphi %s42, %s42
      %s67 = sphi %s43, %s43
    $region35: #{forward.18} parent=24 // loop_header_branch
      %64 = sbr.rel (%p62) target = $region39
    $region36: #{forward.18} parent=24 // loop_body
      %v68 = vld [vmem:[%s66] sm:%s59]
      %69 = vst [vmem:[%s67] sm:%s59] %v68
    $region37: #{forward.18} parent=24 // loop_footer
      %s65 = sadd.s32 1, %s61
    $region38: #{forward.18} parent=24 // loop_footer_branch
      %60 = sbr.rel target = $region34
    $region39: #{forward.18} parent=24 // loop_exit
      _
  $region25: #{forward.18} parent=0 // pred_fallthru
    _
  // Predicated region
  $region40: #{forward.18} parent=0 // pred_check
    _
  $region41: #{forward.18} parent=0 // pred_check_branch
    %72 = sbr.rel (0) target = $region43
  $region42: #{forward.18} parent=0 // pred_region
    %73 = vsyncadd [#allocation3], 448
  $region43: #{forward.18} parent=0 // pred_fallthru
    _
  %s74 = smul.u32 4, 7
  %s75 = smul.u32 %s74, 1
  %s76 = sshll.u32 %s75, 4
  %77 = dma.done [#allocation3], %s76
  %v78 = vld [vmem:[#allocation2] sm:$0xf]
  %v79 = vld [vmem:[#allocation2 + $0x4] sm:$0xf]
  %v80 = vld [vmem:[#allocation2 + $0x8] sm:$0xf]
  %v81 = vld [vmem:[#allocation2 + $0xc] sm:$0xf]
  %v82 = vld [vmem:[#allocation2 + $0x10] sm:$0xf]
  %v83 = vld [vmem:[#allocation2 + $0x14] sm:$0xf]
  %v84 = vld [vmem:[#allocation2 + $0x18] sm:$0x1]
  %v85 = vld [vmem:[#allocation2] sm:$0xc]
  %v86 = vld [vmem:[#allocation2 + $0x18] sm:$0x7]
  %v87 = vld [vmem:[#allocation2] sm:$0x8]
  %v94 = vunpack.c.l.b16 %v78
  %v95 = vunpack.c.l.b16 %v79
  %v96 = vunpack.c.l.b16 %v80
  %v97 = vunpack.c.l.b16 %v81
  %v98 = vunpack.c.l.b16 %v82
  %v99 = vunpack.c.l.b16 %v83
  %v100 = vpack.c.b16 %v95, %v94
  %v101 = vpack.c.b16 %v97, %v96
  %v102 = vpack.c.b16 %v99, %v98
  %v104 = vunpack.c.l.b16 %v84
  %v105 = vpack.c.b16 %v104, %v104
  %vm106 = vsmask.f32 7424
  %v108 = vshrl.u32 %v100, 16
  %v110 = vshll.u32 %v100, 16
  %v112 = vrot.slane %v110, 1
  %v113 = vor.u32 %v108, %v112
  %v115 = vshll.u32 %v101, 16
  %v117 = vrot.slane %v115, 1
  %v118 = vsel %vm106, %v113, %v117
  %v119 = vshrl.u32 %v101, 16
  %v121 = vor.u32 %v119, %v117
  %v123 = vshll.u32 %v102, 16
  %v125 = vrot.slane %v123, 1
  %v126 = vsel %vm106, %v121, %v125
  %v127 = vshrl.u32 %v102, 16
  %v129 = vor.u32 %v127, %v125
  %v131 = vshll.u32 %v105, 16
  %v133 = vrot.slane %v131, 1
  %v134 = vsel %vm106, %v129, %v133
  %135 = vrot.lane.b32.xlu0 %v118, 32
  %v136 = vpop.permute.xlu0 %135
  %137 = vrot.lane.b32.xlu0 %v126, 32
  %v138 = vpop.permute.xlu0 %137
  %139 = vrot.lane.b32.xlu0 %v134, 32
  %v140 = vpop.permute.xlu0 %139
  %v143 = vunpack.c.l.b16 %v85
  %v144 = vunpack.c.l.b16 %v86
  %v145 = vpack.c.b16 %v95, %v143
  %v146 = vpack.c.b16 %v144, %v144
  %vm147 = vsmask.f32 5376
  %v149 = vshrl.u32 %v145, 16
  %v151 = vrot.slane %v149, 2
  %v152 = vshll.u32 %v145, 16
  %v154 = vrot.slane %v152, 3
  %v155 = vor.u32 %v151, %v154
  %v156 = vrot.slane %v119, 2
  %v157 = vrot.slane %v115, 3
  %v158 = vor.u32 %v156, %v157
  %v159 = vsel %vm147, %v155, %v158
  %v160 = vrot.slane %v127, 2
  %v161 = vrot.slane %v123, 3
  %v162 = vor.u32 %v160, %v161
  %v163 = vsel %vm147, %v158, %v162
  %v165 = vshrl.u32 %v146, 16
  %v167 = vrot.slane %v165, 2
  %v168 = vshll.u32 %v146, 16
  %v170 = vrot.slane %v168, 3
  %v171 = vor.u32 %v167, %v170
  %v172 = vsel %vm147, %v162, %v171
  %173 = vrot.lane.b32.xlu0 %v159, 64
  %v174 = vpop.permute.xlu0 %173
  %175 = vrot.lane.b32.xlu0 %v163, 64
  %v176 = vpop.permute.xlu0 %175
  %177 = vrot.lane.b32.xlu0 %v172, 64
  %v178 = vpop.permute.xlu0 %177
  %v180 = vunpack.c.l.b16 %v87
  %v181 = vpack.c.b16 %v95, %v180
  %vm182 = vcmask 1044480
  %v183 = vrot.slane %v181, 3
  %v184 = vrot.slane %v101, 3
  %v185 = vsel %vm182, %v183, %v184
  %v186 = vrot.slane %v102, 3
  %v187 = vsel %vm182, %v184, %v186
  %v188 = vrot.slane %v146, 3
  %v189 = vsel %vm182, %v186, %v188
  %190 = vrot.lane.b32.xlu0 %v185, 96
  %v191 = vpop.permute.xlu0 %190
  %192 = vrot.lane.b32.xlu0 %v187, 96
  %v193 = vpop.permute.xlu0 %192
  %194 = vrot.lane.b32.xlu0 %v189, 96
  %v195 = vpop.permute.xlu0 %194
  %vm196 = vcmask 261120
  %v198 = vsel %vm196, %v100, %v136
  %v200 = vsel %vm196, %v101, %v138
  %v202 = vsel %vm196, %v102, %v140
  %vm203 = vcmask 523264
  %v205 = vsel %vm203, %v198, %v174
  %v207 = vsel %vm203, %v200, %v176
  %v209 = vsel %vm203, %v202, %v178
  %vm210 = vcmask 785408
  %v212 = vsel %vm210, %v205, %v191
  %v215 = vsel %vm210, %v207, %v193
  %v218 = vsel %vm210, %v209, %v195
  %v220 = vld [vmem:[%s1] sm:$0xf]
  %v221 = vld [vmem:[%s1 + $0x4] sm:$0xf]
  %v222 = vld [vmem:[%s1 + $0x8] sm:$0xf]
  %v223 = vld [vmem:[%s1 + $0xc] sm:$0xf]
  %v224 = vld [vmem:[%s1 + $0x10] sm:$0xf]
  %v225 = vld [vmem:[%s1 + $0x14] sm:$0xf]
  %v226 = vld [vmem:[%s1 + $0x18] sm:$0xf]
  %v227 = vld [vmem:[%s1 + $0x1c] sm:$0xf]
  %v228 = vld [vmem:[%s1 + $0x20] sm:$0xf]
  %v229 = vld [vmem:[%s1 + $0x24] sm:$0xf]
  %v230 = vld [vmem:[%s1 + $0x28] sm:$0xf]
  %v231 = vld [vmem:[%s1 + $0x2c] sm:$0xf]
  %v232 = vld [vmem:[%s1 + $0x30] sm:$0xf]
  %v233 = vld [vmem:[%s1 + $0x34] sm:$0xf]
  %v234 = vld [vmem:[%s1 + $0x38] sm:$0xf]
  %v235 = vld [vmem:[%s1 + $0x3c] sm:$0xf]
  %v236 = vld [vmem:[%s2] sm:$0x1]
  %v238 = vperm.slane %v236, 0
  %v256 = vunpack.c.l.b16 %v220
  %v257 = vunpack.c.l.b16 %v221
  %v258 = vunpack.c.l.b16 %v222
  %v259 = vunpack.c.l.b16 %v223
  %v260 = vunpack.c.l.b16 %v224
  %v261 = vunpack.c.l.b16 %v225
  %v262 = vunpack.c.l.b16 %v226
  %v263 = vunpack.c.l.b16 %v227
  %v264 = vunpack.c.l.b16 %v228
  %v265 = vunpack.c.l.b16 %v229
  %v266 = vunpack.c.l.b16 %v230
  %v267 = vunpack.c.l.b16 %v231
  %v268 = vunpack.c.l.b16 %v232
  %v269 = vunpack.c.l.b16 %v233
  %v270 = vunpack.c.l.b16 %v234
  %v271 = vunpack.c.l.b16 %v235
  %v272 = vpack.c.b16 %v257, %v256
  %v273 = vpack.c.b16 %v259, %v258
  %v274 = vpack.c.b16 %v261, %v260
  %v275 = vpack.c.b16 %v263, %v262
  %v276 = vpack.c.b16 %v265, %v264
  %v277 = vpack.c.b16 %v267, %v266
  %v278 = vpack.c.b16 %v269, %v268
  %v279 = vpack.c.b16 %v271, %v270
  %288 = vmatpush.bf16.msra.mxu0 %v279
  %289 = vmatpush.bf16.msra.mxu0 %v278
  %290 = vmatpush.bf16.msra.mxu0 %v277
  %291 = vmatpush.bf16.msra.mxu0 %v276
  %292 = vmatpush.bf16.msra.mxu0 %v275
  %293 = vmatpush.bf16.msra.mxu0 %v274
  %294 = vmatpush.bf16.msra.mxu0 %v273
  %295 = vmatpush.bf16.msra.mxu0 %v272
  %296 = vmatmul.bf16.gmra.mxu0 %v212
  %v297 = vpop.f32.mrf.mxu0
  %v298 = vadd.f32 %v238, %v297
  %v299 = vpop.f32.mrf.mxu0
  %v300 = vadd.f32 %v238, %v299
  %301 = vmatmul.bf16.gmra.mxu0 %v215
  %v302 = vpop.f32.mrf.mxu0
  %v303 = vadd.f32 %v238, %v302
  %v304 = vpop.f32.mrf.mxu0
  %v305 = vadd.f32 %v238, %v304
  %306 = vmatmul.bf16.gmra.mxu0 %v218
  %v307 = vpop.f32.mrf.mxu0
  %v308 = vadd.f32 %v238, %v307
  %v309 = vpop.f32.mrf.mxu0
  %v310 = vadd.f32 %v238, %v309
  %311 = vdwg.mxu0
  %v312 = vld [vmem:[%s5] sm:$0xff]
  %v313 = vld [vmem:[%s5 + $0x8] sm:$0xff]
  %v314 = vld [vmem:[%s5 + $0x10] sm:$0xff]
  %v315 = vld [vmem:[%s5 + $0x18] sm:$0xff]
  %v316 = vld [vmem:[%s5 + $0x20] sm:$0xff]
  %v317 = vld [vmem:[%s5 + $0x28] sm:$0xff]
  %319 = vset.pattern.permute.xlu0 0
  %320 = vperm.xlu0 %319, %v312
  %v321 = vpop.permute.xlu0 %320
  %324 = vset.pattern.permute.xlu0 0
  %325 = vperm.xlu0 %324, %v313
  %v326 = vpop.permute.xlu0 %325
  %329 = vset.pattern.permute.xlu0 0
  %330 = vperm.xlu0 %329, %v314
  %v331 = vpop.permute.xlu0 %330
  %334 = vset.pattern.permute.xlu0 0
  %335 = vperm.xlu0 %334, %v315
  %v336 = vpop.permute.xlu0 %335
  %339 = vset.pattern.permute.xlu0 0
  %340 = vperm.xlu0 %339, %v316
  %v341 = vpop.permute.xlu0 %340
  %344 = vset.pattern.permute.xlu0 0
  %345 = vperm.xlu0 %344, %v317
  %v346 = vpop.permute.xlu0 %345
  %v348 = vmul.f32 %v298, %v321
  %v349 = vmul.f32 %v300, %v326
  %v350 = vmul.f32 %v303, %v331
  %v351 = vmul.f32 %v305, %v336
  %v352 = vmul.f32 %v308, %v341
  %v353 = vmul.f32 %v310, %v346
  %v354 = vadd.f32 %v348, %v349
  %v355 = vadd.f32 %v354, %v350
  %v356 = vadd.f32 %v355, %v351
  %v357 = vadd.f32 %v356, %v352
  %v358 = vadd.f32 %v357, %v353
  %v359 = vrot.slane %v358, 4
  %v360 = vadd.f32 %v358, %v359
  %v361 = vrot.slane %v360, 2
  %v362 = vadd.f32 %v360, %v361
  %v363 = vrot.slane %v362, 1
  %v364 = vadd.f32 %v362, %v363
  %v365 = vmul.f32 %v348, %v348
  %v366 = vmul.f32 %v349, %v349
  %v367 = vmul.f32 %v350, %v350
  %v368 = vmul.f32 %v351, %v351
  %v369 = vmul.f32 %v352, %v352
  %v370 = vmul.f32 %v353, %v353
  %v371 = vadd.f32 %v365, %v366
  %v372 = vadd.f32 %v371, %v367
  %v373 = vadd.f32 %v372, %v368
  %v374 = vadd.f32 %v373, %v369
  %v375 = vadd.f32 %v374, %v370
  %v376 = vrot.slane %v375, 4
  %v377 = vadd.f32 %v375, %v376
  %v378 = vrot.slane %v377, 2
  %v379 = vadd.f32 %v377, %v378
  %v380 = vrot.slane %v379, 1
  %v381 = vadd.f32 %v379, %v380
  %383 = vrot.lane.b32.xlu0 %v364, 96
  %v384 = vpop.permute.xlu0 %383
  %v386 = vadd.f32 %v364, %v384
  %387 = vrot.lane.b32.xlu0 %v364, 64
  %v388 = vpop.permute.xlu0 %387
  %v390 = vadd.f32 %v386, %v388
  %391 = vrot.lane.b32.xlu0 %v364, 32
  %v392 = vpop.permute.xlu0 %391
  %v394 = vadd.f32 %v390, %v392
  %v395 = vmul.f32 %v394, 0.0078125
  %397 = vrot.lane.b32.xlu0 %v381, 96
  %v398 = vpop.permute.xlu0 %397
  %v400 = vadd.f32 %v381, %v398
  %401 = vrot.lane.b32.xlu0 %v381, 64
  %v402 = vpop.permute.xlu0 %401
  %v404 = vadd.f32 %v400, %v402
  %405 = vrot.lane.b32.xlu0 %v381, 32
  %v406 = vpop.permute.xlu0 %405
  %v408 = vadd.f32 %v404, %v406
  %v409 = vmul.f32 %v408, 0.0078125
  %v410 = vmul.f32 %v395, %v395
  %v411 = vsub.f32 %v409, %v410
  %v412 = vmax.f32 %v411, 0.0
  %v413 = vadd.f32 %v412, 1e-05
  %v414 = vrsqrt.pop %v413
  %v415 = vmul.f32 %v414, %v413
  %v416 = vmul.f32 %v415, %v414
  %v417 = vmul.f32 0.5, %v416
  %v418 = vsub.f32 1.5, %v417
  %v419 = vmul.f32 %v414, %v418
  %vm420 = vweird.f32 %v413
  %vm421 = vweird.f32 %v414
  %vm422 = vmor %vm420, %vm421
  %v423 = vsel %vm422, %v414, %v419
  %425 = vrot.lane.b32.xlu0 %v395, 32
  %v426 = vpop.permute.xlu0 %425
  %428 = vrot.lane.b32.xlu0 %v395, 64
  %v429 = vpop.permute.xlu0 %428
  %431 = vrot.lane.b32.xlu0 %v395, 96
  %v432 = vpop.permute.xlu0 %431
  %v434 = vsel %vm196, %v395, %v426
  %v435 = vsel %vm203, %v434, %v429
  %v436 = vsel %vm210, %v435, %v432
  %438 = vrot.lane.b32.xlu0 %v423, 32
  %v439 = vpop.permute.xlu0 %438
  %441 = vrot.lane.b32.xlu0 %v423, 64
  %v442 = vpop.permute.xlu0 %441
  %444 = vrot.lane.b32.xlu0 %v423, 96
  %v445 = vpop.permute.xlu0 %444
  %v447 = vsel %vm196, %v423, %v439
  %v448 = vsel %vm203, %v447, %v442
  %v449 = vsel %vm210, %v448, %v445
  %v450 = vld [vmem:[%s3] sm:$0x1]
  %v451 = vmul.f32 %v449, %v450
  %v452 = vld [vmem:[%s4] sm:$0x1]
  %v453 = vmul.f32 %v436, %v451
  %v454 = vsub.f32 %v452, %v453
  %v455 = vperm.slane %v451, 0
  %v456 = vmul.f32 %v298, %v455
  %v457 = vmul.f32 %v300, %v455
  %v458 = vmul.f32 %v303, %v455
  %v459 = vmul.f32 %v305, %v455
  %v460 = vmul.f32 %v308, %v455
  %v461 = vmul.f32 %v310, %v455
  %v463 = vperm.slane %v454, 0
  %v465 = vadd.f32 %v456, %v463
  %v466 = vadd.f32 %v457, %v463
  %v467 = vadd.f32 %v458, %v463
  %v468 = vadd.f32 %v459, %v463
  %v469 = vadd.f32 %v460, %v463
  %v470 = vadd.f32 %v461, %v463
  %v471 = vmul.f32 %v465, 0.01
  %v472 = vmul.f32 %v466, 0.01
  %v473 = vmul.f32 %v467, 0.01
  %v474 = vmul.f32 %v468, 0.01
  %v475 = vmul.f32 %v469, 0.01
  %v476 = vmul.f32 %v470, 0.01
  %v477 = vmax.f32 %v465, %v471
  %v478 = vmax.f32 %v466, %v472
  %v479 = vmax.f32 %v467, %v473
  %v480 = vmax.f32 %v468, %v474
  %v481 = vmax.f32 %v469, %v475
  %v482 = vmax.f32 %v470, %v476
  %v483 = vpack.c.bf16 %v477, %v477
  %v484 = vpack.c.bf16 %v478, %v478
  %v485 = vpack.c.bf16 %v479, %v479
  %v486 = vpack.c.bf16 %v480, %v480
  %v487 = vpack.c.bf16 %v481, %v481
  %v488 = vpack.c.bf16 %v482, %v482
  %489 = vst [vmem:[%s32] sm:$0xf] %v483
  %490 = vst [vmem:[%s32 + $0x4] sm:$0xf] %v484
  %491 = vst [vmem:[%s32 + $0x8] sm:$0xf] %v485
  %492 = vst [vmem:[%s32 + $0xc] sm:$0xf] %v486
  %493 = vst [vmem:[%s32 + $0x10] sm:$0xf] %v487
  %494 = vst [vmem:[%s32 + $0x14] sm:$0xf] %v488
  %s495 = smul.u32 0, 0
  %s496 = smul.u32 6, %s495
  %p497 = scmp.lt.s32.totalorder %s496, 5
  %s498 = scalar_select %p497, %s496, 5
  %s499 = smul.addr %s498, 4
  %s500 = scalar_lea.vmem %s6, %s499
  // Predicated region
  $region44: #{forward.18} parent=0 // pred_check
    _
  $region45: #{forward.18} parent=0 // pred_check_branch
    %502 = sbr.rel (0) target = $region47
  $region46: #{forward.18} parent=0 // pred_region
    %s503 = smul.u32 0, 0
    %s504 = smul.u32 6, %s503
  $region47: #{forward.18} parent=0 // pred_fallthru
    _
  // Predicated region
  $region48: #{forward.18} parent=0 // pred_check
    _
  $region49: #{forward.18} parent=0 // pred_check_branch
    %506 = sbr.rel (0) target = $region51
  $region50: #{forward.18} parent=0 // pred_region
    %s507 = smul.u32 0, 0
    %s508 = smul.u32 6, %s507
    %p509 = scmp.lt.s32.totalorder %s508, 5
    %s510 = scalar_select %p509, %s508, 5
    %s511 = smul.addr %s510, 4
    %s512 = scalar_lea.vmem %s6, %s511
  $region51: #{forward.18} parent=0 // pred_fallthru
    _
  %513 = vsyncmov [#allocation3]
  %s514 = vpop.sfrf %513
  %p515 = scmp.eq.s32.totalorder %s514, 0
  %p516 = pneg %p515
  %518 = shalt.err (%p516)

// kernel: forward.19
$region0: #{forward.19}
  #allocation0 [shape = 'u32[]', space=smem, size = 0x4, offset = 0x4, fixed_abs, tag = 'smem constant byte address 0x4 - core index']
  #allocation1 [shape = 'u32[72,128]{1,0:T(1,128)}', space=vmem, size = 0x9000, scoped, tag = 'internal scratch']
  #allocation2 [shape = 'bf16[168,16]{1,0:T(8,128)(2,1)}', space=vmem, size = 0xa800, scoped, tag = 'scratch operand']
  #allocation3 [shape = 's32[1]{0}', space=sflag, size = 0x4, scoped, tag = 'scratch operand']
  #allocation4 [shape = 'f32[2,128]{1,0:T(2,128)}', space=vmem, size = 0x400, scoped, tag = 'scratch operand']
  #allocation5 [shape = 's32[]', space=sflag, size = 0x4, offset = 0, fixed_abs, tag = 'sflag constant byte address 0x0 - dummy sync flag']
  %s0 = inlined_call_operand.vmem [shape: bf16[168,16], index: 0, kind: input, shape index: {}]
  %s1 = inlined_call_operand.vmem [shape: bf16[64,128], index: 1, kind: input, shape index: {}]
  %s2 = inlined_call_operand.vmem [shape: f32[1,128], index: 2, kind: input, shape index: {}]
  %s3 = inlined_call_operand.vmem [shape: f32[1,128], index: 3, kind: input, shape index: {}]
  %s4 = inlined_call_operand.vmem [shape: f32[1,128], index: 4, kind: input, shape index: {}]
  %s5 = inlined_call_operand.vmem [shape: f32[152,1], index: 5, kind: input, shape index: {}]
  %s6 = inlined_call_operand.vmem [shape: bf16[152,128], index: 6, kind: output, shape index: {}]
  %s7 = sld [smem:[#allocation0]]
  $region52: #{forward.19} parent=0
    _
  %s9 = ssub.s32 1, %s7
  %s10 = scalar_select 0, %s9, %s7
  // Predicated region
  $region2: #{forward.19} parent=0 // pred_check
    _
  $region3: #{forward.19} parent=0 // pred_check_branch
    %12 = sbr.rel (0) target = $region5
  $region4: #{forward.19} parent=0 // pred_region
    _
  $region5: #{forward.19} parent=0 // pred_fallthru
    _
  // Predicated region
  $region6: #{forward.19} parent=0 // pred_check
    _
  $region7: #{forward.19} parent=0 // pred_check_branch
    %14 = sbr.rel (0) target = $region9
  $region8: #{forward.19} parent=0 // pred_region
    _
  $region9: #{forward.19} parent=0 // pred_fallthru
    _
  // Predicated region
  $region10: #{forward.19} parent=0 // pred_check
    _
  $region11: #{forward.19} parent=0 // pred_check_branch
    %16 = sbr.rel (0) target = $region13
  $region12: #{forward.19} parent=0 // pred_region
    _
  $region13: #{forward.19} parent=0 // pred_fallthru
    _
  // Predicated region
  $region14: #{forward.19} parent=0 // pred_check
    _
  $region15: #{forward.19} parent=0 // pred_check_branch
    %18 = sbr.rel (0) target = $region17
  $region16: #{forward.19} parent=0 // pred_region
    _
  $region17: #{forward.19} parent=0 // pred_fallthru
    _
  // Predicated region
  $region18: #{forward.19} parent=0 // pred_check
    _
  $region19: #{forward.19} parent=0 // pred_check_branch
    %20 = sbr.rel (0) target = $region21
  $region20: #{forward.19} parent=0 // pred_region
    _
  $region21: #{forward.19} parent=0 // pred_fallthru
    _
  %s21 = smul.u32 0, 0
  %s22 = smul.u32 19, %s21
  %p23 = scmp.lt.s32.totalorder %s22, 18
  %s24 = scalar_select %p23, %s22, 18
  %s25 = smul.addr %s24, 4
  %s26 = scalar_lea.vmem %s6, %s25
  %s27 = smul.u32 0, 0
  %s28 = smul.u32 19, %s27
  %p29 = scmp.lt.s32.totalorder %s28, 18
  %s30 = scalar_select %p29, %s28, 18
  %s31 = smul.addr %s30, 4
  %s32 = scalar_lea.vmem %s6, %s31
  %s33 = smul.u32 0, 0
  %s34 = smul.u32 19, %s33
  %s36 = smul.u32 0, 152
  %s37 = sshra.s32 %s36, 3
  %s38 = sand.u32 %s36, 7
  %s39 = smul.addr %s37, 4
  %s40 = scalar_lea.vmem %s0, %s39
  // Predicated region
  $region22: #{forward.19} parent=0 // pred_check
    _
  $region23: #{forward.19} parent=0 // pred_check_branch
    %42 = sbr.rel (0) target = $region25
  $region24: #{forward.19} parent=0 // pred_region
    %s43 = scalar_lea.vmem %s40, 80
    %s44 = scalar_lea.vmem [#allocation2], 80
    loop: start=0, step=1, limit=1
    $region26: #{forward.19} parent=24 // loop_pre_header
      _
    $region27: #{forward.19} parent=24 // loop_header
      %s46 = sphi 0, %s50
      %p47 = scmp.ge.s32.totalorder %s46, 1
      %s51 = sphi %s40, %s40
      %s52 = sphi [#allocation2], [#allocation2]
    $region28: #{forward.19} parent=24 // loop_header_branch
      %49 = sbr.rel (%p47) target = $region32
    $region29: #{forward.19} parent=24 // loop_body
      %v53 = vld [vmem:[%s51] sm:$0xff]
      %54 = vst [vmem:[%s52] sm:$0xff] %v53
      %v55 = vld [vmem:[%s51 + $0x8] sm:$0xff]
      %56 = vst [vmem:[%s52 + $0x8] sm:$0xff] %v55
      %v57 = vld [vmem:[%s51 + $0x10] sm:$0xff]
      %58 = vst [vmem:[%s52 + $0x10] sm:$0xff] %v57
      %v59 = vld [vmem:[%s51 + $0x18] sm:$0xff]
      %60 = vst [vmem:[%s52 + $0x18] sm:$0xff] %v59
      %v61 = vld [vmem:[%s51 + $0x20] sm:$0xff]
      %62 = vst [vmem:[%s52 + $0x20] sm:$0xff] %v61
      %v63 = vld [vmem:[%s51 + $0x28] sm:$0xff]
      %64 = vst [vmem:[%s52 + $0x28] sm:$0xff] %v63
      %v65 = vld [vmem:[%s51 + $0x30] sm:$0xff]
      %66 = vst [vmem:[%s52 + $0x30] sm:$0xff] %v65
      %v67 = vld [vmem:[%s51 + $0x38] sm:$0xff]
      %68 = vst [vmem:[%s52 + $0x38] sm:$0xff] %v67
      %v69 = vld [vmem:[%s51 + $0x40] sm:$0xff]
      %70 = vst [vmem:[%s52 + $0x40] sm:$0xff] %v69
      %v71 = vld [vmem:[%s51 + $0x48] sm:$0xff]
      %72 = vst [vmem:[%s52 + $0x48] sm:$0xff] %v71
    $region30: #{forward.19} parent=24 // loop_footer
      %s50 = sadd.s32 1, %s46
    $region31: #{forward.19} parent=24 // loop_footer_branch
      %45 = sbr.rel target = $region27
    $region32: #{forward.19} parent=24 // loop_exit
      _
    %s74 = ssub.s32 16, 1
    loop: start=0, step=1, limit=1
    $region33: #{forward.19} parent=24 // loop_pre_header
      _
    $region34: #{forward.19} parent=24 // loop_header
      %s76 = sphi 0, %s80
      %p77 = scmp.ge.s32.totalorder %s76, 1
      %s81 = sphi %s43, %s43
      %s82 = sphi %s44, %s44
    $region35: #{forward.19} parent=24 // loop_header_branch
      %79 = sbr.rel (%p77) target = $region39
    $region36: #{forward.19} parent=24 // loop_body
      %v83 = vld [vmem:[%s81] sm:%s74]
      %84 = vst [vmem:[%s82] sm:%s74] %v83
    $region37: #{forward.19} parent=24 // loop_footer
      %s80 = sadd.s32 1, %s76
    $region38: #{forward.19} parent=24 // loop_footer_branch
      %75 = sbr.rel target = $region34
    $region39: #{forward.19} parent=24 // loop_exit
      _
  $region25: #{forward.19} parent=0 // pred_fallthru
    _
  // Predicated region
  $region40: #{forward.19} parent=0 // pred_check
    _
  $region41: #{forward.19} parent=0 // pred_check_branch
    %87 = sbr.rel (0) target = $region43
  $region42: #{forward.19} parent=0 // pred_region
    %88 = vsyncadd [#allocation3], 1344
  $region43: #{forward.19} parent=0 // pred_fallthru
    _
  %s89 = smul.u32 4, 21
  %s90 = smul.u32 %s89, 1
  %s91 = sshll.u32 %s90, 4
  %92 = dma.done [#allocation3], %s91
  %v93 = vld [vmem:[#allocation2] sm:$0xf]
  %v94 = vld [vmem:[#allocation2 + $0x4] sm:$0xf]
  %v95 = vld [vmem:[#allocation2 + $0x8] sm:$0xf]
  %v96 = vld [vmem:[#allocation2 + $0xc] sm:$0xf]
  %v97 = vld [vmem:[#allocation2 + $0x10] sm:$0xf]
  %v98 = vld [vmem:[#allocation2 + $0x14] sm:$0xf]
  %v99 = vld [vmem:[#allocation2 + $0x18] sm:$0xf]
  %v100 = vld [vmem:[#allocation2 + $0x1c] sm:$0xf]
  %v101 = vld [vmem:[#allocation2 + $0x20] sm:$0xf]
  %v102 = vld [vmem:[#allocation2 + $0x24] sm:$0xf]
  %v103 = vld [vmem:[#allocation2 + $0x28] sm:$0xf]
  %v104 = vld [vmem:[#allocation2 + $0x2c] sm:$0xf]
  %v105 = vld [vmem:[#allocation2 + $0x30] sm:$0xf]
  %v106 = vld [vmem:[#allocation2 + $0x34] sm:$0xf]
  %v107 = vld [vmem:[#allocation2 + $0x38] sm:$0xf]
  %v108 = vld [vmem:[#allocation2 + $0x3c] sm:$0xf]
  %v109 = vld [vmem:[#allocation2 + $0x40] sm:$0xf]
  %v110 = vld [vmem:[#allocation2 + $0x44] sm:$0xf]
  %v111 = vld [vmem:[#allocation2 + $0x48] sm:$0xf]
  %v112 = vld [vmem:[#allocation2 + $0x4c] sm:$0x1]
  %v113 = vld [vmem:[#allocation2 + $0x4c] sm:$0xf]
  %v114 = vld [vmem:[#allocation2 + $0x50] sm:$0x1]
  %v115 = vld [vmem:[#allocation2 + $0x4] sm:$0xe]
  %v135 = vunpack.c.l.b16 %v93
  %v136 = vunpack.c.l.b16 %v94
  %v137 = vunpack.c.l.b16 %v95
  %v138 = vunpack.c.l.b16 %v96
  %v139 = vunpack.c.l.b16 %v97
  %v140 = vunpack.c.l.b16 %v98
  %v141 = vunpack.c.l.b16 %v99
  %v142 = vunpack.c.l.b16 %v100
  %v143 = vunpack.c.l.b16 %v101
  %v144 = vunpack.c.l.b16 %v102
  %v145 = vunpack.c.l.b16 %v103
  %v146 = vunpack.c.l.b16 %v104
  %v147 = vunpack.c.l.b16 %v105
  %v148 = vunpack.c.l.b16 %v106
  %v149 = vunpack.c.l.b16 %v107
  %v150 = vunpack.c.l.b16 %v108
  %v151 = vunpack.c.l.b16 %v109
  %v152 = vunpack.c.l.b16 %v110
  %v153 = vunpack.c.l.b16 %v111
  %v154 = vpack.c.b16 %v136, %v135
  %v155 = vpack.c.b16 %v138, %v137
  %v156 = vpack.c.b16 %v140, %v139
  %v157 = vpack.c.b16 %v142, %v141
  %v158 = vpack.c.b16 %v144, %v143
  %v159 = vpack.c.b16 %v146, %v145
  %v160 = vpack.c.b16 %v148, %v147
  %v161 = vpack.c.b16 %v150, %v149
  %v162 = vpack.c.b16 %v152, %v151
  %v163 = vpack.c.b16 %v153, %v153
  %v165 = vunpack.c.l.b16 %v112
  %v166 = vpack.c.b16 %v165, %v153
  %vm167 = vsmask.f32 7424
  %v169 = vshrl.u32 %v154, 16
  %v171 = vshll.u32 %v154, 16
  %v173 = vrot.slane %v171, 1
  %v174 = vor.u32 %v169, %v173
  %v176 = vshll.u32 %v155, 16
  %v178 = vrot.slane %v176, 1
  %v179 = vsel %vm167, %v174, %v178
  %v180 = vshrl.u32 %v155, 16
  %v182 = vor.u32 %v180, %v178
  %v184 = vshll.u32 %v156, 16
  %v186 = vrot.slane %v184, 1
  %v187 = vsel %vm167, %v182, %v186
  %v188 = vshrl.u32 %v156, 16
  %v190 = vor.u32 %v188, %v186
  %v192 = vshll.u32 %v157, 16
  %v194 = vrot.slane %v192, 1
  %v195 = vsel %vm167, %v190, %v194
  %v196 = vshrl.u32 %v157, 16
  %v198 = vor.u32 %v196, %v194
  %v200 = vshll.u32 %v158, 16
  %v202 = vrot.slane %v200, 1
  %v203 = vsel %vm167, %v198, %v202
  %v204 = vshrl.u32 %v158, 16
  %v206 = vor.u32 %v204, %v202
  %v208 = vshll.u32 %v159, 16
  %v210 = vrot.slane %v208, 1
  %v211 = vsel %vm167, %v206, %v210
  %v212 = vshrl.u32 %v159, 16
  %v214 = vor.u32 %v212, %v210
  %v216 = vshll.u32 %v160, 16
  %v218 = vrot.slane %v216, 1
  %v219 = vsel %vm167, %v214, %v218
  %v220 = vshrl.u32 %v160, 16
  %v222 = vor.u32 %v220, %v218
  %v224 = vshll.u32 %v161, 16
  %v226 = vrot.slane %v224, 1
  %v227 = vsel %vm167, %v222, %v226
  %v228 = vshrl.u32 %v161, 16
  %v230 = vor.u32 %v228, %v226
  %v232 = vshll.u32 %v162, 16
  %v234 = vrot.slane %v232, 1
  %v235 = vsel %vm167, %v230, %v234
  %v236 = vshrl.u32 %v162, 16
  %v238 = vor.u32 %v236, %v234
  %v240 = vshll.u32 %v166, 16
  %v242 = vrot.slane %v240, 1
  %v243 = vsel %vm167, %v238, %v242
  %v244 = vshrl.u32 %v166, 16
  %v246 = vor.u32 %v244, %v242
  %247 = vrot.lane.b32.xlu0 %v179, 16
  %v248 = vpop.permute.xlu0 %247
  %249 = vrot.lane.b32.xlu0 %v187, 16
  %v250 = vpop.permute.xlu0 %249
  %251 = vrot.lane.b32.xlu0 %v195, 16
  %v252 = vpop.permute.xlu0 %251
  %253 = vrot.lane.b32.xlu0 %v203, 16
  %v254 = vpop.permute.xlu0 %253
  %255 = vrot.lane.b32.xlu0 %v211, 16
  %v256 = vpop.permute.xlu0 %255
  %257 = vrot.lane.b32.xlu0 %v219, 16
  %v258 = vpop.permute.xlu0 %257
  %259 = vrot.lane.b32.xlu0 %v227, 16
  %v260 = vpop.permute.xlu0 %259
  %261 = vrot.lane.b32.xlu0 %v235, 16
  %v262 = vpop.permute.xlu0 %261
  %263 = vrot.lane.b32.xlu0 %v243, 16
  %v264 = vpop.permute.xlu0 %263
  %265 = vrot.lane.b32.xlu0 %v246, 16
  %v266 = vpop.permute.xlu0 %265
  %v269 = vunpack.c.l.b16 %v113
  %v270 = vunpack.c.l.b16 %v114
  %v271 = vpack.c.b16 %v137, %v136
  %v272 = vpack.c.b16 %v139, %v138
  %v273 = vpack.c.b16 %v141, %v140
  %v274 = vpack.c.b16 %v143, %v142
  %v275 = vpack.c.b16 %v145, %v144
  %v276 = vpack.c.b16 %v147, %v146
  %v277 = vpack.c.b16 %v149, %v148
  %v278 = vpack.c.b16 %v151, %v150
  %v279 = vpack.c.b16 %v153, %v152
  %v280 = vpack.c.b16 %v270, %v269
  %v282 = vshrl.u32 %v271, 16
  %v284 = vshll.u32 %v271, 16
  %v286 = vrot.slane %v284, 1
  %v287 = vor.u32 %v282, %v286
  %v289 = vshll.u32 %v272, 16
  %v291 = vrot.slane %v289, 1
  %v292 = vsel %vm167, %v287, %v291
  %v293 = vshrl.u32 %v272, 16
  %v295 = vor.u32 %v293, %v291
  %v297 = vshll.u32 %v273, 16
  %v299 = vrot.slane %v297, 1
  %v300 = vsel %vm167, %v295, %v299
  %v301 = vshrl.u32 %v273, 16
  %v303 = vor.u32 %v301, %v299
  %v305 = vshll.u32 %v274, 16
  %v307 = vrot.slane %v305, 1
  %v308 = vsel %vm167, %v303, %v307
  %v309 = vshrl.u32 %v274, 16
  %v311 = vor.u32 %v309, %v307
  %v313 = vshll.u32 %v275, 16
  %v315 = vrot.slane %v313, 1
  %v316 = vsel %vm167, %v311, %v315
  %v317 = vshrl.u32 %v275, 16
  %v319 = vor.u32 %v317, %v315
  %v321 = vshll.u32 %v276, 16
  %v323 = vrot.slane %v321, 1
  %v324 = vsel %vm167, %v319, %v323
  %v325 = vshrl.u32 %v276, 16
  %v327 = vor.u32 %v325, %v323
  %v329 = vshll.u32 %v277, 16
  %v331 = vrot.slane %v329, 1
  %v332 = vsel %vm167, %v327, %v331
  %v333 = vshrl.u32 %v277, 16
  %v335 = vor.u32 %v333, %v331
  %v337 = vshll.u32 %v278, 16
  %v339 = vrot.slane %v337, 1
  %v340 = vsel %vm167, %v335, %v339
  %v341 = vshrl.u32 %v278, 16
  %v343 = vor.u32 %v341, %v339
  %v345 = vshll.u32 %v279, 16
  %v347 = vrot.slane %v345, 1
  %v348 = vsel %vm167, %v343, %v347
  %v349 = vshrl.u32 %v279, 16
  %v351 = vor.u32 %v349, %v347
  %v353 = vshll.u32 %v280, 16
  %v355 = vrot.slane %v353, 1
  %v356 = vsel %vm167, %v351, %v355
  %v357 = vshrl.u32 %v280, 16
  %v359 = vor.u32 %v357, %v355
  %360 = vrot.lane.b32.xlu0 %v292, 32
  %v361 = vpop.permute.xlu0 %360
  %362 = vrot.lane.b32.xlu0 %v300, 32
  %v363 = vpop.permute.xlu0 %362
  %364 = vrot.lane.b32.xlu0 %v308, 32
  %v365 = vpop.permute.xlu0 %364
  %366 = vrot.lane.b32.xlu0 %v316, 32
  %v367 = vpop.permute.xlu0 %366
  %368 = vrot.lane.b32.xlu0 %v324, 32
  %v369 = vpop.permute.xlu0 %368
  %370 = vrot.lane.b32.xlu0 %v332, 32
  %v371 = vpop.permute.xlu0 %370
  %372 = vrot.lane.b32.xlu0 %v340, 32
  %v373 = vpop.permute.xlu0 %372
  %374 = vrot.lane.b32.xlu0 %v348, 32
  %v375 = vpop.permute.xlu0 %374
  %376 = vrot.lane.b32.xlu0 %v356, 32
  %v377 = vpop.permute.xlu0 %376
  %378 = vrot.lane.b32.xlu0 %v359, 32
  %v379 = vpop.permute.xlu0 %378
  %v381 = vunpack.c.l.b16 %v115
  %v382 = vpack.c.b16 %v137, %v381
  %vm383 = vcmask 1046528
  %v384 = vrot.slane %v382, 1
  %v385 = vrot.slane %v272, 1
  %v386 = vsel %vm383, %v384, %v385
  %v387 = vrot.slane %v273, 1
  %v388 = vsel %vm383, %v385, %v387
  %v389 = vrot.slane %v274, 1
  %v390 = vsel %vm383, %v387, %v389
  %v391 = vrot.slane %v275, 1
  %v392 = vsel %vm383, %v389, %v391
  %v393 = vrot.slane %v276, 1
  %v394 = vsel %vm383, %v391, %v393
  %v395 = vrot.slane %v277, 1
  %v396 = vsel %vm383, %v393, %v395
  %v397 = vrot.slane %v278, 1
  %v398 = vsel %vm383, %v395, %v397
  %v399 = vrot.slane %v279, 1
  %v400 = vsel %vm383, %v397, %v399
  %v401 = vrot.slane %v280, 1
  %v402 = vsel %vm383, %v399, %v401
  %403 = vrot.lane.b32.xlu0 %v386, 48
  %v404 = vpop.permute.xlu0 %403
  %405 = vrot.lane.b32.xlu0 %v388, 48
  %v406 = vpop.permute.xlu0 %405
  %407 = vrot.lane.b32.xlu0 %v390, 48
  %v408 = vpop.permute.xlu0 %407
  %409 = vrot.lane.b32.xlu0 %v392, 48
  %v410 = vpop.permute.xlu0 %409
  %411 = vrot.lane.b32.xlu0 %v394, 48
  %v412 = vpop.permute.xlu0 %411
  %413 = vrot.lane.b32.xlu0 %v396, 48
  %v414 = vpop.permute.xlu0 %413
  %415 = vrot.lane.b32.xlu0 %v398, 48
  %v416 = vpop.permute.xlu0 %415
  %417 = vrot.lane.b32.xlu0 %v400, 48
  %v418 = vpop.permute.xlu0 %417
  %419 = vrot.lane.b32.xlu0 %v402, 48
  %v420 = vpop.permute.xlu0 %419
  %421 = vrot.lane.b32.xlu0 %v401, 48
  %v422 = vpop.permute.xlu0 %421
  %vm423 = vcmask 130048
  %v425 = vsel %vm423, %v154, %v248
  %v427 = vsel %vm423, %v155, %v250
  %v429 = vsel %vm423, %v156, %v252
  %v431 = vsel %vm423, %v157, %v254
  %v433 = vsel %vm423, %v158, %v256
  %v435 = vsel %vm423, %v159, %v258
  %v437 = vsel %vm423, %v160, %v260
  %v439 = vsel %vm423, %v161, %v262
  %v441 = vsel %vm423, %v162, %v264
  %v444 = vsel %vm423, %v163, %v266
  %vm445 = vcmask 261120
  %v447 = vsel %vm445, %v425, %v361
  %v449 = vsel %vm445, %v427, %v363
  %v451 = vsel %vm445, %v429, %v365
  %v453 = vsel %vm445, %v431, %v367
  %v455 = vsel %vm445, %v433, %v369
  %v457 = vsel %vm445, %v435, %v371
  %v459 = vsel %vm445, %v437, %v373
  %v461 = vsel %vm445, %v439, %v375
  %v463 = vsel %vm445, %v441, %v377
  %v465 = vsel %vm445, %v444, %v379
  %vm466 = vcmask 392192
  %v468 = vsel %vm466, %v447, %v404
  %v470 = vsel %vm466, %v449, %v406
  %v472 = vsel %vm466, %v451, %v408
  %v474 = vsel %vm466, %v453, %v410
  %v476 = vsel %vm466, %v455, %v412
  %v478 = vsel %vm466, %v457, %v414
  %v480 = vsel %vm466, %v459, %v416
  %v482 = vsel %vm466, %v461, %v418
  %v484 = vsel %vm466, %v463, %v420
  %v486 = vsel %vm466, %v465, %v422
  %v487 = vld [vmem:[%s1] sm:$0xf]
  %v488 = vld [vmem:[%s1 + $0x4] sm:$0xf]
  %v489 = vld [vmem:[%s1 + $0x8] sm:$0xf]
  %v490 = vld [vmem:[%s1 + $0xc] sm:$0xf]
  %v491 = vld [vmem:[%s1 + $0x10] sm:$0xf]
  %v492 = vld [vmem:[%s1 + $0x14] sm:$0xf]
  %v493 = vld [vmem:[%s1 + $0x18] sm:$0xf]
  %v494 = vld [vmem:[%s1 + $0x1c] sm:$0xf]
  %v495 = vld [vmem:[%s2] sm:$0x1]
  %v497 = vperm.slane %v495, 0
  %v507 = vunpack.c.l.b16 %v487
  %v508 = vunpack.c.l.b16 %v488
  %v509 = vunpack.c.l.b16 %v489
  %v510 = vunpack.c.l.b16 %v490
  %v511 = vunpack.c.l.b16 %v491
  %v512 = vunpack.c.l.b16 %v492
  %v513 = vunpack.c.l.b16 %v493
  %v514 = vunpack.c.l.b16 %v494
  %v515 = vpack.c.b16 %v508, %v507
  %v516 = vpack.c.b16 %v510, %v509
  %v517 = vpack.c.b16 %v512, %v511
  %v518 = vpack.c.b16 %v514, %v513
  %vm523 = vcmask 523264
  %v524 = vsel %vm523, %v468, 0
  %v526 = vsel %vm523, %v470, 0
  %v528 = vsel %vm523, %v472, 0
  %v530 = vsel %vm523, %v474, 0
  %v532 = vsel %vm523, %v476, 0
  %v534 = vsel %vm523, %v478, 0
  %v536 = vsel %vm523, %v480, 0
  %v538 = vsel %vm523, %v482, 0
  %v540 = vsel %vm523, %v484, 0
  %v542 = vsel %vm523, %v486, 0
  %544 = vmatpush.bf16.msra.mxu0 0
  %545 = vmatpush.bf16.msra.mxu0 0
  %546 = vmatpush.bf16.msra.mxu0 0
  %547 = vmatpush.bf16.msra.mxu0 0
  %548 = vmatpush.bf16.msra.mxu0 %v518
  %549 = vmatpush.bf16.msra.mxu0 %v517
  %550 = vmatpush.bf16.msra.mxu0 %v516
  %551 = vmatpush.bf16.msra.mxu0 %v515
  %552 = vmatmul.bf16.gmra.mxu0 %v524
  %v553 = vpop.f32.mrf.mxu0
  %v554 = vadd.f32 %v497, %v553
  %v555 = vpop.f32.mrf.mxu0
  %v556 = vadd.f32 %v497, %v555
  %557 = vmatmul.bf16.gmra.mxu0 %v526
  %v558 = vpop.f32.mrf.mxu0
  %v559 = vadd.f32 %v497, %v558
  %v560 = vpop.f32.mrf.mxu0
  %v561 = vadd.f32 %v497, %v560
  %562 = vmatmul.bf16.gmra.mxu0 %v528
  %v563 = vpop.f32.mrf.mxu0
  %v564 = vadd.f32 %v497, %v563
  %v565 = vpop.f32.mrf.mxu0
  %v566 = vadd.f32 %v497, %v565
  %567 = vmatmul.bf16.gmra.mxu0 %v530
  %v568 = vpop.f32.mrf.mxu0
  %v569 = vadd.f32 %v497, %v568
  %v570 = vpop.f32.mrf.mxu0
  %v571 = vadd.f32 %v497, %v570
  %572 = vmatmul.bf16.gmra.mxu0 %v532
  %v573 = vpop.f32.mrf.mxu0
  %v574 = vadd.f32 %v497, %v573
  %v575 = vpop.f32.mrf.mxu0
  %v576 = vadd.f32 %v497, %v575
  %577 = vmatmul.bf16.gmra.mxu0 %v534
  %v578 = vpop.f32.mrf.mxu0
  %v579 = vadd.f32 %v497, %v578
  %v580 = vpop.f32.mrf.mxu0
  %v581 = vadd.f32 %v497, %v580
  %582 = vmatmul.bf16.gmra.mxu0 %v536
  %v583 = vpop.f32.mrf.mxu0
  %v584 = vadd.f32 %v497, %v583
  %v585 = vpop.f32.mrf.mxu0
  %v586 = vadd.f32 %v497, %v585
  %587 = vmatmul.bf16.gmra.mxu0 %v538
  %v588 = vpop.f32.mrf.mxu0
  %v589 = vadd.f32 %v497, %v588
  %v590 = vpop.f32.mrf.mxu0
  %v591 = vadd.f32 %v497, %v590
  %592 = vmatmul.bf16.gmra.mxu0 %v540
  %v593 = vpop.f32.mrf.mxu0
  %v594 = vadd.f32 %v497, %v593
  %v595 = vpop.f32.mrf.mxu0
  %v596 = vadd.f32 %v497, %v595
  %597 = vmatmul.bf16.gmra.mxu0 %v542
  %v598 = vpop.f32.mrf.mxu0
  %v599 = vadd.f32 %v497, %v598
  %v600 = vpop.f32.mrf.mxu0
  %601 = vdwg.mxu0
  %v602 = vld [vmem:[%s5] sm:$0xff]
  %v603 = vld [vmem:[%s5 + $0x8] sm:$0xff]
  %v604 = vld [vmem:[%s5 + $0x10] sm:$0xff]
  %v605 = vld [vmem:[%s5 + $0x18] sm:$0xff]
  %v606 = vld [vmem:[%s5 + $0x20] sm:$0xff]
  %v607 = vld [vmem:[%s5 + $0x28] sm:$0xff]
  %v608 = vld [vmem:[%s5 + $0x30] sm:$0xff]
  %v609 = vld [vmem:[%s5 + $0x38] sm:$0xff]
  %v610 = vld [vmem:[%s5 + $0x40] sm:$0xff]
  %v611 = vld [vmem:[%s5 + $0x48] sm:$0xff]
  %v612 = vld [vmem:[%s5 + $0x50] sm:$0xff]
  %v613 = vld [vmem:[%s5 + $0x58] sm:$0xff]
  %v614 = vld [vmem:[%s5 + $0x60] sm:$0xff]
  %v615 = vld [vmem:[%s5 + $0x68] sm:$0xff]
  %v616 = vld [vmem:[%s5 + $0x70] sm:$0xff]
  %v617 = vld [vmem:[%s5 + $0x78] sm:$0xff]
  %v618 = vld [vmem:[%s5 + $0x80] sm:$0xff]
  %v619 = vld [vmem:[%s5 + $0x88] sm:$0xff]
  %v620 = vld [vmem:[%s5 + $0x90] sm:$0xff]
  %622 = vset.pattern.permute.xlu0 0
  %623 = vperm.xlu0 %622, %v602
  %v624 = vpop.permute.xlu0 %623
  %627 = vset.pattern.permute.xlu0 0
  %628 = vperm.xlu0 %627, %v603
  %v629 = vpop.permute.xlu0 %628
  %632 = vset.pattern.permute.xlu0 0
  %633 = vperm.xlu0 %632, %v604
  %v634 = vpop.permute.xlu0 %633
  %637 = vset.pattern.permute.xlu0 0
  %638 = vperm.xlu0 %637, %v605
  %v639 = vpop.permute.xlu0 %638
  %642 = vset.pattern.permute.xlu0 0
  %643 = vperm.xlu0 %642, %v606
  %v644 = vpop.permute.xlu0 %643
  %647 = vset.pattern.permute.xlu0 0
  %648 = vperm.xlu0 %647, %v607
  %v649 = vpop.permute.xlu0 %648
  %652 = vset.pattern.permute.xlu0 0
  %653 = vperm.xlu0 %652, %v608
  %v654 = vpop.permute.xlu0 %653
  %657 = vset.pattern.permute.xlu0 0
  %658 = vperm.xlu0 %657, %v609
  %v659 = vpop.permute.xlu0 %658
  %662 = vset.pattern.permute.xlu0 0
  %663 = vperm.xlu0 %662, %v610
  %v664 = vpop.permute.xlu0 %663
  %667 = vset.pattern.permute.xlu0 0
  %668 = vperm.xlu0 %667, %v611
  %v669 = vpop.permute.xlu0 %668
  %672 = vset.pattern.permute.xlu0 0
  %673 = vperm.xlu0 %672, %v612
  %v674 = vpop.permute.xlu0 %673
  %677 = vset.pattern.permute.xlu0 0
  %678 = vperm.xlu0 %677, %v613
  %v679 = vpop.permute.xlu0 %678
  %682 = vset.pattern.permute.xlu0 0
  %683 = vperm.xlu0 %682, %v614
  %v684 = vpop.permute.xlu0 %683
  %687 = vset.pattern.permute.xlu0 0
  %688 = vperm.xlu0 %687, %v615
  %v689 = vpop.permute.xlu0 %688
  %692 = vset.pattern.permute.xlu0 0
  %693 = vperm.xlu0 %692, %v616
  %v694 = vpop.permute.xlu0 %693
  %697 = vset.pattern.permute.xlu0 0
  %698 = vperm.xlu0 %697, %v617
  %v699 = vpop.permute.xlu0 %698
  %702 = vset.pattern.permute.xlu0 0
  %703 = vperm.xlu0 %702, %v618
  %v704 = vpop.permute.xlu0 %703
  %707 = vset.pattern.permute.xlu0 0
  %708 = vperm.xlu0 %707, %v619
  %v709 = vpop.permute.xlu0 %708
  %712 = vset.pattern.permute.xlu0 0
  %713 = vperm.xlu0 %712, %v620
  %v714 = vpop.permute.xlu0 %713
  %v716 = vmul.f32 %v554, %v624
  %v717 = vmul.f32 %v556, %v629
  %v718 = vmul.f32 %v559, %v634
  %v719 = vmul.f32 %v561, %v639
  %v720 = vmul.f32 %v564, %v644
  %v721 = vmul.f32 %v566, %v649
  %v722 = vmul.f32 %v569, %v654
  %v723 = vmul.f32 %v571, %v659
  %v724 = vmul.f32 %v574, %v664
  %v725 = vmul.f32 %v576, %v669
  %v726 = vmul.f32 %v579, %v674
  %v727 = vmul.f32 %v581, %v679
  %v728 = vmul.f32 %v584, %v684
  %v729 = vmul.f32 %v586, %v689
  %v730 = vmul.f32 %v589, %v694
  %v731 = vmul.f32 %v591, %v699
  %v732 = vmul.f32 %v594, %v704
  %v733 = vmul.f32 %v596, %v709
  %v734 = vmul.f32 %v599, %v714
  %v735 = vadd.f32 %v716, %v717
  %v736 = vadd.f32 %v735, %v718
  %v737 = vadd.f32 %v736, %v719
  %v738 = vadd.f32 %v737, %v720
  %v739 = vadd.f32 %v738, %v721
  %v740 = vadd.f32 %v739, %v722
  %v741 = vadd.f32 %v740, %v723
  %v742 = vadd.f32 %v741, %v724
  %v743 = vadd.f32 %v742, %v725
  %v744 = vadd.f32 %v743, %v726
  %v745 = vadd.f32 %v744, %v727
  %v746 = vadd.f32 %v745, %v728
  %v747 = vadd.f32 %v746, %v729
  %v748 = vadd.f32 %v747, %v730
  %v749 = vadd.f32 %v748, %v731
  %v750 = vadd.f32 %v749, %v732
  %v751 = vadd.f32 %v750, %v733
  %v752 = vadd.f32 %v751, %v734
  %v753 = vrot.slane %v752, 4
  %v754 = vadd.f32 %v752, %v753
  %v755 = vrot.slane %v754, 2
  %v756 = vadd.f32 %v754, %v755
  %v757 = vrot.slane %v756, 1
  %v758 = vadd.f32 %v756, %v757
  %v759 = vmul.f32 %v716, %v716
  %v760 = vmul.f32 %v717, %v717
  %v761 = vmul.f32 %v718, %v718
  %v762 = vmul.f32 %v719, %v719
  %v763 = vmul.f32 %v720, %v720
  %v764 = vmul.f32 %v721, %v721
  %v765 = vmul.f32 %v722, %v722
  %v766 = vmul.f32 %v723, %v723
  %v767 = vmul.f32 %v724, %v724
  %v768 = vmul.f32 %v725, %v725
  %v769 = vmul.f32 %v726, %v726
  %v770 = vmul.f32 %v727, %v727
  %v771 = vmul.f32 %v728, %v728
  %v772 = vmul.f32 %v729, %v729
  %v773 = vmul.f32 %v730, %v730
  %v774 = vmul.f32 %v731, %v731
  %v775 = vmul.f32 %v732, %v732
  %v776 = vmul.f32 %v733, %v733
  %v777 = vmul.f32 %v734, %v734
  %v778 = vadd.f32 %v759, %v760
  %v779 = vadd.f32 %v778, %v761
  %v780 = vadd.f32 %v779, %v762
  %v781 = vadd.f32 %v780, %v763
  %v782 = vadd.f32 %v781, %v764
  %v783 = vadd.f32 %v782, %v765
  %v784 = vadd.f32 %v783, %v766
  %v785 = vadd.f32 %v784, %v767
  %v786 = vadd.f32 %v785, %v768
  %v787 = vadd.f32 %v786, %v769
  %v788 = vadd.f32 %v787, %v770
  %v789 = vadd.f32 %v788, %v771
  %v790 = vadd.f32 %v789, %v772
  %v791 = vadd.f32 %v790, %v773
  %v792 = vadd.f32 %v791, %v774
  %v793 = vadd.f32 %v792, %v775
  %v794 = vadd.f32 %v793, %v776
  %v795 = vadd.f32 %v794, %v777
  %v796 = vrot.slane %v795, 4
  %v797 = vadd.f32 %v795, %v796
  %v798 = vrot.slane %v797, 2
  %v799 = vadd.f32 %v797, %v798
  %v800 = vrot.slane %v799, 1
  %v801 = vadd.f32 %v799, %v800
  %803 = vrot.lane.b32.xlu0 %v758, 96
  %v804 = vpop.permute.xlu0 %803
  %v806 = vadd.f32 %v758, %v804
  %807 = vrot.lane.b32.xlu0 %v758, 64
  %v808 = vpop.permute.xlu0 %807
  %v810 = vadd.f32 %v806, %v808
  %811 = vrot.lane.b32.xlu0 %v758, 32
  %v812 = vpop.permute.xlu0 %811
  %v814 = vadd.f32 %v810, %v812
  %v815 = vmul.f32 %v814, 0.001953125
  %817 = vrot.lane.b32.xlu0 %v801, 96
  %v818 = vpop.permute.xlu0 %817
  %v820 = vadd.f32 %v801, %v818
  %821 = vrot.lane.b32.xlu0 %v801, 64
  %v822 = vpop.permute.xlu0 %821
  %v824 = vadd.f32 %v820, %v822
  %825 = vrot.lane.b32.xlu0 %v801, 32
  %v826 = vpop.permute.xlu0 %825
  %v828 = vadd.f32 %v824, %v826
  %v829 = vmul.f32 %v828, 0.001953125
  %v830 = vmul.f32 %v815, %v815
  %v831 = vsub.f32 %v829, %v830
  %v832 = vmax.f32 %v831, 0.0
  %v833 = vadd.f32 %v832, 1e-05
  %v834 = vrsqrt.pop %v833
  %v835 = vmul.f32 %v834, %v833
  %v836 = vmul.f32 %v835, %v834
  %v837 = vmul.f32 0.5, %v836
  %v838 = vsub.f32 1.5, %v837
  %v839 = vmul.f32 %v834, %v838
  %vm840 = vweird.f32 %v833
  %vm841 = vweird.f32 %v834
  %vm842 = vmor %vm840, %vm841
  %v843 = vsel %vm842, %v834, %v839
  %845 = vrot.lane.b32.xlu0 %v815, 32
  %v846 = vpop.permute.xlu0 %845
  %848 = vrot.lane.b32.xlu0 %v815, 64
  %v849 = vpop.permute.xlu0 %848
  %851 = vrot.lane.b32.xlu0 %v815, 96
  %v852 = vpop.permute.xlu0 %851
  %v854 = vsel %vm445, %v815, %v846
  %v855 = vsel %vm523, %v854, %v849
  %vm856 = vcmask 785408
  %v857 = vsel %vm856, %v855, %v852
  %859 = vrot.lane.b32.xlu0 %v843, 32
  %v860 = vpop.permute.xlu0 %859
  %862 = vrot.lane.b32.xlu0 %v843, 64
  %v863 = vpop.permute.xlu0 %862
  %865 = vrot.lane.b32.xlu0 %v843, 96
  %v866 = vpop.permute.xlu0 %865
  %v868 = vsel %vm445, %v843, %v860
  %v869 = vsel %vm523, %v868, %v863
  %v870 = vsel %vm856, %v869, %v866
  %v871 = vld [vmem:[%s3] sm:$0x1]
  %v872 = vmul.f32 %v870, %v871
  %v873 = vld [vmem:[%s4] sm:$0x1]
  %v874 = vmul.f32 %v857, %v872
  %v875 = vsub.f32 %v873, %v874
  %v876 = vperm.slane %v872, 0
  %v877 = vmul.f32 %v554, %v876
  %v878 = vmul.f32 %v556, %v876
  %v879 = vmul.f32 %v559, %v876
  %v880 = vmul.f32 %v561, %v876
  %v881 = vmul.f32 %v564, %v876
  %v882 = vmul.f32 %v566, %v876
  %v883 = vmul.f32 %v569, %v876
  %v884 = vmul.f32 %v571, %v876
  %v885 = vmul.f32 %v574, %v876
  %v886 = vmul.f32 %v576, %v876
  %v887 = vmul.f32 %v579, %v876
  %v888 = vmul.f32 %v581, %v876
  %v889 = vmul.f32 %v584, %v876
  %v890 = vmul.f32 %v586, %v876
  %v891 = vmul.f32 %v589, %v876
  %v892 = vmul.f32 %v591, %v876
  %v893 = vmul.f32 %v594, %v876
  %v894 = vmul.f32 %v596, %v876
  %v895 = vmul.f32 %v599, %v876
  %v897 = vperm.slane %v875, 0
  %v899 = vadd.f32 %v877, %v897
  %v900 = vadd.f32 %v878, %v897
  %v901 = vadd.f32 %v879, %v897
  %v902 = vadd.f32 %v880, %v897
  %v903 = vadd.f32 %v881, %v897
  %v904 = vadd.f32 %v882, %v897
  %v905 = vadd.f32 %v883, %v897
  %v906 = vadd.f32 %v884, %v897
  %v907 = vadd.f32 %v885, %v897
  %v908 = vadd.f32 %v886, %v897
  %v909 = vadd.f32 %v887, %v897
  %v910 = vadd.f32 %v888, %v897
  %v911 = vadd.f32 %v889, %v897
  %v912 = vadd.f32 %v890, %v897
  %v913 = vadd.f32 %v891, %v897
  %v914 = vadd.f32 %v892, %v897
  %v915 = vadd.f32 %v893, %v897
  %v916 = vadd.f32 %v894, %v897
  %v917 = vadd.f32 %v895, %v897
  %v918 = vmul.f32 %v899, 0.01
  %v919 = vmul.f32 %v900, 0.01
  %v920 = vmul.f32 %v901, 0.01
  %v921 = vmul.f32 %v902, 0.01
  %v922 = vmul.f32 %v903, 0.01
  %v923 = vmul.f32 %v904, 0.01
  %v924 = vmul.f32 %v905, 0.01
  %v925 = vmul.f32 %v906, 0.01
  %v926 = vmul.f32 %v907, 0.01
  %v927 = vmul.f32 %v908, 0.01
  %v928 = vmul.f32 %v909, 0.01
  %v929 = vmul.f32 %v910, 0.01
  %v930 = vmul.f32 %v911, 0.01
  %v931 = vmul.f32 %v912, 0.01
  %v932 = vmul.f32 %v913, 0.01
  %v933 = vmul.f32 %v914, 0.01
  %v934 = vmul.f32 %v915, 0.01
  %v935 = vmul.f32 %v916, 0.01
  %v936 = vmul.f32 %v917, 0.01
  %v937 = vmax.f32 %v899, %v918
  %v938 = vmax.f32 %v900, %v919
  %v939 = vmax.f32 %v901, %v920
  %v940 = vmax.f32 %v902, %v921
  %v941 = vmax.f32 %v903, %v922
  %v942 = vmax.f32 %v904, %v923
  %v943 = vmax.f32 %v905, %v924
  %v944 = vmax.f32 %v906, %v925
  %v945 = vmax.f32 %v907, %v926
  %v946 = vmax.f32 %v908, %v927
  %v947 = vmax.f32 %v909, %v928
  %v948 = vmax.f32 %v910, %v929
  %v949 = vmax.f32 %v911, %v930
  %v950 = vmax.f32 %v912, %v931
  %v951 = vmax.f32 %v913, %v932
  %v952 = vmax.f32 %v914, %v933
  %v953 = vmax.f32 %v915, %v934
  %v954 = vmax.f32 %v916, %v935
  %v955 = vmax.f32 %v917, %v936
  %v956 = vpack.c.bf16 %v937, %v937
  %v957 = vpack.c.bf16 %v938, %v938
  %v958 = vpack.c.bf16 %v939, %v939
  %v959 = vpack.c.bf16 %v940, %v940
  %v960 = vpack.c.bf16 %v941, %v941
  %v961 = vpack.c.bf16 %v942, %v942
  %v962 = vpack.c.bf16 %v943, %v943
  %v963 = vpack.c.bf16 %v944, %v944
  %v964 = vpack.c.bf16 %v945, %v945
  %v965 = vpack.c.bf16 %v946, %v946
  %v966 = vpack.c.bf16 %v947, %v947
  %v967 = vpack.c.bf16 %v948, %v948
  %v968 = vpack.c.bf16 %v949, %v949
  %v969 = vpack.c.bf16 %v950, %v950
  %v970 = vpack.c.bf16 %v951, %v951
  %v971 = vpack.c.bf16 %v952, %v952
  %v972 = vpack.c.bf16 %v953, %v953
  %v973 = vpack.c.bf16 %v954, %v954
  %v974 = vpack.c.bf16 %v955, %v955
  %975 = vst [vmem:[%s32] sm:$0xf] %v956
  %976 = vst [vmem:[%s32 + $0x4] sm:$0xf] %v957
  %977 = vst [vmem:[%s32 + $0x8] sm:$0xf] %v958
  %978 = vst [vmem:[%s32 + $0xc] sm:$0xf] %v959
  %979 = vst [vmem:[%s32 + $0x10] sm:$0xf] %v960
  %980 = vst [vmem:[%s32 + $0x14] sm:$0xf] %v961
  %981 = vst [vmem:[%s32 + $0x18] sm:$0xf] %v962
  %982 = vst [vmem:[%s32 + $0x1c] sm:$0xf] %v963
  %983 = vst [vmem:[%s32 + $0x20] sm:$0xf] %v964
  %984 = vst [vmem:[%s32 + $0x24] sm:$0xf] %v965
  %985 = vst [vmem:[%s32 + $0x28] sm:$0xf] %v966
  %986 = vst [vmem:[%s32 + $0x2c] sm:$0xf] %v967
  %987 = vst [vmem:[%s32 + $0x30] sm:$0xf] %v968
  %988 = vst [vmem:[%s32 + $0x34] sm:$0xf] %v969
  %989 = vst [vmem:[%s32 + $0x38] sm:$0xf] %v970
  %990 = vst [vmem:[%s32 + $0x3c] sm:$0xf] %v971
  %991 = vst [vmem:[%s32 + $0x40] sm:$0xf] %v972
  %992 = vst [vmem:[%s32 + $0x44] sm:$0xf] %v973
  %993 = vst [vmem:[%s32 + $0x48] sm:$0xf] %v974
  %s994 = smul.u32 0, 0
  %s995 = smul.u32 19, %s994
  %p996 = scmp.lt.s32.totalorder %s995, 18
  %s997 = scalar_select %p996, %s995, 18
  %s998 = smul.addr %s997, 4
  %s999 = scalar_lea.vmem %s6, %s998
  // Predicated region
  $region44: #{forward.19} parent=0 // pred_check
    _
  $region45: #{forward.19} parent=0 // pred_check_branch
    %1001 = sbr.rel (0) target = $region47
  $region46: #{forward.19} parent=0 // pred_region
    %s1002 = smul.u32 0, 0
    %s1003 = smul.u32 19, %s1002
  $region47: #{forward.19} parent=0 // pred_fallthru
    _
  // Predicated region
  $region48: #{forward.19} parent=0 // pred_check
    _
  $region49: #{forward.19} parent=0 // pred_check_branch
    %1005 = sbr.rel (0) target = $region51
  $region50: #{forward.19} parent=0 // pred_region
    %s1006 = smul.u32 0, 0
    %s1007 = smul.u32 19, %s1006
    %p1008 = scmp.lt.s32.totalorder %s1007, 18
    %s1009 = scalar_select %p1008, %s1007, 18
    %s1010 = smul.addr %s1009, 4
    %s1011 = scalar_lea.vmem %s6, %s1010
  $region51: #{forward.19} parent=0 // pred_fallthru
    _
  %1012 = vsyncmov [#allocation3]
  %s1013 = vpop.sfrf %1012
  %p1014 = scmp.eq.s32.totalorder %s1013, 0
  %p1015 = pneg %p1014
  %1017 = shalt.err (%p1015)

// kernel: forward.20
$region0: #{forward.20}
  #allocation0 [shape = 'u32[]', space=smem, size = 0x4, offset = 0x4, fixed_abs, tag = 'smem constant byte address 0x4 - core index']
  #allocation1 [shape = 'u32[72,128]{1,0:T(1,128)}', space=vmem, size = 0x9000, scoped, tag = 'internal scratch']
  #allocation2 [shape = 'bf16[304,8]{1,0:T(8,128)(2,1)}', space=vmem, size = 0x13000, scoped, tag = 'scratch operand']
  #allocation3 [shape = 's32[1]{0}', space=sflag, size = 0x4, scoped, tag = 'scratch operand']
  #allocation4 [shape = 'f32[2,128]{1,0:T(2,128)}', space=vmem, size = 0x400, scoped, tag = 'scratch operand']
  #allocation5 [shape = 's32[]', space=sflag, size = 0x4, offset = 0, fixed_abs, tag = 'sflag constant byte address 0x0 - dummy sync flag']
  %s0 = inlined_call_operand.vmem [shape: bf16[584,8], index: 0, kind: input, shape index: {}]
  %s1 = inlined_call_operand.vmem [shape: bf16[32,128], index: 1, kind: input, shape index: {}]
  %s2 = inlined_call_operand.vmem [shape: f32[1,128], index: 2, kind: input, shape index: {}]
  %s3 = inlined_call_operand.vmem [shape: f32[1,128], index: 3, kind: input, shape index: {}]
  %s4 = inlined_call_operand.vmem [shape: f32[1,128], index: 4, kind: input, shape index: {}]
  %s5 = inlined_call_operand.vmem [shape: f32[560,1], index: 5, kind: input, shape index: {}]
  %s6 = inlined_call_operand.vmem [shape: bf16[560,128], index: 6, kind: output, shape index: {}]
  %s7 = sld [smem:[#allocation0]]
  $region84: #{forward.20} parent=0
    _
  %s9 = ssub.s32 1, %s7
  %s10 = scalar_select 0, %s9, %s7
  loop: start=0, step=1, limit=6
  $region2: #{forward.20} parent=0 // loop_pre_header
    _
  $region3: #{forward.20} parent=0 // loop_header
    %s12 = sphi 0, %s16
    %p13 = scmp.ge.s32.totalorder %s12, 6
    %s19 = sphi 0, %s31
    %s20 = sphi 0, %s27
    %s21 = sphi 0, %s19
    %s22 = sphi 0, %s20
    %s23 = sphi 0, %s21
    %s24 = sphi 0, %s22
    %s32 = sphi 0, %s32
    %s34 = sphi 0, %s32
    %s35 = sphi 0, %s34
    %s49 = sphi 0, %s35
    %s53 = sphi 0, %s53
    %s55 = sphi 0, %s53
    %s56 = sphi 0, %s55
    %s70 = sphi 0, %s56
    %s74 = sphi 0, %s74
    %s76 = sphi 0, %s74
    %s77 = sphi 0, %s76
    %s91 = sphi 0, %s77
    %s95 = sphi 0, %s95
    %s97 = sphi 0, %s95
    %s98 = sphi 0, %s97
    %s112 = sphi 0, %s98
    %s118 = sphi 0, %s120
    %s121 = sphi 0, %s118
    %s122 = sphi 0, %s121
    %s138 = sphi 0, %s122
    %s146 = sphi 0, %s148
    %s149 = sphi 0, %s146
    %s150 = sphi 0, %s149
    %s166 = sphi 0, %s150
  $region4: #{forward.20} parent=0 // loop_header_branch
    %15 = sbr.rel (%p13) target = $region8
  $region5: #{forward.20} parent=0 // loop_body
    %s17 = ssub.s32 %s12, 1
    %s18 = ssub.s32 %s12, 2
    %s25 = sadd.s32 1, %s20
    %p26 = scmp.ge.s32.totalorder %s25, 2
    %s27 = scalar_select %p26, 0, %s25
    %s28 = sadd.s32 1, %s19
    %s29 = scalar_select %p26, %s28, %s19
    %p30 = scmp.ge.s32.totalorder %s29, 2
    %s31 = scalar_select %p30, 0, %s29
    %s33 = sadd.s32 %s32, 1
    %p36 = scmp.eq.s32.totalorder %s12, 3
    %p37 = scmp.ne.s32.totalorder %s32, %s34
    %p38 = scmp.eq.s32.totalorder %s12, 0
    %p39 = por %p37, %p38
    %p40 = scmp.ne.s32.totalorder %s32, %s34
    %p41 = scmp.eq.s32.totalorder %s17, 3
    %p42 = por %p40, %p41
    %p43 = scmp.ne.s32.totalorder %s34, %s35
    %p44 = scmp.eq.s32.totalorder %s17, 0
    %p45 = por %p43, %p44
    %p46 = scmp.ne.s32.totalorder %s34, %s35
    %p47 = scmp.eq.s32.totalorder %s18, 3
    %p48 = por %p46, %p47
    %p50 = scmp.ne.s32.totalorder %s35, %s49
    %p51 = scmp.eq.s32.totalorder %s18, 0
    %p52 = por %p50, %p51
    %s54 = sadd.s32 %s53, 1
    %p57 = scmp.eq.s32.totalorder %s12, 3
    %p58 = scmp.ne.s32.totalorder %s53, %s55
    %p59 = scmp.eq.s32.totalorder %s12, 0
    %p60 = por %p58, %p59
    %p61 = scmp.ne.s32.totalorder %s53, %s55
    %p62 = scmp.eq.s32.totalorder %s17, 3
    %p63 = por %p61, %p62
    %p64 = scmp.ne.s32.totalorder %s55, %s56
    %p65 = scmp.eq.s32.totalorder %s17, 0
    %p66 = por %p64, %p65
    %p67 = scmp.ne.s32.totalorder %s55, %s56
    %p68 = scmp.eq.s32.totalorder %s18, 3
    %p69 = por %p67, %p68
    %p71 = scmp.ne.s32.totalorder %s56, %s70
    %p72 = scmp.eq.s32.totalorder %s18, 0
    %p73 = por %p71, %p72
    %s75 = sadd.s32 %s74, 1
    %p78 = scmp.eq.s32.totalorder %s12, 3
    %p79 = scmp.ne.s32.totalorder %s74, %s76
    %p80 = scmp.eq.s32.totalorder %s12, 0
    %p81 = por %p79, %p80
    %p82 = scmp.ne.s32.totalorder %s74, %s76
    %p83 = scmp.eq.s32.totalorder %s17, 3
    %p84 = por %p82, %p83
    %p85 = scmp.ne.s32.totalorder %s76, %s77
    %p86 = scmp.eq.s32.totalorder %s17, 0
    %p87 = por %p85, %p86
    %p88 = scmp.ne.s32.totalorder %s76, %s77
    %p89 = scmp.eq.s32.totalorder %s18, 3
    %p90 = por %p88, %p89
    %p92 = scmp.ne.s32.totalorder %s77, %s91
    %p93 = scmp.eq.s32.totalorder %s18, 0
    %p94 = por %p92, %p93
    %s96 = sadd.s32 %s95, 1
    %p99 = scmp.eq.s32.totalorder %s12, 3
    %p100 = scmp.ne.s32.totalorder %s95, %s97
    %p101 = scmp.eq.s32.totalorder %s12, 0
    %p102 = por %p100, %p101
    %p103 = scmp.ne.s32.totalorder %s95, %s97
    %p104 = scmp.eq.s32.totalorder %s17, 3
    %p105 = por %p103, %p104
    %p106 = scmp.ne.s32.totalorder %s97, %s98
    %p107 = scmp.eq.s32.totalorder %s17, 0
    %p108 = por %p106, %p107
    %p109 = scmp.ne.s32.totalorder %s97, %s98
    %p110 = scmp.eq.s32.totalorder %s18, 3
    %p111 = por %p109, %p110
    %p113 = scmp.ne.s32.totalorder %s98, %s112
    %p114 = scmp.eq.s32.totalorder %s18, 0
    %p115 = por %p113, %p114
    %s116 = ssub.s32 %s20, %s27
    %p117 = scmp.eq.s32.totalorder %s116, 0
    %s119 = sadd.s32 %s118, 1
    %s120 = scalar_select %p117, %s118, %s119
    %p123 = pneg %p117
    %p124 = scmp.eq.s32.totalorder %s12, 3
    %p125 = por %p123, %p124
    %p126 = scmp.ne.s32.totalorder %s118, %s121
    %p127 = scmp.eq.s32.totalorder %s12, 0
    %p128 = por %p126, %p127
    %p129 = scmp.ne.s32.totalorder %s118, %s121
    %p130 = scmp.eq.s32.totalorder %s17, 3
    %p131 = por %p129, %p130
    %p132 = scmp.ne.s32.totalorder %s121, %s122
    %p133 = scmp.eq.s32.totalorder %s17, 0
    %p134 = por %p132, %p133
    %p135 = scmp.ne.s32.totalorder %s121, %s122
    %p136 = scmp.eq.s32.totalorder %s18, 3
    %p137 = por %p135, %p136
    %p139 = scmp.ne.s32.totalorder %s122, %s138
    %p140 = scmp.eq.s32.totalorder %s18, 0
    %p141 = por %p139, %p140
    %s142 = smul.u32 %s19, %s20
    %s143 = smul.u32 %s31, %s27
    %s144 = ssub.s32 %s142, %s143
    %p145 = scmp.eq.s32.totalorder %s144, 0
    %s147 = sadd.s32 %s146, 1
    %s148 = scalar_select %p145, %s146, %s147
    %p151 = pneg %p145
    %p152 = scmp.eq.s32.totalorder %s12, 3
    %p153 = por %p151, %p152
    %p154 = scmp.ne.s32.totalorder %s146, %s149
    %p155 = scmp.eq.s32.totalorder %s12, 0
    %p156 = por %p154, %p155
    %p157 = scmp.ne.s32.totalorder %s146, %s149
    %p158 = scmp.eq.s32.totalorder %s17, 3
    %p159 = por %p157, %p158
    %p160 = scmp.ne.s32.totalorder %s149, %s150
    %p161 = scmp.eq.s32.totalorder %s17, 0
    %p162 = por %p160, %p161
    %p163 = scmp.ne.s32.totalorder %s149, %s150
    %p164 = scmp.eq.s32.totalorder %s18, 3
    %p165 = por %p163, %p164
    %p167 = scmp.ne.s32.totalorder %s150, %s166
    %p168 = scmp.eq.s32.totalorder %s18, 0
    %p169 = por %p167, %p168
    %p170 = scmp.le.s32.totalorder 1, %s12
    %p171 = scmp.lt.s32.totalorder %s12, 5
    %p172 = pnand %p170, %p171
    %p173 = pneg %p172
    // Predicated region
    $region9: #{forward.20} parent=5 // pred_check
      _
    $region10: #{forward.20} parent=5 // pred_check_branch
      %175 = sbr.rel (%p172) target = $region12
    $region11: #{forward.20} parent=5 // pred_region
      %s176 = ssub.s32 %s12, 1
      // Predicated region
      $region13: #{forward.20} parent=11 // pred_check
        %p177 = pneg %p45
      $region14: #{forward.20} parent=11 // pred_check_branch
        %179 = sbr.rel (%p177) target = $region16
      $region15: #{forward.20} parent=11 // pred_region
        _
      $region16: #{forward.20} parent=11 // pred_fallthru
        _
      // Predicated region
      $region17: #{forward.20} parent=11 // pred_check
        %p180 = pneg %p66
      $region18: #{forward.20} parent=11 // pred_check_branch
        %182 = sbr.rel (%p180) target = $region20
      $region19: #{forward.20} parent=11 // pred_region
        _
      $region20: #{forward.20} parent=11 // pred_fallthru
        _
      // Predicated region
      $region21: #{forward.20} parent=11 // pred_check
        %p183 = pneg %p87
      $region22: #{forward.20} parent=11 // pred_check_branch
        %185 = sbr.rel (%p183) target = $region24
      $region23: #{forward.20} parent=11 // pred_region
        _
      $region24: #{forward.20} parent=11 // pred_fallthru
        _
      // Predicated region
      $region25: #{forward.20} parent=11 // pred_check
        %p186 = pneg %p108
      $region26: #{forward.20} parent=11 // pred_check_branch
        %188 = sbr.rel (%p186) target = $region28
      $region27: #{forward.20} parent=11 // pred_region
        _
      $region28: #{forward.20} parent=11 // pred_fallthru
        _
    $region12: #{forward.20} parent=5 // pred_fallthru
      _
    %p189 = scmp.lt.s32.totalorder %s12, 4
    // Predicated region
    $region29: #{forward.20} parent=5 // pred_check
      %p190 = pneg %p189
    $region30: #{forward.20} parent=5 // pred_check_branch
      %192 = sbr.rel (%p190) target = $region32
    $region31: #{forward.20} parent=5 // pred_region
      // Predicated region
      $region33: #{forward.20} parent=31 // pred_check
        %p193 = pneg %p128
      $region34: #{forward.20} parent=31 // pred_check_branch
        %195 = sbr.rel (%p193) target = $region36
      $region35: #{forward.20} parent=31 // pred_region
        %s196 = smul.u32 35, %s20
        %p197 = scmp.lt.s32.totalorder %s196, 69
        %s198 = scalar_select %p197, %s196, 69
        %s199 = smul.addr %s198, 8
        %s200 = scalar_lea.vmem %s5, %s199
        %s201 = smul.u32 35, %s20
      $region36: #{forward.20} parent=31 // pred_fallthru
        _
    $region32: #{forward.20} parent=5 // pred_fallthru
      _
    %p202 = scmp.le.s32.totalorder 1, %s12
    %p203 = scmp.lt.s32.totalorder %s12, 5
    %p204 = pnand %p202, %p203
    %p205 = pneg %p204
    // Predicated region
    $region37: #{forward.20} parent=5 // pred_check
      _
    $region38: #{forward.20} parent=5 // pred_check_branch
      %207 = sbr.rel (%p204) target = $region40
    $region39: #{forward.20} parent=5 // pred_region
      %s208 = ssub.s32 %s12, 1
      %p209 = pneg %p45
      %p210 = pneg %p42
      %p211 = pneg %p66
      %p212 = pneg %p63
      %p213 = pneg %p87
      %p214 = pneg %p84
      %p215 = pneg %p108
      %p216 = pneg %p105
      %s217 = smul.u32 35, %s22
      %p218 = scmp.lt.s32.totalorder %s217, 69
      %s219 = scalar_select %p218, %s217, 69
      %s220 = smul.addr %s219, 8
      %s221 = scalar_lea.vmem %s5, %s220
      %p222 = pneg %p134
      %p223 = pneg %p131
      %p224 = pneg %p162
      %p225 = pneg %p159
      %s226 = smul.u32 %s21, %s22
      %s227 = smul.u32 35, %s226
      %p228 = scmp.lt.s32.totalorder %s227, 69
      %s229 = scalar_select %p228, %s227, 69
      %s230 = smul.addr %s229, 4
      %s231 = scalar_lea.vmem %s6, %s230
      %s232 = smul.u32 35, %s22
      %p233 = scmp.lt.s32.totalorder %s232, 69
      %s234 = scalar_select %p233, %s232, 69
      %s235 = smul.addr %s234, 8
      %s236 = scalar_lea.vmem %s5, %s235
      %s237 = smul.u32 35, %s22
      %s238 = smul.u32 %s21, %s22
      %s239 = smul.u32 35, %s238
      %p240 = scmp.lt.s32.totalorder %s239, 69
      %s241 = scalar_select %p240, %s239, 69
      %s242 = smul.addr %s241, 4
      %s243 = scalar_lea.vmem %s6, %s242
      %s244 = smul.u32 %s21, %s22
      %s245 = smul.u32 35, %s244
      %s247 = smul.u32 %s22, 280
      %s248 = sshra.s32 %s247, 3
      %s249 = sand.u32 %s247, 7
      %s250 = smul.addr %s248, 4
      %s251 = scalar_lea.vmem %s0, %s250
      // Predicated region
      $region41: #{forward.20} parent=39 // pred_check
        _
      $region42: #{forward.20} parent=39 // pred_check_branch
        %253 = sbr.rel (0) target = $region44
      $region43: #{forward.20} parent=39 // pred_region
        loop: start=0, step=1, limit=1
        $region45: #{forward.20} parent=43 // loop_pre_header
          _
        $region46: #{forward.20} parent=43 // loop_header
          %s255 = sphi 0, %s259
          %p256 = scmp.ge.s32.totalorder %s255, 1
          %s260 = sphi %s251, %s251
          %s261 = sphi [#allocation2], [#allocation2]
        $region47: #{forward.20} parent=43 // loop_header_branch
          %258 = sbr.rel (%p256) target = $region51
        $region48: #{forward.20} parent=43 // loop_body
          %v262 = vld [vmem:[%s260] sm:$0xff]
          %263 = vst [vmem:[%s261] sm:$0xff] %v262
          %v264 = vld [vmem:[%s260 + $0x8] sm:$0xff]
          %265 = vst [vmem:[%s261 + $0x8] sm:$0xff] %v264
          %v266 = vld [vmem:[%s260 + $0x10] sm:$0xff]
          %267 = vst [vmem:[%s261 + $0x10] sm:$0xff] %v266
          %v268 = vld [vmem:[%s260 + $0x18] sm:$0xff]
          %269 = vst [vmem:[%s261 + $0x18] sm:$0xff] %v268
          %v270 = vld [vmem:[%s260 + $0x20] sm:$0xff]
          %271 = vst [vmem:[%s261 + $0x20] sm:$0xff] %v270
          %v272 = vld [vmem:[%s260 + $0x28] sm:$0xff]
          %273 = vst [vmem:[%s261 + $0x28] sm:$0xff] %v272
          %v274 = vld [vmem:[%s260 + $0x30] sm:$0xff]
          %275 = vst [vmem:[%s261 + $0x30] sm:$0xff] %v274
          %v276 = vld [vmem:[%s260 + $0x38] sm:$0xff]
          %277 = vst [vmem:[%s261 + $0x38] sm:$0xff] %v276
          %v278 = vld [vmem:[%s260 + $0x40] sm:$0xff]
          %279 = vst [vmem:[%s261 + $0x40] sm:$0xff] %v278
          %v280 = vld [vmem:[%s260 + $0x48] sm:$0xff]
          %281 = vst [vmem:[%s261 + $0x48] sm:$0xff] %v280
          %v282 = vld [vmem:[%s260 + $0x50] sm:$0xff]
          %283 = vst [vmem:[%s261 + $0x50] sm:$0xff] %v282
          %v284 = vld [vmem:[%s260 + $0x58] sm:$0xff]
          %285 = vst [vmem:[%s261 + $0x58] sm:$0xff] %v284
          %v286 = vld [vmem:[%s260 + $0x60] sm:$0xff]
          %287 = vst [vmem:[%s261 + $0x60] sm:$0xff] %v286
          %v288 = vld [vmem:[%s260 + $0x68] sm:$0xff]
          %289 = vst [vmem:[%s261 + $0x68] sm:$0xff] %v288
          %v290 = vld [vmem:[%s260 + $0x70] sm:$0xff]
          %291 = vst [vmem:[%s261 + $0x70] sm:$0xff] %v290
          %v292 = vld [vmem:[%s260 + $0x78] sm:$0xff]
          %293 = vst [vmem:[%s261 + $0x78] sm:$0xff] %v292
          %v294 = vld [vmem:[%s260 + $0x80] sm:$0xff]
          %295 = vst [vmem:[%s261 + $0x80] sm:$0xff] %v294
          %v296 = vld [vmem:[%s260 + $0x88] sm:$0xff]
          %297 = vst [vmem:[%s261 + $0x88] sm:$0xff] %v296
          %v298 = vld [vmem:[%s260 + $0x90] sm:$0xff]
          %299 = vst [vmem:[%s261 + $0x90] sm:$0xff] %v298
        $region49: #{forward.20} parent=43 // loop_footer
          %s259 = sadd.s32 1, %s255
        $region50: #{forward.20} parent=43 // loop_footer_branch
          %254 = sbr.rel target = $region46
        $region51: #{forward.20} parent=43 // loop_exit
          _
      $region44: #{forward.20} parent=39 // pred_fallthru
        _
      // Predicated region
      $region52: #{forward.20} parent=39 // pred_check
        _
      $region53: #{forward.20} parent=39 // pred_check_branch
        %301 = sbr.rel target = $region55
      $region54: #{forward.20} parent=39 // pred_region
        _
      $region55: #{forward.20} parent=39 // pred_fallthru
        _
      // Predicated region
      $region56: #{forward.20} parent=39 // pred_check
        _
      $region57: #{forward.20} parent=39 // pred_check_branch
        %304 = sbr.rel (0) target = $region59
      $region58: #{forward.20} parent=39 // pred_region
        %305 = vsyncadd [#allocation3], 2432
      $region59: #{forward.20} parent=39 // pred_fallthru
        _
      %s306 = smul.u32 4, 38
      %s307 = smul.u32 %s306, 1
      %s308 = sshll.u32 %s307, 4
      %309 = dma.done [#allocation3], %s308
      %v310 = vld [vmem:[#allocation2] sm:$0xf]
      %v311 = vld [vmem:[#allocation2 + $0x4] sm:$0xf]
      %v312 = vld [vmem:[#allocation2 + $0x8] sm:$0xf]
      %v313 = vld [vmem:[#allocation2 + $0xc] sm:$0xf]
      %v314 = vld [vmem:[#allocation2 + $0x10] sm:$0xf]
      %v315 = vld [vmem:[#allocation2 + $0x14] sm:$0xf]
      %v316 = vld [vmem:[#allocation2 + $0x18] sm:$0xf]
      %v317 = vld [vmem:[#allocation2 + $0x1c] sm:$0xf]
      %v318 = vld [vmem:[#allocation2 + $0x20] sm:$0xf]
      %v319 = vld [vmem:[#allocation2 + $0x24] sm:$0xf]
      %v320 = vld [vmem:[#allocation2 + $0x28] sm:$0xf]
      %v321 = vld [vmem:[#allocation2 + $0x2c] sm:$0xf]
      %v322 = vld [vmem:[#allocation2 + $0x30] sm:$0xf]
      %v323 = vld [vmem:[#allocation2 + $0x34] sm:$0xf]
      %v324 = vld [vmem:[#allocation2 + $0x38] sm:$0xf]
      %v325 = vld [vmem:[#allocation2 + $0x3c] sm:$0xf]
      %v326 = vld [vmem:[#allocation2 + $0x40] sm:$0xf]
      %v327 = vld [vmem:[#allocation2 + $0x44] sm:$0xf]
      %v328 = vld [vmem:[#allocation2 + $0x48] sm:$0xf]
      %v329 = vld [vmem:[#allocation2 + $0x4c] sm:$0xf]
      %v330 = vld [vmem:[#allocation2 + $0x50] sm:$0xf]
      %v331 = vld [vmem:[#allocation2 + $0x54] sm:$0xf]
      %v332 = vld [vmem:[#allocation2 + $0x58] sm:$0xf]
      %v333 = vld [vmem:[#allocation2 + $0x5c] sm:$0xf]
      %v334 = vld [vmem:[#allocation2 + $0x60] sm:$0xf]
      %v335 = vld [vmem:[#allocation2 + $0x64] sm:$0xf]
      %v336 = vld [vmem:[#allocation2 + $0x68] sm:$0xf]
      %v337 = vld [vmem:[#allocation2 + $0x6c] sm:$0xf]
      %v338 = vld [vmem:[#allocation2 + $0x70] sm:$0xf]
      %v339 = vld [vmem:[#allocation2 + $0x74] sm:$0xf]
      %v340 = vld [vmem:[#allocation2 + $0x78] sm:$0xf]
      %v341 = vld [vmem:[#allocation2 + $0x7c] sm:$0xf]
      %v342 = vld [vmem:[#allocation2 + $0x80] sm:$0xf]
      %v343 = vld [vmem:[#allocation2 + $0x84] sm:$0xf]
      %v344 = vld [vmem:[#allocation2 + $0x88] sm:$0xf]
      %v345 = vld [vmem:[#allocation2 + $0x8c] sm:$0x1]
      %v346 = vld [vmem:[#allocation2 + $0x8c] sm:$0xf]
      %v347 = vld [vmem:[#allocation2 + $0x90] sm:$0xf]
      %v348 = vld [vmem:[#allocation2 + $0x94] sm:$0x1]
      %v349 = vld [vmem:[#allocation2 + $0x8] sm:$0xe]
      %v385 = vunpack.c.l.b16 %v310
      %v386 = vunpack.c.l.b16 %v311
      %v387 = vunpack.c.l.b16 %v312
      %v388 = vunpack.c.l.b16 %v313
      %v389 = vunpack.c.l.b16 %v314
      %v390 = vunpack.c.l.b16 %v315
      %v391 = vunpack.c.l.b16 %v316
      %v392 = vunpack.c.l.b16 %v317
      %v393 = vunpack.c.l.b16 %v318
      %v394 = vunpack.c.l.b16 %v319
      %v395 = vunpack.c.l.b16 %v320
      %v396 = vunpack.c.l.b16 %v321
      %v397 = vunpack.c.l.b16 %v322
      %v398 = vunpack.c.l.b16 %v323
      %v399 = vunpack.c.l.b16 %v324
      %v400 = vunpack.c.l.b16 %v325
      %v401 = vunpack.c.l.b16 %v326
      %v402 = vunpack.c.l.b16 %v327
      %v403 = vunpack.c.l.b16 %v328
      %v404 = vunpack.c.l.b16 %v329
      %v405 = vunpack.c.l.b16 %v330
      %v406 = vunpack.c.l.b16 %v331
      %v407 = vunpack.c.l.b16 %v332
      %v408 = vunpack.c.l.b16 %v333
      %v409 = vunpack.c.l.b16 %v334
      %v410 = vunpack.c.l.b16 %v335
      %v411 = vunpack.c.l.b16 %v336
      %v412 = vunpack.c.l.b16 %v337
      %v413 = vunpack.c.l.b16 %v338
      %v414 = vunpack.c.l.b16 %v339
      %v415 = vunpack.c.l.b16 %v340
      %v416 = vunpack.c.l.b16 %v341
      %v417 = vunpack.c.l.b16 %v342
      %v418 = vunpack.c.l.b16 %v343
      %v419 = vunpack.c.l.b16 %v344
      %v420 = vpack.c.b16 %v386, %v385
      %v421 = vpack.c.b16 %v388, %v387
      %v422 = vpack.c.b16 %v390, %v389
      %v423 = vpack.c.b16 %v392, %v391
      %v424 = vpack.c.b16 %v394, %v393
      %v425 = vpack.c.b16 %v396, %v395
      %v426 = vpack.c.b16 %v398, %v397
      %v427 = vpack.c.b16 %v400, %v399
      %v428 = vpack.c.b16 %v402, %v401
      %v429 = vpack.c.b16 %v404, %v403
      %v430 = vpack.c.b16 %v406, %v405
      %v431 = vpack.c.b16 %v408, %v407
      %v432 = vpack.c.b16 %v410, %v409
      %v433 = vpack.c.b16 %v412, %v411
      %v434 = vpack.c.b16 %v414, %v413
      %v435 = vpack.c.b16 %v416, %v415
      %v436 = vpack.c.b16 %v418, %v417
      %v437 = vpack.c.b16 %v419, %v419
      %v439 = vunpack.c.l.b16 %v345
      %v440 = vpack.c.b16 %v439, %v419
      %vm441 = vsmask.f32 7424
      %v443 = vshrl.u32 %v420, 16
      %v445 = vshll.u32 %v420, 16
      %v447 = vrot.slane %v445, 1
      %v448 = vor.u32 %v443, %v447
      %v450 = vshll.u32 %v421, 16
      %v452 = vrot.slane %v450, 1
      %v453 = vsel %vm441, %v448, %v452
      %v454 = vshrl.u32 %v421, 16
      %v456 = vor.u32 %v454, %v452
      %v458 = vshll.u32 %v422, 16
      %v460 = vrot.slane %v458, 1
      %v461 = vsel %vm441, %v456, %v460
      %v462 = vshrl.u32 %v422, 16
      %v464 = vor.u32 %v462, %v460
      %v466 = vshll.u32 %v423, 16
      %v468 = vrot.slane %v466, 1
      %v469 = vsel %vm441, %v464, %v468
      %v470 = vshrl.u32 %v423, 16
      %v472 = vor.u32 %v470, %v468
      %v474 = vshll.u32 %v424, 16
      %v476 = vrot.slane %v474, 1
      %v477 = vsel %vm441, %v472, %v476
      %v478 = vshrl.u32 %v424, 16
      %v480 = vor.u32 %v478, %v476
      %v482 = vshll.u32 %v425, 16
      %v484 = vrot.slane %v482, 1
      %v485 = vsel %vm441, %v480, %v484
      %v486 = vshrl.u32 %v425, 16
      %v488 = vor.u32 %v486, %v484
      %v490 = vshll.u32 %v426, 16
      %v492 = vrot.slane %v490, 1
      %v493 = vsel %vm441, %v488, %v492
      %v494 = vshrl.u32 %v426, 16
      %v496 = vor.u32 %v494, %v492
      %v498 = vshll.u32 %v427, 16
      %v500 = vrot.slane %v498, 1
      %v501 = vsel %vm441, %v496, %v500
      %v502 = vshrl.u32 %v427, 16
      %v504 = vor.u32 %v502, %v500
      %v506 = vshll.u32 %v428, 16
      %v508 = vrot.slane %v506, 1
      %v509 = vsel %vm441, %v504, %v508
      %v510 = vshrl.u32 %v428, 16
      %v512 = vor.u32 %v510, %v508
      %v514 = vshll.u32 %v429, 16
      %v516 = vrot.slane %v514, 1
      %v517 = vsel %vm441, %v512, %v516
      %v518 = vshrl.u32 %v429, 16
      %v520 = vor.u32 %v518, %v516
      %v522 = vshll.u32 %v430, 16
      %v524 = vrot.slane %v522, 1
      %v525 = vsel %vm441, %v520, %v524
      %v526 = vshrl.u32 %v430, 16
      %v528 = vor.u32 %v526, %v524
      %v530 = vshll.u32 %v431, 16
      %v532 = vrot.slane %v530, 1
      %v533 = vsel %vm441, %v528, %v532
      %v534 = vshrl.u32 %v431, 16
      %v536 = vor.u32 %v534, %v532
      %v538 = vshll.u32 %v432, 16
      %v540 = vrot.slane %v538, 1
      %v541 = vsel %vm441, %v536, %v540
      %v542 = vshrl.u32 %v432, 16
      %v544 = vor.u32 %v542, %v540
      %v546 = vshll.u32 %v433, 16
      %v548 = vrot.slane %v546, 1
      %v549 = vsel %vm441, %v544, %v548
      %v550 = vshrl.u32 %v433, 16
      %v552 = vor.u32 %v550, %v548
      %v554 = vshll.u32 %v434, 16
      %v556 = vrot.slane %v554, 1
      %v557 = vsel %vm441, %v552, %v556
      %v558 = vshrl.u32 %v434, 16
      %v560 = vor.u32 %v558, %v556
      %v562 = vshll.u32 %v435, 16
      %v564 = vrot.slane %v562, 1
      %v565 = vsel %vm441, %v560, %v564
      %v566 = vshrl.u32 %v435, 16
      %v568 = vor.u32 %v566, %v564
      %v570 = vshll.u32 %v436, 16
      %v572 = vrot.slane %v570, 1
      %v573 = vsel %vm441, %v568, %v572
      %v574 = vshrl.u32 %v436, 16
      %v576 = vor.u32 %v574, %v572
      %v578 = vshll.u32 %v440, 16
      %v580 = vrot.slane %v578, 1
      %v581 = vsel %vm441, %v576, %v580
      %v582 = vshrl.u32 %v440, 16
      %v584 = vor.u32 %v582, %v580
      %585 = vrot.lane.b32.xlu0 %v453, 8
      %v586 = vpop.permute.xlu0 %585
      %587 = vrot.lane.b32.xlu0 %v461, 8
      %v588 = vpop.permute.xlu0 %587
      %589 = vrot.lane.b32.xlu0 %v469, 8
      %v590 = vpop.permute.xlu0 %589
      %591 = vrot.lane.b32.xlu0 %v477, 8
      %v592 = vpop.permute.xlu0 %591
      %593 = vrot.lane.b32.xlu0 %v485, 8
      %v594 = vpop.permute.xlu0 %593
      %595 = vrot.lane.b32.xlu0 %v493, 8
      %v596 = vpop.permute.xlu0 %595
      %597 = vrot.lane.b32.xlu0 %v501, 8
      %v598 = vpop.permute.xlu0 %597
      %599 = vrot.lane.b32.xlu0 %v509, 8
      %v600 = vpop.permute.xlu0 %599
      %601 = vrot.lane.b32.xlu0 %v517, 8
      %v602 = vpop.permute.xlu0 %601
      %603 = vrot.lane.b32.xlu0 %v525, 8
      %v604 = vpop.permute.xlu0 %603
      %605 = vrot.lane.b32.xlu0 %v533, 8
      %v606 = vpop.permute.xlu0 %605
      %607 = vrot.lane.b32.xlu0 %v541, 8
      %v608 = vpop.permute.xlu0 %607
      %609 = vrot.lane.b32.xlu0 %v549, 8
      %v610 = vpop.permute.xlu0 %609
      %611 = vrot.lane.b32.xlu0 %v557, 8
      %v612 = vpop.permute.xlu0 %611
      %613 = vrot.lane.b32.xlu0 %v565, 8
      %v614 = vpop.permute.xlu0 %613
      %615 = vrot.lane.b32.xlu0 %v573, 8
      %v616 = vpop.permute.xlu0 %615
      %617 = vrot.lane.b32.xlu0 %v581, 8
      %v618 = vpop.permute.xlu0 %617
      %619 = vrot.lane.b32.xlu0 %v584, 8
      %v620 = vpop.permute.xlu0 %619
      %v624 = vunpack.c.l.b16 %v346
      %v625 = vunpack.c.l.b16 %v347
      %v626 = vunpack.c.l.b16 %v348
      %v627 = vpack.c.b16 %v624, %v419
      %v628 = vpack.c.b16 %v626, %v625
      %v630 = vshll.u32 %v627, 16
      %v632 = vrot.slane %v630, 1
      %v633 = vsel %vm441, %v576, %v632
      %v634 = vshrl.u32 %v627, 16
      %v636 = vor.u32 %v634, %v632
      %v638 = vshll.u32 %v628, 16
      %v640 = vrot.slane %v638, 1
      %v641 = vsel %vm441, %v636, %v640
      %v642 = vshrl.u32 %v628, 16
      %v644 = vor.u32 %v642, %v640
      %645 = vrot.lane.b32.xlu0 %v461, 16
      %v646 = vpop.permute.xlu0 %645
      %647 = vrot.lane.b32.xlu0 %v469, 16
      %v648 = vpop.permute.xlu0 %647
      %649 = vrot.lane.b32.xlu0 %v477, 16
      %v650 = vpop.permute.xlu0 %649
      %651 = vrot.lane.b32.xlu0 %v485, 16
      %v652 = vpop.permute.xlu0 %651
      %653 = vrot.lane.b32.xlu0 %v493, 16
      %v654 = vpop.permute.xlu0 %653
      %655 = vrot.lane.b32.xlu0 %v501, 16
      %v656 = vpop.permute.xlu0 %655
      %657 = vrot.lane.b32.xlu0 %v509, 16
      %v658 = vpop.permute.xlu0 %657
      %659 = vrot.lane.b32.xlu0 %v517, 16
      %v660 = vpop.permute.xlu0 %659
      %661 = vrot.lane.b32.xlu0 %v525, 16
      %v662 = vpop.permute.xlu0 %661
      %663 = vrot.lane.b32.xlu0 %v533, 16
      %v664 = vpop.permute.xlu0 %663
      %665 = vrot.lane.b32.xlu0 %v541, 16
      %v666 = vpop.permute.xlu0 %665
      %667 = vrot.lane.b32.xlu0 %v549, 16
      %v668 = vpop.permute.xlu0 %667
      %669 = vrot.lane.b32.xlu0 %v557, 16
      %v670 = vpop.permute.xlu0 %669
      %671 = vrot.lane.b32.xlu0 %v565, 16
      %v672 = vpop.permute.xlu0 %671
      %673 = vrot.lane.b32.xlu0 %v573, 16
      %v674 = vpop.permute.xlu0 %673
      %675 = vrot.lane.b32.xlu0 %v633, 16
      %v676 = vpop.permute.xlu0 %675
      %677 = vrot.lane.b32.xlu0 %v641, 16
      %v678 = vpop.permute.xlu0 %677
      %679 = vrot.lane.b32.xlu0 %v644, 16
      %v680 = vpop.permute.xlu0 %679
      %v682 = vunpack.c.l.b16 %v349
      %v683 = vpack.c.b16 %v388, %v682
      %vm684 = vcmask 1046528
      %v685 = vrot.slane %v683, 1
      %v686 = vrot.slane %v422, 1
      %v687 = vsel %vm684, %v685, %v686
      %v688 = vrot.slane %v423, 1
      %v689 = vsel %vm684, %v686, %v688
      %v690 = vrot.slane %v424, 1
      %v691 = vsel %vm684, %v688, %v690
      %v692 = vrot.slane %v425, 1
      %v693 = vsel %vm684, %v690, %v692
      %v694 = vrot.slane %v426, 1
      %v695 = vsel %vm684, %v692, %v694
      %v696 = vrot.slane %v427, 1
      %v697 = vsel %vm684, %v694, %v696
      %v698 = vrot.slane %v428, 1
      %v699 = vsel %vm684, %v696, %v698
      %v700 = vrot.slane %v429, 1
      %v701 = vsel %vm684, %v698, %v700
      %v702 = vrot.slane %v430, 1
      %v703 = vsel %vm684, %v700, %v702
      %v704 = vrot.slane %v431, 1
      %v705 = vsel %vm684, %v702, %v704
      %v706 = vrot.slane %v432, 1
      %v707 = vsel %vm684, %v704, %v706
      %v708 = vrot.slane %v433, 1
      %v709 = vsel %vm684, %v706, %v708
      %v710 = vrot.slane %v434, 1
      %v711 = vsel %vm684, %v708, %v710
      %v712 = vrot.slane %v435, 1
      %v713 = vsel %vm684, %v710, %v712
      %v714 = vrot.slane %v436, 1
      %v715 = vsel %vm684, %v712, %v714
      %v716 = vrot.slane %v627, 1
      %v717 = vsel %vm684, %v714, %v716
      %v718 = vrot.slane %v628, 1
      %v719 = vsel %vm684, %v716, %v718
      %720 = vrot.lane.b32.xlu0 %v687, 24
      %v721 = vpop.permute.xlu0 %720
      %722 = vrot.lane.b32.xlu0 %v689, 24
      %v723 = vpop.permute.xlu0 %722
      %724 = vrot.lane.b32.xlu0 %v691, 24
      %v725 = vpop.permute.xlu0 %724
      %726 = vrot.lane.b32.xlu0 %v693, 24
      %v727 = vpop.permute.xlu0 %726
      %728 = vrot.lane.b32.xlu0 %v695, 24
      %v729 = vpop.permute.xlu0 %728
      %730 = vrot.lane.b32.xlu0 %v697, 24
      %v731 = vpop.permute.xlu0 %730
      %732 = vrot.lane.b32.xlu0 %v699, 24
      %v733 = vpop.permute.xlu0 %732
      %734 = vrot.lane.b32.xlu0 %v701, 24
      %v735 = vpop.permute.xlu0 %734
      %736 = vrot.lane.b32.xlu0 %v703, 24
      %v737 = vpop.permute.xlu0 %736
      %738 = vrot.lane.b32.xlu0 %v705, 24
      %v739 = vpop.permute.xlu0 %738
      %740 = vrot.lane.b32.xlu0 %v707, 24
      %v741 = vpop.permute.xlu0 %740
      %742 = vrot.lane.b32.xlu0 %v709, 24
      %v743 = vpop.permute.xlu0 %742
      %744 = vrot.lane.b32.xlu0 %v711, 24
      %v745 = vpop.permute.xlu0 %744
      %746 = vrot.lane.b32.xlu0 %v713, 24
      %v747 = vpop.permute.xlu0 %746
      %748 = vrot.lane.b32.xlu0 %v715, 24
      %v749 = vpop.permute.xlu0 %748
      %750 = vrot.lane.b32.xlu0 %v717, 24
      %v751 = vpop.permute.xlu0 %750
      %752 = vrot.lane.b32.xlu0 %v719, 24
      %v753 = vpop.permute.xlu0 %752
      %754 = vrot.lane.b32.xlu0 %v718, 24
      %v755 = vpop.permute.xlu0 %754
      %vm756 = vcmask 64512
      %v758 = vsel %vm756, %v420, %v586
      %v760 = vsel %vm756, %v421, %v588
      %v762 = vsel %vm756, %v422, %v590
      %v764 = vsel %vm756, %v423, %v592
      %v766 = vsel %vm756, %v424, %v594
      %v768 = vsel %vm756, %v425, %v596
      %v770 = vsel %vm756, %v426, %v598
      %v772 = vsel %vm756, %v427, %v600
      %v774 = vsel %vm756, %v428, %v602
      %v776 = vsel %vm756, %v429, %v604
      %v778 = vsel %vm756, %v430, %v606
      %v780 = vsel %vm756, %v431, %v608
      %v782 = vsel %vm756, %v432, %v610
      %v784 = vsel %vm756, %v433, %v612
      %v786 = vsel %vm756, %v434, %v614
      %v788 = vsel %vm756, %v435, %v616
      %v790 = vsel %vm756, %v436, %v618
      %v793 = vsel %vm756, %v437, %v620
      %vm794 = vcmask 130048
      %v796 = vsel %vm794, %v758, %v646
      %v798 = vsel %vm794, %v760, %v648
      %v800 = vsel %vm794, %v762, %v650
      %v802 = vsel %vm794, %v764, %v652
      %v804 = vsel %vm794, %v766, %v654
      %v806 = vsel %vm794, %v768, %v656
      %v808 = vsel %vm794, %v770, %v658
      %v810 = vsel %vm794, %v772, %v660
      %v812 = vsel %vm794, %v774, %v662
      %v814 = vsel %vm794, %v776, %v664
      %v816 = vsel %vm794, %v778, %v666
      %v818 = vsel %vm794, %v780, %v668
      %v820 = vsel %vm794, %v782, %v670
      %v822 = vsel %vm794, %v784, %v672
      %v824 = vsel %vm794, %v786, %v674
      %v826 = vsel %vm794, %v788, %v676
      %v828 = vsel %vm794, %v790, %v678
      %v830 = vsel %vm794, %v793, %v680
      %vm831 = vcmask 195584
      %v833 = vsel %vm831, %v796, %v721
      %v835 = vsel %vm831, %v798, %v723
      %v837 = vsel %vm831, %v800, %v725
      %v839 = vsel %vm831, %v802, %v727
      %v841 = vsel %vm831, %v804, %v729
      %v843 = vsel %vm831, %v806, %v731
      %v845 = vsel %vm831, %v808, %v733
      %v847 = vsel %vm831, %v810, %v735
      %v849 = vsel %vm831, %v812, %v737
      %v851 = vsel %vm831, %v814, %v739
      %v853 = vsel %vm831, %v816, %v741
      %v855 = vsel %vm831, %v818, %v743
      %v857 = vsel %vm831, %v820, %v745
      %v859 = vsel %vm831, %v822, %v747
      %v861 = vsel %vm831, %v824, %v749
      %v863 = vsel %vm831, %v826, %v751
      %v865 = vsel %vm831, %v828, %v753
      %v867 = vsel %vm831, %v830, %v755
      %v868 = vld [vmem:[%s1] sm:$0xf]
      %v869 = vld [vmem:[%s1 + $0x4] sm:$0xf]
      %v870 = vld [vmem:[%s1 + $0x8] sm:$0xf]
      %v871 = vld [vmem:[%s1 + $0xc] sm:$0xf]
      %v872 = vld [vmem:[%s2] sm:$0x1]
      %v874 = vperm.slane %v872, 0
      %v880 = vunpack.c.l.b16 %v868
      %v881 = vunpack.c.l.b16 %v869
      %v882 = vunpack.c.l.b16 %v870
      %v883 = vunpack.c.l.b16 %v871
      %v884 = vpack.c.b16 %v881, %v880
      %v885 = vpack.c.b16 %v883, %v882
      %vm888 = vcmask 261120
      %v889 = vsel %vm888, %v833, 0
      %v891 = vsel %vm888, %v835, 0
      %v893 = vsel %vm888, %v837, 0
      %v895 = vsel %vm888, %v839, 0
      %v897 = vsel %vm888, %v841, 0
      %v899 = vsel %vm888, %v843, 0
      %v901 = vsel %vm888, %v845, 0
      %v903 = vsel %vm888, %v847, 0
      %v905 = vsel %vm888, %v849, 0
      %v907 = vsel %vm888, %v851, 0
      %v909 = vsel %vm888, %v853, 0
      %v911 = vsel %vm888, %v855, 0
      %v913 = vsel %vm888, %v857, 0
      %v915 = vsel %vm888, %v859, 0
      %v917 = vsel %vm888, %v861, 0
      %v919 = vsel %vm888, %v863, 0
      %v921 = vsel %vm888, %v865, 0
      %v923 = vsel %vm888, %v867, 0
      %925 = vmatpush.bf16.msra.mxu0 0
      %926 = vmatpush.bf16.msra.mxu0 0
      %927 = vmatpush.bf16.msra.mxu0 0
      %928 = vmatpush.bf16.msra.mxu0 0
      %929 = vmatpush.bf16.msra.mxu0 0
      %930 = vmatpush.bf16.msra.mxu0 0
      %931 = vmatpush.bf16.msra.mxu0 %v885
      %932 = vmatpush.bf16.msra.mxu0 %v884
      %933 = vmatmul.bf16.gmra.mxu0 %v889
      %v934 = vpop.f32.mrf.mxu0
      %v935 = vadd.f32 %v874, %v934
      %v936 = vpop.f32.mrf.mxu0
      %v937 = vadd.f32 %v874, %v936
      %938 = vmatmul.bf16.gmra.mxu0 %v891
      %v939 = vpop.f32.mrf.mxu0
      %v940 = vadd.f32 %v874, %v939
      %v941 = vpop.f32.mrf.mxu0
      %v942 = vadd.f32 %v874, %v941
      %943 = vmatmul.bf16.gmra.mxu0 %v893
      %v944 = vpop.f32.mrf.mxu0
      %v945 = vadd.f32 %v874, %v944
      %v946 = vpop.f32.mrf.mxu0
      %v947 = vadd.f32 %v874, %v946
      %948 = vmatmul.bf16.gmra.mxu0 %v895
      %v949 = vpop.f32.mrf.mxu0
      %v950 = vadd.f32 %v874, %v949
      %v951 = vpop.f32.mrf.mxu0
      %v952 = vadd.f32 %v874, %v951
      %953 = vmatmul.bf16.gmra.mxu0 %v897
      %v954 = vpop.f32.mrf.mxu0
      %v955 = vadd.f32 %v874, %v954
      %v956 = vpop.f32.mrf.mxu0
      %v957 = vadd.f32 %v874, %v956
      %958 = vmatmul.bf16.gmra.mxu0 %v899
      %v959 = vpop.f32.mrf.mxu0
      %v960 = vadd.f32 %v874, %v959
      %v961 = vpop.f32.mrf.mxu0
      %v962 = vadd.f32 %v874, %v961
      %963 = vmatmul.bf16.gmra.mxu0 %v901
      %v964 = vpop.f32.mrf.mxu0
      %v965 = vadd.f32 %v874, %v964
      %v966 = vpop.f32.mrf.mxu0
      %v967 = vadd.f32 %v874, %v966
      %968 = vmatmul.bf16.gmra.mxu0 %v903
      %v969 = vpop.f32.mrf.mxu0
      %v970 = vadd.f32 %v874, %v969
      %v971 = vpop.f32.mrf.mxu0
      %v972 = vadd.f32 %v874, %v971
      %973 = vmatmul.bf16.gmra.mxu0 %v905
      %v974 = vpop.f32.mrf.mxu0
      %v975 = vadd.f32 %v874, %v974
      %v976 = vpop.f32.mrf.mxu0
      %v977 = vadd.f32 %v874, %v976
      %978 = vmatmul.bf16.gmra.mxu0 %v907
      %v979 = vpop.f32.mrf.mxu0
      %v980 = vadd.f32 %v874, %v979
      %v981 = vpop.f32.mrf.mxu0
      %v982 = vadd.f32 %v874, %v981
      %983 = vmatmul.bf16.gmra.mxu0 %v909
      %v984 = vpop.f32.mrf.mxu0
      %v985 = vadd.f32 %v874, %v984
      %v986 = vpop.f32.mrf.mxu0
      %v987 = vadd.f32 %v874, %v986
      %988 = vmatmul.bf16.gmra.mxu0 %v911
      %v989 = vpop.f32.mrf.mxu0
      %v990 = vadd.f32 %v874, %v989
      %v991 = vpop.f32.mrf.mxu0
      %v992 = vadd.f32 %v874, %v991
      %993 = vmatmul.bf16.gmra.mxu0 %v913
      %v994 = vpop.f32.mrf.mxu0
      %v995 = vadd.f32 %v874, %v994
      %v996 = vpop.f32.mrf.mxu0
      %v997 = vadd.f32 %v874, %v996
      %998 = vmatmul.bf16.gmra.mxu0 %v915
      %v999 = vpop.f32.mrf.mxu0
      %v1000 = vadd.f32 %v874, %v999
      %v1001 = vpop.f32.mrf.mxu0
      %v1002 = vadd.f32 %v874, %v1001
      %1003 = vmatmul.bf16.gmra.mxu0 %v917
      %v1004 = vpop.f32.mrf.mxu0
      %v1005 = vadd.f32 %v874, %v1004
      %v1006 = vpop.f32.mrf.mxu0
      %v1007 = vadd.f32 %v874, %v1006
      %1008 = vmatmul.bf16.gmra.mxu0 %v919
      %v1009 = vpop.f32.mrf.mxu0
      %v1010 = vadd.f32 %v874, %v1009
      %v1011 = vpop.f32.mrf.mxu0
      %v1012 = vadd.f32 %v874, %v1011
      %1013 = vmatmul.bf16.gmra.mxu0 %v921
      %v1014 = vpop.f32.mrf.mxu0
      %v1015 = vadd.f32 %v874, %v1014
      %v1016 = vpop.f32.mrf.mxu0
      %v1017 = vadd.f32 %v874, %v1016
      %1018 = vmatmul.bf16.gmra.mxu0 %v923
      %v1019 = vpop.f32.mrf.mxu0
      %v1020 = vadd.f32 %v874, %v1019
      %v1021 = vpop.f32.mrf.mxu0
      %1022 = vdwg.mxu0
      %p1023 = scmp.eq.s32.totalorder %s21, 0
      // Predicated region
      $region60: #{forward.20} parent=39 // pred_check
        %p1024 = pneg %p1023
      $region61: #{forward.20} parent=39 // pred_check_branch
        %1026 = sbr.rel (%p1024) target = $region63
      $region62: #{forward.20} parent=39 // pred_region
        %p1027 = scmp.eq.s32.totalorder %s22, 0
        // Predicated region
        $region64: #{forward.20} parent=62 // pred_check
          %p1028 = pneg %p1027
        $region65: #{forward.20} parent=62 // pred_check_branch
          %1030 = sbr.rel (%p1028) target = $region67
        $region66: #{forward.20} parent=62 // pred_region
          %1031 = vst [vmem:[#allocation4] sm:$0x3] 0.0
        $region67: #{forward.20} parent=62 // pred_fallthru
          _
        %v1032 = vld [vmem:[%s236] sm:$0xff]
        %v1033 = vld [vmem:[%s236 + $0x8] sm:$0xff]
        %v1034 = vld [vmem:[%s236 + $0x10] sm:$0xff]
        %v1035 = vld [vmem:[%s236 + $0x18] sm:$0xff]
        %v1036 = vld [vmem:[%s236 + $0x20] sm:$0xff]
        %v1037 = vld [vmem:[%s236 + $0x28] sm:$0xff]
        %v1038 = vld [vmem:[%s236 + $0x30] sm:$0xff]
        %v1039 = vld [vmem:[%s236 + $0x38] sm:$0xff]
        %v1040 = vld [vmem:[%s236 + $0x40] sm:$0xff]
        %v1041 = vld [vmem:[%s236 + $0x48] sm:$0xff]
        %v1042 = vld [vmem:[%s236 + $0x50] sm:$0xff]
        %v1043 = vld [vmem:[%s236 + $0x58] sm:$0xff]
        %v1044 = vld [vmem:[%s236 + $0x60] sm:$0xff]
        %v1045 = vld [vmem:[%s236 + $0x68] sm:$0xff]
        %v1046 = vld [vmem:[%s236 + $0x70] sm:$0xff]
        %v1047 = vld [vmem:[%s236 + $0x78] sm:$0xff]
        %v1048 = vld [vmem:[%s236 + $0x80] sm:$0xff]
        %v1049 = vld [vmem:[%s236 + $0x88] sm:$0xff]
        %v1050 = vld [vmem:[%s236 + $0x90] sm:$0xff]
        %v1051 = vld [vmem:[%s236 + $0x98] sm:$0xff]
        %v1052 = vld [vmem:[%s236 + $0xa0] sm:$0xff]
        %v1053 = vld [vmem:[%s236 + $0xa8] sm:$0xff]
        %v1054 = vld [vmem:[%s236 + $0xb0] sm:$0xff]
        %v1055 = vld [vmem:[%s236 + $0xb8] sm:$0xff]
        %v1056 = vld [vmem:[%s236 + $0xc0] sm:$0xff]
        %v1057 = vld [vmem:[%s236 + $0xc8] sm:$0xff]
        %v1058 = vld [vmem:[%s236 + $0xd0] sm:$0xff]
        %v1059 = vld [vmem:[%s236 + $0xd8] sm:$0xff]
        %v1060 = vld [vmem:[%s236 + $0xe0] sm:$0xff]
        %v1061 = vld [vmem:[%s236 + $0xe8] sm:$0xff]
        %v1062 = vld [vmem:[%s236 + $0xf0] sm:$0xff]
        %v1063 = vld [vmem:[%s236 + $0xf8] sm:$0xff]
        %v1064 = vld [vmem:[%s236 + $0x100] sm:$0xff]
        %v1065 = vld [vmem:[%s236 + $0x108] sm:$0xff]
        %v1066 = vld [vmem:[%s236 + $0x110] sm:$0xff]
        %1068 = vset.pattern.permute.xlu0 0
        %1069 = vperm.xlu0 %1068, %v1032
        %v1070 = vpop.permute.xlu0 %1069
        %1073 = vset.pattern.permute.xlu0 0
        %1074 = vperm.xlu0 %1073, %v1033
        %v1075 = vpop.permute.xlu0 %1074
        %1078 = vset.pattern.permute.xlu0 0
        %1079 = vperm.xlu0 %1078, %v1034
        %v1080 = vpop.permute.xlu0 %1079
        %1083 = vset.pattern.permute.xlu0 0
        %1084 = vperm.xlu0 %1083, %v1035
        %v1085 = vpop.permute.xlu0 %1084
        %1088 = vset.pattern.permute.xlu0 0
        %1089 = vperm.xlu0 %1088, %v1036
        %v1090 = vpop.permute.xlu0 %1089
        %1093 = vset.pattern.permute.xlu0 0
        %1094 = vperm.xlu0 %1093, %v1037
        %v1095 = vpop.permute.xlu0 %1094
        %1098 = vset.pattern.permute.xlu0 0
        %1099 = vperm.xlu0 %1098, %v1038
        %v1100 = vpop.permute.xlu0 %1099
        %1103 = vset.pattern.permute.xlu0 0
        %1104 = vperm.xlu0 %1103, %v1039
        %v1105 = vpop.permute.xlu0 %1104
        %1108 = vset.pattern.permute.xlu0 0
        %1109 = vperm.xlu0 %1108, %v1040
        %v1110 = vpop.permute.xlu0 %1109
        %1113 = vset.pattern.permute.xlu0 0
        %1114 = vperm.xlu0 %1113, %v1041
        %v1115 = vpop.permute.xlu0 %1114
        %1118 = vset.pattern.permute.xlu0 0
        %1119 = vperm.xlu0 %1118, %v1042
        %v1120 = vpop.permute.xlu0 %1119
        %1123 = vset.pattern.permute.xlu0 0
        %1124 = vperm.xlu0 %1123, %v1043
        %v1125 = vpop.permute.xlu0 %1124
        %1128 = vset.pattern.permute.xlu0 0
        %1129 = vperm.xlu0 %1128, %v1044
        %v1130 = vpop.permute.xlu0 %1129
        %1133 = vset.pattern.permute.xlu0 0
        %1134 = vperm.xlu0 %1133, %v1045
        %v1135 = vpop.permute.xlu0 %1134
        %1138 = vset.pattern.permute.xlu0 0
        %1139 = vperm.xlu0 %1138, %v1046
        %v1140 = vpop.permute.xlu0 %1139
        %1143 = vset.pattern.permute.xlu0 0
        %1144 = vperm.xlu0 %1143, %v1047
        %v1145 = vpop.permute.xlu0 %1144
        %1148 = vset.pattern.permute.xlu0 0
        %1149 = vperm.xlu0 %1148, %v1048
        %v1150 = vpop.permute.xlu0 %1149
        %1153 = vset.pattern.permute.xlu0 0
        %1154 = vperm.xlu0 %1153, %v1049
        %v1155 = vpop.permute.xlu0 %1154
        %1158 = vset.pattern.permute.xlu0 0
        %1159 = vperm.xlu0 %1158, %v1050
        %v1160 = vpop.permute.xlu0 %1159
        %1163 = vset.pattern.permute.xlu0 0
        %1164 = vperm.xlu0 %1163, %v1051
        %v1165 = vpop.permute.xlu0 %1164
        %1168 = vset.pattern.permute.xlu0 0
        %1169 = vperm.xlu0 %1168, %v1052
        %v1170 = vpop.permute.xlu0 %1169
        %1173 = vset.pattern.permute.xlu0 0
        %1174 = vperm.xlu0 %1173, %v1053
        %v1175 = vpop.permute.xlu0 %1174
        %1178 = vset.pattern.permute.xlu0 0
        %1179 = vperm.xlu0 %1178, %v1054
        %v1180 = vpop.permute.xlu0 %1179
        %1183 = vset.pattern.permute.xlu0 0
        %1184 = vperm.xlu0 %1183, %v1055
        %v1185 = vpop.permute.xlu0 %1184
        %1188 = vset.pattern.permute.xlu0 0
        %1189 = vperm.xlu0 %1188, %v1056
        %v1190 = vpop.permute.xlu0 %1189
        %1193 = vset.pattern.permute.xlu0 0
        %1194 = vperm.xlu0 %1193, %v1057
        %v1195 = vpop.permute.xlu0 %1194
        %1198 = vset.pattern.permute.xlu0 0
        %1199 = vperm.xlu0 %1198, %v1058
        %v1200 = vpop.permute.xlu0 %1199
        %1203 = vset.pattern.permute.xlu0 0
        %1204 = vperm.xlu0 %1203, %v1059
        %v1205 = vpop.permute.xlu0 %1204
        %1208 = vset.pattern.permute.xlu0 0
        %1209 = vperm.xlu0 %1208, %v1060
        %v1210 = vpop.permute.xlu0 %1209
        %1213 = vset.pattern.permute.xlu0 0
        %1214 = vperm.xlu0 %1213, %v1061
        %v1215 = vpop.permute.xlu0 %1214
        %1218 = vset.pattern.permute.xlu0 0
        %1219 = vperm.xlu0 %1218, %v1062
        %v1220 = vpop.permute.xlu0 %1219
        %1223 = vset.pattern.permute.xlu0 0
        %1224 = vperm.xlu0 %1223, %v1063
        %v1225 = vpop.permute.xlu0 %1224
        %1228 = vset.pattern.permute.xlu0 0
        %1229 = vperm.xlu0 %1228, %v1064
        %v1230 = vpop.permute.xlu0 %1229
        %1233 = vset.pattern.permute.xlu0 0
        %1234 = vperm.xlu0 %1233, %v1065
        %v1235 = vpop.permute.xlu0 %1234
        %1238 = vset.pattern.permute.xlu0 0
        %1239 = vperm.xlu0 %1238, %v1066
        %v1240 = vpop.permute.xlu0 %1239
        %v1242 = vmul.f32 %v935, %v1070
        %v1243 = vmul.f32 %v937, %v1075
        %v1244 = vmul.f32 %v940, %v1080
        %v1245 = vmul.f32 %v942, %v1085
        %v1246 = vmul.f32 %v945, %v1090
        %v1247 = vmul.f32 %v947, %v1095
        %v1248 = vmul.f32 %v950, %v1100
        %v1249 = vmul.f32 %v952, %v1105
        %v1250 = vmul.f32 %v955, %v1110
        %v1251 = vmul.f32 %v957, %v1115
        %v1252 = vmul.f32 %v960, %v1120
        %v1253 = vmul.f32 %v962, %v1125
        %v1254 = vmul.f32 %v965, %v1130
        %v1255 = vmul.f32 %v967, %v1135
        %v1256 = vmul.f32 %v970, %v1140
        %v1257 = vmul.f32 %v972, %v1145
        %v1258 = vmul.f32 %v975, %v1150
        %v1259 = vmul.f32 %v977, %v1155
        %v1260 = vmul.f32 %v980, %v1160
        %v1261 = vmul.f32 %v982, %v1165
        %v1262 = vmul.f32 %v985, %v1170
        %v1263 = vmul.f32 %v987, %v1175
        %v1264 = vmul.f32 %v990, %v1180
        %v1265 = vmul.f32 %v992, %v1185
        %v1266 = vmul.f32 %v995, %v1190
        %v1267 = vmul.f32 %v997, %v1195
        %v1268 = vmul.f32 %v1000, %v1200
        %v1269 = vmul.f32 %v1002, %v1205
        %v1270 = vmul.f32 %v1005, %v1210
        %v1271 = vmul.f32 %v1007, %v1215
        %v1272 = vmul.f32 %v1010, %v1220
        %v1273 = vmul.f32 %v1012, %v1225
        %v1274 = vmul.f32 %v1015, %v1230
        %v1275 = vmul.f32 %v1017, %v1235
        %v1276 = vmul.f32 %v1020, %v1240
        %v1277 = vadd.f32 %v1242, %v1243
        %v1278 = vadd.f32 %v1277, %v1244
        %v1279 = vadd.f32 %v1278, %v1245
        %v1280 = vadd.f32 %v1279, %v1246
        %v1281 = vadd.f32 %v1280, %v1247
        %v1282 = vadd.f32 %v1281, %v1248
        %v1283 = vadd.f32 %v1282, %v1249
        %v1284 = vadd.f32 %v1283, %v1250
        %v1285 = vadd.f32 %v1284, %v1251
        %v1286 = vadd.f32 %v1285, %v1252
        %v1287 = vadd.f32 %v1286, %v1253
        %v1288 = vadd.f32 %v1287, %v1254
        %v1289 = vadd.f32 %v1288, %v1255
        %v1290 = vadd.f32 %v1289, %v1256
        %v1291 = vadd.f32 %v1290, %v1257
        %v1292 = vadd.f32 %v1291, %v1258
        %v1293 = vadd.f32 %v1292, %v1259
        %v1294 = vadd.f32 %v1293, %v1260
        %v1295 = vadd.f32 %v1294, %v1261
        %v1296 = vadd.f32 %v1295, %v1262
        %v1297 = vadd.f32 %v1296, %v1263
        %v1298 = vadd.f32 %v1297, %v1264
        %v1299 = vadd.f32 %v1298, %v1265
        %v1300 = vadd.f32 %v1299, %v1266
        %v1301 = vadd.f32 %v1300, %v1267
        %v1302 = vadd.f32 %v1301, %v1268
        %v1303 = vadd.f32 %v1302, %v1269
        %v1304 = vadd.f32 %v1303, %v1270
        %v1305 = vadd.f32 %v1304, %v1271
        %v1306 = vadd.f32 %v1305, %v1272
        %v1307 = vadd.f32 %v1306, %v1273
        %v1308 = vadd.f32 %v1307, %v1274
        %v1309 = vadd.f32 %v1308, %v1275
        %v1310 = vadd.f32 %v1309, %v1276
        %v1311 = vrot.slane %v1310, 4
        %v1312 = vadd.f32 %v1310, %v1311
        %v1313 = vrot.slane %v1312, 2
        %v1314 = vadd.f32 %v1312, %v1313
        %v1315 = vrot.slane %v1314, 1
        %v1316 = vadd.f32 %v1314, %v1315
        %v1317 = vmul.f32 %v1242, %v1242
        %v1318 = vmul.f32 %v1243, %v1243
        %v1319 = vmul.f32 %v1244, %v1244
        %v1320 = vmul.f32 %v1245, %v1245
        %v1321 = vmul.f32 %v1246, %v1246
        %v1322 = vmul.f32 %v1247, %v1247
        %v1323 = vmul.f32 %v1248, %v1248
        %v1324 = vmul.f32 %v1249, %v1249
        %v1325 = vmul.f32 %v1250, %v1250
        %v1326 = vmul.f32 %v1251, %v1251
        %v1327 = vmul.f32 %v1252, %v1252
        %v1328 = vmul.f32 %v1253, %v1253
        %v1329 = vmul.f32 %v1254, %v1254
        %v1330 = vmul.f32 %v1255, %v1255
        %v1331 = vmul.f32 %v1256, %v1256
        %v1332 = vmul.f32 %v1257, %v1257
        %v1333 = vmul.f32 %v1258, %v1258
        %v1334 = vmul.f32 %v1259, %v1259
        %v1335 = vmul.f32 %v1260, %v1260
        %v1336 = vmul.f32 %v1261, %v1261
        %v1337 = vmul.f32 %v1262, %v1262
        %v1338 = vmul.f32 %v1263, %v1263
        %v1339 = vmul.f32 %v1264, %v1264
        %v1340 = vmul.f32 %v1265, %v1265
        %v1341 = vmul.f32 %v1266, %v1266
        %v1342 = vmul.f32 %v1267, %v1267
        %v1343 = vmul.f32 %v1268, %v1268
        %v1344 = vmul.f32 %v1269, %v1269
        %v1345 = vmul.f32 %v1270, %v1270
        %v1346 = vmul.f32 %v1271, %v1271
        %v1347 = vmul.f32 %v1272, %v1272
        %v1348 = vmul.f32 %v1273, %v1273
        %v1349 = vmul.f32 %v1274, %v1274
        %v1350 = vmul.f32 %v1275, %v1275
        %v1351 = vmul.f32 %v1276, %v1276
        %v1352 = vadd.f32 %v1317, %v1318
        %v1353 = vadd.f32 %v1352, %v1319
        %v1354 = vadd.f32 %v1353, %v1320
        %v1355 = vadd.f32 %v1354, %v1321
        %v1356 = vadd.f32 %v1355, %v1322
        %v1357 = vadd.f32 %v1356, %v1323
        %v1358 = vadd.f32 %v1357, %v1324
        %v1359 = vadd.f32 %v1358, %v1325
        %v1360 = vadd.f32 %v1359, %v1326
        %v1361 = vadd.f32 %v1360, %v1327
        %v1362 = vadd.f32 %v1361, %v1328
        %v1363 = vadd.f32 %v1362, %v1329
        %v1364 = vadd.f32 %v1363, %v1330
        %v1365 = vadd.f32 %v1364, %v1331
        %v1366 = vadd.f32 %v1365, %v1332
        %v1367 = vadd.f32 %v1366, %v1333
        %v1368 = vadd.f32 %v1367, %v1334
        %v1369 = vadd.f32 %v1368, %v1335
        %v1370 = vadd.f32 %v1369, %v1336
        %v1371 = vadd.f32 %v1370, %v1337
        %v1372 = vadd.f32 %v1371, %v1338
        %v1373 = vadd.f32 %v1372, %v1339
        %v1374 = vadd.f32 %v1373, %v1340
        %v1375 = vadd.f32 %v1374, %v1341
        %v1376 = vadd.f32 %v1375, %v1342
        %v1377 = vadd.f32 %v1376, %v1343
        %v1378 = vadd.f32 %v1377, %v1344
        %v1379 = vadd.f32 %v1378, %v1345
        %v1380 = vadd.f32 %v1379, %v1346
        %v1381 = vadd.f32 %v1380, %v1347
        %v1382 = vadd.f32 %v1381, %v1348
        %v1383 = vadd.f32 %v1382, %v1349
        %v1384 = vadd.f32 %v1383, %v1350
        %v1385 = vadd.f32 %v1384, %v1351
        %v1386 = vrot.slane %v1385, 4
        %v1387 = vadd.f32 %v1385, %v1386
        %v1388 = vrot.slane %v1387, 2
        %v1389 = vadd.f32 %v1387, %v1388
        %v1390 = vrot.slane %v1389, 1
        %v1391 = vadd.f32 %v1389, %v1390
        %v1392 = vld [vmem:[#allocation4] sm:$0x1]
        %v1393 = vadd.f32 %v1392, %v1316
        %1394 = vst [vmem:[#allocation4] sm:$0x1] %v1393
        %v1395 = vld [vmem:[#allocation4 + $0x1] sm:$0x1]
        %v1396 = vadd.f32 %v1395, %v1391
        %1397 = vst [vmem:[#allocation4 + $0x1] sm:$0x1] %v1396
      $region63: #{forward.20} parent=39 // pred_fallthru
        _
      %p1398 = scmp.eq.s32.totalorder %s21, 1
      // Predicated region
      $region68: #{forward.20} parent=39 // pred_check
        %p1399 = pneg %p1398
      $region69: #{forward.20} parent=39 // pred_check_branch
        %1401 = sbr.rel (%p1399) target = $region71
      $region70: #{forward.20} parent=39 // pred_region
        %v1402 = vld [vmem:[#allocation4] sm:$0x1]
        %v1403 = vld [vmem:[#allocation4 + $0x1] sm:$0x1]
        %1405 = vrot.lane.b32.xlu0 %v1402, 96
        %v1406 = vpop.permute.xlu0 %1405
        %v1408 = vadd.f32 %v1402, %v1406
        %1409 = vrot.lane.b32.xlu0 %v1402, 64
        %v1410 = vpop.permute.xlu0 %1409
        %v1412 = vadd.f32 %v1408, %v1410
        %1413 = vrot.lane.b32.xlu0 %v1402, 32
        %v1414 = vpop.permute.xlu0 %1413
        %v1416 = vadd.f32 %v1412, %v1414
        %v1417 = vmul.f32 %v1416, 0.00048828125
        %1419 = vrot.lane.b32.xlu0 %v1403, 96
        %v1420 = vpop.permute.xlu0 %1419
        %v1422 = vadd.f32 %v1403, %v1420
        %1423 = vrot.lane.b32.xlu0 %v1403, 64
        %v1424 = vpop.permute.xlu0 %1423
        %v1426 = vadd.f32 %v1422, %v1424
        %1427 = vrot.lane.b32.xlu0 %v1403, 32
        %v1428 = vpop.permute.xlu0 %1427
        %v1430 = vadd.f32 %v1426, %v1428
        %v1431 = vmul.f32 %v1430, 0.00048828125
        %v1432 = vmul.f32 %v1417, %v1417
        %v1433 = vsub.f32 %v1431, %v1432
        %v1434 = vmax.f32 %v1433, 0.0
        %v1435 = vadd.f32 %v1434, 1e-05
        %v1436 = vrsqrt.pop %v1435
        %v1437 = vmul.f32 %v1436, %v1435
        %v1438 = vmul.f32 %v1437, %v1436
        %v1439 = vmul.f32 0.5, %v1438
        %v1440 = vsub.f32 1.5, %v1439
        %v1441 = vmul.f32 %v1436, %v1440
        %vm1442 = vweird.f32 %v1435
        %vm1443 = vweird.f32 %v1436
        %vm1444 = vmor %vm1442, %vm1443
        %v1445 = vsel %vm1444, %v1436, %v1441
        %1447 = vrot.lane.b32.xlu0 %v1417, 32
        %v1448 = vpop.permute.xlu0 %1447
        %1450 = vrot.lane.b32.xlu0 %v1417, 64
        %v1451 = vpop.permute.xlu0 %1450
        %1453 = vrot.lane.b32.xlu0 %v1417, 96
        %v1454 = vpop.permute.xlu0 %1453
        %v1456 = vsel %vm888, %v1417, %v1448
        %vm1457 = vcmask 523264
        %v1458 = vsel %vm1457, %v1456, %v1451
        %vm1459 = vcmask 785408
        %v1460 = vsel %vm1459, %v1458, %v1454
        %1462 = vrot.lane.b32.xlu0 %v1445, 32
        %v1463 = vpop.permute.xlu0 %1462
        %1465 = vrot.lane.b32.xlu0 %v1445, 64
        %v1466 = vpop.permute.xlu0 %1465
        %1468 = vrot.lane.b32.xlu0 %v1445, 96
        %v1469 = vpop.permute.xlu0 %1468
        %v1471 = vsel %vm888, %v1445, %v1463
        %v1472 = vsel %vm1457, %v1471, %v1466
        %v1473 = vsel %vm1459, %v1472, %v1469
        %v1474 = vld [vmem:[%s3] sm:$0x1]
        %v1475 = vmul.f32 %v1473, %v1474
        %v1476 = vld [vmem:[%s4] sm:$0x1]
        %v1477 = vmul.f32 %v1460, %v1475
        %v1478 = vsub.f32 %v1476, %v1477
        %v1479 = vperm.slane %v1475, 0
        %v1480 = vmul.f32 %v935, %v1479
        %v1481 = vmul.f32 %v937, %v1479
        %v1482 = vmul.f32 %v940, %v1479
        %v1483 = vmul.f32 %v942, %v1479
        %v1484 = vmul.f32 %v945, %v1479
        %v1485 = vmul.f32 %v947, %v1479
        %v1486 = vmul.f32 %v950, %v1479
        %v1487 = vmul.f32 %v952, %v1479
        %v1488 = vmul.f32 %v955, %v1479
        %v1489 = vmul.f32 %v957, %v1479
        %v1490 = vmul.f32 %v960, %v1479
        %v1491 = vmul.f32 %v962, %v1479
        %v1492 = vmul.f32 %v965, %v1479
        %v1493 = vmul.f32 %v967, %v1479
        %v1494 = vmul.f32 %v970, %v1479
        %v1495 = vmul.f32 %v972, %v1479
        %v1496 = vmul.f32 %v975, %v1479
        %v1497 = vmul.f32 %v977, %v1479
        %v1498 = vmul.f32 %v980, %v1479
        %v1499 = vmul.f32 %v982, %v1479
        %v1500 = vmul.f32 %v985, %v1479
        %v1501 = vmul.f32 %v987, %v1479
        %v1502 = vmul.f32 %v990, %v1479
        %v1503 = vmul.f32 %v992, %v1479
        %v1504 = vmul.f32 %v995, %v1479
        %v1505 = vmul.f32 %v997, %v1479
        %v1506 = vmul.f32 %v1000, %v1479
        %v1507 = vmul.f32 %v1002, %v1479
        %v1508 = vmul.f32 %v1005, %v1479
        %v1509 = vmul.f32 %v1007, %v1479
        %v1510 = vmul.f32 %v1010, %v1479
        %v1511 = vmul.f32 %v1012, %v1479
        %v1512 = vmul.f32 %v1015, %v1479
        %v1513 = vmul.f32 %v1017, %v1479
        %v1514 = vmul.f32 %v1020, %v1479
        %v1516 = vperm.slane %v1478, 0
        %v1518 = vadd.f32 %v1480, %v1516
        %v1519 = vadd.f32 %v1481, %v1516
        %v1520 = vadd.f32 %v1482, %v1516
        %v1521 = vadd.f32 %v1483, %v1516
        %v1522 = vadd.f32 %v1484, %v1516
        %v1523 = vadd.f32 %v1485, %v1516
        %v1524 = vadd.f32 %v1486, %v1516
        %v1525 = vadd.f32 %v1487, %v1516
        %v1526 = vadd.f32 %v1488, %v1516
        %v1527 = vadd.f32 %v1489, %v1516
        %v1528 = vadd.f32 %v1490, %v1516
        %v1529 = vadd.f32 %v1491, %v1516
        %v1530 = vadd.f32 %v1492, %v1516
        %v1531 = vadd.f32 %v1493, %v1516
        %v1532 = vadd.f32 %v1494, %v1516
        %v1533 = vadd.f32 %v1495, %v1516
        %v1534 = vadd.f32 %v1496, %v1516
        %v1535 = vadd.f32 %v1497, %v1516
        %v1536 = vadd.f32 %v1498, %v1516
        %v1537 = vadd.f32 %v1499, %v1516
        %v1538 = vadd.f32 %v1500, %v1516
        %v1539 = vadd.f32 %v1501, %v1516
        %v1540 = vadd.f32 %v1502, %v1516
        %v1541 = vadd.f32 %v1503, %v1516
        %v1542 = vadd.f32 %v1504, %v1516
        %v1543 = vadd.f32 %v1505, %v1516
        %v1544 = vadd.f32 %v1506, %v1516
        %v1545 = vadd.f32 %v1507, %v1516
        %v1546 = vadd.f32 %v1508, %v1516
        %v1547 = vadd.f32 %v1509, %v1516
        %v1548 = vadd.f32 %v1510, %v1516
        %v1549 = vadd.f32 %v1511, %v1516
        %v1550 = vadd.f32 %v1512, %v1516
        %v1551 = vadd.f32 %v1513, %v1516
        %v1552 = vadd.f32 %v1514, %v1516
        %v1553 = vmul.f32 %v1518, 0.01
        %v1554 = vmul.f32 %v1519, 0.01
        %v1555 = vmul.f32 %v1520, 0.01
        %v1556 = vmul.f32 %v1521, 0.01
        %v1557 = vmul.f32 %v1522, 0.01
        %v1558 = vmul.f32 %v1523, 0.01
        %v1559 = vmul.f32 %v1524, 0.01
        %v1560 = vmul.f32 %v1525, 0.01
        %v1561 = vmul.f32 %v1526, 0.01
        %v1562 = vmul.f32 %v1527, 0.01
        %v1563 = vmul.f32 %v1528, 0.01
        %v1564 = vmul.f32 %v1529, 0.01
        %v1565 = vmul.f32 %v1530, 0.01
        %v1566 = vmul.f32 %v1531, 0.01
        %v1567 = vmul.f32 %v1532, 0.01
        %v1568 = vmul.f32 %v1533, 0.01
        %v1569 = vmul.f32 %v1534, 0.01
        %v1570 = vmul.f32 %v1535, 0.01
        %v1571 = vmul.f32 %v1536, 0.01
        %v1572 = vmul.f32 %v1537, 0.01
        %v1573 = vmul.f32 %v1538, 0.01
        %v1574 = vmul.f32 %v1539, 0.01
        %v1575 = vmul.f32 %v1540, 0.01
        %v1576 = vmul.f32 %v1541, 0.01
        %v1577 = vmul.f32 %v1542, 0.01
        %v1578 = vmul.f32 %v1543, 0.01
        %v1579 = vmul.f32 %v1544, 0.01
        %v1580 = vmul.f32 %v1545, 0.01
        %v1581 = vmul.f32 %v1546, 0.01
        %v1582 = vmul.f32 %v1547, 0.01
        %v1583 = vmul.f32 %v1548, 0.01
        %v1584 = vmul.f32 %v1549, 0.01
        %v1585 = vmul.f32 %v1550, 0.01
        %v1586 = vmul.f32 %v1551, 0.01
        %v1587 = vmul.f32 %v1552, 0.01
        %v1588 = vmax.f32 %v1518, %v1553
        %v1589 = vmax.f32 %v1519, %v1554
        %v1590 = vmax.f32 %v1520, %v1555
        %v1591 = vmax.f32 %v1521, %v1556
        %v1592 = vmax.f32 %v1522, %v1557
        %v1593 = vmax.f32 %v1523, %v1558
        %v1594 = vmax.f32 %v1524, %v1559
        %v1595 = vmax.f32 %v1525, %v1560
        %v1596 = vmax.f32 %v1526, %v1561
        %v1597 = vmax.f32 %v1527, %v1562
        %v1598 = vmax.f32 %v1528, %v1563
        %v1599 = vmax.f32 %v1529, %v1564
        %v1600 = vmax.f32 %v1530, %v1565
        %v1601 = vmax.f32 %v1531, %v1566
        %v1602 = vmax.f32 %v1532, %v1567
        %v1603 = vmax.f32 %v1533, %v1568
        %v1604 = vmax.f32 %v1534, %v1569
        %v1605 = vmax.f32 %v1535, %v1570
        %v1606 = vmax.f32 %v1536, %v1571
        %v1607 = vmax.f32 %v1537, %v1572
        %v1608 = vmax.f32 %v1538, %v1573
        %v1609 = vmax.f32 %v1539, %v1574
        %v1610 = vmax.f32 %v1540, %v1575
        %v1611 = vmax.f32 %v1541, %v1576
        %v1612 = vmax.f32 %v1542, %v1577
        %v1613 = vmax.f32 %v1543, %v1578
        %v1614 = vmax.f32 %v1544, %v1579
        %v1615 = vmax.f32 %v1545, %v1580
        %v1616 = vmax.f32 %v1546, %v1581
        %v1617 = vmax.f32 %v1547, %v1582
        %v1618 = vmax.f32 %v1548, %v1583
        %v1619 = vmax.f32 %v1549, %v1584
        %v1620 = vmax.f32 %v1550, %v1585
        %v1621 = vmax.f32 %v1551, %v1586
        %v1622 = vmax.f32 %v1552, %v1587
        %v1623 = vpack.c.bf16 %v1588, %v1588
        %v1624 = vpack.c.bf16 %v1589, %v1589
        %v1625 = vpack.c.bf16 %v1590, %v1590
        %v1626 = vpack.c.bf16 %v1591, %v1591
        %v1627 = vpack.c.bf16 %v1592, %v1592
        %v1628 = vpack.c.bf16 %v1593, %v1593
        %v1629 = vpack.c.bf16 %v1594, %v1594
        %v1630 = vpack.c.bf16 %v1595, %v1595
        %v1631 = vpack.c.bf16 %v1596, %v1596
        %v1632 = vpack.c.bf16 %v1597, %v1597
        %v1633 = vpack.c.bf16 %v1598, %v1598
        %v1634 = vpack.c.bf16 %v1599, %v1599
        %v1635 = vpack.c.bf16 %v1600, %v1600
        %v1636 = vpack.c.bf16 %v1601, %v1601
        %v1637 = vpack.c.bf16 %v1602, %v1602
        %v1638 = vpack.c.bf16 %v1603, %v1603
        %v1639 = vpack.c.bf16 %v1604, %v1604
        %v1640 = vpack.c.bf16 %v1605, %v1605
        %v1641 = vpack.c.bf16 %v1606, %v1606
        %v1642 = vpack.c.bf16 %v1607, %v1607
        %v1643 = vpack.c.bf16 %v1608, %v1608
        %v1644 = vpack.c.bf16 %v1609, %v1609
        %v1645 = vpack.c.bf16 %v1610, %v1610
        %v1646 = vpack.c.bf16 %v1611, %v1611
        %v1647 = vpack.c.bf16 %v1612, %v1612
        %v1648 = vpack.c.bf16 %v1613, %v1613
        %v1649 = vpack.c.bf16 %v1614, %v1614
        %v1650 = vpack.c.bf16 %v1615, %v1615
        %v1651 = vpack.c.bf16 %v1616, %v1616
        %v1652 = vpack.c.bf16 %v1617, %v1617
        %v1653 = vpack.c.bf16 %v1618, %v1618
        %v1654 = vpack.c.bf16 %v1619, %v1619
        %v1655 = vpack.c.bf16 %v1620, %v1620
        %v1656 = vpack.c.bf16 %v1621, %v1621
        %v1657 = vpack.c.bf16 %v1622, %v1622
        %1658 = vst [vmem:[%s243] sm:$0xf] %v1623
        %1659 = vst [vmem:[%s243 + $0x4] sm:$0xf] %v1624
        %1660 = vst [vmem:[%s243 + $0x8] sm:$0xf] %v1625
        %1661 = vst [vmem:[%s243 + $0xc] sm:$0xf] %v1626
        %1662 = vst [vmem:[%s243 + $0x10] sm:$0xf] %v1627
        %1663 = vst [vmem:[%s243 + $0x14] sm:$0xf] %v1628
        %1664 = vst [vmem:[%s243 + $0x18] sm:$0xf] %v1629
        %1665 = vst [vmem:[%s243 + $0x1c] sm:$0xf] %v1630
        %1666 = vst [vmem:[%s243 + $0x20] sm:$0xf] %v1631
        %1667 = vst [vmem:[%s243 + $0x24] sm:$0xf] %v1632
        %1668 = vst [vmem:[%s243 + $0x28] sm:$0xf] %v1633
        %1669 = vst [vmem:[%s243 + $0x2c] sm:$0xf] %v1634
        %1670 = vst [vmem:[%s243 + $0x30] sm:$0xf] %v1635
        %1671 = vst [vmem:[%s243 + $0x34] sm:$0xf] %v1636
        %1672 = vst [vmem:[%s243 + $0x38] sm:$0xf] %v1637
        %1673 = vst [vmem:[%s243 + $0x3c] sm:$0xf] %v1638
        %1674 = vst [vmem:[%s243 + $0x40] sm:$0xf] %v1639
        %1675 = vst [vmem:[%s243 + $0x44] sm:$0xf] %v1640
        %1676 = vst [vmem:[%s243 + $0x48] sm:$0xf] %v1641
        %1677 = vst [vmem:[%s243 + $0x4c] sm:$0xf] %v1642
        %1678 = vst [vmem:[%s243 + $0x50] sm:$0xf] %v1643
        %1679 = vst [vmem:[%s243 + $0x54] sm:$0xf] %v1644
        %1680 = vst [vmem:[%s243 + $0x58] sm:$0xf] %v1645
        %1681 = vst [vmem:[%s243 + $0x5c] sm:$0xf] %v1646
        %1682 = vst [vmem:[%s243 + $0x60] sm:$0xf] %v1647
        %1683 = vst [vmem:[%s243 + $0x64] sm:$0xf] %v1648
        %1684 = vst [vmem:[%s243 + $0x68] sm:$0xf] %v1649
        %1685 = vst [vmem:[%s243 + $0x6c] sm:$0xf] %v1650
        %1686 = vst [vmem:[%s243 + $0x70] sm:$0xf] %v1651
        %1687 = vst [vmem:[%s243 + $0x74] sm:$0xf] %v1652
        %1688 = vst [vmem:[%s243 + $0x78] sm:$0xf] %v1653
        %1689 = vst [vmem:[%s243 + $0x7c] sm:$0xf] %v1654
        %1690 = vst [vmem:[%s243 + $0x80] sm:$0xf] %v1655
        %1691 = vst [vmem:[%s243 + $0x84] sm:$0xf] %v1656
        %1692 = vst [vmem:[%s243 + $0x88] sm:$0xf] %v1657
      $region71: #{forward.20} parent=39 // pred_fallthru
        _
      %s1693 = smul.u32 %s21, %s22
      %s1694 = smul.u32 35, %s1693
      %p1695 = scmp.lt.s32.totalorder %s1694, 69
      %s1696 = scalar_select %p1695, %s1694, 69
      %s1697 = smul.addr %s1696, 4
      %s1698 = scalar_lea.vmem %s6, %s1697
      // Predicated region
      $region72: #{forward.20} parent=39 // pred_check
        %p1699 = pneg %p159
      $region73: #{forward.20} parent=39 // pred_check_branch
        %1701 = sbr.rel (%p1699) target = $region75
      $region74: #{forward.20} parent=39 // pred_region
        %s1702 = smul.u32 %s21, %s22
        %s1703 = smul.u32 35, %s1702
      $region75: #{forward.20} parent=39 // pred_fallthru
        _
    $region40: #{forward.20} parent=5 // pred_fallthru
      _
    %p1704 = scmp.le.s32.totalorder 2, %s12
    // Predicated region
    $region76: #{forward.20} parent=5 // pred_check
      %p1705 = pneg %p1704
    $region77: #{forward.20} parent=5 // pred_check_branch
      %1707 = sbr.rel (%p1705) target = $region79
    $region78: #{forward.20} parent=5 // pred_region
      %s1708 = ssub.s32 %s12, 2
      // Predicated region
      $region80: #{forward.20} parent=78 // pred_check
        %p1709 = pneg %p165
      $region81: #{forward.20} parent=78 // pred_check_branch
        %1711 = sbr.rel (%p1709) target = $region83
      $region82: #{forward.20} parent=78 // pred_region
        %s1712 = smul.u32 %s23, %s24
        %s1713 = smul.u32 35, %s1712
        %p1714 = scmp.lt.s32.totalorder %s1713, 69
        %s1715 = scalar_select %p1714, %s1713, 69
        %s1716 = smul.addr %s1715, 4
        %s1717 = scalar_lea.vmem %s6, %s1716
      $region83: #{forward.20} parent=78 // pred_fallthru
        _
    $region79: #{forward.20} parent=5 // pred_fallthru
      _
  $region6: #{forward.20} parent=0 // loop_footer
    %s16 = sadd.s32 1, %s12
  $region7: #{forward.20} parent=0 // loop_footer_branch
    %11 = sbr.rel target = $region3
  $region8: #{forward.20} parent=0 // loop_exit
    _
  %1718 = vsyncmov [#allocation3]
  %s1719 = vpop.sfrf %1718
  %p1720 = scmp.eq.s32.totalorder %s1719, 0
  %p1721 = pneg %p1720
  %1723 = shalt.err (%p1721)

// kernel: forward.21
$region0: #{forward.21}
  #allocation0 [shape = 'u32[]', space=smem, size = 0x4, offset = 0x4, fixed_abs, tag = 'smem constant byte address 0x4 - core index']
  #allocation1 [shape = 'u32[72,128]{1,0:T(1,128)}', space=vmem, size = 0x9000, scoped, tag = 'internal scratch']
  #allocation2 [shape = 'bf16[528,8]{1,0:T(8,128)(2,1)}', space=vmem, size = 0x21000, scoped, tag = 'scratch operand']
  #allocation3 [shape = 's32[1]{0}', space=sflag, size = 0x4, scoped, tag = 'scratch operand']
  #allocation4 [shape = 's32[]', space=sflag, size = 0x4, offset = 0, fixed_abs, tag = 'sflag constant byte address 0x0 - dummy sync flag']
  %s0 = inlined_call_operand.vmem [shape: bf16[2352,8], index: 0, kind: input, shape index: {}]
  %s1 = inlined_call_operand.vmem [shape: bf16[72,128], index: 1, kind: input, shape index: {}]
  %s2 = inlined_call_operand.vmem [shape: f32[1,128], index: 2, kind: input, shape index: {}]
  %s3 = inlined_call_operand.vmem [shape: f32[2280,128], index: 3, kind: output, shape index: {}]
  %s4 = sld [smem:[#allocation0]]
  $region60: #{forward.21} parent=0
    _
  %s6 = ssub.s32 1, %s4
  %s7 = scalar_select 0, %s6, %s4
  loop: start=0, step=1, limit=7
  $region2: #{forward.21} parent=0 // loop_pre_header
    _
  $region3: #{forward.21} parent=0 // loop_header
    %s9 = sphi 0, %s13
    %p10 = scmp.ge.s32.totalorder %s9, 7
    %s17 = sphi 0, %s17
    %s19 = sphi 0, %s17
    %s20 = sphi 0, %s19
    %s34 = sphi 0, %s20
    %s38 = sphi 0, %s38
    %s40 = sphi 0, %s38
    %s41 = sphi 0, %s40
    %s55 = sphi 0, %s41
    %s61 = sphi 0, %s63
    %s64 = sphi 0, %s61
    %s65 = sphi 0, %s64
    %s81 = sphi 0, %s65
  $region4: #{forward.21} parent=0 // loop_header_branch
    %12 = sbr.rel (%p10) target = $region8
  $region5: #{forward.21} parent=0 // loop_body
    %s14 = ssub.s32 %s9, 1
    %s15 = ssub.s32 %s9, 2
    %s16 = sadd.s32 %s9, 1
    %s18 = sadd.s32 %s17, 1
    %p21 = scmp.eq.s32.totalorder %s9, 4
    %p22 = scmp.ne.s32.totalorder %s17, %s19
    %p23 = scmp.eq.s32.totalorder %s9, 0
    %p24 = por %p22, %p23
    %p25 = scmp.ne.s32.totalorder %s17, %s19
    %p26 = scmp.eq.s32.totalorder %s14, 4
    %p27 = por %p25, %p26
    %p28 = scmp.ne.s32.totalorder %s19, %s20
    %p29 = scmp.eq.s32.totalorder %s14, 0
    %p30 = por %p28, %p29
    %p31 = scmp.ne.s32.totalorder %s19, %s20
    %p32 = scmp.eq.s32.totalorder %s15, 4
    %p33 = por %p31, %p32
    %p35 = scmp.ne.s32.totalorder %s20, %s34
    %p36 = scmp.eq.s32.totalorder %s15, 0
    %p37 = por %p35, %p36
    %s39 = sadd.s32 %s38, 1
    %p42 = scmp.eq.s32.totalorder %s9, 4
    %p43 = scmp.ne.s32.totalorder %s38, %s40
    %p44 = scmp.eq.s32.totalorder %s9, 0
    %p45 = por %p43, %p44
    %p46 = scmp.ne.s32.totalorder %s38, %s40
    %p47 = scmp.eq.s32.totalorder %s14, 4
    %p48 = por %p46, %p47
    %p49 = scmp.ne.s32.totalorder %s40, %s41
    %p50 = scmp.eq.s32.totalorder %s14, 0
    %p51 = por %p49, %p50
    %p52 = scmp.ne.s32.totalorder %s40, %s41
    %p53 = scmp.eq.s32.totalorder %s15, 4
    %p54 = por %p52, %p53
    %p56 = scmp.ne.s32.totalorder %s41, %s55
    %p57 = scmp.eq.s32.totalorder %s15, 0
    %p58 = por %p56, %p57
    %s59 = ssub.s32 %s9, %s16
    %p60 = scmp.eq.s32.totalorder %s59, 0
    %s62 = sadd.s32 %s61, 1
    %s63 = scalar_select %p60, %s61, %s62
    %p66 = pneg %p60
    %p67 = scmp.eq.s32.totalorder %s9, 4
    %p68 = por %p66, %p67
    %p69 = scmp.ne.s32.totalorder %s61, %s64
    %p70 = scmp.eq.s32.totalorder %s9, 0
    %p71 = por %p69, %p70
    %p72 = scmp.ne.s32.totalorder %s61, %s64
    %p73 = scmp.eq.s32.totalorder %s14, 4
    %p74 = por %p72, %p73
    %p75 = scmp.ne.s32.totalorder %s64, %s65
    %p76 = scmp.eq.s32.totalorder %s14, 0
    %p77 = por %p75, %p76
    %p78 = scmp.ne.s32.totalorder %s64, %s65
    %p79 = scmp.eq.s32.totalorder %s15, 4
    %p80 = por %p78, %p79
    %p82 = scmp.ne.s32.totalorder %s65, %s81
    %p83 = scmp.eq.s32.totalorder %s15, 0
    %p84 = por %p82, %p83
    %p85 = scmp.le.s32.totalorder 1, %s9
    %p86 = scmp.lt.s32.totalorder %s9, 6
    %p87 = pnand %p85, %p86
    %p88 = pneg %p87
    // Predicated region
    $region9: #{forward.21} parent=5 // pred_check
      _
    $region10: #{forward.21} parent=5 // pred_check_branch
      %90 = sbr.rel (%p87) target = $region12
    $region11: #{forward.21} parent=5 // pred_region
      %s91 = ssub.s32 %s9, 1
      // Predicated region
      $region13: #{forward.21} parent=11 // pred_check
        %p92 = pneg %p30
      $region14: #{forward.21} parent=11 // pred_check_branch
        %94 = sbr.rel (%p92) target = $region16
      $region15: #{forward.21} parent=11 // pred_region
        _
      $region16: #{forward.21} parent=11 // pred_fallthru
        _
      // Predicated region
      $region17: #{forward.21} parent=11 // pred_check
        %p95 = pneg %p51
      $region18: #{forward.21} parent=11 // pred_check_branch
        %97 = sbr.rel (%p95) target = $region20
      $region19: #{forward.21} parent=11 // pred_region
        _
      $region20: #{forward.21} parent=11 // pred_fallthru
        _
    $region12: #{forward.21} parent=5 // pred_fallthru
      _
    %p98 = scmp.lt.s32.totalorder %s9, 5
    // Predicated region
    $region21: #{forward.21} parent=5 // pred_check
      %p99 = pneg %p98
    $region22: #{forward.21} parent=5 // pred_check_branch
      %101 = sbr.rel (%p99) target = $region24
    $region23: #{forward.21} parent=5 // pred_region
      _
    $region24: #{forward.21} parent=5 // pred_fallthru
      _
    %p102 = scmp.le.s32.totalorder 1, %s9
    %p103 = scmp.lt.s32.totalorder %s9, 6
    %p104 = pnand %p102, %p103
    %p105 = pneg %p104
    // Predicated region
    $region25: #{forward.21} parent=5 // pred_check
      _
    $region26: #{forward.21} parent=5 // pred_check_branch
      %107 = sbr.rel (%p104) target = $region28
    $region27: #{forward.21} parent=5 // pred_region
      %s108 = ssub.s32 %s9, 1
      %p109 = pneg %p30
      %p110 = pneg %p27
      %p111 = pneg %p51
      %p112 = pneg %p48
      %p113 = pneg %p77
      %p114 = pneg %p74
      %s115 = smul.u32 57, %s14
      %p116 = scmp.lt.s32.totalorder %s115, 284
      %s117 = scalar_select %p116, %s115, 284
      %s118 = smul.addr %s117, 8
      %s119 = scalar_lea.vmem %s3, %s118
      %s120 = smul.u32 57, %s14
      %p121 = scmp.lt.s32.totalorder %s120, 284
      %s122 = scalar_select %p121, %s120, 284
      %s123 = smul.addr %s122, 8
      %s124 = scalar_lea.vmem %s3, %s123
      %s125 = smul.u32 57, %s14
      %s127 = smul.u32 %s14, 456
      %s128 = sshra.s32 %s127, 3
      %s129 = sand.u32 %s127, 7
      %s130 = smul.addr %s128, 4
      %s131 = scalar_lea.vmem %s0, %s130
      // Predicated region
      $region29: #{forward.21} parent=27 // pred_check
        _
      $region30: #{forward.21} parent=27 // pred_check_branch
        %133 = sbr.rel (0) target = $region32
      $region31: #{forward.21} parent=27 // pred_region
        loop: start=0, step=1, limit=1
        $region33: #{forward.21} parent=31 // loop_pre_header
          _
        $region34: #{forward.21} parent=31 // loop_header
          %s135 = sphi 0, %s139
          %p136 = scmp.ge.s32.totalorder %s135, 1
          %s140 = sphi %s131, %s131
          %s141 = sphi [#allocation2], [#allocation2]
        $region35: #{forward.21} parent=31 // loop_header_branch
          %138 = sbr.rel (%p136) target = $region39
        $region36: #{forward.21} parent=31 // loop_body
          %v142 = vld [vmem:[%s140] sm:$0xff]
          %143 = vst [vmem:[%s141] sm:$0xff] %v142
          %v144 = vld [vmem:[%s140 + $0x8] sm:$0xff]
          %145 = vst [vmem:[%s141 + $0x8] sm:$0xff] %v144
          %v146 = vld [vmem:[%s140 + $0x10] sm:$0xff]
          %147 = vst [vmem:[%s141 + $0x10] sm:$0xff] %v146
          %v148 = vld [vmem:[%s140 + $0x18] sm:$0xff]
          %149 = vst [vmem:[%s141 + $0x18] sm:$0xff] %v148
          %v150 = vld [vmem:[%s140 + $0x20] sm:$0xff]
          %151 = vst [vmem:[%s141 + $0x20] sm:$0xff] %v150
          %v152 = vld [vmem:[%s140 + $0x28] sm:$0xff]
          %153 = vst [vmem:[%s141 + $0x28] sm:$0xff] %v152
          %v154 = vld [vmem:[%s140 + $0x30] sm:$0xff]
          %155 = vst [vmem:[%s141 + $0x30] sm:$0xff] %v154
          %v156 = vld [vmem:[%s140 + $0x38] sm:$0xff]
          %157 = vst [vmem:[%s141 + $0x38] sm:$0xff] %v156
          %v158 = vld [vmem:[%s140 + $0x40] sm:$0xff]
          %159 = vst [vmem:[%s141 + $0x40] sm:$0xff] %v158
          %v160 = vld [vmem:[%s140 + $0x48] sm:$0xff]
          %161 = vst [vmem:[%s141 + $0x48] sm:$0xff] %v160
          %v162 = vld [vmem:[%s140 + $0x50] sm:$0xff]
          %163 = vst [vmem:[%s141 + $0x50] sm:$0xff] %v162
          %v164 = vld [vmem:[%s140 + $0x58] sm:$0xff]
          %165 = vst [vmem:[%s141 + $0x58] sm:$0xff] %v164
          %v166 = vld [vmem:[%s140 + $0x60] sm:$0xff]
          %167 = vst [vmem:[%s141 + $0x60] sm:$0xff] %v166
          %v168 = vld [vmem:[%s140 + $0x68] sm:$0xff]
          %169 = vst [vmem:[%s141 + $0x68] sm:$0xff] %v168
          %v170 = vld [vmem:[%s140 + $0x70] sm:$0xff]
          %171 = vst [vmem:[%s141 + $0x70] sm:$0xff] %v170
          %v172 = vld [vmem:[%s140 + $0x78] sm:$0xff]
          %173 = vst [vmem:[%s141 + $0x78] sm:$0xff] %v172
          %v174 = vld [vmem:[%s140 + $0x80] sm:$0xff]
          %175 = vst [vmem:[%s141 + $0x80] sm:$0xff] %v174
          %v176 = vld [vmem:[%s140 + $0x88] sm:$0xff]
          %177 = vst [vmem:[%s141 + $0x88] sm:$0xff] %v176
          %v178 = vld [vmem:[%s140 + $0x90] sm:$0xff]
          %179 = vst [vmem:[%s141 + $0x90] sm:$0xff] %v178
          %v180 = vld [vmem:[%s140 + $0x98] sm:$0xff]
          %181 = vst [vmem:[%s141 + $0x98] sm:$0xff] %v180
          %v182 = vld [vmem:[%s140 + $0xa0] sm:$0xff]
          %183 = vst [vmem:[%s141 + $0xa0] sm:$0xff] %v182
          %v184 = vld [vmem:[%s140 + $0xa8] sm:$0xff]
          %185 = vst [vmem:[%s141 + $0xa8] sm:$0xff] %v184
          %v186 = vld [vmem:[%s140 + $0xb0] sm:$0xff]
          %187 = vst [vmem:[%s141 + $0xb0] sm:$0xff] %v186
          %v188 = vld [vmem:[%s140 + $0xb8] sm:$0xff]
          %189 = vst [vmem:[%s141 + $0xb8] sm:$0xff] %v188
          %v190 = vld [vmem:[%s140 + $0xc0] sm:$0xff]
          %191 = vst [vmem:[%s141 + $0xc0] sm:$0xff] %v190
          %v192 = vld [vmem:[%s140 + $0xc8] sm:$0xff]
          %193 = vst [vmem:[%s141 + $0xc8] sm:$0xff] %v192
          %v194 = vld [vmem:[%s140 + $0xd0] sm:$0xff]
          %195 = vst [vmem:[%s141 + $0xd0] sm:$0xff] %v194
          %v196 = vld [vmem:[%s140 + $0xd8] sm:$0xff]
          %197 = vst [vmem:[%s141 + $0xd8] sm:$0xff] %v196
          %v198 = vld [vmem:[%s140 + $0xe0] sm:$0xff]
          %199 = vst [vmem:[%s141 + $0xe0] sm:$0xff] %v198
          %v200 = vld [vmem:[%s140 + $0xe8] sm:$0xff]
          %201 = vst [vmem:[%s141 + $0xe8] sm:$0xff] %v200
          %v202 = vld [vmem:[%s140 + $0xf0] sm:$0xff]
          %203 = vst [vmem:[%s141 + $0xf0] sm:$0xff] %v202
          %v204 = vld [vmem:[%s140 + $0xf8] sm:$0xff]
          %205 = vst [vmem:[%s141 + $0xf8] sm:$0xff] %v204
          %v206 = vld [vmem:[%s140 + $0x100] sm:$0xff]
          %207 = vst [vmem:[%s141 + $0x100] sm:$0xff] %v206
        $region37: #{forward.21} parent=31 // loop_footer
          %s139 = sadd.s32 1, %s135
        $region38: #{forward.21} parent=31 // loop_footer_branch
          %134 = sbr.rel target = $region34
        $region39: #{forward.21} parent=31 // loop_exit
          _
      $region32: #{forward.21} parent=27 // pred_fallthru
        _
      // Predicated region
      $region40: #{forward.21} parent=27 // pred_check
        _
      $region41: #{forward.21} parent=27 // pred_check_branch
        %209 = sbr.rel target = $region43
      $region42: #{forward.21} parent=27 // pred_region
        _
      $region43: #{forward.21} parent=27 // pred_fallthru
        _
      // Predicated region
      $region44: #{forward.21} parent=27 // pred_check
        _
      $region45: #{forward.21} parent=27 // pred_check_branch
        %212 = sbr.rel (0) target = $region47
      $region46: #{forward.21} parent=27 // pred_region
        %213 = vsyncadd [#allocation3], 4224
      $region47: #{forward.21} parent=27 // pred_fallthru
        _
      %s214 = smul.u32 4, 66
      %s215 = smul.u32 %s214, 1
      %s216 = sshll.u32 %s215, 4
      %217 = dma.done [#allocation3], %s216
      %v218 = vld [vmem:[#allocation2] sm:$0xf]
      %v219 = vld [vmem:[#allocation2 + $0x4] sm:$0xf]
      %v220 = vld [vmem:[#allocation2 + $0x8] sm:$0xf]
      %v221 = vld [vmem:[#allocation2 + $0xc] sm:$0xf]
      %v222 = vld [vmem:[#allocation2 + $0x10] sm:$0xf]
      %v223 = vld [vmem:[#allocation2 + $0x14] sm:$0xf]
      %v224 = vld [vmem:[#allocation2 + $0x18] sm:$0xf]
      %v225 = vld [vmem:[#allocation2 + $0x1c] sm:$0xf]
      %v226 = vld [vmem:[#allocation2 + $0x20] sm:$0xf]
      %v227 = vld [vmem:[#allocation2 + $0x24] sm:$0xf]
      %v228 = vld [vmem:[#allocation2 + $0x28] sm:$0xf]
      %v229 = vld [vmem:[#allocation2 + $0x2c] sm:$0xf]
      %v230 = vld [vmem:[#allocation2 + $0x30] sm:$0xf]
      %v231 = vld [vmem:[#allocation2 + $0x34] sm:$0xf]
      %v232 = vld [vmem:[#allocation2 + $0x38] sm:$0xf]
      %v233 = vld [vmem:[#allocation2 + $0x3c] sm:$0xf]
      %v234 = vld [vmem:[#allocation2 + $0x40] sm:$0xf]
      %v235 = vld [vmem:[#allocation2 + $0x44] sm:$0xf]
      %v236 = vld [vmem:[#allocation2 + $0x48] sm:$0xf]
      %v237 = vld [vmem:[#allocation2 + $0x4c] sm:$0xf]
      %v238 = vld [vmem:[#allocation2 + $0x50] sm:$0xf]
      %v239 = vld [vmem:[#allocation2 + $0x54] sm:$0xf]
      %v240 = vld [vmem:[#allocation2 + $0x58] sm:$0xf]
      %v241 = vld [vmem:[#allocation2 + $0x5c] sm:$0xf]
      %v242 = vld [vmem:[#allocation2 + $0x60] sm:$0xf]
      %v243 = vld [vmem:[#allocation2 + $0x64] sm:$0xf]
      %v244 = vld [vmem:[#allocation2 + $0x68] sm:$0xf]
      %v245 = vld [vmem:[#allocation2 + $0x6c] sm:$0xf]
      %v246 = vld [vmem:[#allocation2 + $0x70] sm:$0xf]
      %v247 = vld [vmem:[#allocation2 + $0x74] sm:$0xf]
      %v248 = vld [vmem:[#allocation2 + $0x78] sm:$0xf]
      %v249 = vld [vmem:[#allocation2 + $0x7c] sm:$0xf]
      %v250 = vld [vmem:[#allocation2 + $0x80] sm:$0xf]
      %v251 = vld [vmem:[#allocation2 + $0x84] sm:$0xf]
      %v252 = vld [vmem:[#allocation2 + $0x88] sm:$0xf]
      %v253 = vld [vmem:[#allocation2 + $0x8c] sm:$0xf]
      %v254 = vld [vmem:[#allocation2 + $0x90] sm:$0xf]
      %v255 = vld [vmem:[#allocation2 + $0x94] sm:$0xf]
      %v256 = vld [vmem:[#allocation2 + $0x98] sm:$0xf]
      %v257 = vld [vmem:[#allocation2 + $0x9c] sm:$0xf]
      %v258 = vld [vmem:[#allocation2 + $0xa0] sm:$0xf]
      %v259 = vld [vmem:[#allocation2 + $0xa4] sm:$0xf]
      %v260 = vld [vmem:[#allocation2 + $0xa8] sm:$0xf]
      %v261 = vld [vmem:[#allocation2 + $0xac] sm:$0xf]
      %v262 = vld [vmem:[#allocation2 + $0xb0] sm:$0xf]
      %v263 = vld [vmem:[#allocation2 + $0xb4] sm:$0xf]
      %v264 = vld [vmem:[#allocation2 + $0xb8] sm:$0xf]
      %v265 = vld [vmem:[#allocation2 + $0xbc] sm:$0xf]
      %v266 = vld [vmem:[#allocation2 + $0xc0] sm:$0xf]
      %v267 = vld [vmem:[#allocation2 + $0xc4] sm:$0xf]
      %v268 = vld [vmem:[#allocation2 + $0xc8] sm:$0xf]
      %v269 = vld [vmem:[#allocation2 + $0xcc] sm:$0xf]
      %v270 = vld [vmem:[#allocation2 + $0xd0] sm:$0xf]
      %v271 = vld [vmem:[#allocation2 + $0xd4] sm:$0xf]
      %v272 = vld [vmem:[#allocation2 + $0xd8] sm:$0xf]
      %v273 = vld [vmem:[#allocation2 + $0xdc] sm:$0xf]
      %v274 = vld [vmem:[#allocation2 + $0xe0] sm:$0xf]
      %v275 = vld [vmem:[#allocation2 + $0xe4] sm:$0x1]
      %v276 = vld [vmem:[#allocation2] sm:$0xe]
      %v277 = vld [vmem:[#allocation2 + $0x10] sm:$0xe]
      %v278 = vld [vmem:[#allocation2 + $0xe4] sm:$0xf]
      %v279 = vld [vmem:[#allocation2 + $0xe8] sm:$0xf]
      %v280 = vld [vmem:[#allocation2 + $0xec] sm:$0xf]
      %v281 = vld [vmem:[#allocation2 + $0xf0] sm:$0xf]
      %v282 = vld [vmem:[#allocation2 + $0xf4] sm:$0x1]
      %v283 = vld [vmem:[#allocation2 + $0xf4] sm:$0x3]
      %v284 = vld [vmem:[#allocation2 + $0x10] sm:$0xc]
      %v285 = vld [vmem:[#allocation2 + $0x20] sm:$0xc]
      %v286 = vld [vmem:[#allocation2 + $0xf4] sm:$0xf]
      %v287 = vld [vmem:[#allocation2 + $0xf8] sm:$0xf]
      %v288 = vld [vmem:[#allocation2 + $0xfc] sm:$0xf]
      %v289 = vld [vmem:[#allocation2 + $0x100] sm:$0xf]
      %v290 = vld [vmem:[#allocation2 + $0x104] sm:$0x3]
      %v291 = vld [vmem:[#allocation2 + $0x104] sm:$0x7]
      %v292 = vld [vmem:[#allocation2 + $0x20] sm:$0x8]
      %v350 = vunpack.c.l.b16 %v218
      %v351 = vunpack.c.l.b16 %v219
      %v352 = vunpack.c.l.b16 %v220
      %v353 = vunpack.c.l.b16 %v221
      %v354 = vunpack.c.l.b16 %v222
      %v355 = vunpack.c.l.b16 %v223
      %v356 = vunpack.c.l.b16 %v224
      %v357 = vunpack.c.l.b16 %v225
      %v358 = vunpack.c.l.b16 %v226
      %v359 = vunpack.c.l.b16 %v227
      %v360 = vunpack.c.l.b16 %v228
      %v361 = vunpack.c.l.b16 %v229
      %v362 = vunpack.c.l.b16 %v230
      %v363 = vunpack.c.l.b16 %v231
      %v364 = vunpack.c.l.b16 %v232
      %v365 = vunpack.c.l.b16 %v233
      %v366 = vunpack.c.l.b16 %v234
      %v367 = vunpack.c.l.b16 %v235
      %v368 = vunpack.c.l.b16 %v236
      %v369 = vunpack.c.l.b16 %v237
      %v370 = vunpack.c.l.b16 %v238
      %v371 = vunpack.c.l.b16 %v239
      %v372 = vunpack.c.l.b16 %v240
      %v373 = vunpack.c.l.b16 %v241
      %v374 = vunpack.c.l.b16 %v242
      %v375 = vunpack.c.l.b16 %v243
      %v376 = vunpack.c.l.b16 %v244
      %v377 = vunpack.c.l.b16 %v245
      %v378 = vunpack.c.l.b16 %v246
      %v379 = vunpack.c.l.b16 %v247
      %v380 = vunpack.c.l.b16 %v248
      %v381 = vunpack.c.l.b16 %v249
      %v382 = vunpack.c.l.b16 %v250
      %v383 = vunpack.c.l.b16 %v251
      %v384 = vunpack.c.l.b16 %v252
      %v385 = vunpack.c.l.b16 %v253
      %v386 = vunpack.c.l.b16 %v254
      %v387 = vunpack.c.l.b16 %v255
      %v388 = vunpack.c.l.b16 %v256
      %v389 = vunpack.c.l.b16 %v257
      %v390 = vunpack.c.l.b16 %v258
      %v391 = vunpack.c.l.b16 %v259
      %v392 = vunpack.c.l.b16 %v260
      %v393 = vunpack.c.l.b16 %v261
      %v394 = vunpack.c.l.b16 %v262
      %v395 = vunpack.c.l.b16 %v263
      %v396 = vunpack.c.l.b16 %v264
      %v397 = vunpack.c.l.b16 %v265
      %v398 = vunpack.c.l.b16 %v266
      %v399 = vunpack.c.l.b16 %v267
      %v400 = vunpack.c.l.b16 %v268
      %v401 = vunpack.c.l.b16 %v269
      %v402 = vunpack.c.l.b16 %v270
      %v403 = vunpack.c.l.b16 %v271
      %v404 = vunpack.c.l.b16 %v272
      %v405 = vunpack.c.l.b16 %v273
      %v406 = vunpack.c.l.b16 %v274
      %v407 = vpack.c.b16 %v351, %v350
      %v408 = vpack.c.b16 %v353, %v352
      %v409 = vpack.c.b16 %v355, %v354
      %v410 = vpack.c.b16 %v357, %v356
      %v411 = vpack.c.b16 %v359, %v358
      %v412 = vpack.c.b16 %v361, %v360
      %v413 = vpack.c.b16 %v363, %v362
      %v414 = vpack.c.b16 %v365, %v364
      %v415 = vpack.c.b16 %v367, %v366
      %v416 = vpack.c.b16 %v369, %v368
      %v417 = vpack.c.b16 %v371, %v370
      %v418 = vpack.c.b16 %v373, %v372
      %v419 = vpack.c.b16 %v375, %v374
      %v420 = vpack.c.b16 %v377, %v376
      %v421 = vpack.c.b16 %v379, %v378
      %v422 = vpack.c.b16 %v381, %v380
      %v423 = vpack.c.b16 %v383, %v382
      %v424 = vpack.c.b16 %v385, %v384
      %v425 = vpack.c.b16 %v387, %v386
      %v426 = vpack.c.b16 %v389, %v388
      %v427 = vpack.c.b16 %v391, %v390
      %v428 = vpack.c.b16 %v393, %v392
      %v429 = vpack.c.b16 %v395, %v394
      %v430 = vpack.c.b16 %v397, %v396
      %v431 = vpack.c.b16 %v399, %v398
      %v432 = vpack.c.b16 %v401, %v400
      %v433 = vpack.c.b16 %v403, %v402
      %v434 = vpack.c.b16 %v405, %v404
      %v435 = vpack.c.b16 %v406, %v406
      %v437 = vunpack.c.l.b16 %v275
      %v438 = vpack.c.b16 %v437, %v406
      %vm439 = vsmask.f32 7424
      %v441 = vshrl.u32 %v407, 16
      %v443 = vshll.u32 %v407, 16
      %v445 = vrot.slane %v443, 1
      %v446 = vor.u32 %v441, %v445
      %v448 = vshll.u32 %v408, 16
      %v450 = vrot.slane %v448, 1
      %v451 = vsel %vm439, %v446, %v450
      %v452 = vshrl.u32 %v408, 16
      %v454 = vor.u32 %v452, %v450
      %v456 = vshll.u32 %v409, 16
      %v458 = vrot.slane %v456, 1
      %v459 = vsel %vm439, %v454, %v458
      %v460 = vshrl.u32 %v409, 16
      %v462 = vor.u32 %v460, %v458
      %v464 = vshll.u32 %v410, 16
      %v466 = vrot.slane %v464, 1
      %v467 = vsel %vm439, %v462, %v466
      %v468 = vshrl.u32 %v410, 16
      %v470 = vor.u32 %v468, %v466
      %v472 = vshll.u32 %v411, 16
      %v474 = vrot.slane %v472, 1
      %v475 = vsel %vm439, %v470, %v474
      %v476 = vshrl.u32 %v411, 16
      %v478 = vor.u32 %v476, %v474
      %v480 = vshll.u32 %v412, 16
      %v482 = vrot.slane %v480, 1
      %v483 = vsel %vm439, %v478, %v482
      %v484 = vshrl.u32 %v412, 16
      %v486 = vor.u32 %v484, %v482
      %v488 = vshll.u32 %v413, 16
      %v490 = vrot.slane %v488, 1
      %v491 = vsel %vm439, %v486, %v490
      %v492 = vshrl.u32 %v413, 16
      %v494 = vor.u32 %v492, %v490
      %v496 = vshll.u32 %v414, 16
      %v498 = vrot.slane %v496, 1
      %v499 = vsel %vm439, %v494, %v498
      %v500 = vshrl.u32 %v414, 16
      %v502 = vor.u32 %v500, %v498
      %v504 = vshll.u32 %v415, 16
      %v506 = vrot.slane %v504, 1
      %v507 = vsel %vm439, %v502, %v506
      %v508 = vshrl.u32 %v415, 16
      %v510 = vor.u32 %v508, %v506
      %v512 = vshll.u32 %v416, 16
      %v514 = vrot.slane %v512, 1
      %v515 = vsel %vm439, %v510, %v514
      %v516 = vshrl.u32 %v416, 16
      %v518 = vor.u32 %v516, %v514
      %v520 = vshll.u32 %v417, 16
      %v522 = vrot.slane %v520, 1
      %v523 = vsel %vm439, %v518, %v522
      %v524 = vshrl.u32 %v417, 16
      %v526 = vor.u32 %v524, %v522
      %v528 = vshll.u32 %v418, 16
      %v530 = vrot.slane %v528, 1
      %v531 = vsel %vm439, %v526, %v530
      %v532 = vshrl.u32 %v418, 16
      %v534 = vor.u32 %v532, %v530
      %v536 = vshll.u32 %v419, 16
      %v538 = vrot.slane %v536, 1
      %v539 = vsel %vm439, %v534, %v538
      %v540 = vshrl.u32 %v419, 16
      %v542 = vor.u32 %v540, %v538
      %v544 = vshll.u32 %v420, 16
      %v546 = vrot.slane %v544, 1
      %v547 = vsel %vm439, %v542, %v546
      %v548 = vshrl.u32 %v420, 16
      %v550 = vor.u32 %v548, %v546
      %v552 = vshll.u32 %v421, 16
      %v554 = vrot.slane %v552, 1
      %v555 = vsel %vm439, %v550, %v554
      %v556 = vshrl.u32 %v421, 16
      %v558 = vor.u32 %v556, %v554
      %v560 = vshll.u32 %v422, 16
      %v562 = vrot.slane %v560, 1
      %v563 = vsel %vm439, %v558, %v562
      %v564 = vshrl.u32 %v422, 16
      %v566 = vor.u32 %v564, %v562
      %v568 = vshll.u32 %v423, 16
      %v570 = vrot.slane %v568, 1
      %v571 = vsel %vm439, %v566, %v570
      %v572 = vshrl.u32 %v423, 16
      %v574 = vor.u32 %v572, %v570
      %v576 = vshll.u32 %v424, 16
      %v578 = vrot.slane %v576, 1
      %v579 = vsel %vm439, %v574, %v578
      %v580 = vshrl.u32 %v424, 16
      %v582 = vor.u32 %v580, %v578
      %v584 = vshll.u32 %v425, 16
      %v586 = vrot.slane %v584, 1
      %v587 = vsel %vm439, %v582, %v586
      %v588 = vshrl.u32 %v425, 16
      %v590 = vor.u32 %v588, %v586
      %v592 = vshll.u32 %v426, 16
      %v594 = vrot.slane %v592, 1
      %v595 = vsel %vm439, %v590, %v594
      %v596 = vshrl.u32 %v426, 16
      %v598 = vor.u32 %v596, %v594
      %v600 = vshll.u32 %v427, 16
      %v602 = vrot.slane %v600, 1
      %v603 = vsel %vm439, %v598, %v602
      %v604 = vshrl.u32 %v427, 16
      %v606 = vor.u32 %v604, %v602
      %v608 = vshll.u32 %v428, 16
      %v610 = vrot.slane %v608, 1
      %v611 = vsel %vm439, %v606, %v610
      %v612 = vshrl.u32 %v428, 16
      %v614 = vor.u32 %v612, %v610
      %v616 = vshll.u32 %v429, 16
      %v618 = vrot.slane %v616, 1
      %v619 = vsel %vm439, %v614, %v618
      %v620 = vshrl.u32 %v429, 16
      %v622 = vor.u32 %v620, %v618
      %v624 = vshll.u32 %v430, 16
      %v626 = vrot.slane %v624, 1
      %v627 = vsel %vm439, %v622, %v626
      %v628 = vshrl.u32 %v430, 16
      %v630 = vor.u32 %v628, %v626
      %v632 = vshll.u32 %v431, 16
      %v634 = vrot.slane %v632, 1
      %v635 = vsel %vm439, %v630, %v634
      %v636 = vshrl.u32 %v431, 16
      %v638 = vor.u32 %v636, %v634
      %v640 = vshll.u32 %v432, 16
      %v642 = vrot.slane %v640, 1
      %v643 = vsel %vm439, %v638, %v642
      %v644 = vshrl.u32 %v432, 16
      %v646 = vor.u32 %v644, %v642
      %v648 = vshll.u32 %v433, 16
      %v650 = vrot.slane %v648, 1
      %v651 = vsel %vm439, %v646, %v650
      %v652 = vshrl.u32 %v433, 16
      %v654 = vor.u32 %v652, %v650
      %v656 = vshll.u32 %v434, 16
      %v658 = vrot.slane %v656, 1
      %v659 = vsel %vm439, %v654, %v658
      %v660 = vshrl.u32 %v434, 16
      %v662 = vor.u32 %v660, %v658
      %v664 = vshll.u32 %v438, 16
      %v666 = vrot.slane %v664, 1
      %v667 = vsel %vm439, %v662, %v666
      %v668 = vshrl.u32 %v438, 16
      %v670 = vor.u32 %v668, %v666
      %671 = vrot.lane.b32.xlu0 %v451, 8
      %v672 = vpop.permute.xlu0 %671
      %673 = vrot.lane.b32.xlu0 %v459, 8
      %v674 = vpop.permute.xlu0 %673
      %675 = vrot.lane.b32.xlu0 %v467, 8
      %v676 = vpop.permute.xlu0 %675
      %677 = vrot.lane.b32.xlu0 %v475, 8
      %v678 = vpop.permute.xlu0 %677
      %679 = vrot.lane.b32.xlu0 %v483, 8
      %v680 = vpop.permute.xlu0 %679
      %681 = vrot.lane.b32.xlu0 %v491, 8
      %v682 = vpop.permute.xlu0 %681
      %683 = vrot.lane.b32.xlu0 %v499, 8
      %v684 = vpop.permute.xlu0 %683
      %685 = vrot.lane.b32.xlu0 %v507, 8
      %v686 = vpop.permute.xlu0 %685
      %687 = vrot.lane.b32.xlu0 %v515, 8
      %v688 = vpop.permute.xlu0 %687
      %689 = vrot.lane.b32.xlu0 %v523, 8
      %v690 = vpop.permute.xlu0 %689
      %691 = vrot.lane.b32.xlu0 %v531, 8
      %v692 = vpop.permute.xlu0 %691
      %693 = vrot.lane.b32.xlu0 %v539, 8
      %v694 = vpop.permute.xlu0 %693
      %695 = vrot.lane.b32.xlu0 %v547, 8
      %v696 = vpop.permute.xlu0 %695
      %697 = vrot.lane.b32.xlu0 %v555, 8
      %v698 = vpop.permute.xlu0 %697
      %699 = vrot.lane.b32.xlu0 %v563, 8
      %v700 = vpop.permute.xlu0 %699
      %701 = vrot.lane.b32.xlu0 %v571, 8
      %v702 = vpop.permute.xlu0 %701
      %703 = vrot.lane.b32.xlu0 %v579, 8
      %v704 = vpop.permute.xlu0 %703
      %705 = vrot.lane.b32.xlu0 %v587, 8
      %v706 = vpop.permute.xlu0 %705
      %707 = vrot.lane.b32.xlu0 %v595, 8
      %v708 = vpop.permute.xlu0 %707
      %709 = vrot.lane.b32.xlu0 %v603, 8
      %v710 = vpop.permute.xlu0 %709
      %711 = vrot.lane.b32.xlu0 %v611, 8
      %v712 = vpop.permute.xlu0 %711
      %713 = vrot.lane.b32.xlu0 %v619, 8
      %v714 = vpop.permute.xlu0 %713
      %715 = vrot.lane.b32.xlu0 %v627, 8
      %v716 = vpop.permute.xlu0 %715
      %717 = vrot.lane.b32.xlu0 %v635, 8
      %v718 = vpop.permute.xlu0 %717
      %719 = vrot.lane.b32.xlu0 %v643, 8
      %v720 = vpop.permute.xlu0 %719
      %721 = vrot.lane.b32.xlu0 %v651, 8
      %v722 = vpop.permute.xlu0 %721
      %723 = vrot.lane.b32.xlu0 %v659, 8
      %v724 = vpop.permute.xlu0 %723
      %725 = vrot.lane.b32.xlu0 %v667, 8
      %v726 = vpop.permute.xlu0 %725
      %727 = vrot.lane.b32.xlu0 %v670, 8
      %v728 = vpop.permute.xlu0 %727
      %v730 = vunpack.c.l.b16 %v276
      %v731 = vpack.c.b16 %v351, %v730
      %vm732 = vcmask 1046528
      %v733 = vrot.slane %v731, 1
      %v734 = vrot.slane %v408, 1
      %v735 = vsel %vm732, %v733, %v734
      %v736 = vrot.slane %v409, 1
      %v737 = vsel %vm732, %v734, %v736
      %v738 = vrot.slane %v410, 1
      %v739 = vsel %vm732, %v736, %v738
      %v740 = vrot.slane %v411, 1
      %v741 = vsel %vm732, %v738, %v740
      %v742 = vrot.slane %v412, 1
      %v743 = vsel %vm732, %v740, %v742
      %v744 = vrot.slane %v413, 1
      %v745 = vsel %vm732, %v742, %v744
      %v746 = vrot.slane %v414, 1
      %v747 = vsel %vm732, %v744, %v746
      %v748 = vrot.slane %v415, 1
      %v749 = vsel %vm732, %v746, %v748
      %v750 = vrot.slane %v416, 1
      %v751 = vsel %vm732, %v748, %v750
      %v752 = vrot.slane %v417, 1
      %v753 = vsel %vm732, %v750, %v752
      %v754 = vrot.slane %v418, 1
      %v755 = vsel %vm732, %v752, %v754
      %v756 = vrot.slane %v419, 1
      %v757 = vsel %vm732, %v754, %v756
      %v758 = vrot.slane %v420, 1
      %v759 = vsel %vm732, %v756, %v758
      %v760 = vrot.slane %v421, 1
      %v761 = vsel %vm732, %v758, %v760
      %v762 = vrot.slane %v422, 1
      %v763 = vsel %vm732, %v760, %v762
      %v764 = vrot.slane %v423, 1
      %v765 = vsel %vm732, %v762, %v764
      %v766 = vrot.slane %v424, 1
      %v767 = vsel %vm732, %v764, %v766
      %v768 = vrot.slane %v425, 1
      %v769 = vsel %vm732, %v766, %v768
      %v770 = vrot.slane %v426, 1
      %v771 = vsel %vm732, %v768, %v770
      %v772 = vrot.slane %v427, 1
      %v773 = vsel %vm732, %v770, %v772
      %v774 = vrot.slane %v428, 1
      %v775 = vsel %vm732, %v772, %v774
      %v776 = vrot.slane %v429, 1
      %v777 = vsel %vm732, %v774, %v776
      %v778 = vrot.slane %v430, 1
      %v779 = vsel %vm732, %v776, %v778
      %v780 = vrot.slane %v431, 1
      %v781 = vsel %vm732, %v778, %v780
      %v782 = vrot.slane %v432, 1
      %v783 = vsel %vm732, %v780, %v782
      %v784 = vrot.slane %v433, 1
      %v785 = vsel %vm732, %v782, %v784
      %v786 = vrot.slane %v434, 1
      %v787 = vsel %vm732, %v784, %v786
      %v788 = vrot.slane %v438, 1
      %v789 = vsel %vm732, %v786, %v788
      %790 = vrot.lane.b32.xlu0 %v735, 16
      %v791 = vpop.permute.xlu0 %790
      %792 = vrot.lane.b32.xlu0 %v737, 16
      %v793 = vpop.permute.xlu0 %792
      %794 = vrot.lane.b32.xlu0 %v739, 16
      %v795 = vpop.permute.xlu0 %794
      %796 = vrot.lane.b32.xlu0 %v741, 16
      %v797 = vpop.permute.xlu0 %796
      %798 = vrot.lane.b32.xlu0 %v743, 16
      %v799 = vpop.permute.xlu0 %798
      %800 = vrot.lane.b32.xlu0 %v745, 16
      %v801 = vpop.permute.xlu0 %800
      %802 = vrot.lane.b32.xlu0 %v747, 16
      %v803 = vpop.permute.xlu0 %802
      %804 = vrot.lane.b32.xlu0 %v749, 16
      %v805 = vpop.permute.xlu0 %804
      %806 = vrot.lane.b32.xlu0 %v751, 16
      %v807 = vpop.permute.xlu0 %806
      %808 = vrot.lane.b32.xlu0 %v753, 16
      %v809 = vpop.permute.xlu0 %808
      %810 = vrot.lane.b32.xlu0 %v755, 16
      %v811 = vpop.permute.xlu0 %810
      %812 = vrot.lane.b32.xlu0 %v757, 16
      %v813 = vpop.permute.xlu0 %812
      %814 = vrot.lane.b32.xlu0 %v759, 16
      %v815 = vpop.permute.xlu0 %814
      %816 = vrot.lane.b32.xlu0 %v761, 16
      %v817 = vpop.permute.xlu0 %816
      %818 = vrot.lane.b32.xlu0 %v763, 16
      %v819 = vpop.permute.xlu0 %818
      %820 = vrot.lane.b32.xlu0 %v765, 16
      %v821 = vpop.permute.xlu0 %820
      %822 = vrot.lane.b32.xlu0 %v767, 16
      %v823 = vpop.permute.xlu0 %822
      %824 = vrot.lane.b32.xlu0 %v769, 16
      %v825 = vpop.permute.xlu0 %824
      %826 = vrot.lane.b32.xlu0 %v771, 16
      %v827 = vpop.permute.xlu0 %826
      %828 = vrot.lane.b32.xlu0 %v773, 16
      %v829 = vpop.permute.xlu0 %828
      %830 = vrot.lane.b32.xlu0 %v775, 16
      %v831 = vpop.permute.xlu0 %830
      %832 = vrot.lane.b32.xlu0 %v777, 16
      %v833 = vpop.permute.xlu0 %832
      %834 = vrot.lane.b32.xlu0 %v779, 16
      %v835 = vpop.permute.xlu0 %834
      %836 = vrot.lane.b32.xlu0 %v781, 16
      %v837 = vpop.permute.xlu0 %836
      %838 = vrot.lane.b32.xlu0 %v783, 16
      %v839 = vpop.permute.xlu0 %838
      %840 = vrot.lane.b32.xlu0 %v785, 16
      %v841 = vpop.permute.xlu0 %840
      %842 = vrot.lane.b32.xlu0 %v787, 16
      %v843 = vpop.permute.xlu0 %842
      %844 = vrot.lane.b32.xlu0 %v789, 16
      %v845 = vpop.permute.xlu0 %844
      %846 = vrot.lane.b32.xlu0 %v788, 16
      %v847 = vpop.permute.xlu0 %846
      %v854 = vunpack.c.l.b16 %v277
      %v855 = vunpack.c.l.b16 %v278
      %v856 = vunpack.c.l.b16 %v279
      %v857 = vunpack.c.l.b16 %v280
      %v858 = vunpack.c.l.b16 %v281
      %v859 = vunpack.c.l.b16 %v282
      %v860 = vpack.c.b16 %v355, %v854
      %v861 = vpack.c.b16 %v855, %v406
      %v862 = vpack.c.b16 %v857, %v856
      %v863 = vpack.c.b16 %v859, %v858
      %v864 = vrot.slane %v860, 1
      %v865 = vsel %vm732, %v864, %v738
      %v866 = vrot.slane %v861, 1
      %v867 = vsel %vm732, %v786, %v866
      %v868 = vrot.slane %v862, 1
      %v869 = vsel %vm732, %v866, %v868
      %v870 = vrot.slane %v863, 1
      %v871 = vsel %vm732, %v868, %v870
      %872 = vrot.lane.b32.xlu0 %v865, 24
      %v873 = vpop.permute.xlu0 %872
      %874 = vrot.lane.b32.xlu0 %v741, 24
      %v875 = vpop.permute.xlu0 %874
      %876 = vrot.lane.b32.xlu0 %v743, 24
      %v877 = vpop.permute.xlu0 %876
      %878 = vrot.lane.b32.xlu0 %v745, 24
      %v879 = vpop.permute.xlu0 %878
      %880 = vrot.lane.b32.xlu0 %v747, 24
      %v881 = vpop.permute.xlu0 %880
      %882 = vrot.lane.b32.xlu0 %v749, 24
      %v883 = vpop.permute.xlu0 %882
      %884 = vrot.lane.b32.xlu0 %v751, 24
      %v885 = vpop.permute.xlu0 %884
      %886 = vrot.lane.b32.xlu0 %v753, 24
      %v887 = vpop.permute.xlu0 %886
      %888 = vrot.lane.b32.xlu0 %v755, 24
      %v889 = vpop.permute.xlu0 %888
      %890 = vrot.lane.b32.xlu0 %v757, 24
      %v891 = vpop.permute.xlu0 %890
      %892 = vrot.lane.b32.xlu0 %v759, 24
      %v893 = vpop.permute.xlu0 %892
      %894 = vrot.lane.b32.xlu0 %v761, 24
      %v895 = vpop.permute.xlu0 %894
      %896 = vrot.lane.b32.xlu0 %v763, 24
      %v897 = vpop.permute.xlu0 %896
      %898 = vrot.lane.b32.xlu0 %v765, 24
      %v899 = vpop.permute.xlu0 %898
      %900 = vrot.lane.b32.xlu0 %v767, 24
      %v901 = vpop.permute.xlu0 %900
      %902 = vrot.lane.b32.xlu0 %v769, 24
      %v903 = vpop.permute.xlu0 %902
      %904 = vrot.lane.b32.xlu0 %v771, 24
      %v905 = vpop.permute.xlu0 %904
      %906 = vrot.lane.b32.xlu0 %v773, 24
      %v907 = vpop.permute.xlu0 %906
      %908 = vrot.lane.b32.xlu0 %v775, 24
      %v909 = vpop.permute.xlu0 %908
      %910 = vrot.lane.b32.xlu0 %v777, 24
      %v911 = vpop.permute.xlu0 %910
      %912 = vrot.lane.b32.xlu0 %v779, 24
      %v913 = vpop.permute.xlu0 %912
      %914 = vrot.lane.b32.xlu0 %v781, 24
      %v915 = vpop.permute.xlu0 %914
      %916 = vrot.lane.b32.xlu0 %v783, 24
      %v917 = vpop.permute.xlu0 %916
      %918 = vrot.lane.b32.xlu0 %v785, 24
      %v919 = vpop.permute.xlu0 %918
      %920 = vrot.lane.b32.xlu0 %v787, 24
      %v921 = vpop.permute.xlu0 %920
      %922 = vrot.lane.b32.xlu0 %v867, 24
      %v923 = vpop.permute.xlu0 %922
      %924 = vrot.lane.b32.xlu0 %v869, 24
      %v925 = vpop.permute.xlu0 %924
      %926 = vrot.lane.b32.xlu0 %v871, 24
      %v927 = vpop.permute.xlu0 %926
      %928 = vrot.lane.b32.xlu0 %v870, 24
      %v929 = vpop.permute.xlu0 %928
      %v931 = vunpack.c.l.b16 %v283
      %v932 = vpack.c.b16 %v931, %v858
      %vm933 = vsmask.f32 6400
      %v935 = vshrl.u32 %v860, 16
      %v937 = vrot.slane %v935, 1
      %v938 = vshll.u32 %v860, 16
      %v940 = vrot.slane %v938, 2
      %v941 = vor.u32 %v937, %v940
      %v942 = vrot.slane %v468, 1
      %v943 = vrot.slane %v464, 2
      %v944 = vor.u32 %v942, %v943
      %v945 = vsel %vm933, %v941, %v944
      %v946 = vrot.slane %v476, 1
      %v947 = vrot.slane %v472, 2
      %v948 = vor.u32 %v946, %v947
      %v949 = vsel %vm933, %v944, %v948
      %v950 = vrot.slane %v484, 1
      %v951 = vrot.slane %v480, 2
      %v952 = vor.u32 %v950, %v951
      %v953 = vsel %vm933, %v948, %v952
      %v954 = vrot.slane %v492, 1
      %v955 = vrot.slane %v488, 2
      %v956 = vor.u32 %v954, %v955
      %v957 = vsel %vm933, %v952, %v956
      %v958 = vrot.slane %v500, 1
      %v959 = vrot.slane %v496, 2
      %v960 = vor.u32 %v958, %v959
      %v961 = vsel %vm933, %v956, %v960
      %v962 = vrot.slane %v508, 1
      %v963 = vrot.slane %v504, 2
      %v964 = vor.u32 %v962, %v963
      %v965 = vsel %vm933, %v960, %v964
      %v966 = vrot.slane %v516, 1
      %v967 = vrot.slane %v512, 2
      %v968 = vor.u32 %v966, %v967
      %v969 = vsel %vm933, %v964, %v968
      %v970 = vrot.slane %v524, 1
      %v971 = vrot.slane %v520, 2
      %v972 = vor.u32 %v970, %v971
      %v973 = vsel %vm933, %v968, %v972
      %v974 = vrot.slane %v532, 1
      %v975 = vrot.slane %v528, 2
      %v976 = vor.u32 %v974, %v975
      %v977 = vsel %vm933, %v972, %v976
      %v978 = vrot.slane %v540, 1
      %v979 = vrot.slane %v536, 2
      %v980 = vor.u32 %v978, %v979
      %v981 = vsel %vm933, %v976, %v980
      %v982 = vrot.slane %v548, 1
      %v983 = vrot.slane %v544, 2
      %v984 = vor.u32 %v982, %v983
      %v985 = vsel %vm933, %v980, %v984
      %v986 = vrot.slane %v556, 1
      %v987 = vrot.slane %v552, 2
      %v988 = vor.u32 %v986, %v987
      %v989 = vsel %vm933, %v984, %v988
      %v990 = vrot.slane %v564, 1
      %v991 = vrot.slane %v560, 2
      %v992 = vor.u32 %v990, %v991
      %v993 = vsel %vm933, %v988, %v992
      %v994 = vrot.slane %v572, 1
      %v995 = vrot.slane %v568, 2
      %v996 = vor.u32 %v994, %v995
      %v997 = vsel %vm933, %v992, %v996
      %v998 = vrot.slane %v580, 1
      %v999 = vrot.slane %v576, 2
      %v1000 = vor.u32 %v998, %v999
      %v1001 = vsel %vm933, %v996, %v1000
      %v1002 = vrot.slane %v588, 1
      %v1003 = vrot.slane %v584, 2
      %v1004 = vor.u32 %v1002, %v1003
      %v1005 = vsel %vm933, %v1000, %v1004
      %v1006 = vrot.slane %v596, 1
      %v1007 = vrot.slane %v592, 2
      %v1008 = vor.u32 %v1006, %v1007
      %v1009 = vsel %vm933, %v1004, %v1008
      %v1010 = vrot.slane %v604, 1
      %v1011 = vrot.slane %v600, 2
      %v1012 = vor.u32 %v1010, %v1011
      %v1013 = vsel %vm933, %v1008, %v1012
      %v1014 = vrot.slane %v612, 1
      %v1015 = vrot.slane %v608, 2
      %v1016 = vor.u32 %v1014, %v1015
      %v1017 = vsel %vm933, %v1012, %v1016
      %v1018 = vrot.slane %v620, 1
      %v1019 = vrot.slane %v616, 2
      %v1020 = vor.u32 %v1018, %v1019
      %v1021 = vsel %vm933, %v1016, %v1020
      %v1022 = vrot.slane %v628, 1
      %v1023 = vrot.slane %v624, 2
      %v1024 = vor.u32 %v1022, %v1023
      %v1025 = vsel %vm933, %v1020, %v1024
      %v1026 = vrot.slane %v636, 1
      %v1027 = vrot.slane %v632, 2
      %v1028 = vor.u32 %v1026, %v1027
      %v1029 = vsel %vm933, %v1024, %v1028
      %v1030 = vrot.slane %v644, 1
      %v1031 = vrot.slane %v640, 2
      %v1032 = vor.u32 %v1030, %v1031
      %v1033 = vsel %vm933, %v1028, %v1032
      %v1034 = vrot.slane %v652, 1
      %v1035 = vrot.slane %v648, 2
      %v1036 = vor.u32 %v1034, %v1035
      %v1037 = vsel %vm933, %v1032, %v1036
      %v1038 = vrot.slane %v660, 1
      %v1039 = vrot.slane %v656, 2
      %v1040 = vor.u32 %v1038, %v1039
      %v1041 = vsel %vm933, %v1036, %v1040
      %v1043 = vshrl.u32 %v861, 16
      %v1045 = vrot.slane %v1043, 1
      %v1046 = vshll.u32 %v861, 16
      %v1048 = vrot.slane %v1046, 2
      %v1049 = vor.u32 %v1045, %v1048
      %v1050 = vsel %vm933, %v1040, %v1049
      %v1052 = vshrl.u32 %v862, 16
      %v1054 = vrot.slane %v1052, 1
      %v1055 = vshll.u32 %v862, 16
      %v1057 = vrot.slane %v1055, 2
      %v1058 = vor.u32 %v1054, %v1057
      %v1059 = vsel %vm933, %v1049, %v1058
      %v1061 = vshrl.u32 %v932, 16
      %v1063 = vrot.slane %v1061, 1
      %v1064 = vshll.u32 %v932, 16
      %v1066 = vrot.slane %v1064, 2
      %v1067 = vor.u32 %v1063, %v1066
      %v1068 = vsel %vm933, %v1058, %v1067
      %1069 = vrot.lane.b32.xlu0 %v945, 32
      %v1070 = vpop.permute.xlu0 %1069
      %1071 = vrot.lane.b32.xlu0 %v949, 32
      %v1072 = vpop.permute.xlu0 %1071
      %1073 = vrot.lane.b32.xlu0 %v953, 32
      %v1074 = vpop.permute.xlu0 %1073
      %1075 = vrot.lane.b32.xlu0 %v957, 32
      %v1076 = vpop.permute.xlu0 %1075
      %1077 = vrot.lane.b32.xlu0 %v961, 32
      %v1078 = vpop.permute.xlu0 %1077
      %1079 = vrot.lane.b32.xlu0 %v965, 32
      %v1080 = vpop.permute.xlu0 %1079
      %1081 = vrot.lane.b32.xlu0 %v969, 32
      %v1082 = vpop.permute.xlu0 %1081
      %1083 = vrot.lane.b32.xlu0 %v973, 32
      %v1084 = vpop.permute.xlu0 %1083
      %1085 = vrot.lane.b32.xlu0 %v977, 32
      %v1086 = vpop.permute.xlu0 %1085
      %1087 = vrot.lane.b32.xlu0 %v981, 32
      %v1088 = vpop.permute.xlu0 %1087
      %1089 = vrot.lane.b32.xlu0 %v985, 32
      %v1090 = vpop.permute.xlu0 %1089
      %1091 = vrot.lane.b32.xlu0 %v989, 32
      %v1092 = vpop.permute.xlu0 %1091
      %1093 = vrot.lane.b32.xlu0 %v993, 32
      %v1094 = vpop.permute.xlu0 %1093
      %1095 = vrot.lane.b32.xlu0 %v997, 32
      %v1096 = vpop.permute.xlu0 %1095
      %1097 = vrot.lane.b32.xlu0 %v1001, 32
      %v1098 = vpop.permute.xlu0 %1097
      %1099 = vrot.lane.b32.xlu0 %v1005, 32
      %v1100 = vpop.permute.xlu0 %1099
      %1101 = vrot.lane.b32.xlu0 %v1009, 32
      %v1102 = vpop.permute.xlu0 %1101
      %1103 = vrot.lane.b32.xlu0 %v1013, 32
      %v1104 = vpop.permute.xlu0 %1103
      %1105 = vrot.lane.b32.xlu0 %v1017, 32
      %v1106 = vpop.permute.xlu0 %1105
      %1107 = vrot.lane.b32.xlu0 %v1021, 32
      %v1108 = vpop.permute.xlu0 %1107
      %1109 = vrot.lane.b32.xlu0 %v1025, 32
      %v1110 = vpop.permute.xlu0 %1109
      %1111 = vrot.lane.b32.xlu0 %v1029, 32
      %v1112 = vpop.permute.xlu0 %1111
      %1113 = vrot.lane.b32.xlu0 %v1033, 32
      %v1114 = vpop.permute.xlu0 %1113
      %1115 = vrot.lane.b32.xlu0 %v1037, 32
      %v1116 = vpop.permute.xlu0 %1115
      %1117 = vrot.lane.b32.xlu0 %v1041, 32
      %v1118 = vpop.permute.xlu0 %1117
      %1119 = vrot.lane.b32.xlu0 %v1050, 32
      %v1120 = vpop.permute.xlu0 %1119
      %1121 = vrot.lane.b32.xlu0 %v1059, 32
      %v1122 = vpop.permute.xlu0 %1121
      %1123 = vrot.lane.b32.xlu0 %v1068, 32
      %v1124 = vpop.permute.xlu0 %1123
      %1125 = vrot.lane.b32.xlu0 %v1067, 32
      %v1126 = vpop.permute.xlu0 %1125
      %v1128 = vunpack.c.l.b16 %v284
      %v1129 = vpack.c.b16 %v355, %v1128
      %vm1130 = vcmask 1045504
      %v1131 = vrot.slane %v1129, 2
      %v1132 = vrot.slane %v410, 2
      %v1133 = vsel %vm1130, %v1131, %v1132
      %v1134 = vrot.slane %v411, 2
      %v1135 = vsel %vm1130, %v1132, %v1134
      %v1136 = vrot.slane %v412, 2
      %v1137 = vsel %vm1130, %v1134, %v1136
      %v1138 = vrot.slane %v413, 2
      %v1139 = vsel %vm1130, %v1136, %v1138
      %v1140 = vrot.slane %v414, 2
      %v1141 = vsel %vm1130, %v1138, %v1140
      %v1142 = vrot.slane %v415, 2
      %v1143 = vsel %vm1130, %v1140, %v1142
      %v1144 = vrot.slane %v416, 2
      %v1145 = vsel %vm1130, %v1142, %v1144
      %v1146 = vrot.slane %v417, 2
      %v1147 = vsel %vm1130, %v1144, %v1146
      %v1148 = vrot.slane %v418, 2
      %v1149 = vsel %vm1130, %v1146, %v1148
      %v1150 = vrot.slane %v419, 2
      %v1151 = vsel %vm1130, %v1148, %v1150
      %v1152 = vrot.slane %v420, 2
      %v1153 = vsel %vm1130, %v1150, %v1152
      %v1154 = vrot.slane %v421, 2
      %v1155 = vsel %vm1130, %v1152, %v1154
      %v1156 = vrot.slane %v422, 2
      %v1157 = vsel %vm1130, %v1154, %v1156
      %v1158 = vrot.slane %v423, 2
      %v1159 = vsel %vm1130, %v1156, %v1158
      %v1160 = vrot.slane %v424, 2
      %v1161 = vsel %vm1130, %v1158, %v1160
      %v1162 = vrot.slane %v425, 2
      %v1163 = vsel %vm1130, %v1160, %v1162
      %v1164 = vrot.slane %v426, 2
      %v1165 = vsel %vm1130, %v1162, %v1164
      %v1166 = vrot.slane %v427, 2
      %v1167 = vsel %vm1130, %v1164, %v1166
      %v1168 = vrot.slane %v428, 2
      %v1169 = vsel %vm1130, %v1166, %v1168
      %v1170 = vrot.slane %v429, 2
      %v1171 = vsel %vm1130, %v1168, %v1170
      %v1172 = vrot.slane %v430, 2
      %v1173 = vsel %vm1130, %v1170, %v1172
      %v1174 = vrot.slane %v431, 2
      %v1175 = vsel %vm1130, %v1172, %v1174
      %v1176 = vrot.slane %v432, 2
      %v1177 = vsel %vm1130, %v1174, %v1176
      %v1178 = vrot.slane %v433, 2
      %v1179 = vsel %vm1130, %v1176, %v1178
      %v1180 = vrot.slane %v434, 2
      %v1181 = vsel %vm1130, %v1178, %v1180
      %v1182 = vrot.slane %v861, 2
      %v1183 = vsel %vm1130, %v1180, %v1182
      %v1184 = vrot.slane %v862, 2
      %v1185 = vsel %vm1130, %v1182, %v1184
      %v1186 = vrot.slane %v932, 2
      %v1187 = vsel %vm1130, %v1184, %v1186
      %1188 = vrot.lane.b32.xlu0 %v1133, 40
      %v1189 = vpop.permute.xlu0 %1188
      %1190 = vrot.lane.b32.xlu0 %v1135, 40
      %v1191 = vpop.permute.xlu0 %1190
      %1192 = vrot.lane.b32.xlu0 %v1137, 40
      %v1193 = vpop.permute.xlu0 %1192
      %1194 = vrot.lane.b32.xlu0 %v1139, 40
      %v1195 = vpop.permute.xlu0 %1194
      %1196 = vrot.lane.b32.xlu0 %v1141, 40
      %v1197 = vpop.permute.xlu0 %1196
      %1198 = vrot.lane.b32.xlu0 %v1143, 40
      %v1199 = vpop.permute.xlu0 %1198
      %1200 = vrot.lane.b32.xlu0 %v1145, 40
      %v1201 = vpop.permute.xlu0 %1200
      %1202 = vrot.lane.b32.xlu0 %v1147, 40
      %v1203 = vpop.permute.xlu0 %1202
      %1204 = vrot.lane.b32.xlu0 %v1149, 40
      %v1205 = vpop.permute.xlu0 %1204
      %1206 = vrot.lane.b32.xlu0 %v1151, 40
      %v1207 = vpop.permute.xlu0 %1206
      %1208 = vrot.lane.b32.xlu0 %v1153, 40
      %v1209 = vpop.permute.xlu0 %1208
      %1210 = vrot.lane.b32.xlu0 %v1155, 40
      %v1211 = vpop.permute.xlu0 %1210
      %1212 = vrot.lane.b32.xlu0 %v1157, 40
      %v1213 = vpop.permute.xlu0 %1212
      %1214 = vrot.lane.b32.xlu0 %v1159, 40
      %v1215 = vpop.permute.xlu0 %1214
      %1216 = vrot.lane.b32.xlu0 %v1161, 40
      %v1217 = vpop.permute.xlu0 %1216
      %1218 = vrot.lane.b32.xlu0 %v1163, 40
      %v1219 = vpop.permute.xlu0 %1218
      %1220 = vrot.lane.b32.xlu0 %v1165, 40
      %v1221 = vpop.permute.xlu0 %1220
      %1222 = vrot.lane.b32.xlu0 %v1167, 40
      %v1223 = vpop.permute.xlu0 %1222
      %1224 = vrot.lane.b32.xlu0 %v1169, 40
      %v1225 = vpop.permute.xlu0 %1224
      %1226 = vrot.lane.b32.xlu0 %v1171, 40
      %v1227 = vpop.permute.xlu0 %1226
      %1228 = vrot.lane.b32.xlu0 %v1173, 40
      %v1229 = vpop.permute.xlu0 %1228
      %1230 = vrot.lane.b32.xlu0 %v1175, 40
      %v1231 = vpop.permute.xlu0 %1230
      %1232 = vrot.lane.b32.xlu0 %v1177, 40
      %v1233 = vpop.permute.xlu0 %1232
      %1234 = vrot.lane.b32.xlu0 %v1179, 40
      %v1235 = vpop.permute.xlu0 %1234
      %1236 = vrot.lane.b32.xlu0 %v1181, 40
      %v1237 = vpop.permute.xlu0 %1236
      %1238 = vrot.lane.b32.xlu0 %v1183, 40
      %v1239 = vpop.permute.xlu0 %1238
      %1240 = vrot.lane.b32.xlu0 %v1185, 40
      %v1241 = vpop.permute.xlu0 %1240
      %1242 = vrot.lane.b32.xlu0 %v1187, 40
      %v1243 = vpop.permute.xlu0 %1242
      %1244 = vrot.lane.b32.xlu0 %v1186, 40
      %v1245 = vpop.permute.xlu0 %1244
      %v1252 = vunpack.c.l.b16 %v285
      %v1253 = vunpack.c.l.b16 %v286
      %v1254 = vunpack.c.l.b16 %v287
      %v1255 = vunpack.c.l.b16 %v288
      %v1256 = vunpack.c.l.b16 %v289
      %v1257 = vunpack.c.l.b16 %v290
      %v1258 = vpack.c.b16 %v359, %v1252
      %v1259 = vpack.c.b16 %v1253, %v858
      %v1260 = vpack.c.b16 %v1255, %v1254
      %v1261 = vpack.c.b16 %v1257, %v1256
      %v1262 = vrot.slane %v1258, 2
      %v1263 = vsel %vm1130, %v1262, %v1136
      %v1264 = vrot.slane %v1259, 2
      %v1265 = vsel %vm1130, %v1184, %v1264
      %v1266 = vrot.slane %v1260, 2
      %v1267 = vsel %vm1130, %v1264, %v1266
      %v1268 = vrot.slane %v1261, 2
      %v1269 = vsel %vm1130, %v1266, %v1268
      %1270 = vrot.lane.b32.xlu0 %v1263, 48
      %v1271 = vpop.permute.xlu0 %1270
      %1272 = vrot.lane.b32.xlu0 %v1139, 48
      %v1273 = vpop.permute.xlu0 %1272
      %1274 = vrot.lane.b32.xlu0 %v1141, 48
      %v1275 = vpop.permute.xlu0 %1274
      %1276 = vrot.lane.b32.xlu0 %v1143, 48
      %v1277 = vpop.permute.xlu0 %1276
      %1278 = vrot.lane.b32.xlu0 %v1145, 48
      %v1279 = vpop.permute.xlu0 %1278
      %1280 = vrot.lane.b32.xlu0 %v1147, 48
      %v1281 = vpop.permute.xlu0 %1280
      %1282 = vrot.lane.b32.xlu0 %v1149, 48
      %v1283 = vpop.permute.xlu0 %1282
      %1284 = vrot.lane.b32.xlu0 %v1151, 48
      %v1285 = vpop.permute.xlu0 %1284
      %1286 = vrot.lane.b32.xlu0 %v1153, 48
      %v1287 = vpop.permute.xlu0 %1286
      %1288 = vrot.lane.b32.xlu0 %v1155, 48
      %v1289 = vpop.permute.xlu0 %1288
      %1290 = vrot.lane.b32.xlu0 %v1157, 48
      %v1291 = vpop.permute.xlu0 %1290
      %1292 = vrot.lane.b32.xlu0 %v1159, 48
      %v1293 = vpop.permute.xlu0 %1292
      %1294 = vrot.lane.b32.xlu0 %v1161, 48
      %v1295 = vpop.permute.xlu0 %1294
      %1296 = vrot.lane.b32.xlu0 %v1163, 48
      %v1297 = vpop.permute.xlu0 %1296
      %1298 = vrot.lane.b32.xlu0 %v1165, 48
      %v1299 = vpop.permute.xlu0 %1298
      %1300 = vrot.lane.b32.xlu0 %v1167, 48
      %v1301 = vpop.permute.xlu0 %1300
      %1302 = vrot.lane.b32.xlu0 %v1169, 48
      %v1303 = vpop.permute.xlu0 %1302
      %1304 = vrot.lane.b32.xlu0 %v1171, 48
      %v1305 = vpop.permute.xlu0 %1304
      %1306 = vrot.lane.b32.xlu0 %v1173, 48
      %v1307 = vpop.permute.xlu0 %1306
      %1308 = vrot.lane.b32.xlu0 %v1175, 48
      %v1309 = vpop.permute.xlu0 %1308
      %1310 = vrot.lane.b32.xlu0 %v1177, 48
      %v1311 = vpop.permute.xlu0 %1310
      %1312 = vrot.lane.b32.xlu0 %v1179, 48
      %v1313 = vpop.permute.xlu0 %1312
      %1314 = vrot.lane.b32.xlu0 %v1181, 48
      %v1315 = vpop.permute.xlu0 %1314
      %1316 = vrot.lane.b32.xlu0 %v1183, 48
      %v1317 = vpop.permute.xlu0 %1316
      %1318 = vrot.lane.b32.xlu0 %v1185, 48
      %v1319 = vpop.permute.xlu0 %1318
      %1320 = vrot.lane.b32.xlu0 %v1265, 48
      %v1321 = vpop.permute.xlu0 %1320
      %1322 = vrot.lane.b32.xlu0 %v1267, 48
      %v1323 = vpop.permute.xlu0 %1322
      %1324 = vrot.lane.b32.xlu0 %v1269, 48
      %v1325 = vpop.permute.xlu0 %1324
      %1326 = vrot.lane.b32.xlu0 %v1268, 48
      %v1327 = vpop.permute.xlu0 %1326
      %v1329 = vunpack.c.l.b16 %v291
      %v1330 = vpack.c.b16 %v1329, %v1256
      %vm1331 = vsmask.f32 5376
      %v1333 = vshrl.u32 %v1258, 16
      %v1335 = vrot.slane %v1333, 2
      %v1336 = vshll.u32 %v1258, 16
      %v1338 = vrot.slane %v1336, 3
      %v1339 = vor.u32 %v1335, %v1338
      %v1340 = vrot.slane %v484, 2
      %v1341 = vrot.slane %v480, 3
      %v1342 = vor.u32 %v1340, %v1341
      %v1343 = vsel %vm1331, %v1339, %v1342
      %v1344 = vrot.slane %v492, 2
      %v1345 = vrot.slane %v488, 3
      %v1346 = vor.u32 %v1344, %v1345
      %v1347 = vsel %vm1331, %v1342, %v1346
      %v1348 = vrot.slane %v500, 2
      %v1349 = vrot.slane %v496, 3
      %v1350 = vor.u32 %v1348, %v1349
      %v1351 = vsel %vm1331, %v1346, %v1350
      %v1352 = vrot.slane %v508, 2
      %v1353 = vrot.slane %v504, 3
      %v1354 = vor.u32 %v1352, %v1353
      %v1355 = vsel %vm1331, %v1350, %v1354
      %v1356 = vrot.slane %v516, 2
      %v1357 = vrot.slane %v512, 3
      %v1358 = vor.u32 %v1356, %v1357
      %v1359 = vsel %vm1331, %v1354, %v1358
      %v1360 = vrot.slane %v524, 2
      %v1361 = vrot.slane %v520, 3
      %v1362 = vor.u32 %v1360, %v1361
      %v1363 = vsel %vm1331, %v1358, %v1362
      %v1364 = vrot.slane %v532, 2
      %v1365 = vrot.slane %v528, 3
      %v1366 = vor.u32 %v1364, %v1365
      %v1367 = vsel %vm1331, %v1362, %v1366
      %v1368 = vrot.slane %v540, 2
      %v1369 = vrot.slane %v536, 3
      %v1370 = vor.u32 %v1368, %v1369
      %v1371 = vsel %vm1331, %v1366, %v1370
      %v1372 = vrot.slane %v548, 2
      %v1373 = vrot.slane %v544, 3
      %v1374 = vor.u32 %v1372, %v1373
      %v1375 = vsel %vm1331, %v1370, %v1374
      %v1376 = vrot.slane %v556, 2
      %v1377 = vrot.slane %v552, 3
      %v1378 = vor.u32 %v1376, %v1377
      %v1379 = vsel %vm1331, %v1374, %v1378
      %v1380 = vrot.slane %v564, 2
      %v1381 = vrot.slane %v560, 3
      %v1382 = vor.u32 %v1380, %v1381
      %v1383 = vsel %vm1331, %v1378, %v1382
      %v1384 = vrot.slane %v572, 2
      %v1385 = vrot.slane %v568, 3
      %v1386 = vor.u32 %v1384, %v1385
      %v1387 = vsel %vm1331, %v1382, %v1386
      %v1388 = vrot.slane %v580, 2
      %v1389 = vrot.slane %v576, 3
      %v1390 = vor.u32 %v1388, %v1389
      %v1391 = vsel %vm1331, %v1386, %v1390
      %v1392 = vrot.slane %v588, 2
      %v1393 = vrot.slane %v584, 3
      %v1394 = vor.u32 %v1392, %v1393
      %v1395 = vsel %vm1331, %v1390, %v1394
      %v1396 = vrot.slane %v596, 2
      %v1397 = vrot.slane %v592, 3
      %v1398 = vor.u32 %v1396, %v1397
      %v1399 = vsel %vm1331, %v1394, %v1398
      %v1400 = vrot.slane %v604, 2
      %v1401 = vrot.slane %v600, 3
      %v1402 = vor.u32 %v1400, %v1401
      %v1403 = vsel %vm1331, %v1398, %v1402
      %v1404 = vrot.slane %v612, 2
      %v1405 = vrot.slane %v608, 3
      %v1406 = vor.u32 %v1404, %v1405
      %v1407 = vsel %vm1331, %v1402, %v1406
      %v1408 = vrot.slane %v620, 2
      %v1409 = vrot.slane %v616, 3
      %v1410 = vor.u32 %v1408, %v1409
      %v1411 = vsel %vm1331, %v1406, %v1410
      %v1412 = vrot.slane %v628, 2
      %v1413 = vrot.slane %v624, 3
      %v1414 = vor.u32 %v1412, %v1413
      %v1415 = vsel %vm1331, %v1410, %v1414
      %v1416 = vrot.slane %v636, 2
      %v1417 = vrot.slane %v632, 3
      %v1418 = vor.u32 %v1416, %v1417
      %v1419 = vsel %vm1331, %v1414, %v1418
      %v1420 = vrot.slane %v644, 2
      %v1421 = vrot.slane %v640, 3
      %v1422 = vor.u32 %v1420, %v1421
      %v1423 = vsel %vm1331, %v1418, %v1422
      %v1424 = vrot.slane %v652, 2
      %v1425 = vrot.slane %v648, 3
      %v1426 = vor.u32 %v1424, %v1425
      %v1427 = vsel %vm1331, %v1422, %v1426
      %v1428 = vrot.slane %v660, 2
      %v1429 = vrot.slane %v656, 3
      %v1430 = vor.u32 %v1428, %v1429
      %v1431 = vsel %vm1331, %v1426, %v1430
      %v1432 = vrot.slane %v1043, 2
      %v1433 = vrot.slane %v1046, 3
      %v1434 = vor.u32 %v1432, %v1433
      %v1435 = vsel %vm1331, %v1430, %v1434
      %v1436 = vrot.slane %v1052, 2
      %v1437 = vrot.slane %v1055, 3
      %v1438 = vor.u32 %v1436, %v1437
      %v1439 = vsel %vm1331, %v1434, %v1438
      %v1441 = vshrl.u32 %v1259, 16
      %v1443 = vrot.slane %v1441, 2
      %v1444 = vshll.u32 %v1259, 16
      %v1446 = vrot.slane %v1444, 3
      %v1447 = vor.u32 %v1443, %v1446
      %v1448 = vsel %vm1331, %v1438, %v1447
      %v1450 = vshrl.u32 %v1260, 16
      %v1452 = vrot.slane %v1450, 2
      %v1453 = vshll.u32 %v1260, 16
      %v1455 = vrot.slane %v1453, 3
      %v1456 = vor.u32 %v1452, %v1455
      %v1457 = vsel %vm1331, %v1447, %v1456
      %v1459 = vshrl.u32 %v1330, 16
      %v1461 = vrot.slane %v1459, 2
      %v1462 = vshll.u32 %v1330, 16
      %v1464 = vrot.slane %v1462, 3
      %v1465 = vor.u32 %v1461, %v1464
      %v1466 = vsel %vm1331, %v1456, %v1465
      %1467 = vrot.lane.b32.xlu0 %v1343, 56
      %v1468 = vpop.permute.xlu0 %1467
      %1469 = vrot.lane.b32.xlu0 %v1347, 56
      %v1470 = vpop.permute.xlu0 %1469
      %1471 = vrot.lane.b32.xlu0 %v1351, 56
      %v1472 = vpop.permute.xlu0 %1471
      %1473 = vrot.lane.b32.xlu0 %v1355, 56
      %v1474 = vpop.permute.xlu0 %1473
      %1475 = vrot.lane.b32.xlu0 %v1359, 56
      %v1476 = vpop.permute.xlu0 %1475
      %1477 = vrot.lane.b32.xlu0 %v1363, 56
      %v1478 = vpop.permute.xlu0 %1477
      %1479 = vrot.lane.b32.xlu0 %v1367, 56
      %v1480 = vpop.permute.xlu0 %1479
      %1481 = vrot.lane.b32.xlu0 %v1371, 56
      %v1482 = vpop.permute.xlu0 %1481
      %1483 = vrot.lane.b32.xlu0 %v1375, 56
      %v1484 = vpop.permute.xlu0 %1483
      %1485 = vrot.lane.b32.xlu0 %v1379, 56
      %v1486 = vpop.permute.xlu0 %1485
      %1487 = vrot.lane.b32.xlu0 %v1383, 56
      %v1488 = vpop.permute.xlu0 %1487
      %1489 = vrot.lane.b32.xlu0 %v1387, 56
      %v1490 = vpop.permute.xlu0 %1489
      %1491 = vrot.lane.b32.xlu0 %v1391, 56
      %v1492 = vpop.permute.xlu0 %1491
      %1493 = vrot.lane.b32.xlu0 %v1395, 56
      %v1494 = vpop.permute.xlu0 %1493
      %1495 = vrot.lane.b32.xlu0 %v1399, 56
      %v1496 = vpop.permute.xlu0 %1495
      %1497 = vrot.lane.b32.xlu0 %v1403, 56
      %v1498 = vpop.permute.xlu0 %1497
      %1499 = vrot.lane.b32.xlu0 %v1407, 56
      %v1500 = vpop.permute.xlu0 %1499
      %1501 = vrot.lane.b32.xlu0 %v1411, 56
      %v1502 = vpop.permute.xlu0 %1501
      %1503 = vrot.lane.b32.xlu0 %v1415, 56
      %v1504 = vpop.permute.xlu0 %1503
      %1505 = vrot.lane.b32.xlu0 %v1419, 56
      %v1506 = vpop.permute.xlu0 %1505
      %1507 = vrot.lane.b32.xlu0 %v1423, 56
      %v1508 = vpop.permute.xlu0 %1507
      %1509 = vrot.lane.b32.xlu0 %v1427, 56
      %v1510 = vpop.permute.xlu0 %1509
      %1511 = vrot.lane.b32.xlu0 %v1431, 56
      %v1512 = vpop.permute.xlu0 %1511
      %1513 = vrot.lane.b32.xlu0 %v1435, 56
      %v1514 = vpop.permute.xlu0 %1513
      %1515 = vrot.lane.b32.xlu0 %v1439, 56
      %v1516 = vpop.permute.xlu0 %1515
      %1517 = vrot.lane.b32.xlu0 %v1448, 56
      %v1518 = vpop.permute.xlu0 %1517
      %1519 = vrot.lane.b32.xlu0 %v1457, 56
      %v1520 = vpop.permute.xlu0 %1519
      %1521 = vrot.lane.b32.xlu0 %v1466, 56
      %v1522 = vpop.permute.xlu0 %1521
      %1523 = vrot.lane.b32.xlu0 %v1465, 56
      %v1524 = vpop.permute.xlu0 %1523
      %v1526 = vunpack.c.l.b16 %v292
      %v1527 = vpack.c.b16 %v359, %v1526
      %vm1528 = vcmask 1044480
      %v1529 = vrot.slane %v1527, 3
      %v1530 = vrot.slane %v412, 3
      %v1531 = vsel %vm1528, %v1529, %v1530
      %v1532 = vrot.slane %v413, 3
      %v1533 = vsel %vm1528, %v1530, %v1532
      %v1534 = vrot.slane %v414, 3
      %v1535 = vsel %vm1528, %v1532, %v1534
      %v1536 = vrot.slane %v415, 3
      %v1537 = vsel %vm1528, %v1534, %v1536
      %v1538 = vrot.slane %v416, 3
      %v1539 = vsel %vm1528, %v1536, %v1538
      %v1540 = vrot.slane %v417, 3
      %v1541 = vsel %vm1528, %v1538, %v1540
      %v1542 = vrot.slane %v418, 3
      %v1543 = vsel %vm1528, %v1540, %v1542
      %v1544 = vrot.slane %v419, 3
      %v1545 = vsel %vm1528, %v1542, %v1544
      %v1546 = vrot.slane %v420, 3
      %v1547 = vsel %vm1528, %v1544, %v1546
      %v1548 = vrot.slane %v421, 3
      %v1549 = vsel %vm1528, %v1546, %v1548
      %v1550 = vrot.slane %v422, 3
      %v1551 = vsel %vm1528, %v1548, %v1550
      %v1552 = vrot.slane %v423, 3
      %v1553 = vsel %vm1528, %v1550, %v1552
      %v1554 = vrot.slane %v424, 3
      %v1555 = vsel %vm1528, %v1552, %v1554
      %v1556 = vrot.slane %v425, 3
      %v1557 = vsel %vm1528, %v1554, %v1556
      %v1558 = vrot.slane %v426, 3
      %v1559 = vsel %vm1528, %v1556, %v1558
      %v1560 = vrot.slane %v427, 3
      %v1561 = vsel %vm1528, %v1558, %v1560
      %v1562 = vrot.slane %v428, 3
      %v1563 = vsel %vm1528, %v1560, %v1562
      %v1564 = vrot.slane %v429, 3
      %v1565 = vsel %vm1528, %v1562, %v1564
      %v1566 = vrot.slane %v430, 3
      %v1567 = vsel %vm1528, %v1564, %v1566
      %v1568 = vrot.slane %v431, 3
      %v1569 = vsel %vm1528, %v1566, %v1568
      %v1570 = vrot.slane %v432, 3
      %v1571 = vsel %vm1528, %v1568, %v1570
      %v1572 = vrot.slane %v433, 3
      %v1573 = vsel %vm1528, %v1570, %v1572
      %v1574 = vrot.slane %v434, 3
      %v1575 = vsel %vm1528, %v1572, %v1574
      %v1576 = vrot.slane %v861, 3
      %v1577 = vsel %vm1528, %v1574, %v1576
      %v1578 = vrot.slane %v862, 3
      %v1579 = vsel %vm1528, %v1576, %v1578
      %v1580 = vrot.slane %v1259, 3
      %v1581 = vsel %vm1528, %v1578, %v1580
      %v1582 = vrot.slane %v1260, 3
      %v1583 = vsel %vm1528, %v1580, %v1582
      %v1584 = vrot.slane %v1330, 3
      %v1585 = vsel %vm1528, %v1582, %v1584
      %1586 = vrot.lane.b32.xlu0 %v1531, 64
      %v1587 = vpop.permute.xlu0 %1586
      %1588 = vrot.lane.b32.xlu0 %v1533, 64
      %v1589 = vpop.permute.xlu0 %1588
      %1590 = vrot.lane.b32.xlu0 %v1535, 64
      %v1591 = vpop.permute.xlu0 %1590
      %1592 = vrot.lane.b32.xlu0 %v1537, 64
      %v1593 = vpop.permute.xlu0 %1592
      %1594 = vrot.lane.b32.xlu0 %v1539, 64
      %v1595 = vpop.permute.xlu0 %1594
      %1596 = vrot.lane.b32.xlu0 %v1541, 64
      %v1597 = vpop.permute.xlu0 %1596
      %1598 = vrot.lane.b32.xlu0 %v1543, 64
      %v1599 = vpop.permute.xlu0 %1598
      %1600 = vrot.lane.b32.xlu0 %v1545, 64
      %v1601 = vpop.permute.xlu0 %1600
      %1602 = vrot.lane.b32.xlu0 %v1547, 64
      %v1603 = vpop.permute.xlu0 %1602
      %1604 = vrot.lane.b32.xlu0 %v1549, 64
      %v1605 = vpop.permute.xlu0 %1604
      %1606 = vrot.lane.b32.xlu0 %v1551, 64
      %v1607 = vpop.permute.xlu0 %1606
      %1608 = vrot.lane.b32.xlu0 %v1553, 64
      %v1609 = vpop.permute.xlu0 %1608
      %1610 = vrot.lane.b32.xlu0 %v1555, 64
      %v1611 = vpop.permute.xlu0 %1610
      %1612 = vrot.lane.b32.xlu0 %v1557, 64
      %v1613 = vpop.permute.xlu0 %1612
      %1614 = vrot.lane.b32.xlu0 %v1559, 64
      %v1615 = vpop.permute.xlu0 %1614
      %1616 = vrot.lane.b32.xlu0 %v1561, 64
      %v1617 = vpop.permute.xlu0 %1616
      %1618 = vrot.lane.b32.xlu0 %v1563, 64
      %v1619 = vpop.permute.xlu0 %1618
      %1620 = vrot.lane.b32.xlu0 %v1565, 64
      %v1621 = vpop.permute.xlu0 %1620
      %1622 = vrot.lane.b32.xlu0 %v1567, 64
      %v1623 = vpop.permute.xlu0 %1622
      %1624 = vrot.lane.b32.xlu0 %v1569, 64
      %v1625 = vpop.permute.xlu0 %1624
      %1626 = vrot.lane.b32.xlu0 %v1571, 64
      %v1627 = vpop.permute.xlu0 %1626
      %1628 = vrot.lane.b32.xlu0 %v1573, 64
      %v1629 = vpop.permute.xlu0 %1628
      %1630 = vrot.lane.b32.xlu0 %v1575, 64
      %v1631 = vpop.permute.xlu0 %1630
      %1632 = vrot.lane.b32.xlu0 %v1577, 64
      %v1633 = vpop.permute.xlu0 %1632
      %1634 = vrot.lane.b32.xlu0 %v1579, 64
      %v1635 = vpop.permute.xlu0 %1634
      %1636 = vrot.lane.b32.xlu0 %v1581, 64
      %v1637 = vpop.permute.xlu0 %1636
      %1638 = vrot.lane.b32.xlu0 %v1583, 64
      %v1639 = vpop.permute.xlu0 %1638
      %1640 = vrot.lane.b32.xlu0 %v1585, 64
      %v1641 = vpop.permute.xlu0 %1640
      %1642 = vrot.lane.b32.xlu0 %v1584, 64
      %v1643 = vpop.permute.xlu0 %1642
      %vm1644 = vcmask 64512
      %v1646 = vsel %vm1644, %v407, %v672
      %v1648 = vsel %vm1644, %v408, %v674
      %v1650 = vsel %vm1644, %v409, %v676
      %v1652 = vsel %vm1644, %v410, %v678
      %v1654 = vsel %vm1644, %v411, %v680
      %v1656 = vsel %vm1644, %v412, %v682
      %v1658 = vsel %vm1644, %v413, %v684
      %v1660 = vsel %vm1644, %v414, %v686
      %v1662 = vsel %vm1644, %v415, %v688
      %v1664 = vsel %vm1644, %v416, %v690
      %v1666 = vsel %vm1644, %v417, %v692
      %v1668 = vsel %vm1644, %v418, %v694
      %v1670 = vsel %vm1644, %v419, %v696
      %v1672 = vsel %vm1644, %v420, %v698
      %v1674 = vsel %vm1644, %v421, %v700
      %v1676 = vsel %vm1644, %v422, %v702
      %v1678 = vsel %vm1644, %v423, %v704
      %v1680 = vsel %vm1644, %v424, %v706
      %v1682 = vsel %vm1644, %v425, %v708
      %v1684 = vsel %vm1644, %v426, %v710
      %v1686 = vsel %vm1644, %v427, %v712
      %v1688 = vsel %vm1644, %v428, %v714
      %v1690 = vsel %vm1644, %v429, %v716
      %v1692 = vsel %vm1644, %v430, %v718
      %v1694 = vsel %vm1644, %v431, %v720
      %v1696 = vsel %vm1644, %v432, %v722
      %v1698 = vsel %vm1644, %v433, %v724
      %v1700 = vsel %vm1644, %v434, %v726
      %v1703 = vsel %vm1644, %v435, %v728
      %vm1704 = vcmask 130048
      %v1706 = vsel %vm1704, %v1646, %v791
      %v1708 = vsel %vm1704, %v1648, %v793
      %v1710 = vsel %vm1704, %v1650, %v795
      %v1712 = vsel %vm1704, %v1652, %v797
      %v1714 = vsel %vm1704, %v1654, %v799
      %v1716 = vsel %vm1704, %v1656, %v801
      %v1718 = vsel %vm1704, %v1658, %v803
      %v1720 = vsel %vm1704, %v1660, %v805
      %v1722 = vsel %vm1704, %v1662, %v807
      %v1724 = vsel %vm1704, %v1664, %v809
      %v1726 = vsel %vm1704, %v1666, %v811
      %v1728 = vsel %vm1704, %v1668, %v813
      %v1730 = vsel %vm1704, %v1670, %v815
      %v1732 = vsel %vm1704, %v1672, %v817
      %v1734 = vsel %vm1704, %v1674, %v819
      %v1736 = vsel %vm1704, %v1676, %v821
      %v1738 = vsel %vm1704, %v1678, %v823
      %v1740 = vsel %vm1704, %v1680, %v825
      %v1742 = vsel %vm1704, %v1682, %v827
      %v1744 = vsel %vm1704, %v1684, %v829
      %v1746 = vsel %vm1704, %v1686, %v831
      %v1748 = vsel %vm1704, %v1688, %v833
      %v1750 = vsel %vm1704, %v1690, %v835
      %v1752 = vsel %vm1704, %v1692, %v837
      %v1754 = vsel %vm1704, %v1694, %v839
      %v1756 = vsel %vm1704, %v1696, %v841
      %v1758 = vsel %vm1704, %v1698, %v843
      %v1760 = vsel %vm1704, %v1700, %v845
      %v1762 = vsel %vm1704, %v1703, %v847
      %vm1763 = vcmask 195584
      %v1765 = vsel %vm1763, %v1706, %v873
      %v1767 = vsel %vm1763, %v1708, %v875
      %v1769 = vsel %vm1763, %v1710, %v877
      %v1771 = vsel %vm1763, %v1712, %v879
      %v1773 = vsel %vm1763, %v1714, %v881
      %v1775 = vsel %vm1763, %v1716, %v883
      %v1777 = vsel %vm1763, %v1718, %v885
      %v1779 = vsel %vm1763, %v1720, %v887
      %v1781 = vsel %vm1763, %v1722, %v889
      %v1783 = vsel %vm1763, %v1724, %v891
      %v1785 = vsel %vm1763, %v1726, %v893
      %v1787 = vsel %vm1763, %v1728, %v895
      %v1789 = vsel %vm1763, %v1730, %v897
      %v1791 = vsel %vm1763, %v1732, %v899
      %v1793 = vsel %vm1763, %v1734, %v901
      %v1795 = vsel %vm1763, %v1736, %v903
      %v1797 = vsel %vm1763, %v1738, %v905
      %v1799 = vsel %vm1763, %v1740, %v907
      %v1801 = vsel %vm1763, %v1742, %v909
      %v1803 = vsel %vm1763, %v1744, %v911
      %v1805 = vsel %vm1763, %v1746, %v913
      %v1807 = vsel %vm1763, %v1748, %v915
      %v1809 = vsel %vm1763, %v1750, %v917
      %v1811 = vsel %vm1763, %v1752, %v919
      %v1813 = vsel %vm1763, %v1754, %v921
      %v1815 = vsel %vm1763, %v1756, %v923
      %v1817 = vsel %vm1763, %v1758, %v925
      %v1819 = vsel %vm1763, %v1760, %v927
      %v1821 = vsel %vm1763, %v1762, %v929
      %vm1822 = vcmask 261120
      %v1824 = vsel %vm1822, %v1765, %v1070
      %v1826 = vsel %vm1822, %v1767, %v1072
      %v1828 = vsel %vm1822, %v1769, %v1074
      %v1830 = vsel %vm1822, %v1771, %v1076
      %v1832 = vsel %vm1822, %v1773, %v1078
      %v1834 = vsel %vm1822, %v1775, %v1080
      %v1836 = vsel %vm1822, %v1777, %v1082
      %v1838 = vsel %vm1822, %v1779, %v1084
      %v1840 = vsel %vm1822, %v1781, %v1086
      %v1842 = vsel %vm1822, %v1783, %v1088
      %v1844 = vsel %vm1822, %v1785, %v1090
      %v1846 = vsel %vm1822, %v1787, %v1092
      %v1848 = vsel %vm1822, %v1789, %v1094
      %v1850 = vsel %vm1822, %v1791, %v1096
      %v1852 = vsel %vm1822, %v1793, %v1098
      %v1854 = vsel %vm1822, %v1795, %v1100
      %v1856 = vsel %vm1822, %v1797, %v1102
      %v1858 = vsel %vm1822, %v1799, %v1104
      %v1860 = vsel %vm1822, %v1801, %v1106
      %v1862 = vsel %vm1822, %v1803, %v1108
      %v1864 = vsel %vm1822, %v1805, %v1110
      %v1866 = vsel %vm1822, %v1807, %v1112
      %v1868 = vsel %vm1822, %v1809, %v1114
      %v1870 = vsel %vm1822, %v1811, %v1116
      %v1872 = vsel %vm1822, %v1813, %v1118
      %v1874 = vsel %vm1822, %v1815, %v1120
      %v1876 = vsel %vm1822, %v1817, %v1122
      %v1878 = vsel %vm1822, %v1819, %v1124
      %v1880 = vsel %vm1822, %v1821, %v1126
      %vm1881 = vcmask 326656
      %v1883 = vsel %vm1881, %v1824, %v1189
      %v1885 = vsel %vm1881, %v1826, %v1191
      %v1887 = vsel %vm1881, %v1828, %v1193
      %v1889 = vsel %vm1881, %v1830, %v1195
      %v1891 = vsel %vm1881, %v1832, %v1197
      %v1893 = vsel %vm1881, %v1834, %v1199
      %v1895 = vsel %vm1881, %v1836, %v1201
      %v1897 = vsel %vm1881, %v1838, %v1203
      %v1899 = vsel %vm1881, %v1840, %v1205
      %v1901 = vsel %vm1881, %v1842, %v1207
      %v1903 = vsel %vm1881, %v1844, %v1209
      %v1905 = vsel %vm1881, %v1846, %v1211
      %v1907 = vsel %vm1881, %v1848, %v1213
      %v1909 = vsel %vm1881, %v1850, %v1215
      %v1911 = vsel %vm1881, %v1852, %v1217
      %v1913 = vsel %vm1881, %v1854, %v1219
      %v1915 = vsel %vm1881, %v1856, %v1221
      %v1917 = vsel %vm1881, %v1858, %v1223
      %v1919 = vsel %vm1881, %v1860, %v1225
      %v1921 = vsel %vm1881, %v1862, %v1227
      %v1923 = vsel %vm1881, %v1864, %v1229
      %v1925 = vsel %vm1881, %v1866, %v1231
      %v1927 = vsel %vm1881, %v1868, %v1233
      %v1929 = vsel %vm1881, %v1870, %v1235
      %v1931 = vsel %vm1881, %v1872, %v1237
      %v1933 = vsel %vm1881, %v1874, %v1239
      %v1935 = vsel %vm1881, %v1876, %v1241
      %v1937 = vsel %vm1881, %v1878, %v1243
      %v1939 = vsel %vm1881, %v1880, %v1245
      %vm1940 = vcmask 392192
      %v1942 = vsel %vm1940, %v1883, %v1271
      %v1944 = vsel %vm1940, %v1885, %v1273
      %v1946 = vsel %vm1940, %v1887, %v1275
      %v1948 = vsel %vm1940, %v1889, %v1277
      %v1950 = vsel %vm1940, %v1891, %v1279
      %v1952 = vsel %vm1940, %v1893, %v1281
      %v1954 = vsel %vm1940, %v1895, %v1283
      %v1956 = vsel %vm1940, %v1897, %v1285
      %v1958 = vsel %vm1940, %v1899, %v1287
      %v1960 = vsel %vm1940, %v1901, %v1289
      %v1962 = vsel %vm1940, %v1903, %v1291
      %v1964 = vsel %vm1940, %v1905, %v1293
      %v1966 = vsel %vm1940, %v1907, %v1295
      %v1968 = vsel %vm1940, %v1909, %v1297
      %v1970 = vsel %vm1940, %v1911, %v1299
      %v1972 = vsel %vm1940, %v1913, %v1301
      %v1974 = vsel %vm1940, %v1915, %v1303
      %v1976 = vsel %vm1940, %v1917, %v1305
      %v1978 = vsel %vm1940, %v1919, %v1307
      %v1980 = vsel %vm1940, %v1921, %v1309
      %v1982 = vsel %vm1940, %v1923, %v1311
      %v1984 = vsel %vm1940, %v1925, %v1313
      %v1986 = vsel %vm1940, %v1927, %v1315
      %v1988 = vsel %vm1940, %v1929, %v1317
      %v1990 = vsel %vm1940, %v1931, %v1319
      %v1992 = vsel %vm1940, %v1933, %v1321
      %v1994 = vsel %vm1940, %v1935, %v1323
      %v1996 = vsel %vm1940, %v1937, %v1325
      %v1998 = vsel %vm1940, %v1939, %v1327
      %vm1999 = vcmask 457728
      %v2001 = vsel %vm1999, %v1942, %v1468
      %v2003 = vsel %vm1999, %v1944, %v1470
      %v2005 = vsel %vm1999, %v1946, %v1472
      %v2007 = vsel %vm1999, %v1948, %v1474
      %v2009 = vsel %vm1999, %v1950, %v1476
      %v2011 = vsel %vm1999, %v1952, %v1478
      %v2013 = vsel %vm1999, %v1954, %v1480
      %v2015 = vsel %vm1999, %v1956, %v1482
      %v2017 = vsel %vm1999, %v1958, %v1484
      %v2019 = vsel %vm1999, %v1960, %v1486
      %v2021 = vsel %vm1999, %v1962, %v1488
      %v2023 = vsel %vm1999, %v1964, %v1490
      %v2025 = vsel %vm1999, %v1966, %v1492
      %v2027 = vsel %vm1999, %v1968, %v1494
      %v2029 = vsel %vm1999, %v1970, %v1496
      %v2031 = vsel %vm1999, %v1972, %v1498
      %v2033 = vsel %vm1999, %v1974, %v1500
      %v2035 = vsel %vm1999, %v1976, %v1502
      %v2037 = vsel %vm1999, %v1978, %v1504
      %v2039 = vsel %vm1999, %v1980, %v1506
      %v2041 = vsel %vm1999, %v1982, %v1508
      %v2043 = vsel %vm1999, %v1984, %v1510
      %v2045 = vsel %vm1999, %v1986, %v1512
      %v2047 = vsel %vm1999, %v1988, %v1514
      %v2049 = vsel %vm1999, %v1990, %v1516
      %v2051 = vsel %vm1999, %v1992, %v1518
      %v2053 = vsel %vm1999, %v1994, %v1520
      %v2055 = vsel %vm1999, %v1996, %v1522
      %v2057 = vsel %vm1999, %v1998, %v1524
      %vm2058 = vcmask 523264
      %v2060 = vsel %vm2058, %v2001, %v1587
      %v2062 = vsel %vm2058, %v2003, %v1589
      %v2064 = vsel %vm2058, %v2005, %v1591
      %v2066 = vsel %vm2058, %v2007, %v1593
      %v2068 = vsel %vm2058, %v2009, %v1595
      %v2070 = vsel %vm2058, %v2011, %v1597
      %v2072 = vsel %vm2058, %v2013, %v1599
      %v2074 = vsel %vm2058, %v2015, %v1601
      %v2076 = vsel %vm2058, %v2017, %v1603
      %v2078 = vsel %vm2058, %v2019, %v1605
      %v2080 = vsel %vm2058, %v2021, %v1607
      %v2082 = vsel %vm2058, %v2023, %v1609
      %v2084 = vsel %vm2058, %v2025, %v1611
      %v2086 = vsel %vm2058, %v2027, %v1613
      %v2088 = vsel %vm2058, %v2029, %v1615
      %v2090 = vsel %vm2058, %v2031, %v1617
      %v2092 = vsel %vm2058, %v2033, %v1619
      %v2094 = vsel %vm2058, %v2035, %v1621
      %v2096 = vsel %vm2058, %v2037, %v1623
      %v2098 = vsel %vm2058, %v2039, %v1625
      %v2100 = vsel %vm2058, %v2041, %v1627
      %v2102 = vsel %vm2058, %v2043, %v1629
      %v2104 = vsel %vm2058, %v2045, %v1631
      %v2106 = vsel %vm2058, %v2047, %v1633
      %v2108 = vsel %vm2058, %v2049, %v1635
      %v2110 = vsel %vm2058, %v2051, %v1637
      %v2112 = vsel %vm2058, %v2053, %v1639
      %v2114 = vsel %vm2058, %v2055, %v1641
      %v2116 = vsel %vm2058, %v2057, %v1643
      %v2117 = vld [vmem:[%s1] sm:$0xf]
      %v2118 = vld [vmem:[%s1 + $0x4] sm:$0xf]
      %v2119 = vld [vmem:[%s1 + $0x8] sm:$0xf]
      %v2120 = vld [vmem:[%s1 + $0xc] sm:$0xf]
      %v2121 = vld [vmem:[%s1 + $0x10] sm:$0xf]
      %v2122 = vld [vmem:[%s1 + $0x14] sm:$0xf]
      %v2123 = vld [vmem:[%s1 + $0x18] sm:$0xf]
      %v2124 = vld [vmem:[%s1 + $0x1c] sm:$0xf]
      %v2125 = vld [vmem:[%s1 + $0x20] sm:$0xf]
      %v2126 = vld [vmem:[%s2] sm:$0x1]
      %v2128 = vperm.slane %v2126, 0
      %v2139 = vunpack.c.l.b16 %v2117
      %v2140 = vunpack.c.l.b16 %v2118
      %v2141 = vunpack.c.l.b16 %v2119
      %v2142 = vunpack.c.l.b16 %v2120
      %v2143 = vunpack.c.l.b16 %v2121
      %v2144 = vunpack.c.l.b16 %v2122
      %v2145 = vunpack.c.l.b16 %v2123
      %v2146 = vunpack.c.l.b16 %v2124
      %v2147 = vunpack.c.l.b16 %v2125
      %v2148 = vpack.c.b16 %v2140, %v2139
      %v2149 = vpack.c.b16 %v2142, %v2141
      %v2150 = vpack.c.b16 %v2144, %v2143
      %v2151 = vpack.c.b16 %v2146, %v2145
      %v2152 = vpack.c.b16 %v2147, %v2147
      %vm2157 = vcmask 588800
      %v2158 = vsel %vm2157, %v2060, 0
      %v2160 = vsel %vm2157, %v2062, 0
      %v2162 = vsel %vm2157, %v2064, 0
      %v2164 = vsel %vm2157, %v2066, 0
      %v2166 = vsel %vm2157, %v2068, 0
      %v2168 = vsel %vm2157, %v2070, 0
      %v2170 = vsel %vm2157, %v2072, 0
      %v2172 = vsel %vm2157, %v2074, 0
      %v2174 = vsel %vm2157, %v2076, 0
      %v2176 = vsel %vm2157, %v2078, 0
      %v2178 = vsel %vm2157, %v2080, 0
      %v2180 = vsel %vm2157, %v2082, 0
      %v2182 = vsel %vm2157, %v2084, 0
      %v2184 = vsel %vm2157, %v2086, 0
      %v2186 = vsel %vm2157, %v2088, 0
      %v2188 = vsel %vm2157, %v2090, 0
      %v2190 = vsel %vm2157, %v2092, 0
      %v2192 = vsel %vm2157, %v2094, 0
      %v2194 = vsel %vm2157, %v2096, 0
      %v2196 = vsel %vm2157, %v2098, 0
      %v2198 = vsel %vm2157, %v2100, 0
      %v2200 = vsel %vm2157, %v2102, 0
      %v2202 = vsel %vm2157, %v2104, 0
      %v2204 = vsel %vm2157, %v2106, 0
      %v2206 = vsel %vm2157, %v2108, 0
      %v2208 = vsel %vm2157, %v2110, 0
      %v2210 = vsel %vm2157, %v2112, 0
      %v2212 = vsel %vm2157, %v2114, 0
      %v2214 = vsel %vm2157, %v2116, 0
      %vm2216 = vcmask 1043456
      %v2218 = vsel %vm2216, %v2152, 0
      %2220 = vmatpush.bf16.msra.mxu0 0
      %2221 = vmatpush.bf16.msra.mxu0 0
      %2222 = vmatpush.bf16.msra.mxu0 0
      %2223 = vmatpush.bf16.msra.mxu0 %v2218
      %2224 = vmatpush.bf16.msra.mxu0 %v2151
      %2225 = vmatpush.bf16.msra.mxu0 %v2150
      %2226 = vmatpush.bf16.msra.mxu0 %v2149
      %2227 = vmatpush.bf16.msra.mxu0 %v2148
      %2228 = vmatmul.bf16.gmra.mxu0 %v2158
      %v2229 = vpop.f32.mrf.mxu0
      %v2230 = vadd.f32 %v2128, %v2229
      %v2231 = vpop.f32.mrf.mxu0
      %v2232 = vadd.f32 %v2128, %v2231
      %2233 = vmatmul.bf16.gmra.mxu0 %v2160
      %v2234 = vpop.f32.mrf.mxu0
      %v2235 = vadd.f32 %v2128, %v2234
      %v2236 = vpop.f32.mrf.mxu0
      %v2237 = vadd.f32 %v2128, %v2236
      %2238 = vmatmul.bf16.gmra.mxu0 %v2162
      %v2239 = vpop.f32.mrf.mxu0
      %v2240 = vadd.f32 %v2128, %v2239
      %v2241 = vpop.f32.mrf.mxu0
      %v2242 = vadd.f32 %v2128, %v2241
      %2243 = vmatmul.bf16.gmra.mxu0 %v2164
      %v2244 = vpop.f32.mrf.mxu0
      %v2245 = vadd.f32 %v2128, %v2244
      %v2246 = vpop.f32.mrf.mxu0
      %v2247 = vadd.f32 %v2128, %v2246
      %2248 = vmatmul.bf16.gmra.mxu0 %v2166
      %v2249 = vpop.f32.mrf.mxu0
      %v2250 = vadd.f32 %v2128, %v2249
      %v2251 = vpop.f32.mrf.mxu0
      %v2252 = vadd.f32 %v2128, %v2251
      %2253 = vmatmul.bf16.gmra.mxu0 %v2168
      %v2254 = vpop.f32.mrf.mxu0
      %v2255 = vadd.f32 %v2128, %v2254
      %v2256 = vpop.f32.mrf.mxu0
      %v2257 = vadd.f32 %v2128, %v2256
      %2258 = vmatmul.bf16.gmra.mxu0 %v2170
      %v2259 = vpop.f32.mrf.mxu0
      %v2260 = vadd.f32 %v2128, %v2259
      %v2261 = vpop.f32.mrf.mxu0
      %v2262 = vadd.f32 %v2128, %v2261
      %2263 = vmatmul.bf16.gmra.mxu0 %v2172
      %v2264 = vpop.f32.mrf.mxu0
      %v2265 = vadd.f32 %v2128, %v2264
      %v2266 = vpop.f32.mrf.mxu0
      %v2267 = vadd.f32 %v2128, %v2266
      %2268 = vmatmul.bf16.gmra.mxu0 %v2174
      %v2269 = vpop.f32.mrf.mxu0
      %v2270 = vadd.f32 %v2128, %v2269
      %v2271 = vpop.f32.mrf.mxu0
      %v2272 = vadd.f32 %v2128, %v2271
      %2273 = vmatmul.bf16.gmra.mxu0 %v2176
      %v2274 = vpop.f32.mrf.mxu0
      %v2275 = vadd.f32 %v2128, %v2274
      %v2276 = vpop.f32.mrf.mxu0
      %v2277 = vadd.f32 %v2128, %v2276
      %2278 = vmatmul.bf16.gmra.mxu0 %v2178
      %v2279 = vpop.f32.mrf.mxu0
      %v2280 = vadd.f32 %v2128, %v2279
      %v2281 = vpop.f32.mrf.mxu0
      %v2282 = vadd.f32 %v2128, %v2281
      %2283 = vmatmul.bf16.gmra.mxu0 %v2180
      %v2284 = vpop.f32.mrf.mxu0
      %v2285 = vadd.f32 %v2128, %v2284
      %v2286 = vpop.f32.mrf.mxu0
      %v2287 = vadd.f32 %v2128, %v2286
      %2288 = vmatmul.bf16.gmra.mxu0 %v2182
      %v2289 = vpop.f32.mrf.mxu0
      %v2290 = vadd.f32 %v2128, %v2289
      %v2291 = vpop.f32.mrf.mxu0
      %v2292 = vadd.f32 %v2128, %v2291
      %2293 = vmatmul.bf16.gmra.mxu0 %v2184
      %v2294 = vpop.f32.mrf.mxu0
      %v2295 = vadd.f32 %v2128, %v2294
      %v2296 = vpop.f32.mrf.mxu0
      %v2297 = vadd.f32 %v2128, %v2296
      %2298 = vmatmul.bf16.gmra.mxu0 %v2186
      %v2299 = vpop.f32.mrf.mxu0
      %v2300 = vadd.f32 %v2128, %v2299
      %v2301 = vpop.f32.mrf.mxu0
      %v2302 = vadd.f32 %v2128, %v2301
      %2303 = vmatmul.bf16.gmra.mxu0 %v2188
      %v2304 = vpop.f32.mrf.mxu0
      %v2305 = vadd.f32 %v2128, %v2304
      %v2306 = vpop.f32.mrf.mxu0
      %v2307 = vadd.f32 %v2128, %v2306
      %2308 = vmatmul.bf16.gmra.mxu0 %v2190
      %v2309 = vpop.f32.mrf.mxu0
      %v2310 = vadd.f32 %v2128, %v2309
      %v2311 = vpop.f32.mrf.mxu0
      %v2312 = vadd.f32 %v2128, %v2311
      %2313 = vmatmul.bf16.gmra.mxu0 %v2192
      %v2314 = vpop.f32.mrf.mxu0
      %v2315 = vadd.f32 %v2128, %v2314
      %v2316 = vpop.f32.mrf.mxu0
      %v2317 = vadd.f32 %v2128, %v2316
      %2318 = vmatmul.bf16.gmra.mxu0 %v2194
      %v2319 = vpop.f32.mrf.mxu0
      %v2320 = vadd.f32 %v2128, %v2319
      %v2321 = vpop.f32.mrf.mxu0
      %v2322 = vadd.f32 %v2128, %v2321
      %2323 = vmatmul.bf16.gmra.mxu0 %v2196
      %v2324 = vpop.f32.mrf.mxu0
      %v2325 = vadd.f32 %v2128, %v2324
      %v2326 = vpop.f32.mrf.mxu0
      %v2327 = vadd.f32 %v2128, %v2326
      %2328 = vmatmul.bf16.gmra.mxu0 %v2198
      %v2329 = vpop.f32.mrf.mxu0
      %v2330 = vadd.f32 %v2128, %v2329
      %v2331 = vpop.f32.mrf.mxu0
      %v2332 = vadd.f32 %v2128, %v2331
      %2333 = vmatmul.bf16.gmra.mxu0 %v2200
      %v2334 = vpop.f32.mrf.mxu0
      %v2335 = vadd.f32 %v2128, %v2334
      %v2336 = vpop.f32.mrf.mxu0
      %v2337 = vadd.f32 %v2128, %v2336
      %2338 = vmatmul.bf16.gmra.mxu0 %v2202
      %v2339 = vpop.f32.mrf.mxu0
      %v2340 = vadd.f32 %v2128, %v2339
      %v2341 = vpop.f32.mrf.mxu0
      %v2342 = vadd.f32 %v2128, %v2341
      %2343 = vmatmul.bf16.gmra.mxu0 %v2204
      %v2344 = vpop.f32.mrf.mxu0
      %v2345 = vadd.f32 %v2128, %v2344
      %v2346 = vpop.f32.mrf.mxu0
      %v2347 = vadd.f32 %v2128, %v2346
      %2348 = vmatmul.bf16.gmra.mxu0 %v2206
      %v2349 = vpop.f32.mrf.mxu0
      %v2350 = vadd.f32 %v2128, %v2349
      %v2351 = vpop.f32.mrf.mxu0
      %v2352 = vadd.f32 %v2128, %v2351
      %2353 = vmatmul.bf16.gmra.mxu0 %v2208
      %v2354 = vpop.f32.mrf.mxu0
      %v2355 = vadd.f32 %v2128, %v2354
      %v2356 = vpop.f32.mrf.mxu0
      %v2357 = vadd.f32 %v2128, %v2356
      %2358 = vmatmul.bf16.gmra.mxu0 %v2210
      %v2359 = vpop.f32.mrf.mxu0
      %v2360 = vadd.f32 %v2128, %v2359
      %v2361 = vpop.f32.mrf.mxu0
      %v2362 = vadd.f32 %v2128, %v2361
      %2363 = vmatmul.bf16.gmra.mxu0 %v2212
      %v2364 = vpop.f32.mrf.mxu0
      %v2365 = vadd.f32 %v2128, %v2364
      %v2366 = vpop.f32.mrf.mxu0
      %v2367 = vadd.f32 %v2128, %v2366
      %2368 = vmatmul.bf16.gmra.mxu0 %v2214
      %v2369 = vpop.f32.mrf.mxu0
      %v2370 = vadd.f32 %v2128, %v2369
      %v2371 = vpop.f32.mrf.mxu0
      %2372 = vdwg.mxu0
      %2373 = vst [vmem:[%s124] sm:$0xff] %v2230
      %2374 = vst [vmem:[%s124 + $0x8] sm:$0xff] %v2232
      %2375 = vst [vmem:[%s124 + $0x10] sm:$0xff] %v2235
      %2376 = vst [vmem:[%s124 + $0x18] sm:$0xff] %v2237
      %2377 = vst [vmem:[%s124 + $0x20] sm:$0xff] %v2240
      %2378 = vst [vmem:[%s124 + $0x28] sm:$0xff] %v2242
      %2379 = vst [vmem:[%s124 + $0x30] sm:$0xff] %v2245
      %2380 = vst [vmem:[%s124 + $0x38] sm:$0xff] %v2247
      %2381 = vst [vmem:[%s124 + $0x40] sm:$0xff] %v2250
      %2382 = vst [vmem:[%s124 + $0x48] sm:$0xff] %v2252
      %2383 = vst [vmem:[%s124 + $0x50] sm:$0xff] %v2255
      %2384 = vst [vmem:[%s124 + $0x58] sm:$0xff] %v2257
      %2385 = vst [vmem:[%s124 + $0x60] sm:$0xff] %v2260
      %2386 = vst [vmem:[%s124 + $0x68] sm:$0xff] %v2262
      %2387 = vst [vmem:[%s124 + $0x70] sm:$0xff] %v2265
      %2388 = vst [vmem:[%s124 + $0x78] sm:$0xff] %v2267
      %2389 = vst [vmem:[%s124 + $0x80] sm:$0xff] %v2270
      %2390 = vst [vmem:[%s124 + $0x88] sm:$0xff] %v2272
      %2391 = vst [vmem:[%s124 + $0x90] sm:$0xff] %v2275
      %2392 = vst [vmem:[%s124 + $0x98] sm:$0xff] %v2277
      %2393 = vst [vmem:[%s124 + $0xa0] sm:$0xff] %v2280
      %2394 = vst [vmem:[%s124 + $0xa8] sm:$0xff] %v2282
      %2395 = vst [vmem:[%s124 + $0xb0] sm:$0xff] %v2285
      %2396 = vst [vmem:[%s124 + $0xb8] sm:$0xff] %v2287
      %2397 = vst [vmem:[%s124 + $0xc0] sm:$0xff] %v2290
      %2398 = vst [vmem:[%s124 + $0xc8] sm:$0xff] %v2292
      %2399 = vst [vmem:[%s124 + $0xd0] sm:$0xff] %v2295
      %2400 = vst [vmem:[%s124 + $0xd8] sm:$0xff] %v2297
      %2401 = vst [vmem:[%s124 + $0xe0] sm:$0xff] %v2300
      %2402 = vst [vmem:[%s124 + $0xe8] sm:$0xff] %v2302
      %2403 = vst [vmem:[%s124 + $0xf0] sm:$0xff] %v2305
      %2404 = vst [vmem:[%s124 + $0xf8] sm:$0xff] %v2307
      %2405 = vst [vmem:[%s124 + $0x100] sm:$0xff] %v2310
      %2406 = vst [vmem:[%s124 + $0x108] sm:$0xff] %v2312
      %2407 = vst [vmem:[%s124 + $0x110] sm:$0xff] %v2315
      %2408 = vst [vmem:[%s124 + $0x118] sm:$0xff] %v2317
      %2409 = vst [vmem:[%s124 + $0x120] sm:$0xff] %v2320
      %2410 = vst [vmem:[%s124 + $0x128] sm:$0xff] %v2322
      %2411 = vst [vmem:[%s124 + $0x130] sm:$0xff] %v2325
      %2412 = vst [vmem:[%s124 + $0x138] sm:$0xff] %v2327
      %2413 = vst [vmem:[%s124 + $0x140] sm:$0xff] %v2330
      %2414 = vst [vmem:[%s124 + $0x148] sm:$0xff] %v2332
      %2415 = vst [vmem:[%s124 + $0x150] sm:$0xff] %v2335
      %2416 = vst [vmem:[%s124 + $0x158] sm:$0xff] %v2337
      %2417 = vst [vmem:[%s124 + $0x160] sm:$0xff] %v2340
      %2418 = vst [vmem:[%s124 + $0x168] sm:$0xff] %v2342
      %2419 = vst [vmem:[%s124 + $0x170] sm:$0xff] %v2345
      %2420 = vst [vmem:[%s124 + $0x178] sm:$0xff] %v2347
      %2421 = vst [vmem:[%s124 + $0x180] sm:$0xff] %v2350
      %2422 = vst [vmem:[%s124 + $0x188] sm:$0xff] %v2352
      %2423 = vst [vmem:[%s124 + $0x190] sm:$0xff] %v2355
      %2424 = vst [vmem:[%s124 + $0x198] sm:$0xff] %v2357
      %2425 = vst [vmem:[%s124 + $0x1a0] sm:$0xff] %v2360
      %2426 = vst [vmem:[%s124 + $0x1a8] sm:$0xff] %v2362
      %2427 = vst [vmem:[%s124 + $0x1b0] sm:$0xff] %v2365
      %2428 = vst [vmem:[%s124 + $0x1b8] sm:$0xff] %v2367
      %2429 = vst [vmem:[%s124 + $0x1c0] sm:$0xff] %v2370
      %s2430 = smul.u32 57, %s14
      %p2431 = scmp.lt.s32.totalorder %s2430, 284
      %s2432 = scalar_select %p2431, %s2430, 284
      %s2433 = smul.addr %s2432, 8
      %s2434 = scalar_lea.vmem %s3, %s2433
      // Predicated region
      $region48: #{forward.21} parent=27 // pred_check
        %p2435 = pneg %p74
      $region49: #{forward.21} parent=27 // pred_check_branch
        %2437 = sbr.rel (%p2435) target = $region51
      $region50: #{forward.21} parent=27 // pred_region
        %s2438 = smul.u32 57, %s14
      $region51: #{forward.21} parent=27 // pred_fallthru
        _
    $region28: #{forward.21} parent=5 // pred_fallthru
      _
    %p2439 = scmp.le.s32.totalorder 2, %s9
    // Predicated region
    $region52: #{forward.21} parent=5 // pred_check
      %p2440 = pneg %p2439
    $region53: #{forward.21} parent=5 // pred_check_branch
      %2442 = sbr.rel (%p2440) target = $region55
    $region54: #{forward.21} parent=5 // pred_region
      %s2443 = ssub.s32 %s9, 2
      // Predicated region
      $region56: #{forward.21} parent=54 // pred_check
        %p2444 = pneg %p80
      $region57: #{forward.21} parent=54 // pred_check_branch
        %2446 = sbr.rel (%p2444) target = $region59
      $region58: #{forward.21} parent=54 // pred_region
        %s2447 = smul.u32 57, %s15
        %p2448 = scmp.lt.s32.totalorder %s2447, 284
        %s2449 = scalar_select %p2448, %s2447, 284
        %s2450 = smul.addr %s2449, 8
        %s2451 = scalar_lea.vmem %s3, %s2450
      $region59: #{forward.21} parent=54 // pred_fallthru
        _
    $region55: #{forward.21} parent=5 // pred_fallthru
      _
  $region6: #{forward.21} parent=0 // loop_footer
    %s13 = sadd.s32 1, %s9
  $region7: #{forward.21} parent=0 // loop_footer_branch
    %8 = sbr.rel target = $region3
  $region8: #{forward.21} parent=0 // loop_exit
    _
  %2452 = vsyncmov [#allocation3]
  %s2453 = vpop.sfrf %2452
  %p2454 = scmp.eq.s32.totalorder %s2453, 0
  %p2455 = pneg %p2454
  %2457 = shalt.err (%p2455)

</llo_original>
